<compile_context>
chip_gen: v7x
topology: tpu7x:2x2x1
jax: 0.10.0
libtpu: 0.0.40
codegen_flags: <defaults>
</compile_context>

<pallas_src>
import math

import jax
import jax.numpy as jnp
from jax.experimental import pallas as pl
from jax.experimental.pallas import tpu as pltpu


# ----------------------------- Pallas kernel ------------------------------- #
def hldm_forward_kernel(
    x_ref,        # [TB, D]    bf16  flattened image tile
    te_ref,       # [TB, H1]   f32   precomputed (t-1)*wte + b1e
    td_ref,       # [TB, H2]   f32   precomputed  t   *wtd + b1d
    eps_ref,      # [TB, Lp]   f32   N(0,1) noise (zeros in padded lanes)
    w1e_ref,      # [D,  H1]   bf16  encoder layer-1 weight
    w2e_mu_ref,   # [H1, Lp]   bf16  encoder head -> mu
    b2e_mu_ref,   # [1,  Lp]   f32
    w2e_ls_ref,   # [H1, Lp]   bf16  encoder head -> log_sigma
    b2e_ls_ref,   # [1,  Lp]   f32
    w1d_ref,      # [Lp, H2]   bf16  decoder layer-1 weight (zero-padded rows)
    w2d_ref,      # [H2, D]    bf16  decoder layer-2 weight
    b2d_ref,      # [1,  D]    f32
    out_ref,      # [TB, D]    f32   x0_rec tile
):
    bf16 = jnp.bfloat16
    f32 = jnp.float32

    # ---- encoder(x, t - 1): bf16 MXU operands, f32 accumulation ----
    h = jnp.dot(x_ref[...], w1e_ref[...], preferred_element_type=f32)
    h = jnp.maximum(h + te_ref[...], 0.0)            # time-cond bias + ReLU (f32)
    h_b = h.astype(bf16)

    # ---- torch.split(enc, latent_s, 1): two lane-aligned 128-wide heads ----
    mu = jnp.dot(h_b, w2e_mu_ref[...], preferred_element_type=f32) + b2e_mu_ref[...]
    log_sigma = jnp.dot(h_b, w2e_ls_ref[...], preferred_element_type=f32) + b2e_ls_ref[...]

    # ---- z0 = randn * exp(log_sigma) + mu (f32 VPU/EUP math) ----
    z0 = eps_ref[...] * jnp.exp(log_sigma) + mu

    # ---- decoder(z0, t) ----
    hd = jnp.dot(z0.astype(bf16), w1d_ref[...], preferred_element_type=f32)
    hd = jnp.maximum(hd + td_ref[...], 0.0)
    out = jnp.dot(hd.astype(bf16), w2d_ref[...], preferred_element_type=f32) + b2d_ref[...]

    out_ref[...] = out.astype(out_ref.dtype)


# ------------------------------ call builder -------------------------------- #
def _round_up(n, m):
    return ((n + m - 1) // m) * m


def _choose_batch_tile(B):
    """Large tiles for MXU occupancy; grid >= 2 where possible (v7x megacore)."""
    if B >= 256:
        return 128                      # full 128-row MXU tiles, grid >= 2
    if B >= 16:
        return _round_up((B + 1) // 2, 8)   # split batch in two -> grid of 2
    return B                            # tiny batch: single full-size block


def _build_call(Bp, D, Lp, H1, H2, TB, single_buffer_weights):
    if single_buffer_weights:
        # Grid-invariant operands: one VMEM buffer is enough (DMA'd once).
        def wspec(shape):
            return pl.BlockSpec(shape, lambda i: (0, 0), pipeline_mode=pl.Buffered(1))
    else:
        def wspec(shape):
            return pl.BlockSpec(shape, lambda i: (0, 0))

    def row(width):
        return pl.BlockSpec((TB, width), lambda i: (i, 0))

    grid_spec = pltpu.PrefetchScalarGridSpec(
        num_scalar_prefetch=0,
        grid=(Bp // TB,),
        in_specs=[
            row(D),            # x (bf16)
            row(H1),           # te_bias
            row(H2),           # td_bias
            row(Lp),           # eps
            wspec((D, H1)),    # w1e
            wspec((H1, Lp)),   # w2e_mu
            wspec((1, Lp)),    # b2e_mu
            wspec((H1, Lp)),   # w2e_ls
            wspec((1, Lp)),    # b2e_ls
            wspec((Lp, H2)),   # w1d
            wspec((H2, D)),    # w2d
            wspec((1, D)),     # b2d
        ],
        out_specs=pl.BlockSpec((TB, D), lambda i: (i, 0)),
    )

    return pl.pallas_call(
        hldm_forward_kernel,
        out_shape=jax.ShapeDtypeStruct((Bp, D), jnp.float32),
        grid_spec=grid_spec,
        compiler_params=pltpu.CompilerParams(
            dimension_semantics=("parallel",),
            vmem_limit_bytes=32 * 1024 * 1024,   # plenty; safe on v7x's 64 MiB VMEM
        ),
    )


# --------------------------------- wrapper ----------------------------------- #
def hldm_forward(x_nchw, t, eps, params, *, batch_tile=None):
    """x_nchw: [B,C,H,W]; t: [B,1] float; eps: [B,L] -> x0_rec: [B, C*H*W] (f32)."""
    (w1e, wte, b1e, w2e, b2e, w1d, wtd, b1d, w2d, b2d) = params

    B = x_nchw.shape[0]
    D = int(x_nchw.shape[1] * x_nchw.shape[2] * x_nchw.shape[3])
    L = eps.shape[1]
    H1 = w1e.shape[1]
    H2 = w1d.shape[1]

    f32, bf16 = jnp.float32, jnp.bfloat16

    # batch tiling: pad B up to a multiple of TB, slice the output back to B
    TB = _choose_batch_tile(B) if batch_tile is None else batch_tile
    Bp = _round_up(B, TB)
    # lane-aligned latent width (mu / log_sigma each occupy full 128-lane vregs)
    Lp = _round_up(L, 128)

    # torch .view(B,-1) row-major flatten + fold time conditioning into per-row biases
    x_flat = x_nchw.reshape(B, D).astype(f32)
    t = t.astype(f32)
    te_bias = (t - 1.0) * wte + b1e          # [B, H1]  encoder uses t-1
    td_bias = t * wtd + b1d                  # [B, H2]  decoder uses t

    def pad_rows(a):
        return jnp.pad(a, ((0, Bp - B), (0, 0))) if Bp != B else a

    x_p = pad_rows(x_flat).astype(bf16)
    te_p = pad_rows(te_bias).astype(f32)
    td_p = pad_rows(td_bias).astype(f32)
    eps_p = pad_rows(eps.astype(f32))
    if Lp != L:
        eps_p = jnp.pad(eps_p, ((0, 0), (0, Lp - L)))

    # split encoder head into lane-aligned mu / log_sigma weights, zero-pad to Lp.
    # Padding is benign: mu_pad = 0, log_sigma_pad = 0 -> exp = 1, eps_pad = 0,
    # and the padded rows of w1d are zero, so padded latent lanes contribute nothing.
    w2e_mu = jnp.pad(w2e[:, :L], ((0, 0), (0, Lp - L)))
    w2e_ls = jnp.pad(w2e[:, L:], ((0, 0), (0, Lp - L)))
    b2e_mu = jnp.pad(b2e[:, :L], ((0, 0), (0, Lp - L))).astype(f32)
    b2e_ls = jnp.pad(b2e[:, L:], ((0, 0), (0, Lp - L))).astype(f32)
    w1d_p = jnp.pad(w1d, ((0, Lp - L), (0, 0)))

    args = (
        x_p, te_p, td_p, eps_p,
        w1e.astype(bf16),
        w2e_mu.astype(bf16), b2e_mu,
        w2e_ls.astype(bf16), b2e_ls,
        w1d_p.astype(bf16),
        w2d.astype(bf16), b2d.astype(f32),
    )

    try:
        out = _build_call(Bp, D, Lp, H1, H2, TB, single_buffer_weights=True)(*args)
    except Exception:
        # Fall back to default double-buffered invariant weights if this Pallas
        # build rejects pipeline_mode=pl.Buffered(1).
        out = _build_call(Bp, D, Lp, H1, H2, TB, single_buffer_weights=False)(*args)

    return out[:B]


# ----------------------------- params & reference ---------------------------- #
def make_params(key, D, L, H1, H2):
    ks = jax.random.split(key, 6)
    scale = lambda fan_in: 1.0 / math.sqrt(fan_in)
    w1e = jax.random.normal(ks[0], (D, H1), jnp.float32) * scale(D)
    wte = jax.random.normal(ks[1], (1, H1), jnp.float32) * 0.1
    b1e = jnp.zeros((1, H1), jnp.float32)
    w2e = jax.random.normal(ks[2], (H1, 2 * L), jnp.float32) * scale(H1)
    b2e = jnp.zeros((1, 2 * L), jnp.float32)
    w1d = jax.random.normal(ks[3], (L, H2), jnp.float32) * scale(L)
    wtd = jax.random.normal(ks[4], (1, H2), jnp.float32) * 0.1
    b1d = jnp.zeros((1, H2), jnp.float32)
    w2d = jax.random.normal(ks[5], (H2, D), jnp.float32) * scale(H2)
    b2d = jnp.zeros((1, D), jnp.float32)
    return (w1e, wte, b1e, w2e, b2e, w1d, wtd, b1d, w2d, b2d)


def reference_forward(x_nchw, t, eps, params):
    """Plain-JAX f32 reference (mirrors the PyTorch semantics)."""
    (w1e, wte, b1e, w2e, b2e, w1d, wtd, b1d, w2d, b2d) = params
    B = x_nchw.shape[0]
    x = x_nchw.reshape(B, -1)
    h = jnp.maximum(x @ w1e + ((t - 1.0) * wte + b1e), 0.0)
    enc = h @ w2e + b2e
    L = eps.shape[1]
    mu, log_sigma = enc[:, :L], enc[:, L:]
    z0 = eps * jnp.exp(log_sigma) + mu
    hd = jnp.maximum(z0 @ w1d + (t * wtd + b1d), 0.0)
    return hd @ w2d + b2d


def reference_forward_bf16(x_nchw, t, eps, params):
    """Reference with the same bf16-operand / f32-accumulate recipe as the kernel."""
    (w1e, wte, b1e, w2e, b2e, w1d, wtd, b1d, w2d, b2d) = params
    bf = lambda a: a.astype(jnp.bfloat16)
    f32 = jnp.float32
    B = x_nchw.shape[0]
    x = x_nchw.reshape(B, -1)
    L = eps.shape[1]
    h = jnp.dot(bf(x), bf(w1e), preferred_element_type=f32)
    h = jnp.maximum(h + ((t - 1.0) * wte + b1e), 0.0)
    mu = jnp.dot(bf(h), bf(w2e[:, :L]), preferred_element_type=f32) + b2e[:, :L]
    ls = jnp.dot(bf(h), bf(w2e[:, L:]), preferred_element_type=f32) + b2e[:, L:]
    z0 = eps * jnp.exp(ls) + mu
    hd = jnp.dot(bf(z0), bf(w1d), preferred_element_type=f32)
    hd = jnp.maximum(hd + (t * wtd + b1d), 0.0)
    return jnp.dot(bf(hd), bf(w2d), preferred_element_type=f32) + b2d


# ----------------------------------- main ------------------------------------ #
if __name__ == "__main__":
    # Shapes consistent with the module's forward:
    #   x: [B, C, H, W], img_size = (C, H, W), latent_s = L
    B, C, H, W = 256, 4, 16, 16      # B=256 -> batch tile 128, grid of 2
    D = C * H * W                    # 1024
    L = 64                           # latent_s
    H1, H2 = 128, 128                # encoder / decoder hidden widths

    key = jax.random.PRNGKey(0)
    k_x, k_t, k_eps, k_p = jax.random.split(key, 4)

    x = jax.random.normal(k_x, (B, C, H, W), jnp.float32)
    t = jax.random.randint(k_t, (B, 1), 1, 10).astype(jnp.float32)
    # Noise for the reparameterization trick (torch.randn_like(mu_z0)),
    # generated outside the kernel so the run is deterministic.
    eps = jax.random.normal(k_eps, (B, L), jnp.float32)
    params = make_params(k_p, D, L, H1, H2)

    out = jax.block_until_ready(hldm_forward(x, t, eps, params))
    assert out.shape == (B, D)

    # Tight check vs. a reference using the same bf16-operand recipe.
    ref_b = reference_forward_bf16(x, t, eps, params)
    assert float(jnp.max(jnp.abs(out - ref_b))) < 1e-2
    # Loose norm-relative check vs. the pure-f32 reference (bf16 rounding budget).
    ref_f = reference_forward(x, t, eps, params)
    rel = float(jnp.linalg.norm(out - ref_f) / (jnp.linalg.norm(ref_f) + 1e-6))
    assert rel < 5e-2

    # Non-divisible batch path: padded last tile + output slice (no hard assert).
    B2 = 20
    out2 = jax.block_until_ready(hldm_forward(x[:B2], t[:B2], eps[:B2], params))
    ref2 = reference_forward_bf16(x[:B2], t[:B2], eps[:B2], params)
    assert out2.shape == (B2, D)
    assert float(jnp.max(jnp.abs(out2 - ref2))) < 1e-2

    print("KERNEL_OK")
</pallas_src>

<mosaic_0001>
module attributes {stable_mosaic.version = 11 : i64} {
  func.func @hldm_forward_kernel(%arg0: i32, %arg1: memref<128x1024xbf16, #tpu.memory_space<vmem>>, %arg2: memref<128x128xf32, #tpu.memory_space<vmem>>, %arg3: memref<128x128xf32, #tpu.memory_space<vmem>>, %arg4: memref<128x128xf32, #tpu.memory_space<vmem>>, %arg5: memref<1024x128xbf16, #tpu.memory_space<vmem>>, %arg6: memref<128x128xbf16, #tpu.memory_space<vmem>>, %arg7: memref<1x128xf32, #tpu.memory_space<vmem>>, %arg8: memref<128x128xbf16, #tpu.memory_space<vmem>>, %arg9: memref<1x128xf32, #tpu.memory_space<vmem>>, %arg10: memref<128x128xbf16, #tpu.memory_space<vmem>>, %arg11: memref<128x1024xbf16, #tpu.memory_space<vmem>>, %arg12: memref<1x1024xf32, #tpu.memory_space<vmem>>, %arg13: memref<128x1024xf32, #tpu.memory_space<vmem>>) attributes {dimension_semantics = [#tpu.dimension_semantics<parallel>], iteration_bounds = array<i64: 2>, scalar_prefetch = 0 : i64, scratch_operands = 0 : i64, tpu.core_type = #tpu.core_type<tc>, window_params = [{transform_indices = @transform_0, window_bounds = array<i64: 128, 1024>}, {transform_indices = @transform_1, window_bounds = array<i64: 128, 128>}, {transform_indices = @transform_2, window_bounds = array<i64: 128, 128>}, {transform_indices = @transform_3, window_bounds = array<i64: 128, 128>}, {pipeline_mode = #tpu.pipeline_mode<synchronous>, transform_indices = @transform_4, window_bounds = array<i64: 1024, 128>}, {pipeline_mode = #tpu.pipeline_mode<synchronous>, transform_indices = @transform_5, window_bounds = array<i64: 128, 128>}, {pipeline_mode = #tpu.pipeline_mode<synchronous>, transform_indices = @transform_6, window_bounds = array<i64: 1, 128>}, {pipeline_mode = #tpu.pipeline_mode<synchronous>, transform_indices = @transform_7, window_bounds = array<i64: 128, 128>}, {pipeline_mode = #tpu.pipeline_mode<synchronous>, transform_indices = @transform_8, window_bounds = array<i64: 1, 128>}, {pipeline_mode = #tpu.pipeline_mode<synchronous>, transform_indices = @transform_9, window_bounds = array<i64: 128, 128>}, {pipeline_mode = #tpu.pipeline_mode<synchronous>, transform_indices = @transform_10, window_bounds = array<i64: 128, 1024>}, {pipeline_mode = #tpu.pipeline_mode<synchronous>, transform_indices = @transform_11, window_bounds = array<i64: 1, 1024>}, {transform_indices = @transform_12, window_bounds = array<i64: 128, 1024>}]} {
    %c0 = arith.constant 0 : index
    %c0_0 = arith.constant 0 : index
    %0 = vector.load %arg1[%c0, %c0_0] : memref<128x1024xbf16, #tpu.memory_space<vmem>>, vector<128x1024xbf16>
    %c0_1 = arith.constant 0 : index
    %c0_2 = arith.constant 0 : index
    %1 = vector.load %arg5[%c0_1, %c0_2] : memref<1024x128xbf16, #tpu.memory_space<vmem>>, vector<1024x128xbf16>
    %cst = arith.constant dense<0.000000e+00> : vector<128x128xf32>
    %2 = tpu.matmul %0, %1, %cst {dimension_numbers = #tpu.dot_dimension_numbers<[1], [0], [0], [1], [0, 0, 1, 1], [], []>} : vector<128x1024xbf16>, vector<1024x128xbf16>, vector<128x128xf32> -> vector<128x128xf32>
    %c0_3 = arith.constant 0 : index
    %c0_4 = arith.constant 0 : index
    %3 = vector.load %arg2[%c0_3, %c0_4] : memref<128x128xf32, #tpu.memory_space<vmem>>, vector<128x128xf32>
    %4 = arith.addf %2, %3 : vector<128x128xf32>
    %cst_5 = arith.constant 0.000000e+00 : f32
    %5 = vector.broadcast %cst_5 : f32 to vector<128x128xf32>
    %6 = arith.maximumf %4, %5 : vector<128x128xf32>
    %7 = arith.truncf %6 : vector<128x128xf32> to vector<128x128xbf16>
    %c0_6 = arith.constant 0 : index
    %c0_7 = arith.constant 0 : index
    %8 = vector.load %arg6[%c0_6, %c0_7] : memref<128x128xbf16, #tpu.memory_space<vmem>>, vector<128x128xbf16>
    %cst_8 = arith.constant dense<0.000000e+00> : vector<128x128xf32>
    %9 = tpu.matmul %7, %8, %cst_8 {dimension_numbers = #tpu.dot_dimension_numbers<[1], [0], [0], [1], [0, 0, 1, 1], [], []>} : vector<128x128xbf16>, vector<128x128xbf16>, vector<128x128xf32> -> vector<128x128xf32>
    %c0_9 = arith.constant 0 : index
    %c0_10 = arith.constant 0 : index
    %10 = vector.load %arg7[%c0_9, %c0_10] : memref<1x128xf32, #tpu.memory_space<vmem>>, vector<1x128xf32>
    %11 = vector.broadcast %10 : vector<1x128xf32> to vector<128x128xf32>
    %12 = arith.addf %9, %11 : vector<128x128xf32>
    %c0_11 = arith.constant 0 : index
    %c0_12 = arith.constant 0 : index
    %13 = vector.load %arg8[%c0_11, %c0_12] : memref<128x128xbf16, #tpu.memory_space<vmem>>, vector<128x128xbf16>
    %cst_13 = arith.constant dense<0.000000e+00> : vector<128x128xf32>
    %14 = tpu.matmul %7, %13, %cst_13 {dimension_numbers = #tpu.dot_dimension_numbers<[1], [0], [0], [1], [0, 0, 1, 1], [], []>} : vector<128x128xbf16>, vector<128x128xbf16>, vector<128x128xf32> -> vector<128x128xf32>
    %c0_14 = arith.constant 0 : index
    %c0_15 = arith.constant 0 : index
    %15 = vector.load %arg9[%c0_14, %c0_15] : memref<1x128xf32, #tpu.memory_space<vmem>>, vector<1x128xf32>
    %16 = vector.broadcast %15 : vector<1x128xf32> to vector<128x128xf32>
    %17 = arith.addf %14, %16 : vector<128x128xf32>
    %c0_16 = arith.constant 0 : index
    %c0_17 = arith.constant 0 : index
    %18 = vector.load %arg4[%c0_16, %c0_17] : memref<128x128xf32, #tpu.memory_space<vmem>>, vector<128x128xf32>
    %19 = math.exp %17 : vector<128x128xf32>
    %20 = arith.mulf %18, %19 : vector<128x128xf32>
    %21 = arith.addf %20, %12 : vector<128x128xf32>
    %22 = arith.truncf %21 : vector<128x128xf32> to vector<128x128xbf16>
    %c0_18 = arith.constant 0 : index
    %c0_19 = arith.constant 0 : index
    %23 = vector.load %arg10[%c0_18, %c0_19] : memref<128x128xbf16, #tpu.memory_space<vmem>>, vector<128x128xbf16>
    %cst_20 = arith.constant dense<0.000000e+00> : vector<128x128xf32>
    %24 = tpu.matmul %22, %23, %cst_20 {dimension_numbers = #tpu.dot_dimension_numbers<[1], [0], [0], [1], [0, 0, 1, 1], [], []>} : vector<128x128xbf16>, vector<128x128xbf16>, vector<128x128xf32> -> vector<128x128xf32>
    %c0_21 = arith.constant 0 : index
    %c0_22 = arith.constant 0 : index
    %25 = vector.load %arg3[%c0_21, %c0_22] : memref<128x128xf32, #tpu.memory_space<vmem>>, vector<128x128xf32>
    %26 = arith.addf %24, %25 : vector<128x128xf32>
    %cst_23 = arith.constant 0.000000e+00 : f32
    %27 = vector.broadcast %cst_23 : f32 to vector<128x128xf32>
    %28 = arith.maximumf %26, %27 : vector<128x128xf32>
    %29 = arith.truncf %28 : vector<128x128xf32> to vector<128x128xbf16>
    %c0_24 = arith.constant 0 : index
    %c0_25 = arith.constant 0 : index
    %30 = vector.load %arg11[%c0_24, %c0_25] : memref<128x1024xbf16, #tpu.memory_space<vmem>>, vector<128x1024xbf16>
    %cst_26 = arith.constant dense<0.000000e+00> : vector<128x1024xf32>
    %31 = tpu.matmul %29, %30, %cst_26 {dimension_numbers = #tpu.dot_dimension_numbers<[1], [0], [0], [1], [0, 0, 1, 1], [], []>} : vector<128x128xbf16>, vector<128x1024xbf16>, vector<128x1024xf32> -> vector<128x1024xf32>
    %c0_27 = arith.constant 0 : index
    %c0_28 = arith.constant 0 : index
    %32 = vector.load %arg12[%c0_27, %c0_28] : memref<1x1024xf32, #tpu.memory_space<vmem>>, vector<1x1024xf32>
    %33 = vector.broadcast %32 : vector<1x1024xf32> to vector<128x1024xf32>
    %34 = arith.addf %31, %33 : vector<128x1024xf32>
    %c0_29 = arith.constant 0 : index
    %c0_30 = arith.constant 0 : index
    %35 = vector.load %arg13[%c0_29, %c0_30] : memref<128x1024xf32, #tpu.memory_space<vmem>>, vector<128x1024xf32>
    tpu.vector_store %arg13[%c0_29, %c0_30], %34 {strides = array<i32>} : memref<128x1024xf32, #tpu.memory_space<vmem>>, vector<128x1024xf32>,
    return
  }
  func.func @transform_0(%arg0: i32) -> (i32, i32) {
    %c0_i32 = arith.constant 0 : i32
    %c0_i32_0 = arith.constant 0 : i32
    return %arg0, %c0_i32 : i32, i32
  }
  func.func @transform_1(%arg0: i32) -> (i32, i32) {
    %c0_i32 = arith.constant 0 : i32
    %c0_i32_0 = arith.constant 0 : i32
    return %arg0, %c0_i32 : i32, i32
  }
  func.func @transform_2(%arg0: i32) -> (i32, i32) {
    %c0_i32 = arith.constant 0 : i32
    %c0_i32_0 = arith.constant 0 : i32
    return %arg0, %c0_i32 : i32, i32
  }
  func.func @transform_3(%arg0: i32) -> (i32, i32) {
    %c0_i32 = arith.constant 0 : i32
    %c0_i32_0 = arith.constant 0 : i32
    return %arg0, %c0_i32 : i32, i32
  }
  func.func @transform_4(%arg0: i32) -> (i32, i32) {
    %c0_i32 = arith.constant 0 : i32
    %c0_i32_0 = arith.constant 0 : i32
    %c0_i32_1 = arith.constant 0 : i32
    return %c0_i32, %c0_i32_0 : i32, i32
  }
  func.func @transform_5(%arg0: i32) -> (i32, i32) {
    %c0_i32 = arith.constant 0 : i32
    %c0_i32_0 = arith.constant 0 : i32
    %c0_i32_1 = arith.constant 0 : i32
    return %c0_i32, %c0_i32_0 : i32, i32
  }
  func.func @transform_6(%arg0: i32) -> (i32, i32) {
    %c0_i32 = arith.constant 0 : i32
    %c0_i32_0 = arith.constant 0 : i32
    %c0_i32_1 = arith.constant 0 : i32
    return %c0_i32, %c0_i32_0 : i32, i32
  }
  func.func @transform_7(%arg0: i32) -> (i32, i32) {
    %c0_i32 = arith.constant 0 : i32
    %c0_i32_0 = arith.constant 0 : i32
    %c0_i32_1 = arith.constant 0 : i32
    return %c0_i32, %c0_i32_0 : i32, i32
  }
  func.func @transform_8(%arg0: i32) -> (i32, i32) {
    %c0_i32 = arith.constant 0 : i32
    %c0_i32_0 = arith.constant 0 : i32
    %c0_i32_1 = arith.constant 0 : i32
    return %c0_i32, %c0_i32_0 : i32, i32
  }
  func.func @transform_9(%arg0: i32) -> (i32, i32) {
    %c0_i32 = arith.constant 0 : i32
    %c0_i32_0 = arith.constant 0 : i32
    %c0_i32_1 = arith.constant 0 : i32
    return %c0_i32, %c0_i32_0 : i32, i32
  }
  func.func @transform_10(%arg0: i32) -> (i32, i32) {
    %c0_i32 = arith.constant 0 : i32
    %c0_i32_0 = arith.constant 0 : i32
    %c0_i32_1 = arith.constant 0 : i32
    return %c0_i32, %c0_i32_0 : i32, i32
  }
  func.func @transform_11(%arg0: i32) -> (i32, i32) {
    %c0_i32 = arith.constant 0 : i32
    %c0_i32_0 = arith.constant 0 : i32
    %c0_i32_1 = arith.constant 0 : i32
    return %c0_i32, %c0_i32_0 : i32, i32
  }
  func.func @transform_12(%arg0: i32) -> (i32, i32) {
    %c0_i32 = arith.constant 0 : i32
    %c0_i32_0 = arith.constant 0 : i32
    return %arg0, %c0_i32 : i32, i32
  }
}

module attributes {stable_mosaic.version = 11 : i64} {
  func.func @hldm_forward_kernel(%arg0: i32, %arg1: memref<128x1024xbf16, #tpu.memory_space<vmem>>, %arg2: memref<128x128xf32, #tpu.memory_space<vmem>>, %arg3: memref<128x128xf32, #tpu.memory_space<vmem>>, %arg4: memref<128x128xf32, #tpu.memory_space<vmem>>, %arg5: memref<1024x128xbf16, #tpu.memory_space<vmem>>, %arg6: memref<128x128xbf16, #tpu.memory_space<vmem>>, %arg7: memref<1x128xf32, #tpu.memory_space<vmem>>, %arg8: memref<128x128xbf16, #tpu.memory_space<vmem>>, %arg9: memref<1x128xf32, #tpu.memory_space<vmem>>, %arg10: memref<128x128xbf16, #tpu.memory_space<vmem>>, %arg11: memref<128x1024xbf16, #tpu.memory_space<vmem>>, %arg12: memref<1x1024xf32, #tpu.memory_space<vmem>>, %arg13: memref<128x1024xf32, #tpu.memory_space<vmem>>) attributes {dimension_semantics = [#tpu.dimension_semantics<parallel>], iteration_bounds = array<i64: 2>, scalar_prefetch = 0 : i64, scratch_operands = 0 : i64, tpu.core_type = #tpu.core_type<tc>, window_params = [{transform_indices = @transform_0, window_bounds = array<i64: 128, 1024>}, {transform_indices = @transform_1, window_bounds = array<i64: 128, 128>}, {transform_indices = @transform_2, window_bounds = array<i64: 128, 128>}, {transform_indices = @transform_3, window_bounds = array<i64: 128, 128>}, {pipeline_mode = #tpu.pipeline_mode<synchronous>, transform_indices = @transform_4, window_bounds = array<i64: 1024, 128>}, {pipeline_mode = #tpu.pipeline_mode<synchronous>, transform_indices = @transform_5, window_bounds = array<i64: 128, 128>}, {pipeline_mode = #tpu.pipeline_mode<synchronous>, transform_indices = @transform_6, window_bounds = array<i64: 1, 128>}, {pipeline_mode = #tpu.pipeline_mode<synchronous>, transform_indices = @transform_7, window_bounds = array<i64: 128, 128>}, {pipeline_mode = #tpu.pipeline_mode<synchronous>, transform_indices = @transform_8, window_bounds = array<i64: 1, 128>}, {pipeline_mode = #tpu.pipeline_mode<synchronous>, transform_indices = @transform_9, window_bounds = array<i64: 128, 128>}, {pipeline_mode = #tpu.pipeline_mode<synchronous>, transform_indices = @transform_10, window_bounds = array<i64: 128, 1024>}, {pipeline_mode = #tpu.pipeline_mode<synchronous>, transform_indices = @transform_11, window_bounds = array<i64: 1, 1024>}, {transform_indices = @transform_12, window_bounds = array<i64: 128, 1024>}]} {
    %c0 = arith.constant 0 : index
    %c0_0 = arith.constant 0 : index
    %0 = vector.load %arg1[%c0, %c0_0] : memref<128x1024xbf16, #tpu.memory_space<vmem>>, vector<128x1024xbf16>
    %c0_1 = arith.constant 0 : index
    %c0_2 = arith.constant 0 : index
    %1 = vector.load %arg5[%c0_1, %c0_2] : memref<1024x128xbf16, #tpu.memory_space<vmem>>, vector<1024x128xbf16>
    %cst = arith.constant dense<0.000000e+00> : vector<128x128xf32>
    %2 = tpu.matmul %0, %1, %cst {dimension_numbers = #tpu.dot_dimension_numbers<[1], [0], [0], [1], [0, 0, 1, 1], [], []>} : vector<128x1024xbf16>, vector<1024x128xbf16>, vector<128x128xf32> -> vector<128x128xf32>
    %c0_3 = arith.constant 0 : index
    %c0_4 = arith.constant 0 : index
    %3 = vector.load %arg2[%c0_3, %c0_4] : memref<128x128xf32, #tpu.memory_space<vmem>>, vector<128x128xf32>
    %4 = arith.addf %2, %3 : vector<128x128xf32>
    %cst_5 = arith.constant 0.000000e+00 : f32
    %5 = vector.broadcast %cst_5 : f32 to vector<128x128xf32>
    %6 = arith.maximumf %4, %5 : vector<128x128xf32>
    %7 = arith.truncf %6 : vector<128x128xf32> to vector<128x128xbf16>
    %c0_6 = arith.constant 0 : index
    %c0_7 = arith.constant 0 : index
    %8 = vector.load %arg6[%c0_6, %c0_7] : memref<128x128xbf16, #tpu.memory_space<vmem>>, vector<128x128xbf16>
    %cst_8 = arith.constant dense<0.000000e+00> : vector<128x128xf32>
    %9 = tpu.matmul %7, %8, %cst_8 {dimension_numbers = #tpu.dot_dimension_numbers<[1], [0], [0], [1], [0, 0, 1, 1], [], []>} : vector<128x128xbf16>, vector<128x128xbf16>, vector<128x128xf32> -> vector<128x128xf32>
    %c0_9 = arith.constant 0 : index
    %c0_10 = arith.constant 0 : index
    %10 = vector.load %arg7[%c0_9, %c0_10] : memref<1x128xf32, #tpu.memory_space<vmem>>, vector<1x128xf32>
    %11 = vector.broadcast %10 : vector<1x128xf32> to vector<128x128xf32>
    %12 = arith.addf %9, %11 : vector<128x128xf32>
    %c0_11 = arith.constant 0 : index
    %c0_12 = arith.constant 0 : index
    %13 = vector.load %arg8[%c0_11, %c0_12] : memref<128x128xbf16, #tpu.memory_space<vmem>>, vector<128x128xbf16>
    %cst_13 = arith.constant dense<0.000000e+00> : vector<128x128xf32>
    %14 = tpu.matmul %7, %13, %cst_13 {dimension_numbers = #tpu.dot_dimension_numbers<[1], [0], [0], [1], [0, 0, 1, 1], [], []>} : vector<128x128xbf16>, vector<128x128xbf16>, vector<128x128xf32> -> vector<128x128xf32>
    %c0_14 = arith.constant 0 : index
    %c0_15 = arith.constant 0 : index
    %15 = vector.load %arg9[%c0_14, %c0_15] : memref<1x128xf32, #tpu.memory_space<vmem>>, vector<1x128xf32>
    %16 = vector.broadcast %15 : vector<1x128xf32> to vector<128x128xf32>
    %17 = arith.addf %14, %16 : vector<128x128xf32>
    %c0_16 = arith.constant 0 : index
    %c0_17 = arith.constant 0 : index
    %18 = vector.load %arg4[%c0_16, %c0_17] : memref<128x128xf32, #tpu.memory_space<vmem>>, vector<128x128xf32>
    %19 = math.exp %17 : vector<128x128xf32>
    %20 = arith.mulf %18, %19 : vector<128x128xf32>
    %21 = arith.addf %20, %12 : vector<128x128xf32>
    %22 = arith.truncf %21 : vector<128x128xf32> to vector<128x128xbf16>
    %c0_18 = arith.constant 0 : index
    %c0_19 = arith.constant 0 : index
    %23 = vector.load %arg10[%c0_18, %c0_19] : memref<128x128xbf16, #tpu.memory_space<vmem>>, vector<128x128xbf16>
    %cst_20 = arith.constant dense<0.000000e+00> : vector<128x128xf32>
    %24 = tpu.matmul %22, %23, %cst_20 {dimension_numbers = #tpu.dot_dimension_numbers<[1], [0], [0], [1], [0, 0, 1, 1], [], []>} : vector<128x128xbf16>, vector<128x128xbf16>, vector<128x128xf32> -> vector<128x128xf32>
    %c0_21 = arith.constant 0 : index
    %c0_22 = arith.constant 0 : index
    %25 = vector.load %arg3[%c0_21, %c0_22] : memref<128x128xf32, #tpu.memory_space<vmem>>, vector<128x128xf32>
    %26 = arith.addf %24, %25 : vector<128x128xf32>
    %cst_23 = arith.constant 0.000000e+00 : f32
    %27 = vector.broadcast %cst_23 : f32 to vector<128x128xf32>
    %28 = arith.maximumf %26, %27 : vector<128x128xf32>
    %29 = arith.truncf %28 : vector<128x128xf32> to vector<128x128xbf16>
    %c0_24 = arith.constant 0 : index
    %c0_25 = arith.constant 0 : index
    %30 = vector.load %arg11[%c0_24, %c0_25] : memref<128x1024xbf16, #tpu.memory_space<vmem>>, vector<128x1024xbf16>
    %cst_26 = arith.constant dense<0.000000e+00> : vector<128x1024xf32>
    %31 = tpu.matmul %29, %30, %cst_26 {dimension_numbers = #tpu.dot_dimension_numbers<[1], [0], [0], [1], [0, 0, 1, 1], [], []>} : vector<128x128xbf16>, vector<128x1024xbf16>, vector<128x1024xf32> -> vector<128x1024xf32>
    %c0_27 = arith.constant 0 : index
    %c0_28 = arith.constant 0 : index
    %32 = vector.load %arg12[%c0_27, %c0_28] : memref<1x1024xf32, #tpu.memory_space<vmem>>, vector<1x1024xf32>
    %33 = vector.broadcast %32 : vector<1x1024xf32> to vector<128x1024xf32>
    %34 = arith.addf %31, %33 : vector<128x1024xf32>
    %c0_29 = arith.constant 0 : index
    %c0_30 = arith.constant 0 : index
    %35 = vector.load %arg13[%c0_29, %c0_30] : memref<128x1024xf32, #tpu.memory_space<vmem>>, vector<128x1024xf32>
    tpu.vector_store %arg13[%c0_29, %c0_30], %34 {strides = array<i32>} : memref<128x1024xf32, #tpu.memory_space<vmem>>, vector<128x1024xf32>,
    return
  }
  func.func @transform_0(%arg0: i32) -> (i32, i32) {
    %c0_i32 = arith.constant 0 : i32
    %c0_i32_0 = arith.constant 0 : i32
    return %arg0, %c0_i32 : i32, i32
  }
  func.func @transform_1(%arg0: i32) -> (i32, i32) {
    %c0_i32 = arith.constant 0 : i32
    %c0_i32_0 = arith.constant 0 : i32
    return %arg0, %c0_i32 : i32, i32
  }
  func.func @transform_2(%arg0: i32) -> (i32, i32) {
    %c0_i32 = arith.constant 0 : i32
    %c0_i32_0 = arith.constant 0 : i32
    return %arg0, %c0_i32 : i32, i32
  }
  func.func @transform_3(%arg0: i32) -> (i32, i32) {
    %c0_i32 = arith.constant 0 : i32
    %c0_i32_0 = arith.constant 0 : i32
    return %arg0, %c0_i32 : i32, i32
  }
  func.func @transform_4(%arg0: i32) -> (i32, i32) {
    %c0_i32 = arith.constant 0 : i32
    %c0_i32_0 = arith.constant 0 : i32
    %c0_i32_1 = arith.constant 0 : i32
    return %c0_i32, %c0_i32_0 : i32, i32
  }
  func.func @transform_5(%arg0: i32) -> (i32, i32) {
    %c0_i32 = arith.constant 0 : i32
    %c0_i32_0 = arith.constant 0 : i32
    %c0_i32_1 = arith.constant 0 : i32
    return %c0_i32, %c0_i32_0 : i32, i32
  }
  func.func @transform_6(%arg0: i32) -> (i32, i32) {
    %c0_i32 = arith.constant 0 : i32
    %c0_i32_0 = arith.constant 0 : i32
    %c0_i32_1 = arith.constant 0 : i32
    return %c0_i32, %c0_i32_0 : i32, i32
  }
  func.func @transform_7(%arg0: i32) -> (i32, i32) {
    %c0_i32 = arith.constant 0 : i32
    %c0_i32_0 = arith.constant 0 : i32
    %c0_i32_1 = arith.constant 0 : i32
    return %c0_i32, %c0_i32_0 : i32, i32
  }
  func.func @transform_8(%arg0: i32) -> (i32, i32) {
    %c0_i32 = arith.constant 0 : i32
    %c0_i32_0 = arith.constant 0 : i32
    %c0_i32_1 = arith.constant 0 : i32
    return %c0_i32, %c0_i32_0 : i32, i32
  }
  func.func @transform_9(%arg0: i32) -> (i32, i32) {
    %c0_i32 = arith.constant 0 : i32
    %c0_i32_0 = arith.constant 0 : i32
    %c0_i32_1 = arith.constant 0 : i32
    return %c0_i32, %c0_i32_0 : i32, i32
  }
  func.func @transform_10(%arg0: i32) -> (i32, i32) {
    %c0_i32 = arith.constant 0 : i32
    %c0_i32_0 = arith.constant 0 : i32
    %c0_i32_1 = arith.constant 0 : i32
    return %c0_i32, %c0_i32_0 : i32, i32
  }
  func.func @transform_11(%arg0: i32) -> (i32, i32) {
    %c0_i32 = arith.constant 0 : i32
    %c0_i32_0 = arith.constant 0 : i32
    %c0_i32_1 = arith.constant 0 : i32
    return %c0_i32, %c0_i32_0 : i32, i32
  }
  func.func @transform_12(%arg0: i32) -> (i32, i32) {
    %c0_i32 = arith.constant 0 : i32
    %c0_i32_0 = arith.constant 0 : i32
    return %arg0, %c0_i32 : i32, i32
  }
}

</mosaic_0001>

<llo_original>
// kernel: tpu_custom_call.1
$region0: #{tpu_custom_call.1}
  #allocation0 [shape = 'u32[]', space=smem, size = 0x4, offset = 0x4, fixed_abs, tag = 'smem constant byte address 0x4 - core index']
  #allocation1 [shape = 'u32[144,128]{1,0:T(1,128)}', space=vmem, size = 0x12000, scoped, tag = 'internal scratch']
  %s0 = inlined_call_operand.hbm [shape: bf16[256,1024], index: 0, kind: input, shape index: {}]
  %s1 = inlined_call_operand.hbm [shape: f32[256,128], index: 1, kind: input, shape index: {}]
  %s2 = inlined_call_operand.hbm [shape: f32[256,128], index: 2, kind: input, shape index: {}]
  %s3 = inlined_call_operand.hbm [shape: f32[256,128], index: 3, kind: input, shape index: {}]
  %s4 = inlined_call_operand.hbm [shape: bf16[1024,128], index: 4, kind: input, shape index: {}]
  %s5 = inlined_call_operand.hbm [shape: bf16[128,128], index: 5, kind: input, shape index: {}]
  %s6 = inlined_call_operand.vmem [shape: f32[1,128], index: 6, kind: input, shape index: {}]
  %s7 = inlined_call_operand.hbm [shape: bf16[128,128], index: 7, kind: input, shape index: {}]
  %s8 = inlined_call_operand.vmem [shape: f32[1,128], index: 8, kind: input, shape index: {}]
  %s9 = inlined_call_operand.hbm [shape: bf16[128,128], index: 9, kind: input, shape index: {}]
  %s10 = inlined_call_operand.hbm [shape: bf16[128,1024], index: 10, kind: input, shape index: {}]
  %s11 = inlined_call_operand.vmem [shape: f32[1,1024], index: 11, kind: input, shape index: {}]
  %s12 = inlined_call_operand.hbm [shape: f32[256,1024], index: 12, kind: output, shape index: {}]
  %s13 = sld [smem:[#allocation0]]
  $region117: #{tpu_custom_call.1} parent=0
    _
  %s15 = ssub.s32 1, %s13
  %s16 = scalar_select 0, %s15, %s13
  $region1: #{tpu_custom_call.1} parent=0
    #allocation2 [shape = 'u8[524288]{0}', space=vmem, size = 0x80000, scoped, tag = 'input window, operand 0']
    #allocation3 [shape = 's32[2]{0}', space=sflag, size = 0x8, scoped, tag = 'scoped memory for tpu_custom_call.1']
    #allocation4 [shape = 's32[2]{0}', space=sflag, size = 0x8, scoped, tag = 'scoped memory for tpu_custom_call.1']
    #allocation5 [shape = 'u8[131072]{0}', space=vmem, size = 0x20000, scoped, tag = 'input window, operand 1']
    #allocation6 [shape = 's32[2]{0}', space=sflag, size = 0x8, scoped, tag = 'scoped memory for tpu_custom_call.1']
    #allocation7 [shape = 'u8[131072]{0}', space=vmem, size = 0x20000, scoped, tag = 'input window, operand 2']
    #allocation8 [shape = 'u8[131072]{0}', space=vmem, size = 0x20000, scoped, tag = 'input window, operand 3']
    #allocation9 [shape = 's32[2]{0}', space=sflag, size = 0x8, scoped, tag = 'scoped memory for tpu_custom_call.1']
    #allocation10 [shape = 'u8[262144]{0}', space=vmem, size = 0x40000, scoped, tag = 'input window, operand 4, single buffered']
    #allocation11 [shape = 'u8[32768]{0}', space=vmem, size = 0x8000, scoped, tag = 'input window, operand 5, single buffered']
    #allocation12 [shape = 's32[1]{0}', space=sflag, size = 0x4, scoped, tag = 'scoped memory for tpu_custom_call.1']
    #allocation13 [shape = 'u8[32768]{0}', space=vmem, size = 0x8000, scoped, tag = 'input window, operand 7, single buffered']
    #allocation14 [shape = 'u8[32768]{0}', space=vmem, size = 0x8000, scoped, tag = 'input window, operand 9, single buffered']
    #allocation15 [shape = 's32[1]{0}', space=sflag, size = 0x4, scoped, tag = 'scoped memory for tpu_custom_call.1']
    #allocation16 [shape = 'u8[262144]{0}', space=vmem, size = 0x40000, scoped, tag = 'input window, operand 10, single buffered']
    #allocation17 [shape = 'u8[1048576]{0}', space=vmem, size = 0x100000, scoped, tag = 'output window, operand 0']
    %17 = vsyncpa [#allocation3], 0
    %s18 = scalar_lea.sflag [#allocation3], 1
    %19 = vsyncpa %s18, 0
    %20 = vsyncpa [#allocation6], 0
    %s21 = scalar_lea.sflag [#allocation6], 1
    %22 = vsyncpa %s21, 0
    %23 = vsyncpa [#allocation9], 0
    %s24 = scalar_lea.sflag [#allocation9], 1
    %25 = vsyncpa %s24, 0
    %26 = vsyncpa [#allocation12], 0
    %27 = vsyncpa [#allocation15], 0
    %28 = vsyncpa [#allocation4], 0
    %s29 = scalar_lea.sflag [#allocation4], 1
    %30 = vsyncpa %s29, 0
    loop: start=0, step=1, limit=4
    $region2: #{tpu_custom_call.1} parent=1 // loop_pre_header
      _
    $region3: #{tpu_custom_call.1} parent=1 // loop_header
      %s32 = sphi 0, %s36
      %p33 = scmp.ge.s32.totalorder %s32, 4
      %s42 = sphi 0, %s44
      %s45 = sphi 0, %s42
      %s46 = sphi 0, %s45
      %s62 = sphi 0, %s46
      %s68 = sphi 0, %s70
      %s71 = sphi 0, %s68
      %s72 = sphi 0, %s71
      %s88 = sphi 0, %s72
      %s94 = sphi 0, %s96
      %s97 = sphi 0, %s94
      %s98 = sphi 0, %s97
      %s114 = sphi 0, %s98
      %s120 = sphi 0, %s122
      %s123 = sphi 0, %s120
      %s124 = sphi 0, %s123
      %s140 = sphi 0, %s124
      %s144 = sphi 0, %s144
      %s146 = sphi 0, %s144
      %s147 = sphi 0, %s146
      %s161 = sphi 0, %s147
      %s165 = sphi 0, %s165
      %s167 = sphi 0, %s165
      %s168 = sphi 0, %s167
      %s182 = sphi 0, %s168
      %s186 = sphi 0, %s186
      %s188 = sphi 0, %s186
      %s189 = sphi 0, %s188
      %s203 = sphi 0, %s189
      %s207 = sphi 0, %s207
      %s209 = sphi 0, %s207
      %s210 = sphi 0, %s209
      %s224 = sphi 0, %s210
      %s228 = sphi 0, %s228
      %s230 = sphi 0, %s228
      %s231 = sphi 0, %s230
      %s245 = sphi 0, %s231
      %s249 = sphi 0, %s249
      %s251 = sphi 0, %s249
      %s252 = sphi 0, %s251
      %s266 = sphi 0, %s252
      %s270 = sphi 0, %s270
      %s272 = sphi 0, %s270
      %s273 = sphi 0, %s272
      %s287 = sphi 0, %s273
      %s291 = sphi 0, %s291
      %s293 = sphi 0, %s291
      %s294 = sphi 0, %s293
      %s308 = sphi 0, %s294
      %s314 = sphi 0, %s316
      %s317 = sphi 0, %s314
      %s318 = sphi 0, %s317
      %s334 = sphi 0, %s318
    $region4: #{tpu_custom_call.1} parent=1 // loop_header_branch
      %35 = sbr.rel (%p33) target = $region8
    $region5: #{tpu_custom_call.1} parent=1 // loop_body
      %s37 = ssub.s32 %s32, 1
      %s38 = ssub.s32 %s32, 2
      %s39 = sadd.s32 %s32, 1
      %s40 = ssub.s32 %s32, %s39
      %p41 = scmp.eq.s32.totalorder %s40, 0
      %s43 = sadd.s32 %s42, 1
      %s44 = scalar_select %p41, %s42, %s43
      %p47 = pneg %p41
      %p48 = scmp.eq.s32.totalorder %s32, 1
      %p49 = por %p47, %p48
      %p50 = scmp.ne.s32.totalorder %s42, %s45
      %p51 = scmp.eq.s32.totalorder %s32, 0
      %p52 = por %p50, %p51
      %p53 = scmp.ne.s32.totalorder %s42, %s45
      %p54 = scmp.eq.s32.totalorder %s37, 1
      %p55 = por %p53, %p54
      %p56 = scmp.ne.s32.totalorder %s45, %s46
      %p57 = scmp.eq.s32.totalorder %s37, 0
      %p58 = por %p56, %p57
      %p59 = scmp.ne.s32.totalorder %s45, %s46
      %p60 = scmp.eq.s32.totalorder %s38, 1
      %p61 = por %p59, %p60
      %p63 = scmp.ne.s32.totalorder %s46, %s62
      %p64 = scmp.eq.s32.totalorder %s38, 0
      %p65 = por %p63, %p64
      %s66 = ssub.s32 %s32, %s39
      %p67 = scmp.eq.s32.totalorder %s66, 0
      %s69 = sadd.s32 %s68, 1
      %s70 = scalar_select %p67, %s68, %s69
      %p73 = pneg %p67
      %p74 = scmp.eq.s32.totalorder %s32, 1
      %p75 = por %p73, %p74
      %p76 = scmp.ne.s32.totalorder %s68, %s71
      %p77 = scmp.eq.s32.totalorder %s32, 0
      %p78 = por %p76, %p77
      %p79 = scmp.ne.s32.totalorder %s68, %s71
      %p80 = scmp.eq.s32.totalorder %s37, 1
      %p81 = por %p79, %p80
      %p82 = scmp.ne.s32.totalorder %s71, %s72
      %p83 = scmp.eq.s32.totalorder %s37, 0
      %p84 = por %p82, %p83
      %p85 = scmp.ne.s32.totalorder %s71, %s72
      %p86 = scmp.eq.s32.totalorder %s38, 1
      %p87 = por %p85, %p86
      %p89 = scmp.ne.s32.totalorder %s72, %s88
      %p90 = scmp.eq.s32.totalorder %s38, 0
      %p91 = por %p89, %p90
      %s92 = ssub.s32 %s32, %s39
      %p93 = scmp.eq.s32.totalorder %s92, 0
      %s95 = sadd.s32 %s94, 1
      %s96 = scalar_select %p93, %s94, %s95
      %p99 = pneg %p93
      %p100 = scmp.eq.s32.totalorder %s32, 1
      %p101 = por %p99, %p100
      %p102 = scmp.ne.s32.totalorder %s94, %s97
      %p103 = scmp.eq.s32.totalorder %s32, 0
      %p104 = por %p102, %p103
      %p105 = scmp.ne.s32.totalorder %s94, %s97
      %p106 = scmp.eq.s32.totalorder %s37, 1
      %p107 = por %p105, %p106
      %p108 = scmp.ne.s32.totalorder %s97, %s98
      %p109 = scmp.eq.s32.totalorder %s37, 0
      %p110 = por %p108, %p109
      %p111 = scmp.ne.s32.totalorder %s97, %s98
      %p112 = scmp.eq.s32.totalorder %s38, 1
      %p113 = por %p111, %p112
      %p115 = scmp.ne.s32.totalorder %s98, %s114
      %p116 = scmp.eq.s32.totalorder %s38, 0
      %p117 = por %p115, %p116
      %s118 = ssub.s32 %s32, %s39
      %p119 = scmp.eq.s32.totalorder %s118, 0
      %s121 = sadd.s32 %s120, 1
      %s122 = scalar_select %p119, %s120, %s121
      %p125 = pneg %p119
      %p126 = scmp.eq.s32.totalorder %s32, 1
      %p127 = por %p125, %p126
      %p128 = scmp.ne.s32.totalorder %s120, %s123
      %p129 = scmp.eq.s32.totalorder %s32, 0
      %p130 = por %p128, %p129
      %p131 = scmp.ne.s32.totalorder %s120, %s123
      %p132 = scmp.eq.s32.totalorder %s37, 1
      %p133 = por %p131, %p132
      %p134 = scmp.ne.s32.totalorder %s123, %s124
      %p135 = scmp.eq.s32.totalorder %s37, 0
      %p136 = por %p134, %p135
      %p137 = scmp.ne.s32.totalorder %s123, %s124
      %p138 = scmp.eq.s32.totalorder %s38, 1
      %p139 = por %p137, %p138
      %p141 = scmp.ne.s32.totalorder %s124, %s140
      %p142 = scmp.eq.s32.totalorder %s38, 0
      %p143 = por %p141, %p142
      %s145 = sadd.s32 %s144, 1
      %p148 = scmp.eq.s32.totalorder %s32, 1
      %p149 = scmp.ne.s32.totalorder %s144, %s146
      %p150 = scmp.eq.s32.totalorder %s32, 0
      %p151 = por %p149, %p150
      %p152 = scmp.ne.s32.totalorder %s144, %s146
      %p153 = scmp.eq.s32.totalorder %s37, 1
      %p154 = por %p152, %p153
      %p155 = scmp.ne.s32.totalorder %s146, %s147
      %p156 = scmp.eq.s32.totalorder %s37, 0
      %p157 = por %p155, %p156
      %p158 = scmp.ne.s32.totalorder %s146, %s147
      %p159 = scmp.eq.s32.totalorder %s38, 1
      %p160 = por %p158, %p159
      %p162 = scmp.ne.s32.totalorder %s147, %s161
      %p163 = scmp.eq.s32.totalorder %s38, 0
      %p164 = por %p162, %p163
      %s166 = sadd.s32 %s165, 1
      %p169 = scmp.eq.s32.totalorder %s32, 1
      %p170 = scmp.ne.s32.totalorder %s165, %s167
      %p171 = scmp.eq.s32.totalorder %s32, 0
      %p172 = por %p170, %p171
      %p173 = scmp.ne.s32.totalorder %s165, %s167
      %p174 = scmp.eq.s32.totalorder %s37, 1
      %p175 = por %p173, %p174
      %p176 = scmp.ne.s32.totalorder %s167, %s168
      %p177 = scmp.eq.s32.totalorder %s37, 0
      %p178 = por %p176, %p177
      %p179 = scmp.ne.s32.totalorder %s167, %s168
      %p180 = scmp.eq.s32.totalorder %s38, 1
      %p181 = por %p179, %p180
      %p183 = scmp.ne.s32.totalorder %s168, %s182
      %p184 = scmp.eq.s32.totalorder %s38, 0
      %p185 = por %p183, %p184
      %s187 = sadd.s32 %s186, 1
      %p190 = scmp.eq.s32.totalorder %s32, 1
      %p191 = scmp.ne.s32.totalorder %s186, %s188
      %p192 = scmp.eq.s32.totalorder %s32, 0
      %p193 = por %p191, %p192
      %p194 = scmp.ne.s32.totalorder %s186, %s188
      %p195 = scmp.eq.s32.totalorder %s37, 1
      %p196 = por %p194, %p195
      %p197 = scmp.ne.s32.totalorder %s188, %s189
      %p198 = scmp.eq.s32.totalorder %s37, 0
      %p199 = por %p197, %p198
      %p200 = scmp.ne.s32.totalorder %s188, %s189
      %p201 = scmp.eq.s32.totalorder %s38, 1
      %p202 = por %p200, %p201
      %p204 = scmp.ne.s32.totalorder %s189, %s203
      %p205 = scmp.eq.s32.totalorder %s38, 0
      %p206 = por %p204, %p205
      %s208 = sadd.s32 %s207, 1
      %p211 = scmp.eq.s32.totalorder %s32, 1
      %p212 = scmp.ne.s32.totalorder %s207, %s209
      %p213 = scmp.eq.s32.totalorder %s32, 0
      %p214 = por %p212, %p213
      %p215 = scmp.ne.s32.totalorder %s207, %s209
      %p216 = scmp.eq.s32.totalorder %s37, 1
      %p217 = por %p215, %p216
      %p218 = scmp.ne.s32.totalorder %s209, %s210
      %p219 = scmp.eq.s32.totalorder %s37, 0
      %p220 = por %p218, %p219
      %p221 = scmp.ne.s32.totalorder %s209, %s210
      %p222 = scmp.eq.s32.totalorder %s38, 1
      %p223 = por %p221, %p222
      %p225 = scmp.ne.s32.totalorder %s210, %s224
      %p226 = scmp.eq.s32.totalorder %s38, 0
      %p227 = por %p225, %p226
      %s229 = sadd.s32 %s228, 1
      %p232 = scmp.eq.s32.totalorder %s32, 1
      %p233 = scmp.ne.s32.totalorder %s228, %s230
      %p234 = scmp.eq.s32.totalorder %s32, 0
      %p235 = por %p233, %p234
      %p236 = scmp.ne.s32.totalorder %s228, %s230
      %p237 = scmp.eq.s32.totalorder %s37, 1
      %p238 = por %p236, %p237
      %p239 = scmp.ne.s32.totalorder %s230, %s231
      %p240 = scmp.eq.s32.totalorder %s37, 0
      %p241 = por %p239, %p240
      %p242 = scmp.ne.s32.totalorder %s230, %s231
      %p243 = scmp.eq.s32.totalorder %s38, 1
      %p244 = por %p242, %p243
      %p246 = scmp.ne.s32.totalorder %s231, %s245
      %p247 = scmp.eq.s32.totalorder %s38, 0
      %p248 = por %p246, %p247
      %s250 = sadd.s32 %s249, 1
      %p253 = scmp.eq.s32.totalorder %s32, 1
      %p254 = scmp.ne.s32.totalorder %s249, %s251
      %p255 = scmp.eq.s32.totalorder %s32, 0
      %p256 = por %p254, %p255
      %p257 = scmp.ne.s32.totalorder %s249, %s251
      %p258 = scmp.eq.s32.totalorder %s37, 1
      %p259 = por %p257, %p258
      %p260 = scmp.ne.s32.totalorder %s251, %s252
      %p261 = scmp.eq.s32.totalorder %s37, 0
      %p262 = por %p260, %p261
      %p263 = scmp.ne.s32.totalorder %s251, %s252
      %p264 = scmp.eq.s32.totalorder %s38, 1
      %p265 = por %p263, %p264
      %p267 = scmp.ne.s32.totalorder %s252, %s266
      %p268 = scmp.eq.s32.totalorder %s38, 0
      %p269 = por %p267, %p268
      %s271 = sadd.s32 %s270, 1
      %p274 = scmp.eq.s32.totalorder %s32, 1
      %p275 = scmp.ne.s32.totalorder %s270, %s272
      %p276 = scmp.eq.s32.totalorder %s32, 0
      %p277 = por %p275, %p276
      %p278 = scmp.ne.s32.totalorder %s270, %s272
      %p279 = scmp.eq.s32.totalorder %s37, 1
      %p280 = por %p278, %p279
      %p281 = scmp.ne.s32.totalorder %s272, %s273
      %p282 = scmp.eq.s32.totalorder %s37, 0
      %p283 = por %p281, %p282
      %p284 = scmp.ne.s32.totalorder %s272, %s273
      %p285 = scmp.eq.s32.totalorder %s38, 1
      %p286 = por %p284, %p285
      %p288 = scmp.ne.s32.totalorder %s273, %s287
      %p289 = scmp.eq.s32.totalorder %s38, 0
      %p290 = por %p288, %p289
      %s292 = sadd.s32 %s291, 1
      %p295 = scmp.eq.s32.totalorder %s32, 1
      %p296 = scmp.ne.s32.totalorder %s291, %s293
      %p297 = scmp.eq.s32.totalorder %s32, 0
      %p298 = por %p296, %p297
      %p299 = scmp.ne.s32.totalorder %s291, %s293
      %p300 = scmp.eq.s32.totalorder %s37, 1
      %p301 = por %p299, %p300
      %p302 = scmp.ne.s32.totalorder %s293, %s294
      %p303 = scmp.eq.s32.totalorder %s37, 0
      %p304 = por %p302, %p303
      %p305 = scmp.ne.s32.totalorder %s293, %s294
      %p306 = scmp.eq.s32.totalorder %s38, 1
      %p307 = por %p305, %p306
      %p309 = scmp.ne.s32.totalorder %s294, %s308
      %p310 = scmp.eq.s32.totalorder %s38, 0
      %p311 = por %p309, %p310
      %s312 = ssub.s32 %s32, %s39
      %p313 = scmp.eq.s32.totalorder %s312, 0
      %s315 = sadd.s32 %s314, 1
      %s316 = scalar_select %p313, %s314, %s315
      %p319 = pneg %p313
      %p320 = scmp.eq.s32.totalorder %s32, 1
      %p321 = por %p319, %p320
      %p322 = scmp.ne.s32.totalorder %s314, %s317
      %p323 = scmp.eq.s32.totalorder %s32, 0
      %p324 = por %p322, %p323
      %p325 = scmp.ne.s32.totalorder %s314, %s317
      %p326 = scmp.eq.s32.totalorder %s37, 1
      %p327 = por %p325, %p326
      %p328 = scmp.ne.s32.totalorder %s317, %s318
      %p329 = scmp.eq.s32.totalorder %s37, 0
      %p330 = por %p328, %p329
      %p331 = scmp.ne.s32.totalorder %s317, %s318
      %p332 = scmp.eq.s32.totalorder %s38, 1
      %p333 = por %p331, %p332
      %p335 = scmp.ne.s32.totalorder %s318, %s334
      %p336 = scmp.eq.s32.totalorder %s38, 0
      %p337 = por %p335, %p336
      %p338 = scmp.le.s32.totalorder 1, %s32
      %p339 = scmp.lt.s32.totalorder %s32, 3
      %p340 = pnand %p338, %p339
      %p341 = pneg %p340
      // Predicated region
      $region9: #{tpu_custom_call.1} parent=5 // pred_check
        _
      $region10: #{tpu_custom_call.1} parent=5 // pred_check_branch
        %343 = sbr.rel (%p340) target = $region12
      $region11: #{tpu_custom_call.1} parent=5 // pred_region
        %s344 = ssub.s32 %s32, 1
        // Predicated region
        $region13: #{tpu_custom_call.1} parent=11 // pred_check
          %p345 = pneg %p157
        $region14: #{tpu_custom_call.1} parent=11 // pred_check_branch
          %347 = sbr.rel (%p345) target = $region16
        $region15: #{tpu_custom_call.1} parent=11 // pred_region
          %s349 = ssub.s32 8192, 8192
          %350 = vsyncadd [#allocation9], %s349
          %s351 = sshll.u32 [#allocation10], 4
          %s352 = int_to_ptr.vmem [resolvable:$true] %s351
          %357 = dma.hbm_to_vmem [thread:$0]  %s4, 8192, %s352, [#allocation9], 64, 64, 4
        $region16: #{tpu_custom_call.1} parent=11 // pred_fallthru
          _
        // Predicated region
        $region17: #{tpu_custom_call.1} parent=11 // pred_check
          %p358 = pneg %p178
        $region18: #{tpu_custom_call.1} parent=11 // pred_check_branch
          %360 = sbr.rel (%p358) target = $region20
        $region19: #{tpu_custom_call.1} parent=11 // pred_region
          %s362 = ssub.s32 1024, 1024
          %363 = vsyncadd [#allocation12], %s362
          %s364 = sshll.u32 [#allocation11], 4
          %s365 = int_to_ptr.vmem [resolvable:$true] %s364
          %370 = dma.hbm_to_vmem [thread:$0]  %s5, 1024, %s365, [#allocation12], 64, 64, 4
        $region20: #{tpu_custom_call.1} parent=11 // pred_fallthru
          _
        // Predicated region
        $region21: #{tpu_custom_call.1} parent=11 // pred_check
          %p371 = pneg %p199
        $region22: #{tpu_custom_call.1} parent=11 // pred_check_branch
          %373 = sbr.rel (%p371) target = $region24
        $region23: #{tpu_custom_call.1} parent=11 // pred_region
          _
        $region24: #{tpu_custom_call.1} parent=11 // pred_fallthru
          _
        // Predicated region
        $region25: #{tpu_custom_call.1} parent=11 // pred_check
          %p374 = pneg %p220
        $region26: #{tpu_custom_call.1} parent=11 // pred_check_branch
          %376 = sbr.rel (%p374) target = $region28
        $region27: #{tpu_custom_call.1} parent=11 // pred_region
          %s378 = ssub.s32 1024, 1024
          %379 = vsyncadd [#allocation12], %s378
          %s380 = sshll.u32 [#allocation13], 4
          %s381 = int_to_ptr.vmem [resolvable:$true] %s380
          %386 = dma.hbm_to_vmem [thread:$0]  %s7, 1024, %s381, [#allocation12], 64, 64, 4
        $region28: #{tpu_custom_call.1} parent=11 // pred_fallthru
          _
        // Predicated region
        $region29: #{tpu_custom_call.1} parent=11 // pred_check
          %p387 = pneg %p241
        $region30: #{tpu_custom_call.1} parent=11 // pred_check_branch
          %389 = sbr.rel (%p387) target = $region32
        $region31: #{tpu_custom_call.1} parent=11 // pred_region
          _
        $region32: #{tpu_custom_call.1} parent=11 // pred_fallthru
          _
        // Predicated region
        $region33: #{tpu_custom_call.1} parent=11 // pred_check
          %p390 = pneg %p262
        $region34: #{tpu_custom_call.1} parent=11 // pred_check_branch
          %392 = sbr.rel (%p390) target = $region36
        $region35: #{tpu_custom_call.1} parent=11 // pred_region
          %s394 = ssub.s32 1024, 1024
          %395 = vsyncadd [#allocation15], %s394
          %s396 = sshll.u32 [#allocation14], 4
          %s397 = int_to_ptr.vmem [resolvable:$true] %s396
          %402 = dma.hbm_to_vmem [thread:$0]  %s9, 1024, %s397, [#allocation15], 64, 64, 4
        $region36: #{tpu_custom_call.1} parent=11 // pred_fallthru
          _
        // Predicated region
        $region37: #{tpu_custom_call.1} parent=11 // pred_check
          %p403 = pneg %p283
        $region38: #{tpu_custom_call.1} parent=11 // pred_check_branch
          %405 = sbr.rel (%p403) target = $region40
        $region39: #{tpu_custom_call.1} parent=11 // pred_region
          %s407 = ssub.s32 8192, 8192
          %408 = vsyncadd [#allocation15], %s407
          %s409 = sshll.u32 [#allocation16], 4
          %s410 = int_to_ptr.vmem [resolvable:$true] %s409
          %415 = dma.hbm_to_vmem [thread:$0]  %s10, 8192, %s410, [#allocation15], 512, 512, 32
        $region40: #{tpu_custom_call.1} parent=11 // pred_fallthru
          _
        // Predicated region
        $region41: #{tpu_custom_call.1} parent=11 // pred_check
          %p416 = pneg %p304
        $region42: #{tpu_custom_call.1} parent=11 // pred_check_branch
          %418 = sbr.rel (%p416) target = $region44
        $region43: #{tpu_custom_call.1} parent=11 // pred_region
          _
        $region44: #{tpu_custom_call.1} parent=11 // pred_fallthru
          _
      $region12: #{tpu_custom_call.1} parent=5 // pred_fallthru
        _
      %p419 = scmp.lt.s32.totalorder %s32, 2
      // Predicated region
      $region45: #{tpu_custom_call.1} parent=5 // pred_check
        %p420 = pneg %p419
      $region46: #{tpu_custom_call.1} parent=5 // pred_check_branch
        %422 = sbr.rel (%p420) target = $region48
      $region47: #{tpu_custom_call.1} parent=5 // pred_region
        // Predicated region
        $region49: #{tpu_custom_call.1} parent=47 // pred_check
          %p423 = pneg %p52
        $region50: #{tpu_custom_call.1} parent=47 // pred_check_branch
          %425 = sbr.rel (%p423) target = $region52
        $region51: #{tpu_custom_call.1} parent=47 // pred_region
          %s426 = sand.u32 %s42, 1
          %s427 = scalar_lea.sflag [#allocation3], %s426
          %s428 = sand.u32 %s42, 1
          %s429 = smul.addr %s428, 512
          %s430 = scalar_lea.vmem [#allocation2], %s429
          %s431 = smul.u32 16, %s32
          %s433 = ssub.s32 8192, 8192
          %434 = vsyncadd %s427, %s433
          %s435 = smul.addr %s431, 8
          %s436 = smul.addr %s435, 64
          %s437 = scalar_lea.hbm %s0, %s436
          %s438 = sshll.u32 %s430, 4
          %s439 = int_to_ptr.vmem [resolvable:$true] %s438
          %444 = dma.hbm_to_vmem [thread:$0]  %s437, 8192, %s439, %s427, 512, 512, 32
        $region52: #{tpu_custom_call.1} parent=47 // pred_fallthru
          _
        // Predicated region
        $region53: #{tpu_custom_call.1} parent=47 // pred_check
          %p445 = pneg %p78
        $region54: #{tpu_custom_call.1} parent=47 // pred_check_branch
          %447 = sbr.rel (%p445) target = $region56
        $region55: #{tpu_custom_call.1} parent=47 // pred_region
          %s448 = sand.u32 %s32, 1
          %s449 = scalar_lea.sflag [#allocation6], %s448
          %s450 = sand.u32 %s68, 1
          %s451 = smul.addr %s450, 128
          %s452 = scalar_lea.vmem [#allocation5], %s451
          %s453 = smul.u32 16, %s32
          %s455 = ssub.s32 2048, 2048
          %456 = vsyncadd %s449, %s455
          %s457 = smul.addr %s453, 128
          %s458 = scalar_lea.hbm %s1, %s457
          %s459 = sshll.u32 %s452, 4
          %s460 = int_to_ptr.vmem [resolvable:$true] %s459
          %465 = dma.hbm_to_vmem [thread:$0]  %s458, 2048, %s460, %s449, 128, 128, 8
        $region56: #{tpu_custom_call.1} parent=47 // pred_fallthru
          _
        // Predicated region
        $region57: #{tpu_custom_call.1} parent=47 // pred_check
          %p466 = pneg %p104
        $region58: #{tpu_custom_call.1} parent=47 // pred_check_branch
          %468 = sbr.rel (%p466) target = $region60
        $region59: #{tpu_custom_call.1} parent=47 // pred_region
          %s469 = sand.u32 %s32, 1
          %s470 = scalar_lea.sflag [#allocation6], %s469
          %s471 = sand.u32 %s94, 1
          %s472 = smul.addr %s471, 128
          %s473 = scalar_lea.vmem [#allocation7], %s472
          %s474 = smul.u32 16, %s32
          %s476 = ssub.s32 2048, 2048
          %477 = vsyncadd %s470, %s476
          %s478 = smul.addr %s474, 128
          %s479 = scalar_lea.hbm %s2, %s478
          %s480 = sshll.u32 %s473, 4
          %s481 = int_to_ptr.vmem [resolvable:$true] %s480
          %486 = dma.hbm_to_vmem [thread:$0]  %s479, 2048, %s481, %s470, 128, 128, 8
        $region60: #{tpu_custom_call.1} parent=47 // pred_fallthru
          _
        // Predicated region
        $region61: #{tpu_custom_call.1} parent=47 // pred_check
          %p487 = pneg %p130
        $region62: #{tpu_custom_call.1} parent=47 // pred_check_branch
          %489 = sbr.rel (%p487) target = $region64
        $region63: #{tpu_custom_call.1} parent=47 // pred_region
          %s490 = sand.u32 %s32, 1
          %s491 = scalar_lea.sflag [#allocation9], %s490
          %s492 = sand.u32 %s120, 1
          %s493 = smul.addr %s492, 128
          %s494 = scalar_lea.vmem [#allocation8], %s493
          %s495 = smul.u32 16, %s32
          %s497 = ssub.s32 2048, 2048
          %498 = vsyncadd %s491, %s497
          %s499 = smul.addr %s495, 128
          %s500 = scalar_lea.hbm %s3, %s499
          %s501 = sshll.u32 %s494, 4
          %s502 = int_to_ptr.vmem [resolvable:$true] %s501
          %507 = dma.hbm_to_vmem [thread:$0]  %s500, 2048, %s502, %s491, 128, 128, 8
        $region64: #{tpu_custom_call.1} parent=47 // pred_fallthru
          _
      $region48: #{tpu_custom_call.1} parent=5 // pred_fallthru
        _
      %p508 = scmp.le.s32.totalorder 1, %s32
      %p509 = scmp.lt.s32.totalorder %s32, 3
      %p510 = pnand %p508, %p509
      %p511 = pneg %p510
      // Predicated region
      $region65: #{tpu_custom_call.1} parent=5 // pred_check
        _
      $region66: #{tpu_custom_call.1} parent=5 // pred_check_branch
        %513 = sbr.rel (%p510) target = $region68
      $region67: #{tpu_custom_call.1} parent=5 // pred_region
        %s514 = ssub.s32 %s32, 1
        %s515 = sand.u32 %s45, 1
        %s516 = scalar_lea.sflag [#allocation3], %s515
        %s517 = sand.u32 %s45, 1
        %s518 = smul.addr %s517, 512
        %s519 = scalar_lea.vmem [#allocation2], %s518
        // Predicated region
        $region69: #{tpu_custom_call.1} parent=67 // pred_check
          %p520 = pneg %p58
        $region70: #{tpu_custom_call.1} parent=67 // pred_check_branch
          %522 = sbr.rel (%p520) target = $region72
        $region71: #{tpu_custom_call.1} parent=67 // pred_region
          %523 = dma.done %s516, 8192
        $region72: #{tpu_custom_call.1} parent=67 // pred_fallthru
          _
        %s524 = sand.u32 %s37, 1
        %s525 = scalar_lea.sflag [#allocation6], %s524
        %s526 = sand.u32 %s71, 1
        %s527 = smul.addr %s526, 128
        %s528 = scalar_lea.vmem [#allocation5], %s527
        // Predicated region
        $region73: #{tpu_custom_call.1} parent=67 // pred_check
          %p529 = pneg %p84
        $region74: #{tpu_custom_call.1} parent=67 // pred_check_branch
          %531 = sbr.rel (%p529) target = $region76
        $region75: #{tpu_custom_call.1} parent=67 // pred_region
          %532 = dma.done %s525, 2048
        $region76: #{tpu_custom_call.1} parent=67 // pred_fallthru
          _
        %s533 = sand.u32 %s37, 1
        %s534 = scalar_lea.sflag [#allocation6], %s533
        %s535 = sand.u32 %s97, 1
        %s536 = smul.addr %s535, 128
        %s537 = scalar_lea.vmem [#allocation7], %s536
        // Predicated region
        $region77: #{tpu_custom_call.1} parent=67 // pred_check
          %p538 = pneg %p110
        $region78: #{tpu_custom_call.1} parent=67 // pred_check_branch
          %540 = sbr.rel (%p538) target = $region80
        $region79: #{tpu_custom_call.1} parent=67 // pred_region
          %541 = dma.done %s534, 2048
        $region80: #{tpu_custom_call.1} parent=67 // pred_fallthru
          _
        %s542 = sand.u32 %s37, 1
        %s543 = scalar_lea.sflag [#allocation9], %s542
        %s544 = sand.u32 %s123, 1
        %s545 = smul.addr %s544, 128
        %s546 = scalar_lea.vmem [#allocation8], %s545
        // Predicated region
        $region81: #{tpu_custom_call.1} parent=67 // pred_check
          %p547 = pneg %p136
        $region82: #{tpu_custom_call.1} parent=67 // pred_check_branch
          %549 = sbr.rel (%p547) target = $region84
        $region83: #{tpu_custom_call.1} parent=67 // pred_region
          %550 = dma.done %s543, 2048
        $region84: #{tpu_custom_call.1} parent=67 // pred_fallthru
          _
        // Predicated region
        $region85: #{tpu_custom_call.1} parent=67 // pred_check
          %p551 = pneg %p157
        $region86: #{tpu_custom_call.1} parent=67 // pred_check_branch
          %553 = sbr.rel (%p551) target = $region88
        $region87: #{tpu_custom_call.1} parent=67 // pred_region
          %554 = dma.done [#allocation9], 8192
        $region88: #{tpu_custom_call.1} parent=67 // pred_fallthru
          _
        // Predicated region
        $region89: #{tpu_custom_call.1} parent=67 // pred_check
          %p555 = pneg %p178
        $region90: #{tpu_custom_call.1} parent=67 // pred_check_branch
          %557 = sbr.rel (%p555) target = $region92
        $region91: #{tpu_custom_call.1} parent=67 // pred_region
          %558 = dma.done [#allocation12], 1024
        $region92: #{tpu_custom_call.1} parent=67 // pred_fallthru
          _
        // Predicated region
        $region93: #{tpu_custom_call.1} parent=67 // pred_check
          %p559 = pneg %p220
        $region94: #{tpu_custom_call.1} parent=67 // pred_check_branch
          %561 = sbr.rel (%p559) target = $region96
        $region95: #{tpu_custom_call.1} parent=67 // pred_region
          %562 = dma.done [#allocation12], 1024
        $region96: #{tpu_custom_call.1} parent=67 // pred_fallthru
          _
        // Predicated region
        $region97: #{tpu_custom_call.1} parent=67 // pred_check
          %p563 = pneg %p262
        $region98: #{tpu_custom_call.1} parent=67 // pred_check_branch
          %565 = sbr.rel (%p563) target = $region100
        $region99: #{tpu_custom_call.1} parent=67 // pred_region
          %566 = dma.done [#allocation15], 1024
        $region100: #{tpu_custom_call.1} parent=67 // pred_fallthru
          _
        // Predicated region
        $region101: #{tpu_custom_call.1} parent=67 // pred_check
          %p567 = pneg %p283
        $region102: #{tpu_custom_call.1} parent=67 // pred_check_branch
          %569 = sbr.rel (%p567) target = $region104
        $region103: #{tpu_custom_call.1} parent=67 // pred_region
          %570 = dma.done [#allocation15], 8192
        $region104: #{tpu_custom_call.1} parent=67 // pred_fallthru
          _
        %s571 = sand.u32 %s45, 1
        %s572 = scalar_lea.sflag [#allocation3], %s571
        %s573 = sand.u32 %s45, 1
        %s574 = smul.addr %s573, 512
        %s575 = scalar_lea.vmem [#allocation2], %s574
        %p576 = pneg %p58
        %p577 = pneg %p55
        %s578 = sand.u32 %s37, 1
        %s579 = scalar_lea.sflag [#allocation6], %s578
        %s580 = sand.u32 %s71, 1
        %s581 = smul.addr %s580, 128
        %s582 = scalar_lea.vmem [#allocation5], %s581
        %p583 = pneg %p84
        %p584 = pneg %p81
        %s585 = sand.u32 %s37, 1
        %s586 = scalar_lea.sflag [#allocation6], %s585
        %s587 = sand.u32 %s97, 1
        %s588 = smul.addr %s587, 128
        %s589 = scalar_lea.vmem [#allocation7], %s588
        %p590 = pneg %p110
        %p591 = pneg %p107
        %s592 = sand.u32 %s37, 1
        %s593 = scalar_lea.sflag [#allocation9], %s592
        %s594 = sand.u32 %s123, 1
        %s595 = smul.addr %s594, 128
        %s596 = scalar_lea.vmem [#allocation8], %s595
        %p597 = pneg %p136
        %p598 = pneg %p133
        %p599 = pneg %p157
        %p600 = pneg %p154
        %p601 = pneg %p178
        %p602 = pneg %p175
        %p603 = pneg %p199
        %p604 = pneg %p196
        %p605 = pneg %p220
        %p606 = pneg %p217
        %p607 = pneg %p241
        %p608 = pneg %p238
        %p609 = pneg %p262
        %p610 = pneg %p259
        %p611 = pneg %p283
        %p612 = pneg %p280
        %p613 = pneg %p304
        %p614 = pneg %p301
        %p615 = pneg %p330
        %p616 = pneg %p327
        %s617 = sand.u32 %s317, 1
        %s618 = scalar_lea.sflag [#allocation4], %s617
        %s619 = sand.u32 %s317, 1
        %s620 = smul.addr %s619, 1024
        %s621 = scalar_lea.vmem [#allocation17], %s620
        %s622 = smul.u32 16, %s37
        %s623 = smul.u32 16, %s37
        %s624 = smul.u32 16, %s37
        %s625 = smul.u32 16, %s37
        %s626 = smul.u32 16, %s37
        %v628 = vld [vmem:[%s519] sm:$0xff]
        %v629 = vld [vmem:[%s519 + $0x8] sm:$0xff]
        %v630 = vld [vmem:[%s519 + $0x10] sm:$0xff]
        %v631 = vld [vmem:[%s519 + $0x18] sm:$0xff]
        %v632 = vld [vmem:[%s519 + $0x20] sm:$0xff]
        %v633 = vld [vmem:[%s519 + $0x28] sm:$0xff]
        %v634 = vld [vmem:[%s519 + $0x30] sm:$0xff]
        %v635 = vld [vmem:[%s519 + $0x38] sm:$0xff]
        %v636 = vld [vmem:[%s519 + $0x40] sm:$0xff]
        %v637 = vld [vmem:[%s519 + $0x48] sm:$0xff]
        %v638 = vld [vmem:[%s519 + $0x50] sm:$0xff]
        %v639 = vld [vmem:[%s519 + $0x58] sm:$0xff]
        %v640 = vld [vmem:[%s519 + $0x60] sm:$0xff]
        %v641 = vld [vmem:[%s519 + $0x68] sm:$0xff]
        %v642 = vld [vmem:[%s519 + $0x70] sm:$0xff]
        %v643 = vld [vmem:[%s519 + $0x78] sm:$0xff]
        %v644 = vld [vmem:[%s519 + $0x80] sm:$0xff]
        %v645 = vld [vmem:[%s519 + $0x88] sm:$0xff]
        %v646 = vld [vmem:[%s519 + $0x90] sm:$0xff]
        %v647 = vld [vmem:[%s519 + $0x98] sm:$0xff]
        %v648 = vld [vmem:[%s519 + $0xa0] sm:$0xff]
        %v649 = vld [vmem:[%s519 + $0xa8] sm:$0xff]
        %v650 = vld [vmem:[%s519 + $0xb0] sm:$0xff]
        %v651 = vld [vmem:[%s519 + $0xb8] sm:$0xff]
        %v652 = vld [vmem:[%s519 + $0xc0] sm:$0xff]
        %v653 = vld [vmem:[%s519 + $0xc8] sm:$0xff]
        %v654 = vld [vmem:[%s519 + $0xd0] sm:$0xff]
        %v655 = vld [vmem:[%s519 + $0xd8] sm:$0xff]
        %v656 = vld [vmem:[%s519 + $0xe0] sm:$0xff]
        %v657 = vld [vmem:[%s519 + $0xe8] sm:$0xff]
        %v658 = vld [vmem:[%s519 + $0xf0] sm:$0xff]
        %v659 = vld [vmem:[%s519 + $0xf8] sm:$0xff]
        %v660 = vld [vmem:[%s519 + $0x100] sm:$0xff]
        %v661 = vld [vmem:[%s519 + $0x108] sm:$0xff]
        %v662 = vld [vmem:[%s519 + $0x110] sm:$0xff]
        %v663 = vld [vmem:[%s519 + $0x118] sm:$0xff]
        %v664 = vld [vmem:[%s519 + $0x120] sm:$0xff]
        %v665 = vld [vmem:[%s519 + $0x128] sm:$0xff]
        %v666 = vld [vmem:[%s519 + $0x130] sm:$0xff]
        %v667 = vld [vmem:[%s519 + $0x138] sm:$0xff]
        %v668 = vld [vmem:[%s519 + $0x140] sm:$0xff]
        %v669 = vld [vmem:[%s519 + $0x148] sm:$0xff]
        %v670 = vld [vmem:[%s519 + $0x150] sm:$0xff]
        %v671 = vld [vmem:[%s519 + $0x158] sm:$0xff]
        %v672 = vld [vmem:[%s519 + $0x160] sm:$0xff]
        %v673 = vld [vmem:[%s519 + $0x168] sm:$0xff]
        %v674 = vld [vmem:[%s519 + $0x170] sm:$0xff]
        %v675 = vld [vmem:[%s519 + $0x178] sm:$0xff]
        %v676 = vld [vmem:[%s519 + $0x180] sm:$0xff]
        %v677 = vld [vmem:[%s519 + $0x188] sm:$0xff]
        %v678 = vld [vmem:[%s519 + $0x190] sm:$0xff]
        %v679 = vld [vmem:[%s519 + $0x198] sm:$0xff]
        %v680 = vld [vmem:[%s519 + $0x1a0] sm:$0xff]
        %v681 = vld [vmem:[%s519 + $0x1a8] sm:$0xff]
        %v682 = vld [vmem:[%s519 + $0x1b0] sm:$0xff]
        %v683 = vld [vmem:[%s519 + $0x1b8] sm:$0xff]
        %v684 = vld [vmem:[%s519 + $0x1c0] sm:$0xff]
        %v685 = vld [vmem:[%s519 + $0x1c8] sm:$0xff]
        %v686 = vld [vmem:[%s519 + $0x1d0] sm:$0xff]
        %v687 = vld [vmem:[%s519 + $0x1d8] sm:$0xff]
        %v688 = vld [vmem:[%s519 + $0x1e0] sm:$0xff]
        %v689 = vld [vmem:[%s519 + $0x1e8] sm:$0xff]
        %v690 = vld [vmem:[%s519 + $0x1f0] sm:$0xff]
        %v691 = vld [vmem:[%s519 + $0x1f8] sm:$0xff]
        %v692 = vld [vmem:[#allocation10] sm:$0xf]
        %v693 = vld [vmem:[#allocation10 + $0x4] sm:$0xf]
        %v694 = vld [vmem:[#allocation10 + $0x8] sm:$0xf]
        %v695 = vld [vmem:[#allocation10 + $0xc] sm:$0xf]
        %v696 = vld [vmem:[#allocation10 + $0x10] sm:$0xf]
        %v697 = vld [vmem:[#allocation10 + $0x14] sm:$0xf]
        %v698 = vld [vmem:[#allocation10 + $0x18] sm:$0xf]
        %v699 = vld [vmem:[#allocation10 + $0x1c] sm:$0xf]
        %v700 = vld [vmem:[#allocation10 + $0x20] sm:$0xf]
        %v701 = vld [vmem:[#allocation10 + $0x24] sm:$0xf]
        %v702 = vld [vmem:[#allocation10 + $0x28] sm:$0xf]
        %v703 = vld [vmem:[#allocation10 + $0x2c] sm:$0xf]
        %v704 = vld [vmem:[#allocation10 + $0x30] sm:$0xf]
        %v705 = vld [vmem:[#allocation10 + $0x34] sm:$0xf]
        %v706 = vld [vmem:[#allocation10 + $0x38] sm:$0xf]
        %v707 = vld [vmem:[#allocation10 + $0x3c] sm:$0xf]
        %v708 = vld [vmem:[#allocation10 + $0x40] sm:$0xf]
        %v709 = vld [vmem:[#allocation10 + $0x44] sm:$0xf]
        %v710 = vld [vmem:[#allocation10 + $0x48] sm:$0xf]
        %v711 = vld [vmem:[#allocation10 + $0x4c] sm:$0xf]
        %v712 = vld [vmem:[#allocation10 + $0x50] sm:$0xf]
        %v713 = vld [vmem:[#allocation10 + $0x54] sm:$0xf]
        %v714 = vld [vmem:[#allocation10 + $0x58] sm:$0xf]
        %v715 = vld [vmem:[#allocation10 + $0x5c] sm:$0xf]
        %v716 = vld [vmem:[#allocation10 + $0x60] sm:$0xf]
        %v717 = vld [vmem:[#allocation10 + $0x64] sm:$0xf]
        %v718 = vld [vmem:[#allocation10 + $0x68] sm:$0xf]
        %v719 = vld [vmem:[#allocation10 + $0x6c] sm:$0xf]
        %v720 = vld [vmem:[#allocation10 + $0x70] sm:$0xf]
        %v721 = vld [vmem:[#allocation10 + $0x74] sm:$0xf]
        %v722 = vld [vmem:[#allocation10 + $0x78] sm:$0xf]
        %v723 = vld [vmem:[#allocation10 + $0x7c] sm:$0xf]
        %v724 = vld [vmem:[#allocation10 + $0x80] sm:$0xf]
        %v725 = vld [vmem:[#allocation10 + $0x84] sm:$0xf]
        %v726 = vld [vmem:[#allocation10 + $0x88] sm:$0xf]
        %v727 = vld [vmem:[#allocation10 + $0x8c] sm:$0xf]
        %v728 = vld [vmem:[#allocation10 + $0x90] sm:$0xf]
        %v729 = vld [vmem:[#allocation10 + $0x94] sm:$0xf]
        %v730 = vld [vmem:[#allocation10 + $0x98] sm:$0xf]
        %v731 = vld [vmem:[#allocation10 + $0x9c] sm:$0xf]
        %v732 = vld [vmem:[#allocation10 + $0xa0] sm:$0xf]
        %v733 = vld [vmem:[#allocation10 + $0xa4] sm:$0xf]
        %v734 = vld [vmem:[#allocation10 + $0xa8] sm:$0xf]
        %v735 = vld [vmem:[#allocation10 + $0xac] sm:$0xf]
        %v736 = vld [vmem:[#allocation10 + $0xb0] sm:$0xf]
        %v737 = vld [vmem:[#allocation10 + $0xb4] sm:$0xf]
        %v738 = vld [vmem:[#allocation10 + $0xb8] sm:$0xf]
        %v739 = vld [vmem:[#allocation10 + $0xbc] sm:$0xf]
        %v740 = vld [vmem:[#allocation10 + $0xc0] sm:$0xf]
        %v741 = vld [vmem:[#allocation10 + $0xc4] sm:$0xf]
        %v742 = vld [vmem:[#allocation10 + $0xc8] sm:$0xf]
        %v743 = vld [vmem:[#allocation10 + $0xcc] sm:$0xf]
        %v744 = vld [vmem:[#allocation10 + $0xd0] sm:$0xf]
        %v745 = vld [vmem:[#allocation10 + $0xd4] sm:$0xf]
        %v746 = vld [vmem:[#allocation10 + $0xd8] sm:$0xf]
        %v747 = vld [vmem:[#allocation10 + $0xdc] sm:$0xf]
        %v748 = vld [vmem:[#allocation10 + $0xe0] sm:$0xf]
        %v749 = vld [vmem:[#allocation10 + $0xe4] sm:$0xf]
        %v750 = vld [vmem:[#allocation10 + $0xe8] sm:$0xf]
        %v751 = vld [vmem:[#allocation10 + $0xec] sm:$0xf]
        %v752 = vld [vmem:[#allocation10 + $0xf0] sm:$0xf]
        %v753 = vld [vmem:[#allocation10 + $0xf4] sm:$0xf]
        %v754 = vld [vmem:[#allocation10 + $0xf8] sm:$0xf]
        %v755 = vld [vmem:[#allocation10 + $0xfc] sm:$0xf]
        %v756 = vld [vmem:[#allocation10 + $0x100] sm:$0xf]
        %v757 = vld [vmem:[#allocation10 + $0x104] sm:$0xf]
        %v758 = vld [vmem:[#allocation10 + $0x108] sm:$0xf]
        %v759 = vld [vmem:[#allocation10 + $0x10c] sm:$0xf]
        %v760 = vld [vmem:[#allocation10 + $0x110] sm:$0xf]
        %v761 = vld [vmem:[#allocation10 + $0x114] sm:$0xf]
        %v762 = vld [vmem:[#allocation10 + $0x118] sm:$0xf]
        %v763 = vld [vmem:[#allocation10 + $0x11c] sm:$0xf]
        %v764 = vld [vmem:[#allocation10 + $0x120] sm:$0xf]
        %v765 = vld [vmem:[#allocation10 + $0x124] sm:$0xf]
        %v766 = vld [vmem:[#allocation10 + $0x128] sm:$0xf]
        %v767 = vld [vmem:[#allocation10 + $0x12c] sm:$0xf]
        %v768 = vld [vmem:[#allocation10 + $0x130] sm:$0xf]
        %v769 = vld [vmem:[#allocation10 + $0x134] sm:$0xf]
        %v770 = vld [vmem:[#allocation10 + $0x138] sm:$0xf]
        %v771 = vld [vmem:[#allocation10 + $0x13c] sm:$0xf]
        %v772 = vld [vmem:[#allocation10 + $0x140] sm:$0xf]
        %v773 = vld [vmem:[#allocation10 + $0x144] sm:$0xf]
        %v774 = vld [vmem:[#allocation10 + $0x148] sm:$0xf]
        %v775 = vld [vmem:[#allocation10 + $0x14c] sm:$0xf]
        %v776 = vld [vmem:[#allocation10 + $0x150] sm:$0xf]
        %v777 = vld [vmem:[#allocation10 + $0x154] sm:$0xf]
        %v778 = vld [vmem:[#allocation10 + $0x158] sm:$0xf]
        %v779 = vld [vmem:[#allocation10 + $0x15c] sm:$0xf]
        %v780 = vld [vmem:[#allocation10 + $0x160] sm:$0xf]
        %v781 = vld [vmem:[#allocation10 + $0x164] sm:$0xf]
        %v782 = vld [vmem:[#allocation10 + $0x168] sm:$0xf]
        %v783 = vld [vmem:[#allocation10 + $0x16c] sm:$0xf]
        %v784 = vld [vmem:[#allocation10 + $0x170] sm:$0xf]
        %v785 = vld [vmem:[#allocation10 + $0x174] sm:$0xf]
        %v786 = vld [vmem:[#allocation10 + $0x178] sm:$0xf]
        %v787 = vld [vmem:[#allocation10 + $0x17c] sm:$0xf]
        %v788 = vld [vmem:[#allocation10 + $0x180] sm:$0xf]
        %v789 = vld [vmem:[#allocation10 + $0x184] sm:$0xf]
        %v790 = vld [vmem:[#allocation10 + $0x188] sm:$0xf]
        %v791 = vld [vmem:[#allocation10 + $0x18c] sm:$0xf]
        %v792 = vld [vmem:[#allocation10 + $0x190] sm:$0xf]
        %v793 = vld [vmem:[#allocation10 + $0x194] sm:$0xf]
        %v794 = vld [vmem:[#allocation10 + $0x198] sm:$0xf]
        %v795 = vld [vmem:[#allocation10 + $0x19c] sm:$0xf]
        %v796 = vld [vmem:[#allocation10 + $0x1a0] sm:$0xf]
        %v797 = vld [vmem:[#allocation10 + $0x1a4] sm:$0xf]
        %v798 = vld [vmem:[#allocation10 + $0x1a8] sm:$0xf]
        %v799 = vld [vmem:[#allocation10 + $0x1ac] sm:$0xf]
        %v800 = vld [vmem:[#allocation10 + $0x1b0] sm:$0xf]
        %v801 = vld [vmem:[#allocation10 + $0x1b4] sm:$0xf]
        %v802 = vld [vmem:[#allocation10 + $0x1b8] sm:$0xf]
        %v803 = vld [vmem:[#allocation10 + $0x1bc] sm:$0xf]
        %v804 = vld [vmem:[#allocation10 + $0x1c0] sm:$0xf]
        %v805 = vld [vmem:[#allocation10 + $0x1c4] sm:$0xf]
        %v806 = vld [vmem:[#allocation10 + $0x1c8] sm:$0xf]
        %v807 = vld [vmem:[#allocation10 + $0x1cc] sm:$0xf]
        %v808 = vld [vmem:[#allocation10 + $0x1d0] sm:$0xf]
        %v809 = vld [vmem:[#allocation10 + $0x1d4] sm:$0xf]
        %v810 = vld [vmem:[#allocation10 + $0x1d8] sm:$0xf]
        %v811 = vld [vmem:[#allocation10 + $0x1dc] sm:$0xf]
        %v812 = vld [vmem:[#allocation10 + $0x1e0] sm:$0xf]
        %v813 = vld [vmem:[#allocation10 + $0x1e4] sm:$0xf]
        %v814 = vld [vmem:[#allocation10 + $0x1e8] sm:$0xf]
        %v815 = vld [vmem:[#allocation10 + $0x1ec] sm:$0xf]
        %v816 = vld [vmem:[#allocation10 + $0x1f0] sm:$0xf]
        %v817 = vld [vmem:[#allocation10 + $0x1f4] sm:$0xf]
        %v818 = vld [vmem:[#allocation10 + $0x1f8] sm:$0xf]
        %v819 = vld [vmem:[#allocation10 + $0x1fc] sm:$0xf]
        %v820 = vld [vmem:[%s528] sm:$0xff]
        %v821 = vld [vmem:[%s528 + $0x8] sm:$0xff]
        %v822 = vld [vmem:[%s528 + $0x10] sm:$0xff]
        %v823 = vld [vmem:[%s528 + $0x18] sm:$0xff]
        %v824 = vld [vmem:[%s528 + $0x20] sm:$0xff]
        %v825 = vld [vmem:[%s528 + $0x28] sm:$0xff]
        %v826 = vld [vmem:[%s528 + $0x30] sm:$0xff]
        %v827 = vld [vmem:[%s528 + $0x38] sm:$0xff]
        %v828 = vld [vmem:[%s528 + $0x40] sm:$0xff]
        %v829 = vld [vmem:[%s528 + $0x48] sm:$0xff]
        %v830 = vld [vmem:[%s528 + $0x50] sm:$0xff]
        %v831 = vld [vmem:[%s528 + $0x58] sm:$0xff]
        %v832 = vld [vmem:[%s528 + $0x60] sm:$0xff]
        %v833 = vld [vmem:[%s528 + $0x68] sm:$0xff]
        %v834 = vld [vmem:[%s528 + $0x70] sm:$0xff]
        %v835 = vld [vmem:[%s528 + $0x78] sm:$0xff]
        %v900 = vunpack.c.l.b16 %v628
        %v901 = vunpack.c.h.b16 %v628
        %v902 = vunpack.c.l.b16 %v629
        %v903 = vunpack.c.h.b16 %v629
        %v904 = vunpack.c.l.b16 %v630
        %v905 = vunpack.c.h.b16 %v630
        %v906 = vunpack.c.l.b16 %v631
        %v907 = vunpack.c.h.b16 %v631
        %v908 = vunpack.c.l.b16 %v632
        %v909 = vunpack.c.h.b16 %v632
        %v910 = vunpack.c.l.b16 %v633
        %v911 = vunpack.c.h.b16 %v633
        %v912 = vunpack.c.l.b16 %v634
        %v913 = vunpack.c.h.b16 %v634
        %v914 = vunpack.c.l.b16 %v635
        %v915 = vunpack.c.h.b16 %v635
        %v916 = vunpack.c.l.b16 %v636
        %v917 = vunpack.c.h.b16 %v636
        %v918 = vunpack.c.l.b16 %v637
        %v919 = vunpack.c.h.b16 %v637
        %v920 = vunpack.c.l.b16 %v638
        %v921 = vunpack.c.h.b16 %v638
        %v922 = vunpack.c.l.b16 %v639
        %v923 = vunpack.c.h.b16 %v639
        %v924 = vunpack.c.l.b16 %v640
        %v925 = vunpack.c.h.b16 %v640
        %v926 = vunpack.c.l.b16 %v641
        %v927 = vunpack.c.h.b16 %v641
        %v928 = vunpack.c.l.b16 %v642
        %v929 = vunpack.c.h.b16 %v642
        %v930 = vunpack.c.l.b16 %v643
        %v931 = vunpack.c.h.b16 %v643
        %v932 = vunpack.c.l.b16 %v644
        %v933 = vunpack.c.h.b16 %v644
        %v934 = vunpack.c.l.b16 %v645
        %v935 = vunpack.c.h.b16 %v645
        %v936 = vunpack.c.l.b16 %v646
        %v937 = vunpack.c.h.b16 %v646
        %v938 = vunpack.c.l.b16 %v647
        %v939 = vunpack.c.h.b16 %v647
        %v940 = vunpack.c.l.b16 %v648
        %v941 = vunpack.c.h.b16 %v648
        %v942 = vunpack.c.l.b16 %v649
        %v943 = vunpack.c.h.b16 %v649
        %v944 = vunpack.c.l.b16 %v650
        %v945 = vunpack.c.h.b16 %v650
        %v946 = vunpack.c.l.b16 %v651
        %v947 = vunpack.c.h.b16 %v651
        %v948 = vunpack.c.l.b16 %v652
        %v949 = vunpack.c.h.b16 %v652
        %v950 = vunpack.c.l.b16 %v653
        %v951 = vunpack.c.h.b16 %v653
        %v952 = vunpack.c.l.b16 %v654
        %v953 = vunpack.c.h.b16 %v654
        %v954 = vunpack.c.l.b16 %v655
        %v955 = vunpack.c.h.b16 %v655
        %v956 = vunpack.c.l.b16 %v656
        %v957 = vunpack.c.h.b16 %v656
        %v958 = vunpack.c.l.b16 %v657
        %v959 = vunpack.c.h.b16 %v657
        %v960 = vunpack.c.l.b16 %v658
        %v961 = vunpack.c.h.b16 %v658
        %v962 = vunpack.c.l.b16 %v659
        %v963 = vunpack.c.h.b16 %v659
        %v964 = vunpack.c.l.b16 %v660
        %v965 = vunpack.c.h.b16 %v660
        %v966 = vunpack.c.l.b16 %v661
        %v967 = vunpack.c.h.b16 %v661
        %v968 = vunpack.c.l.b16 %v662
        %v969 = vunpack.c.h.b16 %v662
        %v970 = vunpack.c.l.b16 %v663
        %v971 = vunpack.c.h.b16 %v663
        %v972 = vunpack.c.l.b16 %v664
        %v973 = vunpack.c.h.b16 %v664
        %v974 = vunpack.c.l.b16 %v665
        %v975 = vunpack.c.h.b16 %v665
        %v976 = vunpack.c.l.b16 %v666
        %v977 = vunpack.c.h.b16 %v666
        %v978 = vunpack.c.l.b16 %v667
        %v979 = vunpack.c.h.b16 %v667
        %v980 = vunpack.c.l.b16 %v668
        %v981 = vunpack.c.h.b16 %v668
        %v982 = vunpack.c.l.b16 %v669
        %v983 = vunpack.c.h.b16 %v669
        %v984 = vunpack.c.l.b16 %v670
        %v985 = vunpack.c.h.b16 %v670
        %v986 = vunpack.c.l.b16 %v671
        %v987 = vunpack.c.h.b16 %v671
        %v988 = vunpack.c.l.b16 %v672
        %v989 = vunpack.c.h.b16 %v672
        %v990 = vunpack.c.l.b16 %v673
        %v991 = vunpack.c.h.b16 %v673
        %v992 = vunpack.c.l.b16 %v674
        %v993 = vunpack.c.h.b16 %v674
        %v994 = vunpack.c.l.b16 %v675
        %v995 = vunpack.c.h.b16 %v675
        %v996 = vunpack.c.l.b16 %v676
        %v997 = vunpack.c.h.b16 %v676
        %v998 = vunpack.c.l.b16 %v677
        %v999 = vunpack.c.h.b16 %v677
        %v1000 = vunpack.c.l.b16 %v678
        %v1001 = vunpack.c.h.b16 %v678
        %v1002 = vunpack.c.l.b16 %v679
        %v1003 = vunpack.c.h.b16 %v679
        %v1004 = vunpack.c.l.b16 %v680
        %v1005 = vunpack.c.h.b16 %v680
        %v1006 = vunpack.c.l.b16 %v681
        %v1007 = vunpack.c.h.b16 %v681
        %v1008 = vunpack.c.l.b16 %v682
        %v1009 = vunpack.c.h.b16 %v682
        %v1010 = vunpack.c.l.b16 %v683
        %v1011 = vunpack.c.h.b16 %v683
        %v1012 = vunpack.c.l.b16 %v684
        %v1013 = vunpack.c.h.b16 %v684
        %v1014 = vunpack.c.l.b16 %v685
        %v1015 = vunpack.c.h.b16 %v685
        %v1016 = vunpack.c.l.b16 %v686
        %v1017 = vunpack.c.h.b16 %v686
        %v1018 = vunpack.c.l.b16 %v687
        %v1019 = vunpack.c.h.b16 %v687
        %v1020 = vunpack.c.l.b16 %v688
        %v1021 = vunpack.c.h.b16 %v688
        %v1022 = vunpack.c.l.b16 %v689
        %v1023 = vunpack.c.h.b16 %v689
        %v1024 = vunpack.c.l.b16 %v690
        %v1025 = vunpack.c.h.b16 %v690
        %v1026 = vunpack.c.l.b16 %v691
        %v1027 = vunpack.c.h.b16 %v691
        %v1028 = vpack.c.b16 %v908, %v900
        %v1029 = vpack.c.b16 %v909, %v901
        %v1030 = vpack.c.b16 %v910, %v902
        %v1031 = vpack.c.b16 %v911, %v903
        %v1032 = vpack.c.b16 %v912, %v904
        %v1033 = vpack.c.b16 %v913, %v905
        %v1034 = vpack.c.b16 %v914, %v906
        %v1035 = vpack.c.b16 %v915, %v907
        %v1036 = vpack.c.b16 %v924, %v916
        %v1037 = vpack.c.b16 %v925, %v917
        %v1038 = vpack.c.b16 %v926, %v918
        %v1039 = vpack.c.b16 %v927, %v919
        %v1040 = vpack.c.b16 %v928, %v920
        %v1041 = vpack.c.b16 %v929, %v921
        %v1042 = vpack.c.b16 %v930, %v922
        %v1043 = vpack.c.b16 %v931, %v923
        %v1044 = vpack.c.b16 %v940, %v932
        %v1045 = vpack.c.b16 %v941, %v933
        %v1046 = vpack.c.b16 %v942, %v934
        %v1047 = vpack.c.b16 %v943, %v935
        %v1048 = vpack.c.b16 %v944, %v936
        %v1049 = vpack.c.b16 %v945, %v937
        %v1050 = vpack.c.b16 %v946, %v938
        %v1051 = vpack.c.b16 %v947, %v939
        %v1052 = vpack.c.b16 %v956, %v948
        %v1053 = vpack.c.b16 %v957, %v949
        %v1054 = vpack.c.b16 %v958, %v950
        %v1055 = vpack.c.b16 %v959, %v951
        %v1056 = vpack.c.b16 %v960, %v952
        %v1057 = vpack.c.b16 %v961, %v953
        %v1058 = vpack.c.b16 %v962, %v954
        %v1059 = vpack.c.b16 %v963, %v955
        %v1060 = vpack.c.b16 %v972, %v964
        %v1061 = vpack.c.b16 %v973, %v965
        %v1062 = vpack.c.b16 %v974, %v966
        %v1063 = vpack.c.b16 %v975, %v967
        %v1064 = vpack.c.b16 %v976, %v968
        %v1065 = vpack.c.b16 %v977, %v969
        %v1066 = vpack.c.b16 %v978, %v970
        %v1067 = vpack.c.b16 %v979, %v971
        %v1068 = vpack.c.b16 %v988, %v980
        %v1069 = vpack.c.b16 %v989, %v981
        %v1070 = vpack.c.b16 %v990, %v982
        %v1071 = vpack.c.b16 %v991, %v983
        %v1072 = vpack.c.b16 %v992, %v984
        %v1073 = vpack.c.b16 %v993, %v985
        %v1074 = vpack.c.b16 %v994, %v986
        %v1075 = vpack.c.b16 %v995, %v987
        %v1076 = vpack.c.b16 %v1004, %v996
        %v1077 = vpack.c.b16 %v1005, %v997
        %v1078 = vpack.c.b16 %v1006, %v998
        %v1079 = vpack.c.b16 %v1007, %v999
        %v1080 = vpack.c.b16 %v1008, %v1000
        %v1081 = vpack.c.b16 %v1009, %v1001
        %v1082 = vpack.c.b16 %v1010, %v1002
        %v1083 = vpack.c.b16 %v1011, %v1003
        %v1084 = vpack.c.b16 %v1020, %v1012
        %v1085 = vpack.c.b16 %v1021, %v1013
        %v1086 = vpack.c.b16 %v1022, %v1014
        %v1087 = vpack.c.b16 %v1023, %v1015
        %v1088 = vpack.c.b16 %v1024, %v1016
        %v1089 = vpack.c.b16 %v1025, %v1017
        %v1090 = vpack.c.b16 %v1026, %v1018
        %v1091 = vpack.c.b16 %v1027, %v1019
        %v1284 = vunpack.c.l.b16 %v692
        %v1285 = vunpack.c.l.b16 %v693
        %v1286 = vunpack.c.l.b16 %v694
        %v1287 = vunpack.c.l.b16 %v695
        %v1288 = vunpack.c.l.b16 %v696
        %v1289 = vunpack.c.l.b16 %v697
        %v1290 = vunpack.c.l.b16 %v698
        %v1291 = vunpack.c.l.b16 %v699
        %v1292 = vunpack.c.l.b16 %v700
        %v1293 = vunpack.c.l.b16 %v701
        %v1294 = vunpack.c.l.b16 %v702
        %v1295 = vunpack.c.l.b16 %v703
        %v1296 = vunpack.c.l.b16 %v704
        %v1297 = vunpack.c.l.b16 %v705
        %v1298 = vunpack.c.l.b16 %v706
        %v1299 = vunpack.c.l.b16 %v707
        %v1300 = vunpack.c.l.b16 %v708
        %v1301 = vunpack.c.l.b16 %v709
        %v1302 = vunpack.c.l.b16 %v710
        %v1303 = vunpack.c.l.b16 %v711
        %v1304 = vunpack.c.l.b16 %v712
        %v1305 = vunpack.c.l.b16 %v713
        %v1306 = vunpack.c.l.b16 %v714
        %v1307 = vunpack.c.l.b16 %v715
        %v1308 = vunpack.c.l.b16 %v716
        %v1309 = vunpack.c.l.b16 %v717
        %v1310 = vunpack.c.l.b16 %v718
        %v1311 = vunpack.c.l.b16 %v719
        %v1312 = vunpack.c.l.b16 %v720
        %v1313 = vunpack.c.l.b16 %v721
        %v1314 = vunpack.c.l.b16 %v722
        %v1315 = vunpack.c.l.b16 %v723
        %v1316 = vunpack.c.l.b16 %v724
        %v1317 = vunpack.c.l.b16 %v725
        %v1318 = vunpack.c.l.b16 %v726
        %v1319 = vunpack.c.l.b16 %v727
        %v1320 = vunpack.c.l.b16 %v728
        %v1321 = vunpack.c.l.b16 %v729
        %v1322 = vunpack.c.l.b16 %v730
        %v1323 = vunpack.c.l.b16 %v731
        %v1324 = vunpack.c.l.b16 %v732
        %v1325 = vunpack.c.l.b16 %v733
        %v1326 = vunpack.c.l.b16 %v734
        %v1327 = vunpack.c.l.b16 %v735
        %v1328 = vunpack.c.l.b16 %v736
        %v1329 = vunpack.c.l.b16 %v737
        %v1330 = vunpack.c.l.b16 %v738
        %v1331 = vunpack.c.l.b16 %v739
        %v1332 = vunpack.c.l.b16 %v740
        %v1333 = vunpack.c.l.b16 %v741
        %v1334 = vunpack.c.l.b16 %v742
        %v1335 = vunpack.c.l.b16 %v743
        %v1336 = vunpack.c.l.b16 %v744
        %v1337 = vunpack.c.l.b16 %v745
        %v1338 = vunpack.c.l.b16 %v746
        %v1339 = vunpack.c.l.b16 %v747
        %v1340 = vunpack.c.l.b16 %v748
        %v1341 = vunpack.c.l.b16 %v749
        %v1342 = vunpack.c.l.b16 %v750
        %v1343 = vunpack.c.l.b16 %v751
        %v1344 = vunpack.c.l.b16 %v752
        %v1345 = vunpack.c.l.b16 %v753
        %v1346 = vunpack.c.l.b16 %v754
        %v1347 = vunpack.c.l.b16 %v755
        %v1348 = vunpack.c.l.b16 %v756
        %v1349 = vunpack.c.l.b16 %v757
        %v1350 = vunpack.c.l.b16 %v758
        %v1351 = vunpack.c.l.b16 %v759
        %v1352 = vunpack.c.l.b16 %v760
        %v1353 = vunpack.c.l.b16 %v761
        %v1354 = vunpack.c.l.b16 %v762
        %v1355 = vunpack.c.l.b16 %v763
        %v1356 = vunpack.c.l.b16 %v764
        %v1357 = vunpack.c.l.b16 %v765
        %v1358 = vunpack.c.l.b16 %v766
        %v1359 = vunpack.c.l.b16 %v767
        %v1360 = vunpack.c.l.b16 %v768
        %v1361 = vunpack.c.l.b16 %v769
        %v1362 = vunpack.c.l.b16 %v770
        %v1363 = vunpack.c.l.b16 %v771
        %v1364 = vunpack.c.l.b16 %v772
        %v1365 = vunpack.c.l.b16 %v773
        %v1366 = vunpack.c.l.b16 %v774
        %v1367 = vunpack.c.l.b16 %v775
        %v1368 = vunpack.c.l.b16 %v776
        %v1369 = vunpack.c.l.b16 %v777
        %v1370 = vunpack.c.l.b16 %v778
        %v1371 = vunpack.c.l.b16 %v779
        %v1372 = vunpack.c.l.b16 %v780
        %v1373 = vunpack.c.l.b16 %v781
        %v1374 = vunpack.c.l.b16 %v782
        %v1375 = vunpack.c.l.b16 %v783
        %v1376 = vunpack.c.l.b16 %v784
        %v1377 = vunpack.c.l.b16 %v785
        %v1378 = vunpack.c.l.b16 %v786
        %v1379 = vunpack.c.l.b16 %v787
        %v1380 = vunpack.c.l.b16 %v788
        %v1381 = vunpack.c.l.b16 %v789
        %v1382 = vunpack.c.l.b16 %v790
        %v1383 = vunpack.c.l.b16 %v791
        %v1384 = vunpack.c.l.b16 %v792
        %v1385 = vunpack.c.l.b16 %v793
        %v1386 = vunpack.c.l.b16 %v794
        %v1387 = vunpack.c.l.b16 %v795
        %v1388 = vunpack.c.l.b16 %v796
        %v1389 = vunpack.c.l.b16 %v797
        %v1390 = vunpack.c.l.b16 %v798
        %v1391 = vunpack.c.l.b16 %v799
        %v1392 = vunpack.c.l.b16 %v800
        %v1393 = vunpack.c.l.b16 %v801
        %v1394 = vunpack.c.l.b16 %v802
        %v1395 = vunpack.c.l.b16 %v803
        %v1396 = vunpack.c.l.b16 %v804
        %v1397 = vunpack.c.l.b16 %v805
        %v1398 = vunpack.c.l.b16 %v806
        %v1399 = vunpack.c.l.b16 %v807
        %v1400 = vunpack.c.l.b16 %v808
        %v1401 = vunpack.c.l.b16 %v809
        %v1402 = vunpack.c.l.b16 %v810
        %v1403 = vunpack.c.l.b16 %v811
        %v1404 = vunpack.c.l.b16 %v812
        %v1405 = vunpack.c.l.b16 %v813
        %v1406 = vunpack.c.l.b16 %v814
        %v1407 = vunpack.c.l.b16 %v815
        %v1408 = vunpack.c.l.b16 %v816
        %v1409 = vunpack.c.l.b16 %v817
        %v1410 = vunpack.c.l.b16 %v818
        %v1411 = vunpack.c.l.b16 %v819
        %v1412 = vpack.c.b16 %v1285, %v1284
        %v1413 = vpack.c.b16 %v1287, %v1286
        %v1414 = vpack.c.b16 %v1289, %v1288
        %v1415 = vpack.c.b16 %v1291, %v1290
        %v1416 = vpack.c.b16 %v1293, %v1292
        %v1417 = vpack.c.b16 %v1295, %v1294
        %v1418 = vpack.c.b16 %v1297, %v1296
        %v1419 = vpack.c.b16 %v1299, %v1298
        %v1420 = vpack.c.b16 %v1301, %v1300
        %v1421 = vpack.c.b16 %v1303, %v1302
        %v1422 = vpack.c.b16 %v1305, %v1304
        %v1423 = vpack.c.b16 %v1307, %v1306
        %v1424 = vpack.c.b16 %v1309, %v1308
        %v1425 = vpack.c.b16 %v1311, %v1310
        %v1426 = vpack.c.b16 %v1313, %v1312
        %v1427 = vpack.c.b16 %v1315, %v1314
        %v1428 = vpack.c.b16 %v1317, %v1316
        %v1429 = vpack.c.b16 %v1319, %v1318
        %v1430 = vpack.c.b16 %v1321, %v1320
        %v1431 = vpack.c.b16 %v1323, %v1322
        %v1432 = vpack.c.b16 %v1325, %v1324
        %v1433 = vpack.c.b16 %v1327, %v1326
        %v1434 = vpack.c.b16 %v1329, %v1328
        %v1435 = vpack.c.b16 %v1331, %v1330
        %v1436 = vpack.c.b16 %v1333, %v1332
        %v1437 = vpack.c.b16 %v1335, %v1334
        %v1438 = vpack.c.b16 %v1337, %v1336
        %v1439 = vpack.c.b16 %v1339, %v1338
        %v1440 = vpack.c.b16 %v1341, %v1340
        %v1441 = vpack.c.b16 %v1343, %v1342
        %v1442 = vpack.c.b16 %v1345, %v1344
        %v1443 = vpack.c.b16 %v1347, %v1346
        %v1444 = vpack.c.b16 %v1349, %v1348
        %v1445 = vpack.c.b16 %v1351, %v1350
        %v1446 = vpack.c.b16 %v1353, %v1352
        %v1447 = vpack.c.b16 %v1355, %v1354
        %v1448 = vpack.c.b16 %v1357, %v1356
        %v1449 = vpack.c.b16 %v1359, %v1358
        %v1450 = vpack.c.b16 %v1361, %v1360
        %v1451 = vpack.c.b16 %v1363, %v1362
        %v1452 = vpack.c.b16 %v1365, %v1364
        %v1453 = vpack.c.b16 %v1367, %v1366
        %v1454 = vpack.c.b16 %v1369, %v1368
        %v1455 = vpack.c.b16 %v1371, %v1370
        %v1456 = vpack.c.b16 %v1373, %v1372
        %v1457 = vpack.c.b16 %v1375, %v1374
        %v1458 = vpack.c.b16 %v1377, %v1376
        %v1459 = vpack.c.b16 %v1379, %v1378
        %v1460 = vpack.c.b16 %v1381, %v1380
        %v1461 = vpack.c.b16 %v1383, %v1382
        %v1462 = vpack.c.b16 %v1385, %v1384
        %v1463 = vpack.c.b16 %v1387, %v1386
        %v1464 = vpack.c.b16 %v1389, %v1388
        %v1465 = vpack.c.b16 %v1391, %v1390
        %v1466 = vpack.c.b16 %v1393, %v1392
        %v1467 = vpack.c.b16 %v1395, %v1394
        %v1468 = vpack.c.b16 %v1397, %v1396
        %v1469 = vpack.c.b16 %v1399, %v1398
        %v1470 = vpack.c.b16 %v1401, %v1400
        %v1471 = vpack.c.b16 %v1403, %v1402
        %v1472 = vpack.c.b16 %v1405, %v1404
        %v1473 = vpack.c.b16 %v1407, %v1406
        %v1474 = vpack.c.b16 %v1409, %v1408
        %v1475 = vpack.c.b16 %v1411, %v1410
        %1540 = vmatprep.subr.bf16.mxu0 0
        %1541 = vmatpush1.bf16.msra.mxu0 %v1412
        %1542 = vmatprep.subr.bf16.mxu0 0
        %1543 = vmatpush1.bf16.msra.mxu0 %v1413
        %1544 = vmatprep.subr.bf16.mxu0 0
        %1545 = vmatpush1.bf16.msra.mxu0 %v1414
        %1546 = vmatprep.subr.bf16.mxu0 0
        %1547 = vmatpush1.bf16.msra.mxu0 %v1415
        %1548 = vmatprep.subr.bf16.mxu0 0
        %1549 = vmatpush1.bf16.msra.mxu0 %v1416
        %1550 = vmatprep.subr.bf16.mxu0 0
        %1551 = vmatpush1.bf16.msra.mxu0 %v1417
        %1552 = vmatprep.subr.bf16.mxu0 0
        %1553 = vmatpush1.bf16.msra.mxu0 %v1418
        %1554 = vmatprep.subr.bf16.mxu0 0
        %1555 = vmatpush1.bf16.msra.mxu0 %v1419
        %1556 = vmatprep.subr.bf16.mxu0 0
        %1557 = vmatpush1.bf16.msra.mxu0 %v1420
        %1558 = vmatprep.subr.bf16.mxu0 0
        %1559 = vmatpush1.bf16.msra.mxu0 %v1421
        %1560 = vmatprep.subr.bf16.mxu0 0
        %1561 = vmatpush1.bf16.msra.mxu0 %v1422
        %1562 = vmatprep.subr.bf16.mxu0 0
        %1563 = vmatpush1.bf16.msra.mxu0 %v1423
        %1564 = vmatprep.subr.bf16.mxu0 0
        %1565 = vmatpush1.bf16.msra.mxu0 %v1424
        %1566 = vmatprep.subr.bf16.mxu0 0
        %1567 = vmatpush1.bf16.msra.mxu0 %v1425
        %1568 = vmatprep.subr.bf16.mxu0 0
        %1569 = vmatpush1.bf16.msra.mxu0 %v1426
        %1570 = vmatprep.subr.bf16.mxu0 0
        %1571 = vmatpush1.bf16.msra.mxu0 %v1427
        %1572 = vmatprep.mubr.bf16.mxu0 %v1029
        %1573 = vmatmul.mubr.bf16.gmra.mrb[0].mxu0 %v1028
        %v1574 = vpop.f32.mrb[0].mxu0
        %v1575 = vadd.f32 %v820, %v1574
        %v1576 = vpop.f32.mrb[0].mxu0
        %v1577 = vpop.f32.mrb[0].mxu0
        %v1578 = vadd.f32 %v821, %v1577
        %v1579 = vpop.f32.mrb[0].mxu0
        %1580 = vmatprep.mubr.bf16.mxu0 %v1037
        %1581 = vmatmul.mubr.bf16.gmra.mrb[0].mxu0 %v1036
        %v1582 = vpop.f32.mrb[0].mxu0
        %v1583 = vadd.f32 %v822, %v1582
        %v1584 = vpop.f32.mrb[0].mxu0
        %v1585 = vpop.f32.mrb[0].mxu0
        %v1586 = vadd.f32 %v823, %v1585
        %v1587 = vpop.f32.mrb[0].mxu0
        %1588 = vmatprep.mubr.bf16.mxu0 %v1045
        %1589 = vmatmul.mubr.bf16.gmra.mrb[0].mxu0 %v1044
        %v1590 = vpop.f32.mrb[0].mxu0
        %v1591 = vadd.f32 %v824, %v1590
        %v1592 = vpop.f32.mrb[0].mxu0
        %v1593 = vpop.f32.mrb[0].mxu0
        %v1594 = vadd.f32 %v825, %v1593
        %v1595 = vpop.f32.mrb[0].mxu0
        %1596 = vmatprep.mubr.bf16.mxu0 %v1053
        %1597 = vmatmul.mubr.bf16.gmra.mrb[0].mxu0 %v1052
        %v1598 = vpop.f32.mrb[0].mxu0
        %v1599 = vadd.f32 %v826, %v1598
        %v1600 = vpop.f32.mrb[0].mxu0
        %v1601 = vpop.f32.mrb[0].mxu0
        %v1602 = vadd.f32 %v827, %v1601
        %v1603 = vpop.f32.mrb[0].mxu0
        %1604 = vmatprep.mubr.bf16.mxu0 %v1061
        %1605 = vmatmul.mubr.bf16.gmra.mrb[0].mxu0 %v1060
        %v1606 = vpop.f32.mrb[0].mxu0
        %v1607 = vadd.f32 %v828, %v1606
        %v1608 = vpop.f32.mrb[0].mxu0
        %v1609 = vpop.f32.mrb[0].mxu0
        %v1610 = vadd.f32 %v829, %v1609
        %v1611 = vpop.f32.mrb[0].mxu0
        %1612 = vmatprep.mubr.bf16.mxu0 %v1069
        %1613 = vmatmul.mubr.bf16.gmra.mrb[0].mxu0 %v1068
        %v1614 = vpop.f32.mrb[0].mxu0
        %v1615 = vadd.f32 %v830, %v1614
        %v1616 = vpop.f32.mrb[0].mxu0
        %v1617 = vpop.f32.mrb[0].mxu0
        %v1618 = vadd.f32 %v831, %v1617
        %v1619 = vpop.f32.mrb[0].mxu0
        %1620 = vmatprep.mubr.bf16.mxu0 %v1077
        %1621 = vmatmul.mubr.bf16.gmra.mrb[0].mxu0 %v1076
        %v1622 = vpop.f32.mrb[0].mxu0
        %v1623 = vadd.f32 %v832, %v1622
        %v1624 = vpop.f32.mrb[0].mxu0
        %v1625 = vpop.f32.mrb[0].mxu0
        %v1626 = vadd.f32 %v833, %v1625
        %v1627 = vpop.f32.mrb[0].mxu0
        %1628 = vmatprep.mubr.bf16.mxu0 %v1085
        %1629 = vmatmul.mubr.bf16.gmra.mrb[0].mxu0 %v1084
        %v1630 = vpop.f32.mrb[0].mxu0
        %v1631 = vadd.f32 %v834, %v1630
        %v1632 = vpop.f32.mrb[0].mxu0
        %v1633 = vpop.f32.mrb[0].mxu0
        %v1634 = vadd.f32 %v835, %v1633
        %v1635 = vpop.f32.mrb[0].mxu0
        %1636 = vdwg.mxu0
        %1637 = vmatprep.subr.bf16.mxu0 0
        %1638 = vmatpush1.bf16.msra.mxu0 %v1428
        %1639 = vmatprep.subr.bf16.mxu0 0
        %1640 = vmatpush1.bf16.msra.mxu0 %v1429
        %1641 = vmatprep.subr.bf16.mxu0 0
        %1642 = vmatpush1.bf16.msra.mxu0 %v1430
        %1643 = vmatprep.subr.bf16.mxu0 0
        %1644 = vmatpush1.bf16.msra.mxu0 %v1431
        %1645 = vmatprep.subr.bf16.mxu0 0
        %1646 = vmatpush1.bf16.msra.mxu0 %v1432
        %1647 = vmatprep.subr.bf16.mxu0 0
        %1648 = vmatpush1.bf16.msra.mxu0 %v1433
        %1649 = vmatprep.subr.bf16.mxu0 0
        %1650 = vmatpush1.bf16.msra.mxu0 %v1434
        %1651 = vmatprep.subr.bf16.mxu0 0
        %1652 = vmatpush1.bf16.msra.mxu0 %v1435
        %1653 = vmatprep.subr.bf16.mxu0 0
        %1654 = vmatpush1.bf16.msra.mxu0 %v1436
        %1655 = vmatprep.subr.bf16.mxu0 0
        %1656 = vmatpush1.bf16.msra.mxu0 %v1437
        %1657 = vmatprep.subr.bf16.mxu0 0
        %1658 = vmatpush1.bf16.msra.mxu0 %v1438
        %1659 = vmatprep.subr.bf16.mxu0 0
        %1660 = vmatpush1.bf16.msra.mxu0 %v1439
        %1661 = vmatprep.subr.bf16.mxu0 0
        %1662 = vmatpush1.bf16.msra.mxu0 %v1440
        %1663 = vmatprep.subr.bf16.mxu0 0
        %1664 = vmatpush1.bf16.msra.mxu0 %v1441
        %1665 = vmatprep.subr.bf16.mxu0 0
        %1666 = vmatpush1.bf16.msra.mxu0 %v1442
        %1667 = vmatprep.subr.bf16.mxu0 0
        %1668 = vmatpush1.bf16.msra.mxu0 %v1443
        %1669 = vmatprep.mubr.bf16.mxu0 %v1031
        %1670 = vmatmul.mubr.bf16.gmra.mrb[0].mxu0 %v1030
        %v1671 = vpop.f32.mrb[0].mxu0
        %v1672 = vadd.f32 %v1575, %v1671
        %v1673 = vpop.f32.mrb[0].mxu0
        %v1674 = vpop.f32.mrb[0].mxu0
        %v1675 = vadd.f32 %v1578, %v1674
        %v1676 = vpop.f32.mrb[0].mxu0
        %1677 = vmatprep.mubr.bf16.mxu0 %v1039
        %1678 = vmatmul.mubr.bf16.gmra.mrb[0].mxu0 %v1038
        %v1679 = vpop.f32.mrb[0].mxu0
        %v1680 = vadd.f32 %v1583, %v1679
        %v1681 = vpop.f32.mrb[0].mxu0
        %v1682 = vpop.f32.mrb[0].mxu0
        %v1683 = vadd.f32 %v1586, %v1682
        %v1684 = vpop.f32.mrb[0].mxu0
        %1685 = vmatprep.mubr.bf16.mxu0 %v1047
        %1686 = vmatmul.mubr.bf16.gmra.mrb[0].mxu0 %v1046
        %v1687 = vpop.f32.mrb[0].mxu0
        %v1688 = vadd.f32 %v1591, %v1687
        %v1689 = vpop.f32.mrb[0].mxu0
        %v1690 = vpop.f32.mrb[0].mxu0
        %v1691 = vadd.f32 %v1594, %v1690
        %v1692 = vpop.f32.mrb[0].mxu0
        %1693 = vmatprep.mubr.bf16.mxu0 %v1055
        %1694 = vmatmul.mubr.bf16.gmra.mrb[0].mxu0 %v1054
        %v1695 = vpop.f32.mrb[0].mxu0
        %v1696 = vadd.f32 %v1599, %v1695
        %v1697 = vpop.f32.mrb[0].mxu0
        %v1698 = vpop.f32.mrb[0].mxu0
        %v1699 = vadd.f32 %v1602, %v1698
        %v1700 = vpop.f32.mrb[0].mxu0
        %1701 = vmatprep.mubr.bf16.mxu0 %v1063
        %1702 = vmatmul.mubr.bf16.gmra.mrb[0].mxu0 %v1062
        %v1703 = vpop.f32.mrb[0].mxu0
        %v1704 = vadd.f32 %v1607, %v1703
        %v1705 = vpop.f32.mrb[0].mxu0
        %v1706 = vpop.f32.mrb[0].mxu0
        %v1707 = vadd.f32 %v1610, %v1706
        %v1708 = vpop.f32.mrb[0].mxu0
        %1709 = vmatprep.mubr.bf16.mxu0 %v1071
        %1710 = vmatmul.mubr.bf16.gmra.mrb[0].mxu0 %v1070
        %v1711 = vpop.f32.mrb[0].mxu0
        %v1712 = vadd.f32 %v1615, %v1711
        %v1713 = vpop.f32.mrb[0].mxu0
        %v1714 = vpop.f32.mrb[0].mxu0
        %v1715 = vadd.f32 %v1618, %v1714
        %v1716 = vpop.f32.mrb[0].mxu0
        %1717 = vmatprep.mubr.bf16.mxu0 %v1079
        %1718 = vmatmul.mubr.bf16.gmra.mrb[0].mxu0 %v1078
        %v1719 = vpop.f32.mrb[0].mxu0
        %v1720 = vadd.f32 %v1623, %v1719
        %v1721 = vpop.f32.mrb[0].mxu0
        %v1722 = vpop.f32.mrb[0].mxu0
        %v1723 = vadd.f32 %v1626, %v1722
        %v1724 = vpop.f32.mrb[0].mxu0
        %1725 = vmatprep.mubr.bf16.mxu0 %v1087
        %1726 = vmatmul.mubr.bf16.gmra.mrb[0].mxu0 %v1086
        %v1727 = vpop.f32.mrb[0].mxu0
        %v1728 = vadd.f32 %v1631, %v1727
        %v1729 = vpop.f32.mrb[0].mxu0
        %v1730 = vpop.f32.mrb[0].mxu0
        %v1731 = vadd.f32 %v1634, %v1730
        %v1732 = vpop.f32.mrb[0].mxu0
        %1733 = vdwg.mxu0
        %1734 = vmatprep.subr.bf16.mxu0 0
        %1735 = vmatpush1.bf16.msra.mxu0 %v1444
        %1736 = vmatprep.subr.bf16.mxu0 0
        %1737 = vmatpush1.bf16.msra.mxu0 %v1445
        %1738 = vmatprep.subr.bf16.mxu0 0
        %1739 = vmatpush1.bf16.msra.mxu0 %v1446
        %1740 = vmatprep.subr.bf16.mxu0 0
        %1741 = vmatpush1.bf16.msra.mxu0 %v1447
        %1742 = vmatprep.subr.bf16.mxu0 0
        %1743 = vmatpush1.bf16.msra.mxu0 %v1448
        %1744 = vmatprep.subr.bf16.mxu0 0
        %1745 = vmatpush1.bf16.msra.mxu0 %v1449
        %1746 = vmatprep.subr.bf16.mxu0 0
        %1747 = vmatpush1.bf16.msra.mxu0 %v1450
        %1748 = vmatprep.subr.bf16.mxu0 0
        %1749 = vmatpush1.bf16.msra.mxu0 %v1451
        %1750 = vmatprep.subr.bf16.mxu0 0
        %1751 = vmatpush1.bf16.msra.mxu0 %v1452
        %1752 = vmatprep.subr.bf16.mxu0 0
        %1753 = vmatpush1.bf16.msra.mxu0 %v1453
        %1754 = vmatprep.subr.bf16.mxu0 0
        %1755 = vmatpush1.bf16.msra.mxu0 %v1454
        %1756 = vmatprep.subr.bf16.mxu0 0
        %1757 = vmatpush1.bf16.msra.mxu0 %v1455
        %1758 = vmatprep.subr.bf16.mxu0 0
        %1759 = vmatpush1.bf16.msra.mxu0 %v1456
        %1760 = vmatprep.subr.bf16.mxu0 0
        %1761 = vmatpush1.bf16.msra.mxu0 %v1457
        %1762 = vmatprep.subr.bf16.mxu0 0
        %1763 = vmatpush1.bf16.msra.mxu0 %v1458
        %1764 = vmatprep.subr.bf16.mxu0 0
        %1765 = vmatpush1.bf16.msra.mxu0 %v1459
        %1766 = vmatprep.mubr.bf16.mxu0 %v1033
        %1767 = vmatmul.mubr.bf16.gmra.mrb[0].mxu0 %v1032
        %v1768 = vpop.f32.mrb[0].mxu0
        %v1769 = vadd.f32 %v1672, %v1768
        %v1770 = vpop.f32.mrb[0].mxu0
        %v1771 = vpop.f32.mrb[0].mxu0
        %v1772 = vadd.f32 %v1675, %v1771
        %v1773 = vpop.f32.mrb[0].mxu0
        %1774 = vmatprep.mubr.bf16.mxu0 %v1041
        %1775 = vmatmul.mubr.bf16.gmra.mrb[0].mxu0 %v1040
        %v1776 = vpop.f32.mrb[0].mxu0
        %v1777 = vadd.f32 %v1680, %v1776
        %v1778 = vpop.f32.mrb[0].mxu0
        %v1779 = vpop.f32.mrb[0].mxu0
        %v1780 = vadd.f32 %v1683, %v1779
        %v1781 = vpop.f32.mrb[0].mxu0
        %1782 = vmatprep.mubr.bf16.mxu0 %v1049
        %1783 = vmatmul.mubr.bf16.gmra.mrb[0].mxu0 %v1048
        %v1784 = vpop.f32.mrb[0].mxu0
        %v1785 = vadd.f32 %v1688, %v1784
        %v1786 = vpop.f32.mrb[0].mxu0
        %v1787 = vpop.f32.mrb[0].mxu0
        %v1788 = vadd.f32 %v1691, %v1787
        %v1789 = vpop.f32.mrb[0].mxu0
        %1790 = vmatprep.mubr.bf16.mxu0 %v1057
        %1791 = vmatmul.mubr.bf16.gmra.mrb[0].mxu0 %v1056
        %v1792 = vpop.f32.mrb[0].mxu0
        %v1793 = vadd.f32 %v1696, %v1792
        %v1794 = vpop.f32.mrb[0].mxu0
        %v1795 = vpop.f32.mrb[0].mxu0
        %v1796 = vadd.f32 %v1699, %v1795
        %v1797 = vpop.f32.mrb[0].mxu0
        %1798 = vmatprep.mubr.bf16.mxu0 %v1065
        %1799 = vmatmul.mubr.bf16.gmra.mrb[0].mxu0 %v1064
        %v1800 = vpop.f32.mrb[0].mxu0
        %v1801 = vadd.f32 %v1704, %v1800
        %v1802 = vpop.f32.mrb[0].mxu0
        %v1803 = vpop.f32.mrb[0].mxu0
        %v1804 = vadd.f32 %v1707, %v1803
        %v1805 = vpop.f32.mrb[0].mxu0
        %1806 = vmatprep.mubr.bf16.mxu0 %v1073
        %1807 = vmatmul.mubr.bf16.gmra.mrb[0].mxu0 %v1072
        %v1808 = vpop.f32.mrb[0].mxu0
        %v1809 = vadd.f32 %v1712, %v1808
        %v1810 = vpop.f32.mrb[0].mxu0
        %v1811 = vpop.f32.mrb[0].mxu0
        %v1812 = vadd.f32 %v1715, %v1811
        %v1813 = vpop.f32.mrb[0].mxu0
        %1814 = vmatprep.mubr.bf16.mxu0 %v1081
        %1815 = vmatmul.mubr.bf16.gmra.mrb[0].mxu0 %v1080
        %v1816 = vpop.f32.mrb[0].mxu0
        %v1817 = vadd.f32 %v1720, %v1816
        %v1818 = vpop.f32.mrb[0].mxu0
        %v1819 = vpop.f32.mrb[0].mxu0
        %v1820 = vadd.f32 %v1723, %v1819
        %v1821 = vpop.f32.mrb[0].mxu0
        %1822 = vmatprep.mubr.bf16.mxu0 %v1089
        %1823 = vmatmul.mubr.bf16.gmra.mrb[0].mxu0 %v1088
        %v1824 = vpop.f32.mrb[0].mxu0
        %v1825 = vadd.f32 %v1728, %v1824
        %v1826 = vpop.f32.mrb[0].mxu0
        %v1827 = vpop.f32.mrb[0].mxu0
        %v1828 = vadd.f32 %v1731, %v1827
        %v1829 = vpop.f32.mrb[0].mxu0
        %1830 = vdwg.mxu0
        %1831 = vmatprep.subr.bf16.mxu0 0
        %1832 = vmatpush1.bf16.msra.mxu0 %v1460
        %1833 = vmatprep.subr.bf16.mxu0 0
        %1834 = vmatpush1.bf16.msra.mxu0 %v1461
        %1835 = vmatprep.subr.bf16.mxu0 0
        %1836 = vmatpush1.bf16.msra.mxu0 %v1462
        %1837 = vmatprep.subr.bf16.mxu0 0
        %1838 = vmatpush1.bf16.msra.mxu0 %v1463
        %1839 = vmatprep.subr.bf16.mxu0 0
        %1840 = vmatpush1.bf16.msra.mxu0 %v1464
        %1841 = vmatprep.subr.bf16.mxu0 0
        %1842 = vmatpush1.bf16.msra.mxu0 %v1465
        %1843 = vmatprep.subr.bf16.mxu0 0
        %1844 = vmatpush1.bf16.msra.mxu0 %v1466
        %1845 = vmatprep.subr.bf16.mxu0 0
        %1846 = vmatpush1.bf16.msra.mxu0 %v1467
        %1847 = vmatprep.subr.bf16.mxu0 0
        %1848 = vmatpush1.bf16.msra.mxu0 %v1468
        %1849 = vmatprep.subr.bf16.mxu0 0
        %1850 = vmatpush1.bf16.msra.mxu0 %v1469
        %1851 = vmatprep.subr.bf16.mxu0 0
        %1852 = vmatpush1.bf16.msra.mxu0 %v1470
        %1853 = vmatprep.subr.bf16.mxu0 0
        %1854 = vmatpush1.bf16.msra.mxu0 %v1471
        %1855 = vmatprep.subr.bf16.mxu0 0
        %1856 = vmatpush1.bf16.msra.mxu0 %v1472
        %1857 = vmatprep.subr.bf16.mxu0 0
        %1858 = vmatpush1.bf16.msra.mxu0 %v1473
        %1859 = vmatprep.subr.bf16.mxu0 0
        %1860 = vmatpush1.bf16.msra.mxu0 %v1474
        %1861 = vmatprep.subr.bf16.mxu0 0
        %1862 = vmatpush1.bf16.msra.mxu0 %v1475
        %1863 = vmatprep.mubr.bf16.mxu0 %v1035
        %1864 = vmatmul.mubr.bf16.gmra.mrb[0].mxu0 %v1034
        %v1865 = vpop.f32.mrb[0].mxu0
        %v1866 = vadd.f32 %v1769, %v1865
        %v1867 = vpop.f32.mrb[0].mxu0
        %v1868 = vpop.f32.mrb[0].mxu0
        %v1869 = vadd.f32 %v1772, %v1868
        %v1870 = vpop.f32.mrb[0].mxu0
        %1871 = vmatprep.mubr.bf16.mxu0 %v1043
        %1872 = vmatmul.mubr.bf16.gmra.mrb[0].mxu0 %v1042
        %v1873 = vpop.f32.mrb[0].mxu0
        %v1874 = vadd.f32 %v1777, %v1873
        %v1875 = vpop.f32.mrb[0].mxu0
        %v1876 = vpop.f32.mrb[0].mxu0
        %v1877 = vadd.f32 %v1780, %v1876
        %v1878 = vpop.f32.mrb[0].mxu0
        %1879 = vmatprep.mubr.bf16.mxu0 %v1051
        %1880 = vmatmul.mubr.bf16.gmra.mrb[0].mxu0 %v1050
        %v1881 = vpop.f32.mrb[0].mxu0
        %v1882 = vadd.f32 %v1785, %v1881
        %v1883 = vpop.f32.mrb[0].mxu0
        %v1884 = vpop.f32.mrb[0].mxu0
        %v1885 = vadd.f32 %v1788, %v1884
        %v1886 = vpop.f32.mrb[0].mxu0
        %1887 = vmatprep.mubr.bf16.mxu0 %v1059
        %1888 = vmatmul.mubr.bf16.gmra.mrb[0].mxu0 %v1058
        %v1889 = vpop.f32.mrb[0].mxu0
        %v1890 = vadd.f32 %v1793, %v1889
        %v1891 = vpop.f32.mrb[0].mxu0
        %v1892 = vpop.f32.mrb[0].mxu0
        %v1893 = vadd.f32 %v1796, %v1892
        %v1894 = vpop.f32.mrb[0].mxu0
        %1895 = vmatprep.mubr.bf16.mxu0 %v1067
        %1896 = vmatmul.mubr.bf16.gmra.mrb[0].mxu0 %v1066
        %v1897 = vpop.f32.mrb[0].mxu0
        %v1898 = vadd.f32 %v1801, %v1897
        %v1899 = vpop.f32.mrb[0].mxu0
        %v1900 = vpop.f32.mrb[0].mxu0
        %v1901 = vadd.f32 %v1804, %v1900
        %v1902 = vpop.f32.mrb[0].mxu0
        %1903 = vmatprep.mubr.bf16.mxu0 %v1075
        %1904 = vmatmul.mubr.bf16.gmra.mrb[0].mxu0 %v1074
        %v1905 = vpop.f32.mrb[0].mxu0
        %v1906 = vadd.f32 %v1809, %v1905
        %v1907 = vpop.f32.mrb[0].mxu0
        %v1908 = vpop.f32.mrb[0].mxu0
        %v1909 = vadd.f32 %v1812, %v1908
        %v1910 = vpop.f32.mrb[0].mxu0
        %1911 = vmatprep.mubr.bf16.mxu0 %v1083
        %1912 = vmatmul.mubr.bf16.gmra.mrb[0].mxu0 %v1082
        %v1913 = vpop.f32.mrb[0].mxu0
        %v1914 = vadd.f32 %v1817, %v1913
        %v1915 = vpop.f32.mrb[0].mxu0
        %v1916 = vpop.f32.mrb[0].mxu0
        %v1917 = vadd.f32 %v1820, %v1916
        %v1918 = vpop.f32.mrb[0].mxu0
        %1919 = vmatprep.mubr.bf16.mxu0 %v1091
        %1920 = vmatmul.mubr.bf16.gmra.mrb[0].mxu0 %v1090
        %v1921 = vpop.f32.mrb[0].mxu0
        %v1922 = vadd.f32 %v1825, %v1921
        %v1923 = vpop.f32.mrb[0].mxu0
        %v1924 = vpop.f32.mrb[0].mxu0
        %v1925 = vadd.f32 %v1828, %v1924
        %v1926 = vpop.f32.mrb[0].mxu0
        %1927 = vdwg.mxu0
        %v1928 = vmax.f32 %v1866, 0.0
        %v1929 = vmax.f32 %v1869, 0.0
        %v1930 = vmax.f32 %v1874, 0.0
        %v1931 = vmax.f32 %v1877, 0.0
        %v1932 = vmax.f32 %v1882, 0.0
        %v1933 = vmax.f32 %v1885, 0.0
        %v1934 = vmax.f32 %v1890, 0.0
        %v1935 = vmax.f32 %v1893, 0.0
        %v1936 = vmax.f32 %v1898, 0.0
        %v1937 = vmax.f32 %v1901, 0.0
        %v1938 = vmax.f32 %v1906, 0.0
        %v1939 = vmax.f32 %v1909, 0.0
        %v1940 = vmax.f32 %v1914, 0.0
        %v1941 = vmax.f32 %v1917, 0.0
        %v1942 = vmax.f32 %v1922, 0.0
        %v1943 = vmax.f32 %v1925, 0.0
        %v1944 = vpack.c.bf16 %v1929, %v1928
        %v1945 = vpack.c.bf16 %v1931, %v1930
        %v1946 = vpack.c.bf16 %v1933, %v1932
        %v1947 = vpack.c.bf16 %v1935, %v1934
        %v1948 = vpack.c.bf16 %v1937, %v1936
        %v1949 = vpack.c.bf16 %v1939, %v1938
        %v1950 = vpack.c.bf16 %v1941, %v1940
        %v1951 = vpack.c.bf16 %v1943, %v1942
        %v1952 = vld [vmem:[#allocation11] sm:$0xf]
        %v1953 = vld [vmem:[#allocation11 + $0x4] sm:$0xf]
        %v1954 = vld [vmem:[#allocation11 + $0x8] sm:$0xf]
        %v1955 = vld [vmem:[#allocation11 + $0xc] sm:$0xf]
        %v1956 = vld [vmem:[#allocation11 + $0x10] sm:$0xf]
        %v1957 = vld [vmem:[#allocation11 + $0x14] sm:$0xf]
        %v1958 = vld [vmem:[#allocation11 + $0x18] sm:$0xf]
        %v1959 = vld [vmem:[#allocation11 + $0x1c] sm:$0xf]
        %v1960 = vld [vmem:[#allocation11 + $0x20] sm:$0xf]
        %v1961 = vld [vmem:[#allocation11 + $0x24] sm:$0xf]
        %v1962 = vld [vmem:[#allocation11 + $0x28] sm:$0xf]
        %v1963 = vld [vmem:[#allocation11 + $0x2c] sm:$0xf]
        %v1964 = vld [vmem:[#allocation11 + $0x30] sm:$0xf]
        %v1965 = vld [vmem:[#allocation11 + $0x34] sm:$0xf]
        %v1966 = vld [vmem:[#allocation11 + $0x38] sm:$0xf]
        %v1967 = vld [vmem:[#allocation11 + $0x3c] sm:$0xf]
        %v1968 = vld [vmem:[%s6] sm:$0x1]
        %v1970 = vlaneseq
        %v1971 = vshrl.u32 %v1970, 7
        %v1972 = vsub.s32 0, %v1971
        %v1973 = vrot.slane %v1968, %v1972
        %v1991 = vunpack.c.l.b16 %v1952
        %v1992 = vunpack.c.l.b16 %v1953
        %v1993 = vunpack.c.l.b16 %v1954
        %v1994 = vunpack.c.l.b16 %v1955
        %v1995 = vunpack.c.l.b16 %v1956
        %v1996 = vunpack.c.l.b16 %v1957
        %v1997 = vunpack.c.l.b16 %v1958
        %v1998 = vunpack.c.l.b16 %v1959
        %v1999 = vunpack.c.l.b16 %v1960
        %v2000 = vunpack.c.l.b16 %v1961
        %v2001 = vunpack.c.l.b16 %v1962
        %v2002 = vunpack.c.l.b16 %v1963
        %v2003 = vunpack.c.l.b16 %v1964
        %v2004 = vunpack.c.l.b16 %v1965
        %v2005 = vunpack.c.l.b16 %v1966
        %v2006 = vunpack.c.l.b16 %v1967
        %v2007 = vpack.c.b16 %v1992, %v1991
        %v2008 = vpack.c.b16 %v1994, %v1993
        %v2009 = vpack.c.b16 %v1996, %v1995
        %v2010 = vpack.c.b16 %v1998, %v1997
        %v2011 = vpack.c.b16 %v2000, %v1999
        %v2012 = vpack.c.b16 %v2002, %v2001
        %v2013 = vpack.c.b16 %v2004, %v2003
        %v2014 = vpack.c.b16 %v2006, %v2005
        %2023 = vmatprep.subr.bf16.mxu0 0
        %2024 = vmatpush1.bf16.msra.mxu0 %v2007
        %2025 = vmatprep.subr.bf16.mxu0 0
        %2026 = vmatpush1.bf16.msra.mxu0 %v2008
        %2027 = vmatprep.subr.bf16.mxu0 0
        %2028 = vmatpush1.bf16.msra.mxu0 %v2009
        %2029 = vmatprep.subr.bf16.mxu0 0
        %2030 = vmatpush1.bf16.msra.mxu0 %v2010
        %2031 = vmatprep.subr.bf16.mxu0 0
        %2032 = vmatpush1.bf16.msra.mxu0 %v2011
        %2033 = vmatprep.subr.bf16.mxu0 0
        %2034 = vmatpush1.bf16.msra.mxu0 %v2012
        %2035 = vmatprep.subr.bf16.mxu0 0
        %2036 = vmatpush1.bf16.msra.mxu0 %v2013
        %2037 = vmatprep.subr.bf16.mxu0 0
        %2038 = vmatpush1.bf16.msra.mxu0 %v2014
        %2039 = vmatprep.subr.bf16.mxu0 0
        %2040 = vmatpush1.bf16.msra.mxu0 0
        %2041 = vmatprep.subr.bf16.mxu0 0
        %2042 = vmatpush1.bf16.msra.mxu0 0
        %2043 = vmatprep.subr.bf16.mxu0 0
        %2044 = vmatpush1.bf16.msra.mxu0 0
        %2045 = vmatprep.subr.bf16.mxu0 0
        %2046 = vmatpush1.bf16.msra.mxu0 0
        %2047 = vmatprep.subr.bf16.mxu0 0
        %2048 = vmatpush1.bf16.msra.mxu0 0
        %2049 = vmatprep.subr.bf16.mxu0 0
        %2050 = vmatpush1.bf16.msra.mxu0 0
        %2051 = vmatprep.subr.bf16.mxu0 0
        %2052 = vmatpush1.bf16.msra.mxu0 0
        %2053 = vmatprep.subr.bf16.mxu0 0
        %2054 = vmatpush1.bf16.msra.mxu0 0
        %2055 = vmatprep.mubr.bf16.mxu0 0
        %2056 = vmatmul.mubr.bf16.gmra.mrb[0].mxu0 %v1944
        %v2057 = vpop.f32.mrb[0].mxu0
        %v2058 = vadd.f32 %v1973, %v2057
        %v2059 = vpop.f32.mrb[0].mxu0
        %v2060 = vpop.f32.mrb[0].mxu0
        %v2061 = vadd.f32 %v1973, %v2060
        %v2062 = vpop.f32.mrb[0].mxu0
        %2063 = vmatprep.mubr.bf16.mxu0 0
        %2064 = vmatmul.mubr.bf16.gmra.mrb[0].mxu0 %v1945
        %v2065 = vpop.f32.mrb[0].mxu0
        %v2066 = vadd.f32 %v1973, %v2065
        %v2067 = vpop.f32.mrb[0].mxu0
        %v2068 = vpop.f32.mrb[0].mxu0
        %v2069 = vadd.f32 %v1973, %v2068
        %v2070 = vpop.f32.mrb[0].mxu0
        %2071 = vmatprep.mubr.bf16.mxu0 0
        %2072 = vmatmul.mubr.bf16.gmra.mrb[0].mxu0 %v1946
        %v2073 = vpop.f32.mrb[0].mxu0
        %v2074 = vadd.f32 %v1973, %v2073
        %v2075 = vpop.f32.mrb[0].mxu0
        %v2076 = vpop.f32.mrb[0].mxu0
        %v2077 = vadd.f32 %v1973, %v2076
        %v2078 = vpop.f32.mrb[0].mxu0
        %2079 = vmatprep.mubr.bf16.mxu0 0
        %2080 = vmatmul.mubr.bf16.gmra.mrb[0].mxu0 %v1947
        %v2081 = vpop.f32.mrb[0].mxu0
        %v2082 = vadd.f32 %v1973, %v2081
        %v2083 = vpop.f32.mrb[0].mxu0
        %v2084 = vpop.f32.mrb[0].mxu0
        %v2085 = vadd.f32 %v1973, %v2084
        %v2086 = vpop.f32.mrb[0].mxu0
        %2087 = vmatprep.mubr.bf16.mxu0 0
        %2088 = vmatmul.mubr.bf16.gmra.mrb[0].mxu0 %v1948
        %v2089 = vpop.f32.mrb[0].mxu0
        %v2090 = vadd.f32 %v1973, %v2089
        %v2091 = vpop.f32.mrb[0].mxu0
        %v2092 = vpop.f32.mrb[0].mxu0
        %v2093 = vadd.f32 %v1973, %v2092
        %v2094 = vpop.f32.mrb[0].mxu0
        %2095 = vmatprep.mubr.bf16.mxu0 0
        %2096 = vmatmul.mubr.bf16.gmra.mrb[0].mxu0 %v1949
        %v2097 = vpop.f32.mrb[0].mxu0
        %v2098 = vadd.f32 %v1973, %v2097
        %v2099 = vpop.f32.mrb[0].mxu0
        %v2100 = vpop.f32.mrb[0].mxu0
        %v2101 = vadd.f32 %v1973, %v2100
        %v2102 = vpop.f32.mrb[0].mxu0
        %2103 = vmatprep.mubr.bf16.mxu0 0
        %2104 = vmatmul.mubr.bf16.gmra.mrb[0].mxu0 %v1950
        %v2105 = vpop.f32.mrb[0].mxu0
        %v2106 = vadd.f32 %v1973, %v2105
        %v2107 = vpop.f32.mrb[0].mxu0
        %v2108 = vpop.f32.mrb[0].mxu0
        %v2109 = vadd.f32 %v1973, %v2108
        %v2110 = vpop.f32.mrb[0].mxu0
        %2111 = vmatprep.mubr.bf16.mxu0 0
        %2112 = vmatmul.mubr.bf16.gmra.mrb[0].mxu0 %v1951
        %v2113 = vpop.f32.mrb[0].mxu0
        %v2114 = vadd.f32 %v1973, %v2113
        %v2115 = vpop.f32.mrb[0].mxu0
        %v2116 = vpop.f32.mrb[0].mxu0
        %v2117 = vadd.f32 %v1973, %v2116
        %v2118 = vpop.f32.mrb[0].mxu0
        %2119 = vdwg.mxu0
        %v2120 = vld [vmem:[#allocation13] sm:$0xf]
        %v2121 = vld [vmem:[#allocation13 + $0x4] sm:$0xf]
        %v2122 = vld [vmem:[#allocation13 + $0x8] sm:$0xf]
        %v2123 = vld [vmem:[#allocation13 + $0xc] sm:$0xf]
        %v2124 = vld [vmem:[#allocation13 + $0x10] sm:$0xf]
        %v2125 = vld [vmem:[#allocation13 + $0x14] sm:$0xf]
        %v2126 = vld [vmem:[#allocation13 + $0x18] sm:$0xf]
        %v2127 = vld [vmem:[#allocation13 + $0x1c] sm:$0xf]
        %v2128 = vld [vmem:[#allocation13 + $0x20] sm:$0xf]
        %v2129 = vld [vmem:[#allocation13 + $0x24] sm:$0xf]
        %v2130 = vld [vmem:[#allocation13 + $0x28] sm:$0xf]
        %v2131 = vld [vmem:[#allocation13 + $0x2c] sm:$0xf]
        %v2132 = vld [vmem:[#allocation13 + $0x30] sm:$0xf]
        %v2133 = vld [vmem:[#allocation13 + $0x34] sm:$0xf]
        %v2134 = vld [vmem:[#allocation13 + $0x38] sm:$0xf]
        %v2135 = vld [vmem:[#allocation13 + $0x3c] sm:$0xf]
        %v2136 = vld [vmem:[%s8] sm:$0x1]
        %v2138 = vlaneseq
        %v2139 = vshrl.u32 %v2138, 7
        %v2140 = vsub.s32 0, %v2139
        %v2141 = vrot.slane %v2136, %v2140
        %v2159 = vunpack.c.l.b16 %v2120
        %v2160 = vunpack.c.l.b16 %v2121
        %v2161 = vunpack.c.l.b16 %v2122
        %v2162 = vunpack.c.l.b16 %v2123
        %v2163 = vunpack.c.l.b16 %v2124
        %v2164 = vunpack.c.l.b16 %v2125
        %v2165 = vunpack.c.l.b16 %v2126
        %v2166 = vunpack.c.l.b16 %v2127
        %v2167 = vunpack.c.l.b16 %v2128
        %v2168 = vunpack.c.l.b16 %v2129
        %v2169 = vunpack.c.l.b16 %v2130
        %v2170 = vunpack.c.l.b16 %v2131
        %v2171 = vunpack.c.l.b16 %v2132
        %v2172 = vunpack.c.l.b16 %v2133
        %v2173 = vunpack.c.l.b16 %v2134
        %v2174 = vunpack.c.l.b16 %v2135
        %v2175 = vpack.c.b16 %v2160, %v2159
        %v2176 = vpack.c.b16 %v2162, %v2161
        %v2177 = vpack.c.b16 %v2164, %v2163
        %v2178 = vpack.c.b16 %v2166, %v2165
        %v2179 = vpack.c.b16 %v2168, %v2167
        %v2180 = vpack.c.b16 %v2170, %v2169
        %v2181 = vpack.c.b16 %v2172, %v2171
        %v2182 = vpack.c.b16 %v2174, %v2173
        %2191 = vmatprep.subr.bf16.mxu0 0
        %2192 = vmatpush1.bf16.msra.mxu0 %v2175
        %2193 = vmatprep.subr.bf16.mxu0 0
        %2194 = vmatpush1.bf16.msra.mxu0 %v2176
        %2195 = vmatprep.subr.bf16.mxu0 0
        %2196 = vmatpush1.bf16.msra.mxu0 %v2177
        %2197 = vmatprep.subr.bf16.mxu0 0
        %2198 = vmatpush1.bf16.msra.mxu0 %v2178
        %2199 = vmatprep.subr.bf16.mxu0 0
        %2200 = vmatpush1.bf16.msra.mxu0 %v2179
        %2201 = vmatprep.subr.bf16.mxu0 0
        %2202 = vmatpush1.bf16.msra.mxu0 %v2180
        %2203 = vmatprep.subr.bf16.mxu0 0
        %2204 = vmatpush1.bf16.msra.mxu0 %v2181
        %2205 = vmatprep.subr.bf16.mxu0 0
        %2206 = vmatpush1.bf16.msra.mxu0 %v2182
        %2207 = vmatprep.subr.bf16.mxu0 0
        %2208 = vmatpush1.bf16.msra.mxu0 0
        %2209 = vmatprep.subr.bf16.mxu0 0
        %2210 = vmatpush1.bf16.msra.mxu0 0
        %2211 = vmatprep.subr.bf16.mxu0 0
        %2212 = vmatpush1.bf16.msra.mxu0 0
        %2213 = vmatprep.subr.bf16.mxu0 0
        %2214 = vmatpush1.bf16.msra.mxu0 0
        %2215 = vmatprep.subr.bf16.mxu0 0
        %2216 = vmatpush1.bf16.msra.mxu0 0
        %2217 = vmatprep.subr.bf16.mxu0 0
        %2218 = vmatpush1.bf16.msra.mxu0 0
        %2219 = vmatprep.subr.bf16.mxu0 0
        %2220 = vmatpush1.bf16.msra.mxu0 0
        %2221 = vmatprep.subr.bf16.mxu0 0
        %2222 = vmatpush1.bf16.msra.mxu0 0
        %2223 = vmatprep.mubr.bf16.mxu0 0
        %2224 = vmatmul.mubr.bf16.gmra.mrb[0].mxu0 %v1944
        %v2225 = vpop.f32.mrb[0].mxu0
        %v2226 = vadd.f32 %v2141, %v2225
        %v2227 = vpop.f32.mrb[0].mxu0
        %v2228 = vpop.f32.mrb[0].mxu0
        %v2229 = vadd.f32 %v2141, %v2228
        %v2230 = vpop.f32.mrb[0].mxu0
        %2231 = vmatprep.mubr.bf16.mxu0 0
        %2232 = vmatmul.mubr.bf16.gmra.mrb[0].mxu0 %v1945
        %v2233 = vpop.f32.mrb[0].mxu0
        %v2234 = vadd.f32 %v2141, %v2233
        %v2235 = vpop.f32.mrb[0].mxu0
        %v2236 = vpop.f32.mrb[0].mxu0
        %v2237 = vadd.f32 %v2141, %v2236
        %v2238 = vpop.f32.mrb[0].mxu0
        %2239 = vmatprep.mubr.bf16.mxu0 0
        %2240 = vmatmul.mubr.bf16.gmra.mrb[0].mxu0 %v1946
        %v2241 = vpop.f32.mrb[0].mxu0
        %v2242 = vadd.f32 %v2141, %v2241
        %v2243 = vpop.f32.mrb[0].mxu0
        %v2244 = vpop.f32.mrb[0].mxu0
        %v2245 = vadd.f32 %v2141, %v2244
        %v2246 = vpop.f32.mrb[0].mxu0
        %2247 = vmatprep.mubr.bf16.mxu0 0
        %2248 = vmatmul.mubr.bf16.gmra.mrb[0].mxu0 %v1947
        %v2249 = vpop.f32.mrb[0].mxu0
        %v2250 = vadd.f32 %v2141, %v2249
        %v2251 = vpop.f32.mrb[0].mxu0
        %v2252 = vpop.f32.mrb[0].mxu0
        %v2253 = vadd.f32 %v2141, %v2252
        %v2254 = vpop.f32.mrb[0].mxu0
        %2255 = vmatprep.mubr.bf16.mxu0 0
        %2256 = vmatmul.mubr.bf16.gmra.mrb[0].mxu0 %v1948
        %v2257 = vpop.f32.mrb[0].mxu0
        %v2258 = vadd.f32 %v2141, %v2257
        %v2259 = vpop.f32.mrb[0].mxu0
        %v2260 = vpop.f32.mrb[0].mxu0
        %v2261 = vadd.f32 %v2141, %v2260
        %v2262 = vpop.f32.mrb[0].mxu0
        %2263 = vmatprep.mubr.bf16.mxu0 0
        %2264 = vmatmul.mubr.bf16.gmra.mrb[0].mxu0 %v1949
        %v2265 = vpop.f32.mrb[0].mxu0
        %v2266 = vadd.f32 %v2141, %v2265
        %v2267 = vpop.f32.mrb[0].mxu0
        %v2268 = vpop.f32.mrb[0].mxu0
        %v2269 = vadd.f32 %v2141, %v2268
        %v2270 = vpop.f32.mrb[0].mxu0
        %2271 = vmatprep.mubr.bf16.mxu0 0
        %2272 = vmatmul.mubr.bf16.gmra.mrb[0].mxu0 %v1950
        %v2273 = vpop.f32.mrb[0].mxu0
        %v2274 = vadd.f32 %v2141, %v2273
        %v2275 = vpop.f32.mrb[0].mxu0
        %v2276 = vpop.f32.mrb[0].mxu0
        %v2277 = vadd.f32 %v2141, %v2276
        %v2278 = vpop.f32.mrb[0].mxu0
        %2279 = vmatprep.mubr.bf16.mxu0 0
        %2280 = vmatmul.mubr.bf16.gmra.mrb[0].mxu0 %v1951
        %v2281 = vpop.f32.mrb[0].mxu0
        %v2282 = vadd.f32 %v2141, %v2281
        %v2283 = vpop.f32.mrb[0].mxu0
        %v2284 = vpop.f32.mrb[0].mxu0
        %v2285 = vadd.f32 %v2141, %v2284
        %v2286 = vpop.f32.mrb[0].mxu0
        %2287 = vdwg.mxu0
        %v2288 = vld [vmem:[%s546] sm:$0xff]
        %v2289 = vld [vmem:[%s546 + $0x8] sm:$0xff]
        %v2290 = vld [vmem:[%s546 + $0x10] sm:$0xff]
        %v2291 = vld [vmem:[%s546 + $0x18] sm:$0xff]
        %v2292 = vld [vmem:[%s546 + $0x20] sm:$0xff]
        %v2293 = vld [vmem:[%s546 + $0x28] sm:$0xff]
        %v2294 = vld [vmem:[%s546 + $0x30] sm:$0xff]
        %v2295 = vld [vmem:[%s546 + $0x38] sm:$0xff]
        %v2296 = vld [vmem:[%s546 + $0x40] sm:$0xff]
        %v2297 = vld [vmem:[%s546 + $0x48] sm:$0xff]
        %v2298 = vld [vmem:[%s546 + $0x50] sm:$0xff]
        %v2299 = vld [vmem:[%s546 + $0x58] sm:$0xff]
        %v2300 = vld [vmem:[%s546 + $0x60] sm:$0xff]
        %v2301 = vld [vmem:[%s546 + $0x68] sm:$0xff]
        %v2302 = vld [vmem:[%s546 + $0x70] sm:$0xff]
        %v2303 = vld [vmem:[%s546 + $0x78] sm:$0xff]
        %v2304 = vmul.f32 %v2226, 1.442695
        %v2305 = vpow.pop %v2304
        %v2306 = vmul.f32 %v2229, 1.442695
        %v2307 = vpow.pop %v2306
        %v2308 = vmul.f32 %v2234, 1.442695
        %v2309 = vpow.pop %v2308
        %v2310 = vmul.f32 %v2237, 1.442695
        %v2311 = vpow.pop %v2310
        %v2312 = vmul.f32 %v2242, 1.442695
        %v2313 = vpow.pop %v2312
        %v2314 = vmul.f32 %v2245, 1.442695
        %v2315 = vpow.pop %v2314
        %v2316 = vmul.f32 %v2250, 1.442695
        %v2317 = vpow.pop %v2316
        %v2318 = vmul.f32 %v2253, 1.442695
        %v2319 = vpow.pop %v2318
        %v2320 = vmul.f32 %v2258, 1.442695
        %v2321 = vpow.pop %v2320
        %v2322 = vmul.f32 %v2261, 1.442695
        %v2323 = vpow.pop %v2322
        %v2324 = vmul.f32 %v2266, 1.442695
        %v2325 = vpow.pop %v2324
        %v2326 = vmul.f32 %v2269, 1.442695
        %v2327 = vpow.pop %v2326
        %v2328 = vmul.f32 %v2274, 1.442695
        %v2329 = vpow.pop %v2328
        %v2330 = vmul.f32 %v2277, 1.442695
        %v2331 = vpow.pop %v2330
        %v2332 = vmul.f32 %v2282, 1.442695
        %v2333 = vpow.pop %v2332
        %v2334 = vmul.f32 %v2285, 1.442695
        %v2335 = vpow.pop %v2334
        %v2336 = vmul.f32 %v2288, %v2305
        %v2337 = vmul.f32 %v2289, %v2307
        %v2338 = vmul.f32 %v2290, %v2309
        %v2339 = vmul.f32 %v2291, %v2311
        %v2340 = vmul.f32 %v2292, %v2313
        %v2341 = vmul.f32 %v2293, %v2315
        %v2342 = vmul.f32 %v2294, %v2317
        %v2343 = vmul.f32 %v2295, %v2319
        %v2344 = vmul.f32 %v2296, %v2321
        %v2345 = vmul.f32 %v2297, %v2323
        %v2346 = vmul.f32 %v2298, %v2325
        %v2347 = vmul.f32 %v2299, %v2327
        %v2348 = vmul.f32 %v2300, %v2329
        %v2349 = vmul.f32 %v2301, %v2331
        %v2350 = vmul.f32 %v2302, %v2333
        %v2351 = vmul.f32 %v2303, %v2335
        %v2352 = vadd.f32 %v2336, %v2058
        %v2353 = vadd.f32 %v2337, %v2061
        %v2354 = vadd.f32 %v2338, %v2066
        %v2355 = vadd.f32 %v2339, %v2069
        %v2356 = vadd.f32 %v2340, %v2074
        %v2357 = vadd.f32 %v2341, %v2077
        %v2358 = vadd.f32 %v2342, %v2082
        %v2359 = vadd.f32 %v2343, %v2085
        %v2360 = vadd.f32 %v2344, %v2090
        %v2361 = vadd.f32 %v2345, %v2093
        %v2362 = vadd.f32 %v2346, %v2098
        %v2363 = vadd.f32 %v2347, %v2101
        %v2364 = vadd.f32 %v2348, %v2106
        %v2365 = vadd.f32 %v2349, %v2109
        %v2366 = vadd.f32 %v2350, %v2114
        %v2367 = vadd.f32 %v2351, %v2117
        %v2368 = vpack.c.bf16 %v2353, %v2352
        %v2369 = vpack.c.bf16 %v2355, %v2354
        %v2370 = vpack.c.bf16 %v2357, %v2356
        %v2371 = vpack.c.bf16 %v2359, %v2358
        %v2372 = vpack.c.bf16 %v2361, %v2360
        %v2373 = vpack.c.bf16 %v2363, %v2362
        %v2374 = vpack.c.bf16 %v2365, %v2364
        %v2375 = vpack.c.bf16 %v2367, %v2366
        %v2376 = vld [vmem:[#allocation14] sm:$0xf]
        %v2377 = vld [vmem:[#allocation14 + $0x4] sm:$0xf]
        %v2378 = vld [vmem:[#allocation14 + $0x8] sm:$0xf]
        %v2379 = vld [vmem:[#allocation14 + $0xc] sm:$0xf]
        %v2380 = vld [vmem:[#allocation14 + $0x10] sm:$0xf]
        %v2381 = vld [vmem:[#allocation14 + $0x14] sm:$0xf]
        %v2382 = vld [vmem:[#allocation14 + $0x18] sm:$0xf]
        %v2383 = vld [vmem:[#allocation14 + $0x1c] sm:$0xf]
        %v2384 = vld [vmem:[#allocation14 + $0x20] sm:$0xf]
        %v2385 = vld [vmem:[#allocation14 + $0x24] sm:$0xf]
        %v2386 = vld [vmem:[#allocation14 + $0x28] sm:$0xf]
        %v2387 = vld [vmem:[#allocation14 + $0x2c] sm:$0xf]
        %v2388 = vld [vmem:[#allocation14 + $0x30] sm:$0xf]
        %v2389 = vld [vmem:[#allocation14 + $0x34] sm:$0xf]
        %v2390 = vld [vmem:[#allocation14 + $0x38] sm:$0xf]
        %v2391 = vld [vmem:[#allocation14 + $0x3c] sm:$0xf]
        %v2392 = vld [vmem:[%s537] sm:$0xff]
        %v2393 = vld [vmem:[%s537 + $0x8] sm:$0xff]
        %v2394 = vld [vmem:[%s537 + $0x10] sm:$0xff]
        %v2395 = vld [vmem:[%s537 + $0x18] sm:$0xff]
        %v2396 = vld [vmem:[%s537 + $0x20] sm:$0xff]
        %v2397 = vld [vmem:[%s537 + $0x28] sm:$0xff]
        %v2398 = vld [vmem:[%s537 + $0x30] sm:$0xff]
        %v2399 = vld [vmem:[%s537 + $0x38] sm:$0xff]
        %v2400 = vld [vmem:[%s537 + $0x40] sm:$0xff]
        %v2401 = vld [vmem:[%s537 + $0x48] sm:$0xff]
        %v2402 = vld [vmem:[%s537 + $0x50] sm:$0xff]
        %v2403 = vld [vmem:[%s537 + $0x58] sm:$0xff]
        %v2404 = vld [vmem:[%s537 + $0x60] sm:$0xff]
        %v2405 = vld [vmem:[%s537 + $0x68] sm:$0xff]
        %v2406 = vld [vmem:[%s537 + $0x70] sm:$0xff]
        %v2407 = vld [vmem:[%s537 + $0x78] sm:$0xff]
        %v2424 = vunpack.c.l.b16 %v2376
        %v2425 = vunpack.c.l.b16 %v2377
        %v2426 = vunpack.c.l.b16 %v2378
        %v2427 = vunpack.c.l.b16 %v2379
        %v2428 = vunpack.c.l.b16 %v2380
        %v2429 = vunpack.c.l.b16 %v2381
        %v2430 = vunpack.c.l.b16 %v2382
        %v2431 = vunpack.c.l.b16 %v2383
        %v2432 = vunpack.c.l.b16 %v2384
        %v2433 = vunpack.c.l.b16 %v2385
        %v2434 = vunpack.c.l.b16 %v2386
        %v2435 = vunpack.c.l.b16 %v2387
        %v2436 = vunpack.c.l.b16 %v2388
        %v2437 = vunpack.c.l.b16 %v2389
        %v2438 = vunpack.c.l.b16 %v2390
        %v2439 = vunpack.c.l.b16 %v2391
        %v2440 = vpack.c.b16 %v2425, %v2424
        %v2441 = vpack.c.b16 %v2427, %v2426
        %v2442 = vpack.c.b16 %v2429, %v2428
        %v2443 = vpack.c.b16 %v2431, %v2430
        %v2444 = vpack.c.b16 %v2433, %v2432
        %v2445 = vpack.c.b16 %v2435, %v2434
        %v2446 = vpack.c.b16 %v2437, %v2436
        %v2447 = vpack.c.b16 %v2439, %v2438
        %2456 = vmatprep.subr.bf16.mxu0 0
        %2457 = vmatpush1.bf16.msra.mxu0 %v2440
        %2458 = vmatprep.subr.bf16.mxu0 0
        %2459 = vmatpush1.bf16.msra.mxu0 %v2441
        %2460 = vmatprep.subr.bf16.mxu0 0
        %2461 = vmatpush1.bf16.msra.mxu0 %v2442
        %2462 = vmatprep.subr.bf16.mxu0 0
        %2463 = vmatpush1.bf16.msra.mxu0 %v2443
        %2464 = vmatprep.subr.bf16.mxu0 0
        %2465 = vmatpush1.bf16.msra.mxu0 %v2444
        %2466 = vmatprep.subr.bf16.mxu0 0
        %2467 = vmatpush1.bf16.msra.mxu0 %v2445
        %2468 = vmatprep.subr.bf16.mxu0 0
        %2469 = vmatpush1.bf16.msra.mxu0 %v2446
        %2470 = vmatprep.subr.bf16.mxu0 0
        %2471 = vmatpush1.bf16.msra.mxu0 %v2447
        %2472 = vmatprep.subr.bf16.mxu0 0
        %2473 = vmatpush1.bf16.msra.mxu0 0
        %2474 = vmatprep.subr.bf16.mxu0 0
        %2475 = vmatpush1.bf16.msra.mxu0 0
        %2476 = vmatprep.subr.bf16.mxu0 0
        %2477 = vmatpush1.bf16.msra.mxu0 0
        %2478 = vmatprep.subr.bf16.mxu0 0
        %2479 = vmatpush1.bf16.msra.mxu0 0
        %2480 = vmatprep.subr.bf16.mxu0 0
        %2481 = vmatpush1.bf16.msra.mxu0 0
        %2482 = vmatprep.subr.bf16.mxu0 0
        %2483 = vmatpush1.bf16.msra.mxu0 0
        %2484 = vmatprep.subr.bf16.mxu0 0
        %2485 = vmatpush1.bf16.msra.mxu0 0
        %2486 = vmatprep.subr.bf16.mxu0 0
        %2487 = vmatpush1.bf16.msra.mxu0 0
        %2488 = vmatprep.mubr.bf16.mxu0 0
        %2489 = vmatmul.mubr.bf16.gmra.mrb[0].mxu0 %v2368
        %v2490 = vpop.f32.mrb[0].mxu0
        %v2491 = vadd.f32 %v2392, %v2490
        %v2492 = vpop.f32.mrb[0].mxu0
        %v2493 = vpop.f32.mrb[0].mxu0
        %v2494 = vadd.f32 %v2393, %v2493
        %v2495 = vpop.f32.mrb[0].mxu0
        %2496 = vmatprep.mubr.bf16.mxu0 0
        %2497 = vmatmul.mubr.bf16.gmra.mrb[0].mxu0 %v2369
        %v2498 = vpop.f32.mrb[0].mxu0
        %v2499 = vadd.f32 %v2394, %v2498
        %v2500 = vpop.f32.mrb[0].mxu0
        %v2501 = vpop.f32.mrb[0].mxu0
        %v2502 = vadd.f32 %v2395, %v2501
        %v2503 = vpop.f32.mrb[0].mxu0
        %2504 = vmatprep.mubr.bf16.mxu0 0
        %2505 = vmatmul.mubr.bf16.gmra.mrb[0].mxu0 %v2370
        %v2506 = vpop.f32.mrb[0].mxu0
        %v2507 = vadd.f32 %v2396, %v2506
        %v2508 = vpop.f32.mrb[0].mxu0
        %v2509 = vpop.f32.mrb[0].mxu0
        %v2510 = vadd.f32 %v2397, %v2509
        %v2511 = vpop.f32.mrb[0].mxu0
        %2512 = vmatprep.mubr.bf16.mxu0 0
        %2513 = vmatmul.mubr.bf16.gmra.mrb[0].mxu0 %v2371
        %v2514 = vpop.f32.mrb[0].mxu0
        %v2515 = vadd.f32 %v2398, %v2514
        %v2516 = vpop.f32.mrb[0].mxu0
        %v2517 = vpop.f32.mrb[0].mxu0
        %v2518 = vadd.f32 %v2399, %v2517
        %v2519 = vpop.f32.mrb[0].mxu0
        %2520 = vmatprep.mubr.bf16.mxu0 0
        %2521 = vmatmul.mubr.bf16.gmra.mrb[0].mxu0 %v2372
        %v2522 = vpop.f32.mrb[0].mxu0
        %v2523 = vadd.f32 %v2400, %v2522
        %v2524 = vpop.f32.mrb[0].mxu0
        %v2525 = vpop.f32.mrb[0].mxu0
        %v2526 = vadd.f32 %v2401, %v2525
        %v2527 = vpop.f32.mrb[0].mxu0
        %2528 = vmatprep.mubr.bf16.mxu0 0
        %2529 = vmatmul.mubr.bf16.gmra.mrb[0].mxu0 %v2373
        %v2530 = vpop.f32.mrb[0].mxu0
        %v2531 = vadd.f32 %v2402, %v2530
        %v2532 = vpop.f32.mrb[0].mxu0
        %v2533 = vpop.f32.mrb[0].mxu0
        %v2534 = vadd.f32 %v2403, %v2533
        %v2535 = vpop.f32.mrb[0].mxu0
        %2536 = vmatprep.mubr.bf16.mxu0 0
        %2537 = vmatmul.mubr.bf16.gmra.mrb[0].mxu0 %v2374
        %v2538 = vpop.f32.mrb[0].mxu0
        %v2539 = vadd.f32 %v2404, %v2538
        %v2540 = vpop.f32.mrb[0].mxu0
        %v2541 = vpop.f32.mrb[0].mxu0
        %v2542 = vadd.f32 %v2405, %v2541
        %v2543 = vpop.f32.mrb[0].mxu0
        %2544 = vmatprep.mubr.bf16.mxu0 0
        %2545 = vmatmul.mubr.bf16.gmra.mrb[0].mxu0 %v2375
        %v2546 = vpop.f32.mrb[0].mxu0
        %v2547 = vadd.f32 %v2406, %v2546
        %v2548 = vpop.f32.mrb[0].mxu0
        %v2549 = vpop.f32.mrb[0].mxu0
        %v2550 = vadd.f32 %v2407, %v2549
        %v2551 = vpop.f32.mrb[0].mxu0
        %2552 = vdwg.mxu0
        %v2553 = vmax.f32 %v2491, 0.0
        %v2554 = vmax.f32 %v2494, 0.0
        %v2555 = vmax.f32 %v2499, 0.0
        %v2556 = vmax.f32 %v2502, 0.0
        %v2557 = vmax.f32 %v2507, 0.0
        %v2558 = vmax.f32 %v2510, 0.0
        %v2559 = vmax.f32 %v2515, 0.0
        %v2560 = vmax.f32 %v2518, 0.0
        %v2561 = vmax.f32 %v2523, 0.0
        %v2562 = vmax.f32 %v2526, 0.0
        %v2563 = vmax.f32 %v2531, 0.0
        %v2564 = vmax.f32 %v2534, 0.0
        %v2565 = vmax.f32 %v2539, 0.0
        %v2566 = vmax.f32 %v2542, 0.0
        %v2567 = vmax.f32 %v2547, 0.0
        %v2568 = vmax.f32 %v2550, 0.0
        %v2569 = vpack.c.bf16 %v2554, %v2553
        %v2570 = vpack.c.bf16 %v2556, %v2555
        %v2571 = vpack.c.bf16 %v2558, %v2557
        %v2572 = vpack.c.bf16 %v2560, %v2559
        %v2573 = vpack.c.bf16 %v2562, %v2561
        %v2574 = vpack.c.bf16 %v2564, %v2563
        %v2575 = vpack.c.bf16 %v2566, %v2565
        %v2576 = vpack.c.bf16 %v2568, %v2567
        %v2577 = vld [vmem:[#allocation16] sm:$0xff]
        %v2578 = vld [vmem:[#allocation16 + $0x8] sm:$0xff]
        %v2579 = vld [vmem:[#allocation16 + $0x10] sm:$0xff]
        %v2580 = vld [vmem:[#allocation16 + $0x18] sm:$0xff]
        %v2581 = vld [vmem:[#allocation16 + $0x20] sm:$0xff]
        %v2582 = vld [vmem:[#allocation16 + $0x28] sm:$0xff]
        %v2583 = vld [vmem:[#allocation16 + $0x30] sm:$0xff]
        %v2584 = vld [vmem:[#allocation16 + $0x38] sm:$0xff]
        %v2585 = vld [vmem:[#allocation16 + $0x40] sm:$0xff]
        %v2586 = vld [vmem:[#allocation16 + $0x48] sm:$0xff]
        %v2587 = vld [vmem:[#allocation16 + $0x50] sm:$0xff]
        %v2588 = vld [vmem:[#allocation16 + $0x58] sm:$0xff]
        %v2589 = vld [vmem:[#allocation16 + $0x60] sm:$0xff]
        %v2590 = vld [vmem:[#allocation16 + $0x68] sm:$0xff]
        %v2591 = vld [vmem:[#allocation16 + $0x70] sm:$0xff]
        %v2592 = vld [vmem:[#allocation16 + $0x78] sm:$0xff]
        %v2593 = vld [vmem:[#allocation16 + $0x80] sm:$0xff]
        %v2594 = vld [vmem:[#allocation16 + $0x88] sm:$0xff]
        %v2595 = vld [vmem:[#allocation16 + $0x90] sm:$0xff]
        %v2596 = vld [vmem:[#allocation16 + $0x98] sm:$0xff]
        %v2597 = vld [vmem:[#allocation16 + $0xa0] sm:$0xff]
        %v2598 = vld [vmem:[#allocation16 + $0xa8] sm:$0xff]
        %v2599 = vld [vmem:[#allocation16 + $0xb0] sm:$0xff]
        %v2600 = vld [vmem:[#allocation16 + $0xb8] sm:$0xff]
        %v2601 = vld [vmem:[#allocation16 + $0xc0] sm:$0xff]
        %v2602 = vld [vmem:[#allocation16 + $0xc8] sm:$0xff]
        %v2603 = vld [vmem:[#allocation16 + $0xd0] sm:$0xff]
        %v2604 = vld [vmem:[#allocation16 + $0xd8] sm:$0xff]
        %v2605 = vld [vmem:[#allocation16 + $0xe0] sm:$0xff]
        %v2606 = vld [vmem:[#allocation16 + $0xe8] sm:$0xff]
        %v2607 = vld [vmem:[#allocation16 + $0xf0] sm:$0xff]
        %v2608 = vld [vmem:[#allocation16 + $0xf8] sm:$0xff]
        %v2609 = vld [vmem:[#allocation16 + $0x100] sm:$0xff]
        %v2610 = vld [vmem:[#allocation16 + $0x108] sm:$0xff]
        %v2611 = vld [vmem:[#allocation16 + $0x110] sm:$0xff]
        %v2612 = vld [vmem:[#allocation16 + $0x118] sm:$0xff]
        %v2613 = vld [vmem:[#allocation16 + $0x120] sm:$0xff]
        %v2614 = vld [vmem:[#allocation16 + $0x128] sm:$0xff]
        %v2615 = vld [vmem:[#allocation16 + $0x130] sm:$0xff]
        %v2616 = vld [vmem:[#allocation16 + $0x138] sm:$0xff]
        %v2617 = vld [vmem:[#allocation16 + $0x140] sm:$0xff]
        %v2618 = vld [vmem:[#allocation16 + $0x148] sm:$0xff]
        %v2619 = vld [vmem:[#allocation16 + $0x150] sm:$0xff]
        %v2620 = vld [vmem:[#allocation16 + $0x158] sm:$0xff]
        %v2621 = vld [vmem:[#allocation16 + $0x160] sm:$0xff]
        %v2622 = vld [vmem:[#allocation16 + $0x168] sm:$0xff]
        %v2623 = vld [vmem:[#allocation16 + $0x170] sm:$0xff]
        %v2624 = vld [vmem:[#allocation16 + $0x178] sm:$0xff]
        %v2625 = vld [vmem:[#allocation16 + $0x180] sm:$0xff]
        %v2626 = vld [vmem:[#allocation16 + $0x188] sm:$0xff]
        %v2627 = vld [vmem:[#allocation16 + $0x190] sm:$0xff]
        %v2628 = vld [vmem:[#allocation16 + $0x198] sm:$0xff]
        %v2629 = vld [vmem:[#allocation16 + $0x1a0] sm:$0xff]
        %v2630 = vld [vmem:[#allocation16 + $0x1a8] sm:$0xff]
        %v2631 = vld [vmem:[#allocation16 + $0x1b0] sm:$0xff]
        %v2632 = vld [vmem:[#allocation16 + $0x1b8] sm:$0xff]
        %v2633 = vld [vmem:[#allocation16 + $0x1c0] sm:$0xff]
        %v2634 = vld [vmem:[#allocation16 + $0x1c8] sm:$0xff]
        %v2635 = vld [vmem:[#allocation16 + $0x1d0] sm:$0xff]
        %v2636 = vld [vmem:[#allocation16 + $0x1d8] sm:$0xff]
        %v2637 = vld [vmem:[#allocation16 + $0x1e0] sm:$0xff]
        %v2638 = vld [vmem:[#allocation16 + $0x1e8] sm:$0xff]
        %v2639 = vld [vmem:[#allocation16 + $0x1f0] sm:$0xff]
        %v2640 = vld [vmem:[#allocation16 + $0x1f8] sm:$0xff]
        %v2641 = vld [vmem:[%s11] sm:$0xff]
        %v2643 = vlaneseq
        %v2644 = vshrl.u32 %v2643, 7
        %v2645 = vsub.s32 0, %v2644
        %v2646 = vrot.slane %v2641, %v2645
        %v2647 = vlaneseq
        %v2648 = vshrl.u32 %v2647, 7
        %v2649 = vsub.s32 1, %v2648
        %v2650 = vrot.slane %v2641, %v2649
        %v2651 = vlaneseq
        %v2652 = vshrl.u32 %v2651, 7
        %v2653 = vsub.s32 2, %v2652
        %v2654 = vrot.slane %v2641, %v2653
        %v2655 = vlaneseq
        %v2656 = vshrl.u32 %v2655, 7
        %v2657 = vsub.s32 3, %v2656
        %v2658 = vrot.slane %v2641, %v2657
        %v2659 = vlaneseq
        %v2660 = vshrl.u32 %v2659, 7
        %v2661 = vsub.s32 4, %v2660
        %v2662 = vrot.slane %v2641, %v2661
        %v2663 = vlaneseq
        %v2664 = vshrl.u32 %v2663, 7
        %v2665 = vsub.s32 5, %v2664
        %v2666 = vrot.slane %v2641, %v2665
        %v2667 = vlaneseq
        %v2668 = vshrl.u32 %v2667, 7
        %v2669 = vsub.s32 6, %v2668
        %v2670 = vrot.slane %v2641, %v2669
        %v2671 = vlaneseq
        %v2672 = vshrl.u32 %v2671, 7
        %v2673 = vsub.s32 7, %v2672
        %v2674 = vrot.slane %v2641, %v2673
        %v2747 = vunpack.c.l.b16 %v2577
        %v2748 = vunpack.c.h.b16 %v2577
        %v2749 = vunpack.c.l.b16 %v2578
        %v2750 = vunpack.c.h.b16 %v2578
        %v2751 = vunpack.c.l.b16 %v2579
        %v2752 = vunpack.c.h.b16 %v2579
        %v2753 = vunpack.c.l.b16 %v2580
        %v2754 = vunpack.c.h.b16 %v2580
        %v2755 = vunpack.c.l.b16 %v2581
        %v2756 = vunpack.c.h.b16 %v2581
        %v2757 = vunpack.c.l.b16 %v2582
        %v2758 = vunpack.c.h.b16 %v2582
        %v2759 = vunpack.c.l.b16 %v2583
        %v2760 = vunpack.c.h.b16 %v2583
        %v2761 = vunpack.c.l.b16 %v2584
        %v2762 = vunpack.c.h.b16 %v2584
        %v2763 = vunpack.c.l.b16 %v2585
        %v2764 = vunpack.c.h.b16 %v2585
        %v2765 = vunpack.c.l.b16 %v2586
        %v2766 = vunpack.c.h.b16 %v2586
        %v2767 = vunpack.c.l.b16 %v2587
        %v2768 = vunpack.c.h.b16 %v2587
        %v2769 = vunpack.c.l.b16 %v2588
        %v2770 = vunpack.c.h.b16 %v2588
        %v2771 = vunpack.c.l.b16 %v2589
        %v2772 = vunpack.c.h.b16 %v2589
        %v2773 = vunpack.c.l.b16 %v2590
        %v2774 = vunpack.c.h.b16 %v2590
        %v2775 = vunpack.c.l.b16 %v2591
        %v2776 = vunpack.c.h.b16 %v2591
        %v2777 = vunpack.c.l.b16 %v2592
        %v2778 = vunpack.c.h.b16 %v2592
        %v2779 = vunpack.c.l.b16 %v2593
        %v2780 = vunpack.c.h.b16 %v2593
        %v2781 = vunpack.c.l.b16 %v2594
        %v2782 = vunpack.c.h.b16 %v2594
        %v2783 = vunpack.c.l.b16 %v2595
        %v2784 = vunpack.c.h.b16 %v2595
        %v2785 = vunpack.c.l.b16 %v2596
        %v2786 = vunpack.c.h.b16 %v2596
        %v2787 = vunpack.c.l.b16 %v2597
        %v2788 = vunpack.c.h.b16 %v2597
        %v2789 = vunpack.c.l.b16 %v2598
        %v2790 = vunpack.c.h.b16 %v2598
        %v2791 = vunpack.c.l.b16 %v2599
        %v2792 = vunpack.c.h.b16 %v2599
        %v2793 = vunpack.c.l.b16 %v2600
        %v2794 = vunpack.c.h.b16 %v2600
        %v2795 = vunpack.c.l.b16 %v2601
        %v2796 = vunpack.c.h.b16 %v2601
        %v2797 = vunpack.c.l.b16 %v2602
        %v2798 = vunpack.c.h.b16 %v2602
        %v2799 = vunpack.c.l.b16 %v2603
        %v2800 = vunpack.c.h.b16 %v2603
        %v2801 = vunpack.c.l.b16 %v2604
        %v2802 = vunpack.c.h.b16 %v2604
        %v2803 = vunpack.c.l.b16 %v2605
        %v2804 = vunpack.c.h.b16 %v2605
        %v2805 = vunpack.c.l.b16 %v2606
        %v2806 = vunpack.c.h.b16 %v2606
        %v2807 = vunpack.c.l.b16 %v2607
        %v2808 = vunpack.c.h.b16 %v2607
        %v2809 = vunpack.c.l.b16 %v2608
        %v2810 = vunpack.c.h.b16 %v2608
        %v2811 = vunpack.c.l.b16 %v2609
        %v2812 = vunpack.c.h.b16 %v2609
        %v2813 = vunpack.c.l.b16 %v2610
        %v2814 = vunpack.c.h.b16 %v2610
        %v2815 = vunpack.c.l.b16 %v2611
        %v2816 = vunpack.c.h.b16 %v2611
        %v2817 = vunpack.c.l.b16 %v2612
        %v2818 = vunpack.c.h.b16 %v2612
        %v2819 = vunpack.c.l.b16 %v2613
        %v2820 = vunpack.c.h.b16 %v2613
        %v2821 = vunpack.c.l.b16 %v2614
        %v2822 = vunpack.c.h.b16 %v2614
        %v2823 = vunpack.c.l.b16 %v2615
        %v2824 = vunpack.c.h.b16 %v2615
        %v2825 = vunpack.c.l.b16 %v2616
        %v2826 = vunpack.c.h.b16 %v2616
        %v2827 = vunpack.c.l.b16 %v2617
        %v2828 = vunpack.c.h.b16 %v2617
        %v2829 = vunpack.c.l.b16 %v2618
        %v2830 = vunpack.c.h.b16 %v2618
        %v2831 = vunpack.c.l.b16 %v2619
        %v2832 = vunpack.c.h.b16 %v2619
        %v2833 = vunpack.c.l.b16 %v2620
        %v2834 = vunpack.c.h.b16 %v2620
        %v2835 = vunpack.c.l.b16 %v2621
        %v2836 = vunpack.c.h.b16 %v2621
        %v2837 = vunpack.c.l.b16 %v2622
        %v2838 = vunpack.c.h.b16 %v2622
        %v2839 = vunpack.c.l.b16 %v2623
        %v2840 = vunpack.c.h.b16 %v2623
        %v2841 = vunpack.c.l.b16 %v2624
        %v2842 = vunpack.c.h.b16 %v2624
        %v2843 = vunpack.c.l.b16 %v2625
        %v2844 = vunpack.c.h.b16 %v2625
        %v2845 = vunpack.c.l.b16 %v2626
        %v2846 = vunpack.c.h.b16 %v2626
        %v2847 = vunpack.c.l.b16 %v2627
        %v2848 = vunpack.c.h.b16 %v2627
        %v2849 = vunpack.c.l.b16 %v2628
        %v2850 = vunpack.c.h.b16 %v2628
        %v2851 = vunpack.c.l.b16 %v2629
        %v2852 = vunpack.c.h.b16 %v2629
        %v2853 = vunpack.c.l.b16 %v2630
        %v2854 = vunpack.c.h.b16 %v2630
        %v2855 = vunpack.c.l.b16 %v2631
        %v2856 = vunpack.c.h.b16 %v2631
        %v2857 = vunpack.c.l.b16 %v2632
        %v2858 = vunpack.c.h.b16 %v2632
        %v2859 = vunpack.c.l.b16 %v2633
        %v2860 = vunpack.c.h.b16 %v2633
        %v2861 = vunpack.c.l.b16 %v2634
        %v2862 = vunpack.c.h.b16 %v2634
        %v2863 = vunpack.c.l.b16 %v2635
        %v2864 = vunpack.c.h.b16 %v2635
        %v2865 = vunpack.c.l.b16 %v2636
        %v2866 = vunpack.c.h.b16 %v2636
        %v2867 = vunpack.c.l.b16 %v2637
        %v2868 = vunpack.c.h.b16 %v2637
        %v2869 = vunpack.c.l.b16 %v2638
        %v2870 = vunpack.c.h.b16 %v2638
        %v2871 = vunpack.c.l.b16 %v2639
        %v2872 = vunpack.c.h.b16 %v2639
        %v2873 = vunpack.c.l.b16 %v2640
        %v2874 = vunpack.c.h.b16 %v2640
        %v2875 = vpack.c.b16 %v2755, %v2747
        %v2876 = vpack.c.b16 %v2756, %v2748
        %v2877 = vpack.c.b16 %v2757, %v2749
        %v2878 = vpack.c.b16 %v2758, %v2750
        %v2879 = vpack.c.b16 %v2759, %v2751
        %v2880 = vpack.c.b16 %v2760, %v2752
        %v2881 = vpack.c.b16 %v2761, %v2753
        %v2882 = vpack.c.b16 %v2762, %v2754
        %v2883 = vpack.c.b16 %v2771, %v2763
        %v2884 = vpack.c.b16 %v2772, %v2764
        %v2885 = vpack.c.b16 %v2773, %v2765
        %v2886 = vpack.c.b16 %v2774, %v2766
        %v2887 = vpack.c.b16 %v2775, %v2767
        %v2888 = vpack.c.b16 %v2776, %v2768
        %v2889 = vpack.c.b16 %v2777, %v2769
        %v2890 = vpack.c.b16 %v2778, %v2770
        %v2891 = vpack.c.b16 %v2787, %v2779
        %v2892 = vpack.c.b16 %v2788, %v2780
        %v2893 = vpack.c.b16 %v2789, %v2781
        %v2894 = vpack.c.b16 %v2790, %v2782
        %v2895 = vpack.c.b16 %v2791, %v2783
        %v2896 = vpack.c.b16 %v2792, %v2784
        %v2897 = vpack.c.b16 %v2793, %v2785
        %v2898 = vpack.c.b16 %v2794, %v2786
        %v2899 = vpack.c.b16 %v2803, %v2795
        %v2900 = vpack.c.b16 %v2804, %v2796
        %v2901 = vpack.c.b16 %v2805, %v2797
        %v2902 = vpack.c.b16 %v2806, %v2798
        %v2903 = vpack.c.b16 %v2807, %v2799
        %v2904 = vpack.c.b16 %v2808, %v2800
        %v2905 = vpack.c.b16 %v2809, %v2801
        %v2906 = vpack.c.b16 %v2810, %v2802
        %v2907 = vpack.c.b16 %v2819, %v2811
        %v2908 = vpack.c.b16 %v2820, %v2812
        %v2909 = vpack.c.b16 %v2821, %v2813
        %v2910 = vpack.c.b16 %v2822, %v2814
        %v2911 = vpack.c.b16 %v2823, %v2815
        %v2912 = vpack.c.b16 %v2824, %v2816
        %v2913 = vpack.c.b16 %v2825, %v2817
        %v2914 = vpack.c.b16 %v2826, %v2818
        %v2915 = vpack.c.b16 %v2835, %v2827
        %v2916 = vpack.c.b16 %v2836, %v2828
        %v2917 = vpack.c.b16 %v2837, %v2829
        %v2918 = vpack.c.b16 %v2838, %v2830
        %v2919 = vpack.c.b16 %v2839, %v2831
        %v2920 = vpack.c.b16 %v2840, %v2832
        %v2921 = vpack.c.b16 %v2841, %v2833
        %v2922 = vpack.c.b16 %v2842, %v2834
        %v2923 = vpack.c.b16 %v2851, %v2843
        %v2924 = vpack.c.b16 %v2852, %v2844
        %v2925 = vpack.c.b16 %v2853, %v2845
        %v2926 = vpack.c.b16 %v2854, %v2846
        %v2927 = vpack.c.b16 %v2855, %v2847
        %v2928 = vpack.c.b16 %v2856, %v2848
        %v2929 = vpack.c.b16 %v2857, %v2849
        %v2930 = vpack.c.b16 %v2858, %v2850
        %v2931 = vpack.c.b16 %v2867, %v2859
        %v2932 = vpack.c.b16 %v2868, %v2860
        %v2933 = vpack.c.b16 %v2869, %v2861
        %v2934 = vpack.c.b16 %v2870, %v2862
        %v2935 = vpack.c.b16 %v2871, %v2863
        %v2936 = vpack.c.b16 %v2872, %v2864
        %v2937 = vpack.c.b16 %v2873, %v2865
        %v2938 = vpack.c.b16 %v2874, %v2866
        %3003 = vmatprep.subr.bf16.mxu0 %v2876
        %3004 = vmatpush1.bf16.msra.mxu0 %v2875
        %3005 = vmatprep.subr.bf16.mxu0 %v2884
        %3006 = vmatpush1.bf16.msra.mxu0 %v2883
        %3007 = vmatprep.subr.bf16.mxu0 %v2892
        %3008 = vmatpush1.bf16.msra.mxu0 %v2891
        %3009 = vmatprep.subr.bf16.mxu0 %v2900
        %3010 = vmatpush1.bf16.msra.mxu0 %v2899
        %3011 = vmatprep.subr.bf16.mxu0 %v2908
        %3012 = vmatpush1.bf16.msra.mxu0 %v2907
        %3013 = vmatprep.subr.bf16.mxu0 %v2916
        %3014 = vmatpush1.bf16.msra.mxu0 %v2915
        %3015 = vmatprep.subr.bf16.mxu0 %v2924
        %3016 = vmatpush1.bf16.msra.mxu0 %v2923
        %3017 = vmatprep.subr.bf16.mxu0 %v2932
        %3018 = vmatpush1.bf16.msra.mxu0 %v2931
        %3019 = vmatprep.subr.bf16.mxu0 0
        %3020 = vmatpush1.bf16.msra.mxu0 0
        %3021 = vmatprep.subr.bf16.mxu0 0
        %3022 = vmatpush1.bf16.msra.mxu0 0
        %3023 = vmatprep.subr.bf16.mxu0 0
        %3024 = vmatpush1.bf16.msra.mxu0 0
        %3025 = vmatprep.subr.bf16.mxu0 0
        %3026 = vmatpush1.bf16.msra.mxu0 0
        %3027 = vmatprep.subr.bf16.mxu0 0
        %3028 = vmatpush1.bf16.msra.mxu0 0
        %3029 = vmatprep.subr.bf16.mxu0 0
        %3030 = vmatpush1.bf16.msra.mxu0 0
        %3031 = vmatprep.subr.bf16.mxu0 0
        %3032 = vmatpush1.bf16.msra.mxu0 0
        %3033 = vmatprep.subr.bf16.mxu0 0
        %3034 = vmatpush1.bf16.msra.mxu0 0
        %3035 = vmatprep.mubr.bf16.mxu0 0
        %3036 = vmatmul.mubr.bf16.gmra.mrb[0].mxu0 %v2569
        %v3037 = vpop.f32.mrb[0].mxu0
        %v3038 = vadd.f32 %v2646, %v3037
        %v3039 = vpop.f32.mrb[0].mxu0
        %v3040 = vadd.f32 %v2650, %v3039
        %v3041 = vpop.f32.mrb[0].mxu0
        %v3042 = vadd.f32 %v2646, %v3041
        %v3043 = vpop.f32.mrb[0].mxu0
        %v3044 = vadd.f32 %v2650, %v3043
        %3045 = vmatprep.mubr.bf16.mxu0 0
        %3046 = vmatmul.mubr.bf16.gmra.mrb[0].mxu0 %v2570
        %v3047 = vpop.f32.mrb[0].mxu0
        %v3048 = vadd.f32 %v2646, %v3047
        %v3049 = vpop.f32.mrb[0].mxu0
        %v3050 = vadd.f32 %v2650, %v3049
        %v3051 = vpop.f32.mrb[0].mxu0
        %v3052 = vadd.f32 %v2646, %v3051
        %v3053 = vpop.f32.mrb[0].mxu0
        %v3054 = vadd.f32 %v2650, %v3053
        %3055 = vmatprep.mubr.bf16.mxu0 0
        %3056 = vmatmul.mubr.bf16.gmra.mrb[0].mxu0 %v2571
        %v3057 = vpop.f32.mrb[0].mxu0
        %v3058 = vadd.f32 %v2646, %v3057
        %v3059 = vpop.f32.mrb[0].mxu0
        %v3060 = vadd.f32 %v2650, %v3059
        %v3061 = vpop.f32.mrb[0].mxu0
        %v3062 = vadd.f32 %v2646, %v3061
        %v3063 = vpop.f32.mrb[0].mxu0
        %v3064 = vadd.f32 %v2650, %v3063
        %3065 = vmatprep.mubr.bf16.mxu0 0
        %3066 = vmatmul.mubr.bf16.gmra.mrb[0].mxu0 %v2572
        %v3067 = vpop.f32.mrb[0].mxu0
        %v3068 = vadd.f32 %v2646, %v3067
        %v3069 = vpop.f32.mrb[0].mxu0
        %v3070 = vadd.f32 %v2650, %v3069
        %v3071 = vpop.f32.mrb[0].mxu0
        %v3072 = vadd.f32 %v2646, %v3071
        %v3073 = vpop.f32.mrb[0].mxu0
        %v3074 = vadd.f32 %v2650, %v3073
        %3075 = vmatprep.mubr.bf16.mxu0 0
        %3076 = vmatmul.mubr.bf16.gmra.mrb[0].mxu0 %v2573
        %v3077 = vpop.f32.mrb[0].mxu0
        %v3078 = vadd.f32 %v2646, %v3077
        %v3079 = vpop.f32.mrb[0].mxu0
        %v3080 = vadd.f32 %v2650, %v3079
        %v3081 = vpop.f32.mrb[0].mxu0
        %v3082 = vadd.f32 %v2646, %v3081
        %v3083 = vpop.f32.mrb[0].mxu0
        %v3084 = vadd.f32 %v2650, %v3083
        %3085 = vmatprep.mubr.bf16.mxu0 0
        %3086 = vmatmul.mubr.bf16.gmra.mrb[0].mxu0 %v2574
        %v3087 = vpop.f32.mrb[0].mxu0
        %v3088 = vadd.f32 %v2646, %v3087
        %v3089 = vpop.f32.mrb[0].mxu0
        %v3090 = vadd.f32 %v2650, %v3089
        %v3091 = vpop.f32.mrb[0].mxu0
        %v3092 = vadd.f32 %v2646, %v3091
        %v3093 = vpop.f32.mrb[0].mxu0
        %v3094 = vadd.f32 %v2650, %v3093
        %3095 = vmatprep.mubr.bf16.mxu0 0
        %3096 = vmatmul.mubr.bf16.gmra.mrb[0].mxu0 %v2575
        %v3097 = vpop.f32.mrb[0].mxu0
        %v3098 = vadd.f32 %v2646, %v3097
        %v3099 = vpop.f32.mrb[0].mxu0
        %v3100 = vadd.f32 %v2650, %v3099
        %v3101 = vpop.f32.mrb[0].mxu0
        %v3102 = vadd.f32 %v2646, %v3101
        %v3103 = vpop.f32.mrb[0].mxu0
        %v3104 = vadd.f32 %v2650, %v3103
        %3105 = vmatprep.mubr.bf16.mxu0 0
        %3106 = vmatmul.mubr.bf16.gmra.mrb[0].mxu0 %v2576
        %v3107 = vpop.f32.mrb[0].mxu0
        %v3108 = vadd.f32 %v2646, %v3107
        %v3109 = vpop.f32.mrb[0].mxu0
        %v3110 = vadd.f32 %v2650, %v3109
        %v3111 = vpop.f32.mrb[0].mxu0
        %v3112 = vadd.f32 %v2646, %v3111
        %v3113 = vpop.f32.mrb[0].mxu0
        %v3114 = vadd.f32 %v2650, %v3113
        %3115 = vdwg.mxu0
        %3116 = vmatprep.subr.bf16.mxu0 %v2878
        %3117 = vmatpush1.bf16.msra.mxu0 %v2877
        %3118 = vmatprep.subr.bf16.mxu0 %v2886
        %3119 = vmatpush1.bf16.msra.mxu0 %v2885
        %3120 = vmatprep.subr.bf16.mxu0 %v2894
        %3121 = vmatpush1.bf16.msra.mxu0 %v2893
        %3122 = vmatprep.subr.bf16.mxu0 %v2902
        %3123 = vmatpush1.bf16.msra.mxu0 %v2901
        %3124 = vmatprep.subr.bf16.mxu0 %v2910
        %3125 = vmatpush1.bf16.msra.mxu0 %v2909
        %3126 = vmatprep.subr.bf16.mxu0 %v2918
        %3127 = vmatpush1.bf16.msra.mxu0 %v2917
        %3128 = vmatprep.subr.bf16.mxu0 %v2926
        %3129 = vmatpush1.bf16.msra.mxu0 %v2925
        %3130 = vmatprep.subr.bf16.mxu0 %v2934
        %3131 = vmatpush1.bf16.msra.mxu0 %v2933
        %3132 = vmatprep.subr.bf16.mxu0 0
        %3133 = vmatpush1.bf16.msra.mxu0 0
        %3134 = vmatprep.subr.bf16.mxu0 0
        %3135 = vmatpush1.bf16.msra.mxu0 0
        %3136 = vmatprep.subr.bf16.mxu0 0
        %3137 = vmatpush1.bf16.msra.mxu0 0
        %3138 = vmatprep.subr.bf16.mxu0 0
        %3139 = vmatpush1.bf16.msra.mxu0 0
        %3140 = vmatprep.subr.bf16.mxu0 0
        %3141 = vmatpush1.bf16.msra.mxu0 0
        %3142 = vmatprep.subr.bf16.mxu0 0
        %3143 = vmatpush1.bf16.msra.mxu0 0
        %3144 = vmatprep.subr.bf16.mxu0 0
        %3145 = vmatpush1.bf16.msra.mxu0 0
        %3146 = vmatprep.subr.bf16.mxu0 0
        %3147 = vmatpush1.bf16.msra.mxu0 0
        %3148 = vmatprep.mubr.bf16.mxu0 0
        %3149 = vmatmul.mubr.bf16.gmra.mrb[0].mxu0 %v2569
        %v3150 = vpop.f32.mrb[0].mxu0
        %v3151 = vadd.f32 %v2654, %v3150
        %v3152 = vpop.f32.mrb[0].mxu0
        %v3153 = vadd.f32 %v2658, %v3152
        %v3154 = vpop.f32.mrb[0].mxu0
        %v3155 = vadd.f32 %v2654, %v3154
        %v3156 = vpop.f32.mrb[0].mxu0
        %v3157 = vadd.f32 %v2658, %v3156
        %3158 = vmatprep.mubr.bf16.mxu0 0
        %3159 = vmatmul.mubr.bf16.gmra.mrb[0].mxu0 %v2570
        %v3160 = vpop.f32.mrb[0].mxu0
        %v3161 = vadd.f32 %v2654, %v3160
        %v3162 = vpop.f32.mrb[0].mxu0
        %v3163 = vadd.f32 %v2658, %v3162
        %v3164 = vpop.f32.mrb[0].mxu0
        %v3165 = vadd.f32 %v2654, %v3164
        %v3166 = vpop.f32.mrb[0].mxu0
        %v3167 = vadd.f32 %v2658, %v3166
        %3168 = vmatprep.mubr.bf16.mxu0 0
        %3169 = vmatmul.mubr.bf16.gmra.mrb[0].mxu0 %v2571
        %v3170 = vpop.f32.mrb[0].mxu0
        %v3171 = vadd.f32 %v2654, %v3170
        %v3172 = vpop.f32.mrb[0].mxu0
        %v3173 = vadd.f32 %v2658, %v3172
        %v3174 = vpop.f32.mrb[0].mxu0
        %v3175 = vadd.f32 %v2654, %v3174
        %v3176 = vpop.f32.mrb[0].mxu0
        %v3177 = vadd.f32 %v2658, %v3176
        %3178 = vmatprep.mubr.bf16.mxu0 0
        %3179 = vmatmul.mubr.bf16.gmra.mrb[0].mxu0 %v2572
        %v3180 = vpop.f32.mrb[0].mxu0
        %v3181 = vadd.f32 %v2654, %v3180
        %v3182 = vpop.f32.mrb[0].mxu0
        %v3183 = vadd.f32 %v2658, %v3182
        %v3184 = vpop.f32.mrb[0].mxu0
        %v3185 = vadd.f32 %v2654, %v3184
        %v3186 = vpop.f32.mrb[0].mxu0
        %v3187 = vadd.f32 %v2658, %v3186
        %3188 = vmatprep.mubr.bf16.mxu0 0
        %3189 = vmatmul.mubr.bf16.gmra.mrb[0].mxu0 %v2573
        %v3190 = vpop.f32.mrb[0].mxu0
        %v3191 = vadd.f32 %v2654, %v3190
        %v3192 = vpop.f32.mrb[0].mxu0
        %v3193 = vadd.f32 %v2658, %v3192
        %v3194 = vpop.f32.mrb[0].mxu0
        %v3195 = vadd.f32 %v2654, %v3194
        %v3196 = vpop.f32.mrb[0].mxu0
        %v3197 = vadd.f32 %v2658, %v3196
        %3198 = vmatprep.mubr.bf16.mxu0 0
        %3199 = vmatmul.mubr.bf16.gmra.mrb[0].mxu0 %v2574
        %v3200 = vpop.f32.mrb[0].mxu0
        %v3201 = vadd.f32 %v2654, %v3200
        %v3202 = vpop.f32.mrb[0].mxu0
        %v3203 = vadd.f32 %v2658, %v3202
        %v3204 = vpop.f32.mrb[0].mxu0
        %v3205 = vadd.f32 %v2654, %v3204
        %v3206 = vpop.f32.mrb[0].mxu0
        %v3207 = vadd.f32 %v2658, %v3206
        %3208 = vmatprep.mubr.bf16.mxu0 0
        %3209 = vmatmul.mubr.bf16.gmra.mrb[0].mxu0 %v2575
        %v3210 = vpop.f32.mrb[0].mxu0
        %v3211 = vadd.f32 %v2654, %v3210
        %v3212 = vpop.f32.mrb[0].mxu0
        %v3213 = vadd.f32 %v2658, %v3212
        %v3214 = vpop.f32.mrb[0].mxu0
        %v3215 = vadd.f32 %v2654, %v3214
        %v3216 = vpop.f32.mrb[0].mxu0
        %v3217 = vadd.f32 %v2658, %v3216
        %3218 = vmatprep.mubr.bf16.mxu0 0
        %3219 = vmatmul.mubr.bf16.gmra.mrb[0].mxu0 %v2576
        %v3220 = vpop.f32.mrb[0].mxu0
        %v3221 = vadd.f32 %v2654, %v3220
        %v3222 = vpop.f32.mrb[0].mxu0
        %v3223 = vadd.f32 %v2658, %v3222
        %v3224 = vpop.f32.mrb[0].mxu0
        %v3225 = vadd.f32 %v2654, %v3224
        %v3226 = vpop.f32.mrb[0].mxu0
        %v3227 = vadd.f32 %v2658, %v3226
        %3228 = vdwg.mxu0
        %3229 = vmatprep.subr.bf16.mxu0 %v2880
        %3230 = vmatpush1.bf16.msra.mxu0 %v2879
        %3231 = vmatprep.subr.bf16.mxu0 %v2888
        %3232 = vmatpush1.bf16.msra.mxu0 %v2887
        %3233 = vmatprep.subr.bf16.mxu0 %v2896
        %3234 = vmatpush1.bf16.msra.mxu0 %v2895
        %3235 = vmatprep.subr.bf16.mxu0 %v2904
        %3236 = vmatpush1.bf16.msra.mxu0 %v2903
        %3237 = vmatprep.subr.bf16.mxu0 %v2912
        %3238 = vmatpush1.bf16.msra.mxu0 %v2911
        %3239 = vmatprep.subr.bf16.mxu0 %v2920
        %3240 = vmatpush1.bf16.msra.mxu0 %v2919
        %3241 = vmatprep.subr.bf16.mxu0 %v2928
        %3242 = vmatpush1.bf16.msra.mxu0 %v2927
        %3243 = vmatprep.subr.bf16.mxu0 %v2936
        %3244 = vmatpush1.bf16.msra.mxu0 %v2935
        %3245 = vmatprep.subr.bf16.mxu0 0
        %3246 = vmatpush1.bf16.msra.mxu0 0
        %3247 = vmatprep.subr.bf16.mxu0 0
        %3248 = vmatpush1.bf16.msra.mxu0 0
        %3249 = vmatprep.subr.bf16.mxu0 0
        %3250 = vmatpush1.bf16.msra.mxu0 0
        %3251 = vmatprep.subr.bf16.mxu0 0
        %3252 = vmatpush1.bf16.msra.mxu0 0
        %3253 = vmatprep.subr.bf16.mxu0 0
        %3254 = vmatpush1.bf16.msra.mxu0 0
        %3255 = vmatprep.subr.bf16.mxu0 0
        %3256 = vmatpush1.bf16.msra.mxu0 0
        %3257 = vmatprep.subr.bf16.mxu0 0
        %3258 = vmatpush1.bf16.msra.mxu0 0
        %3259 = vmatprep.subr.bf16.mxu0 0
        %3260 = vmatpush1.bf16.msra.mxu0 0
        %3261 = vmatprep.mubr.bf16.mxu0 0
        %3262 = vmatmul.mubr.bf16.gmra.mrb[0].mxu0 %v2569
        %v3263 = vpop.f32.mrb[0].mxu0
        %v3264 = vadd.f32 %v2662, %v3263
        %v3265 = vpop.f32.mrb[0].mxu0
        %v3266 = vadd.f32 %v2666, %v3265
        %v3267 = vpop.f32.mrb[0].mxu0
        %v3268 = vadd.f32 %v2662, %v3267
        %v3269 = vpop.f32.mrb[0].mxu0
        %v3270 = vadd.f32 %v2666, %v3269
        %3271 = vmatprep.mubr.bf16.mxu0 0
        %3272 = vmatmul.mubr.bf16.gmra.mrb[0].mxu0 %v2570
        %v3273 = vpop.f32.mrb[0].mxu0
        %v3274 = vadd.f32 %v2662, %v3273
        %v3275 = vpop.f32.mrb[0].mxu0
        %v3276 = vadd.f32 %v2666, %v3275
        %v3277 = vpop.f32.mrb[0].mxu0
        %v3278 = vadd.f32 %v2662, %v3277
        %v3279 = vpop.f32.mrb[0].mxu0
        %v3280 = vadd.f32 %v2666, %v3279
        %3281 = vmatprep.mubr.bf16.mxu0 0
        %3282 = vmatmul.mubr.bf16.gmra.mrb[0].mxu0 %v2571
        %v3283 = vpop.f32.mrb[0].mxu0
        %v3284 = vadd.f32 %v2662, %v3283
        %v3285 = vpop.f32.mrb[0].mxu0
        %v3286 = vadd.f32 %v2666, %v3285
        %v3287 = vpop.f32.mrb[0].mxu0
        %v3288 = vadd.f32 %v2662, %v3287
        %v3289 = vpop.f32.mrb[0].mxu0
        %v3290 = vadd.f32 %v2666, %v3289
        %3291 = vmatprep.mubr.bf16.mxu0 0
        %3292 = vmatmul.mubr.bf16.gmra.mrb[0].mxu0 %v2572
        %v3293 = vpop.f32.mrb[0].mxu0
        %v3294 = vadd.f32 %v2662, %v3293
        %v3295 = vpop.f32.mrb[0].mxu0
        %v3296 = vadd.f32 %v2666, %v3295
        %v3297 = vpop.f32.mrb[0].mxu0
        %v3298 = vadd.f32 %v2662, %v3297
        %v3299 = vpop.f32.mrb[0].mxu0
        %v3300 = vadd.f32 %v2666, %v3299
        %3301 = vmatprep.mubr.bf16.mxu0 0
        %3302 = vmatmul.mubr.bf16.gmra.mrb[0].mxu0 %v2573
        %v3303 = vpop.f32.mrb[0].mxu0
        %v3304 = vadd.f32 %v2662, %v3303
        %v3305 = vpop.f32.mrb[0].mxu0
        %v3306 = vadd.f32 %v2666, %v3305
        %v3307 = vpop.f32.mrb[0].mxu0
        %v3308 = vadd.f32 %v2662, %v3307
        %v3309 = vpop.f32.mrb[0].mxu0
        %v3310 = vadd.f32 %v2666, %v3309
        %3311 = vmatprep.mubr.bf16.mxu0 0
        %3312 = vmatmul.mubr.bf16.gmra.mrb[0].mxu0 %v2574
        %v3313 = vpop.f32.mrb[0].mxu0
        %v3314 = vadd.f32 %v2662, %v3313
        %v3315 = vpop.f32.mrb[0].mxu0
        %v3316 = vadd.f32 %v2666, %v3315
        %v3317 = vpop.f32.mrb[0].mxu0
        %v3318 = vadd.f32 %v2662, %v3317
        %v3319 = vpop.f32.mrb[0].mxu0
        %v3320 = vadd.f32 %v2666, %v3319
        %3321 = vmatprep.mubr.bf16.mxu0 0
        %3322 = vmatmul.mubr.bf16.gmra.mrb[0].mxu0 %v2575
        %v3323 = vpop.f32.mrb[0].mxu0
        %v3324 = vadd.f32 %v2662, %v3323
        %v3325 = vpop.f32.mrb[0].mxu0
        %v3326 = vadd.f32 %v2666, %v3325
        %v3327 = vpop.f32.mrb[0].mxu0
        %v3328 = vadd.f32 %v2662, %v3327
        %v3329 = vpop.f32.mrb[0].mxu0
        %v3330 = vadd.f32 %v2666, %v3329
        %3331 = vmatprep.mubr.bf16.mxu0 0
        %3332 = vmatmul.mubr.bf16.gmra.mrb[0].mxu0 %v2576
        %v3333 = vpop.f32.mrb[0].mxu0
        %v3334 = vadd.f32 %v2662, %v3333
        %v3335 = vpop.f32.mrb[0].mxu0
        %v3336 = vadd.f32 %v2666, %v3335
        %v3337 = vpop.f32.mrb[0].mxu0
        %v3338 = vadd.f32 %v2662, %v3337
        %v3339 = vpop.f32.mrb[0].mxu0
        %v3340 = vadd.f32 %v2666, %v3339
        %3341 = vdwg.mxu0
        %3342 = vmatprep.subr.bf16.mxu0 %v2882
        %3343 = vmatpush1.bf16.msra.mxu0 %v2881
        %3344 = vmatprep.subr.bf16.mxu0 %v2890
        %3345 = vmatpush1.bf16.msra.mxu0 %v2889
        %3346 = vmatprep.subr.bf16.mxu0 %v2898
        %3347 = vmatpush1.bf16.msra.mxu0 %v2897
        %3348 = vmatprep.subr.bf16.mxu0 %v2906
        %3349 = vmatpush1.bf16.msra.mxu0 %v2905
        %3350 = vmatprep.subr.bf16.mxu0 %v2914
        %3351 = vmatpush1.bf16.msra.mxu0 %v2913
        %3352 = vmatprep.subr.bf16.mxu0 %v2922
        %3353 = vmatpush1.bf16.msra.mxu0 %v2921
        %3354 = vmatprep.subr.bf16.mxu0 %v2930
        %3355 = vmatpush1.bf16.msra.mxu0 %v2929
        %3356 = vmatprep.subr.bf16.mxu0 %v2938
        %3357 = vmatpush1.bf16.msra.mxu0 %v2937
        %3358 = vmatprep.subr.bf16.mxu0 0
        %3359 = vmatpush1.bf16.msra.mxu0 0
        %3360 = vmatprep.subr.bf16.mxu0 0
        %3361 = vmatpush1.bf16.msra.mxu0 0
        %3362 = vmatprep.subr.bf16.mxu0 0
        %3363 = vmatpush1.bf16.msra.mxu0 0
        %3364 = vmatprep.subr.bf16.mxu0 0
        %3365 = vmatpush1.bf16.msra.mxu0 0
        %3366 = vmatprep.subr.bf16.mxu0 0
        %3367 = vmatpush1.bf16.msra.mxu0 0
        %3368 = vmatprep.subr.bf16.mxu0 0
        %3369 = vmatpush1.bf16.msra.mxu0 0
        %3370 = vmatprep.subr.bf16.mxu0 0
        %3371 = vmatpush1.bf16.msra.mxu0 0
        %3372 = vmatprep.subr.bf16.mxu0 0
        %3373 = vmatpush1.bf16.msra.mxu0 0
        %3374 = vmatprep.mubr.bf16.mxu0 0
        %3375 = vmatmul.mubr.bf16.gmra.mrb[0].mxu0 %v2569
        %v3376 = vpop.f32.mrb[0].mxu0
        %v3377 = vadd.f32 %v2670, %v3376
        %v3378 = vpop.f32.mrb[0].mxu0
        %v3379 = vadd.f32 %v2674, %v3378
        %v3380 = vpop.f32.mrb[0].mxu0
        %v3381 = vadd.f32 %v2670, %v3380
        %v3382 = vpop.f32.mrb[0].mxu0
        %v3383 = vadd.f32 %v2674, %v3382
        %3384 = vmatprep.mubr.bf16.mxu0 0
        %3385 = vmatmul.mubr.bf16.gmra.mrb[0].mxu0 %v2570
        %v3386 = vpop.f32.mrb[0].mxu0
        %v3387 = vadd.f32 %v2670, %v3386
        %v3388 = vpop.f32.mrb[0].mxu0
        %v3389 = vadd.f32 %v2674, %v3388
        %v3390 = vpop.f32.mrb[0].mxu0
        %v3391 = vadd.f32 %v2670, %v3390
        %v3392 = vpop.f32.mrb[0].mxu0
        %v3393 = vadd.f32 %v2674, %v3392
        %3394 = vmatprep.mubr.bf16.mxu0 0
        %3395 = vmatmul.mubr.bf16.gmra.mrb[0].mxu0 %v2571
        %v3396 = vpop.f32.mrb[0].mxu0
        %v3397 = vadd.f32 %v2670, %v3396
        %v3398 = vpop.f32.mrb[0].mxu0
        %v3399 = vadd.f32 %v2674, %v3398
        %v3400 = vpop.f32.mrb[0].mxu0
        %v3401 = vadd.f32 %v2670, %v3400
        %v3402 = vpop.f32.mrb[0].mxu0
        %v3403 = vadd.f32 %v2674, %v3402
        %3404 = vmatprep.mubr.bf16.mxu0 0
        %3405 = vmatmul.mubr.bf16.gmra.mrb[0].mxu0 %v2572
        %v3406 = vpop.f32.mrb[0].mxu0
        %v3407 = vadd.f32 %v2670, %v3406
        %v3408 = vpop.f32.mrb[0].mxu0
        %v3409 = vadd.f32 %v2674, %v3408
        %v3410 = vpop.f32.mrb[0].mxu0
        %v3411 = vadd.f32 %v2670, %v3410
        %v3412 = vpop.f32.mrb[0].mxu0
        %v3413 = vadd.f32 %v2674, %v3412
        %3414 = vmatprep.mubr.bf16.mxu0 0
        %3415 = vmatmul.mubr.bf16.gmra.mrb[0].mxu0 %v2573
        %v3416 = vpop.f32.mrb[0].mxu0
        %v3417 = vadd.f32 %v2670, %v3416
        %v3418 = vpop.f32.mrb[0].mxu0
        %v3419 = vadd.f32 %v2674, %v3418
        %v3420 = vpop.f32.mrb[0].mxu0
        %v3421 = vadd.f32 %v2670, %v3420
        %v3422 = vpop.f32.mrb[0].mxu0
        %v3423 = vadd.f32 %v2674, %v3422
        %3424 = vmatprep.mubr.bf16.mxu0 0
        %3425 = vmatmul.mubr.bf16.gmra.mrb[0].mxu0 %v2574
        %v3426 = vpop.f32.mrb[0].mxu0
        %v3427 = vadd.f32 %v2670, %v3426
        %v3428 = vpop.f32.mrb[0].mxu0
        %v3429 = vadd.f32 %v2674, %v3428
        %v3430 = vpop.f32.mrb[0].mxu0
        %v3431 = vadd.f32 %v2670, %v3430
        %v3432 = vpop.f32.mrb[0].mxu0
        %v3433 = vadd.f32 %v2674, %v3432
        %3434 = vmatprep.mubr.bf16.mxu0 0
        %3435 = vmatmul.mubr.bf16.gmra.mrb[0].mxu0 %v2575
        %v3436 = vpop.f32.mrb[0].mxu0
        %v3437 = vadd.f32 %v2670, %v3436
        %v3438 = vpop.f32.mrb[0].mxu0
        %v3439 = vadd.f32 %v2674, %v3438
        %v3440 = vpop.f32.mrb[0].mxu0
        %v3441 = vadd.f32 %v2670, %v3440
        %v3442 = vpop.f32.mrb[0].mxu0
        %v3443 = vadd.f32 %v2674, %v3442
        %3444 = vmatprep.mubr.bf16.mxu0 0
        %3445 = vmatmul.mubr.bf16.gmra.mrb[0].mxu0 %v2576
        %v3446 = vpop.f32.mrb[0].mxu0
        %v3447 = vadd.f32 %v2670, %v3446
        %v3448 = vpop.f32.mrb[0].mxu0
        %v3449 = vadd.f32 %v2674, %v3448
        %v3450 = vpop.f32.mrb[0].mxu0
        %v3451 = vadd.f32 %v2670, %v3450
        %v3452 = vpop.f32.mrb[0].mxu0
        %v3453 = vadd.f32 %v2674, %v3452
        %3454 = vdwg.mxu0
        %3455 = vst [vmem:[%s621] sm:$0xff] %v3038
        %3456 = vst [vmem:[%s621 + $0x8] sm:$0xff] %v3040
        %3457 = vst [vmem:[%s621 + $0x10] sm:$0xff] %v3151
        %3458 = vst [vmem:[%s621 + $0x18] sm:$0xff] %v3153
        %3459 = vst [vmem:[%s621 + $0x20] sm:$0xff] %v3264
        %3460 = vst [vmem:[%s621 + $0x28] sm:$0xff] %v3266
        %3461 = vst [vmem:[%s621 + $0x30] sm:$0xff] %v3377
        %3462 = vst [vmem:[%s621 + $0x38] sm:$0xff] %v3379
        %3463 = vst [vmem:[%s621 + $0x40] sm:$0xff] %v3042
        %3464 = vst [vmem:[%s621 + $0x48] sm:$0xff] %v3044
        %3465 = vst [vmem:[%s621 + $0x50] sm:$0xff] %v3155
        %3466 = vst [vmem:[%s621 + $0x58] sm:$0xff] %v3157
        %3467 = vst [vmem:[%s621 + $0x60] sm:$0xff] %v3268
        %3468 = vst [vmem:[%s621 + $0x68] sm:$0xff] %v3270
        %3469 = vst [vmem:[%s621 + $0x70] sm:$0xff] %v3381
        %3470 = vst [vmem:[%s621 + $0x78] sm:$0xff] %v3383
        %3471 = vst [vmem:[%s621 + $0x80] sm:$0xff] %v3048
        %3472 = vst [vmem:[%s621 + $0x88] sm:$0xff] %v3050
        %3473 = vst [vmem:[%s621 + $0x90] sm:$0xff] %v3161
        %3474 = vst [vmem:[%s621 + $0x98] sm:$0xff] %v3163
        %3475 = vst [vmem:[%s621 + $0xa0] sm:$0xff] %v3274
        %3476 = vst [vmem:[%s621 + $0xa8] sm:$0xff] %v3276
        %3477 = vst [vmem:[%s621 + $0xb0] sm:$0xff] %v3387
        %3478 = vst [vmem:[%s621 + $0xb8] sm:$0xff] %v3389
        %3479 = vst [vmem:[%s621 + $0xc0] sm:$0xff] %v3052
        %3480 = vst [vmem:[%s621 + $0xc8] sm:$0xff] %v3054
        %3481 = vst [vmem:[%s621 + $0xd0] sm:$0xff] %v3165
        %3482 = vst [vmem:[%s621 + $0xd8] sm:$0xff] %v3167
        %3483 = vst [vmem:[%s621 + $0xe0] sm:$0xff] %v3278
        %3484 = vst [vmem:[%s621 + $0xe8] sm:$0xff] %v3280
        %3485 = vst [vmem:[%s621 + $0xf0] sm:$0xff] %v3391
        %3486 = vst [vmem:[%s621 + $0xf8] sm:$0xff] %v3393
        %3487 = vst [vmem:[%s621 + $0x100] sm:$0xff] %v3058
        %3488 = vst [vmem:[%s621 + $0x108] sm:$0xff] %v3060
        %3489 = vst [vmem:[%s621 + $0x110] sm:$0xff] %v3171
        %3490 = vst [vmem:[%s621 + $0x118] sm:$0xff] %v3173
        %3491 = vst [vmem:[%s621 + $0x120] sm:$0xff] %v3284
        %3492 = vst [vmem:[%s621 + $0x128] sm:$0xff] %v3286
        %3493 = vst [vmem:[%s621 + $0x130] sm:$0xff] %v3397
        %3494 = vst [vmem:[%s621 + $0x138] sm:$0xff] %v3399
        %3495 = vst [vmem:[%s621 + $0x140] sm:$0xff] %v3062
        %3496 = vst [vmem:[%s621 + $0x148] sm:$0xff] %v3064
        %3497 = vst [vmem:[%s621 + $0x150] sm:$0xff] %v3175
        %3498 = vst [vmem:[%s621 + $0x158] sm:$0xff] %v3177
        %3499 = vst [vmem:[%s621 + $0x160] sm:$0xff] %v3288
        %3500 = vst [vmem:[%s621 + $0x168] sm:$0xff] %v3290
        %3501 = vst [vmem:[%s621 + $0x170] sm:$0xff] %v3401
        %3502 = vst [vmem:[%s621 + $0x178] sm:$0xff] %v3403
        %3503 = vst [vmem:[%s621 + $0x180] sm:$0xff] %v3068
        %3504 = vst [vmem:[%s621 + $0x188] sm:$0xff] %v3070
        %3505 = vst [vmem:[%s621 + $0x190] sm:$0xff] %v3181
        %3506 = vst [vmem:[%s621 + $0x198] sm:$0xff] %v3183
        %3507 = vst [vmem:[%s621 + $0x1a0] sm:$0xff] %v3294
        %3508 = vst [vmem:[%s621 + $0x1a8] sm:$0xff] %v3296
        %3509 = vst [vmem:[%s621 + $0x1b0] sm:$0xff] %v3407
        %3510 = vst [vmem:[%s621 + $0x1b8] sm:$0xff] %v3409
        %3511 = vst [vmem:[%s621 + $0x1c0] sm:$0xff] %v3072
        %3512 = vst [vmem:[%s621 + $0x1c8] sm:$0xff] %v3074
        %3513 = vst [vmem:[%s621 + $0x1d0] sm:$0xff] %v3185
        %3514 = vst [vmem:[%s621 + $0x1d8] sm:$0xff] %v3187
        %3515 = vst [vmem:[%s621 + $0x1e0] sm:$0xff] %v3298
        %3516 = vst [vmem:[%s621 + $0x1e8] sm:$0xff] %v3300
        %3517 = vst [vmem:[%s621 + $0x1f0] sm:$0xff] %v3411
        %3518 = vst [vmem:[%s621 + $0x1f8] sm:$0xff] %v3413
        %3519 = vst [vmem:[%s621 + $0x200] sm:$0xff] %v3078
        %3520 = vst [vmem:[%s621 + $0x208] sm:$0xff] %v3080
        %3521 = vst [vmem:[%s621 + $0x210] sm:$0xff] %v3191
        %3522 = vst [vmem:[%s621 + $0x218] sm:$0xff] %v3193
        %3523 = vst [vmem:[%s621 + $0x220] sm:$0xff] %v3304
        %3524 = vst [vmem:[%s621 + $0x228] sm:$0xff] %v3306
        %3525 = vst [vmem:[%s621 + $0x230] sm:$0xff] %v3417
        %3526 = vst [vmem:[%s621 + $0x238] sm:$0xff] %v3419
        %3527 = vst [vmem:[%s621 + $0x240] sm:$0xff] %v3082
        %3528 = vst [vmem:[%s621 + $0x248] sm:$0xff] %v3084
        %3529 = vst [vmem:[%s621 + $0x250] sm:$0xff] %v3195
        %3530 = vst [vmem:[%s621 + $0x258] sm:$0xff] %v3197
        %3531 = vst [vmem:[%s621 + $0x260] sm:$0xff] %v3308
        %3532 = vst [vmem:[%s621 + $0x268] sm:$0xff] %v3310
        %3533 = vst [vmem:[%s621 + $0x270] sm:$0xff] %v3421
        %3534 = vst [vmem:[%s621 + $0x278] sm:$0xff] %v3423
        %3535 = vst [vmem:[%s621 + $0x280] sm:$0xff] %v3088
        %3536 = vst [vmem:[%s621 + $0x288] sm:$0xff] %v3090
        %3537 = vst [vmem:[%s621 + $0x290] sm:$0xff] %v3201
        %3538 = vst [vmem:[%s621 + $0x298] sm:$0xff] %v3203
        %3539 = vst [vmem:[%s621 + $0x2a0] sm:$0xff] %v3314
        %3540 = vst [vmem:[%s621 + $0x2a8] sm:$0xff] %v3316
        %3541 = vst [vmem:[%s621 + $0x2b0] sm:$0xff] %v3427
        %3542 = vst [vmem:[%s621 + $0x2b8] sm:$0xff] %v3429
        %3543 = vst [vmem:[%s621 + $0x2c0] sm:$0xff] %v3092
        %3544 = vst [vmem:[%s621 + $0x2c8] sm:$0xff] %v3094
        %3545 = vst [vmem:[%s621 + $0x2d0] sm:$0xff] %v3205
        %3546 = vst [vmem:[%s621 + $0x2d8] sm:$0xff] %v3207
        %3547 = vst [vmem:[%s621 + $0x2e0] sm:$0xff] %v3318
        %3548 = vst [vmem:[%s621 + $0x2e8] sm:$0xff] %v3320
        %3549 = vst [vmem:[%s621 + $0x2f0] sm:$0xff] %v3431
        %3550 = vst [vmem:[%s621 + $0x2f8] sm:$0xff] %v3433
        %3551 = vst [vmem:[%s621 + $0x300] sm:$0xff] %v3098
        %3552 = vst [vmem:[%s621 + $0x308] sm:$0xff] %v3100
        %3553 = vst [vmem:[%s621 + $0x310] sm:$0xff] %v3211
        %3554 = vst [vmem:[%s621 + $0x318] sm:$0xff] %v3213
        %3555 = vst [vmem:[%s621 + $0x320] sm:$0xff] %v3324
        %3556 = vst [vmem:[%s621 + $0x328] sm:$0xff] %v3326
        %3557 = vst [vmem:[%s621 + $0x330] sm:$0xff] %v3437
        %3558 = vst [vmem:[%s621 + $0x338] sm:$0xff] %v3439
        %3559 = vst [vmem:[%s621 + $0x340] sm:$0xff] %v3102
        %3560 = vst [vmem:[%s621 + $0x348] sm:$0xff] %v3104
        %3561 = vst [vmem:[%s621 + $0x350] sm:$0xff] %v3215
        %3562 = vst [vmem:[%s621 + $0x358] sm:$0xff] %v3217
        %3563 = vst [vmem:[%s621 + $0x360] sm:$0xff] %v3328
        %3564 = vst [vmem:[%s621 + $0x368] sm:$0xff] %v3330
        %3565 = vst [vmem:[%s621 + $0x370] sm:$0xff] %v3441
        %3566 = vst [vmem:[%s621 + $0x378] sm:$0xff] %v3443
        %3567 = vst [vmem:[%s621 + $0x380] sm:$0xff] %v3108
        %3568 = vst [vmem:[%s621 + $0x388] sm:$0xff] %v3110
        %3569 = vst [vmem:[%s621 + $0x390] sm:$0xff] %v3221
        %3570 = vst [vmem:[%s621 + $0x398] sm:$0xff] %v3223
        %3571 = vst [vmem:[%s621 + $0x3a0] sm:$0xff] %v3334
        %3572 = vst [vmem:[%s621 + $0x3a8] sm:$0xff] %v3336
        %3573 = vst [vmem:[%s621 + $0x3b0] sm:$0xff] %v3447
        %3574 = vst [vmem:[%s621 + $0x3b8] sm:$0xff] %v3449
        %3575 = vst [vmem:[%s621 + $0x3c0] sm:$0xff] %v3112
        %3576 = vst [vmem:[%s621 + $0x3c8] sm:$0xff] %v3114
        %3577 = vst [vmem:[%s621 + $0x3d0] sm:$0xff] %v3225
        %3578 = vst [vmem:[%s621 + $0x3d8] sm:$0xff] %v3227
        %3579 = vst [vmem:[%s621 + $0x3e0] sm:$0xff] %v3338
        %3580 = vst [vmem:[%s621 + $0x3e8] sm:$0xff] %v3340
        %3581 = vst [vmem:[%s621 + $0x3f0] sm:$0xff] %v3451
        %3582 = vst [vmem:[%s621 + $0x3f8] sm:$0xff] %v3453
        %s3583 = sand.u32 %s317, 1
        %s3584 = scalar_lea.sflag [#allocation4], %s3583
        %s3585 = sand.u32 %s317, 1
        %s3586 = smul.addr %s3585, 1024
        %s3587 = scalar_lea.vmem [#allocation17], %s3586
        // Predicated region
        $region105: #{tpu_custom_call.1} parent=67 // pred_check
          %p3588 = pneg %p327
        $region106: #{tpu_custom_call.1} parent=67 // pred_check_branch
          %3590 = sbr.rel (%p3588) target = $region108
        $region107: #{tpu_custom_call.1} parent=67 // pred_region
          %s3591 = smul.u32 16, %s37
          %s3593 = ssub.s32 16384, 16384
          %3594 = vsyncadd %s3584, %s3593
          %s3595 = smul.addr %s3591, 8
          %s3596 = smul.addr %s3595, 128
          %s3597 = scalar_lea.hbm %s12, %s3596
          %s3598 = sshll.u32 %s3587, 4
          %s3599 = int_to_ptr.vmem [resolvable:$true] %s3598
          %3604 = dma.vmem_to_hbm [thread:$0]  %s3599, 16384, %s3597, %s3584, 1024, 1024, 64
        $region108: #{tpu_custom_call.1} parent=67 // pred_fallthru
          _
      $region68: #{tpu_custom_call.1} parent=5 // pred_fallthru
        _
      %p3605 = scmp.le.s32.totalorder 2, %s32
      // Predicated region
      $region109: #{tpu_custom_call.1} parent=5 // pred_check
        %p3606 = pneg %p3605
      $region110: #{tpu_custom_call.1} parent=5 // pred_check_branch
        %3608 = sbr.rel (%p3606) target = $region112
      $region111: #{tpu_custom_call.1} parent=5 // pred_region
        %s3609 = ssub.s32 %s32, 2
        // Predicated region
        $region113: #{tpu_custom_call.1} parent=111 // pred_check
          %p3610 = pneg %p333
        $region114: #{tpu_custom_call.1} parent=111 // pred_check_branch
          %3612 = sbr.rel (%p3610) target = $region116
        $region115: #{tpu_custom_call.1} parent=111 // pred_region
          %s3613 = sand.u32 %s318, 1
          %s3614 = scalar_lea.sflag [#allocation4], %s3613
          %s3615 = sand.u32 %s318, 1
          %s3616 = smul.addr %s3615, 1024
          %s3617 = scalar_lea.vmem [#allocation17], %s3616
          %3618 = dma.done %s3614, 16384
        $region116: #{tpu_custom_call.1} parent=111 // pred_fallthru
          _
      $region112: #{tpu_custom_call.1} parent=5 // pred_fallthru
        _
    $region6: #{tpu_custom_call.1} parent=1 // loop_footer
      %s36 = sadd.s32 1, %s32
    $region7: #{tpu_custom_call.1} parent=1 // loop_footer_branch
      %31 = sbr.rel target = $region3
    $region8: #{tpu_custom_call.1} parent=1 // loop_exit
      _
    %3619 = vsyncpa [#allocation3], 1
    %s3620 = scalar_lea.sflag [#allocation3], 1
    %3621 = vsyncpa %s3620, 1
    %3622 = vsyncpa [#allocation6], 1
    %s3623 = scalar_lea.sflag [#allocation6], 1
    %3624 = vsyncpa %s3623, 1
    %3625 = vsyncpa [#allocation9], 1
    %s3626 = scalar_lea.sflag [#allocation9], 1
    %3627 = vsyncpa %s3626, 1
    %3628 = vsyncpa [#allocation12], 1
    %3629 = vsyncpa [#allocation15], 1
    %3630 = vsyncpa [#allocation4], 1
    %s3631 = scalar_lea.sflag [#allocation4], 1
    %3632 = vsyncpa %s3631, 1

// kernel: tpu_custom_call.1
$region0: #{tpu_custom_call.1}
  #allocation0 [shape = 'u32[]', space=smem, size = 0x4, offset = 0x4, fixed_abs, tag = 'smem constant byte address 0x4 - core index']
  #allocation1 [shape = 'u32[144,128]{1,0:T(1,128)}', space=vmem, size = 0x12000, scoped, tag = 'internal scratch']
  %s0 = inlined_call_operand.hbm [shape: bf16[256,1024], index: 0, kind: input, shape index: {}]
  %s1 = inlined_call_operand.hbm [shape: f32[256,128], index: 1, kind: input, shape index: {}]
  %s2 = inlined_call_operand.hbm [shape: f32[256,128], index: 2, kind: input, shape index: {}]
  %s3 = inlined_call_operand.hbm [shape: f32[256,128], index: 3, kind: input, shape index: {}]
  %s4 = inlined_call_operand.hbm [shape: bf16[1024,128], index: 4, kind: input, shape index: {}]
  %s5 = inlined_call_operand.hbm [shape: bf16[128,128], index: 5, kind: input, shape index: {}]
  %s6 = inlined_call_operand.vmem [shape: f32[1,128], index: 6, kind: input, shape index: {}]
  %s7 = inlined_call_operand.hbm [shape: bf16[128,128], index: 7, kind: input, shape index: {}]
  %s8 = inlined_call_operand.vmem [shape: f32[1,128], index: 8, kind: input, shape index: {}]
  %s9 = inlined_call_operand.hbm [shape: bf16[128,128], index: 9, kind: input, shape index: {}]
  %s10 = inlined_call_operand.hbm [shape: bf16[128,1024], index: 10, kind: input, shape index: {}]
  %s11 = inlined_call_operand.vmem [shape: f32[1,1024], index: 11, kind: input, shape index: {}]
  %s12 = inlined_call_operand.hbm [shape: f32[256,1024], index: 12, kind: output, shape index: {}]
  %s13 = sld [smem:[#allocation0]]
  $region117: #{tpu_custom_call.1} parent=0
    _
  %s15 = ssub.s32 1, %s13
  %s16 = scalar_select 0, %s15, %s13
  $region1: #{tpu_custom_call.1} parent=0
    #allocation2 [shape = 'u8[524288]{0}', space=vmem, size = 0x80000, scoped, tag = 'input window, operand 0']
    #allocation3 [shape = 's32[2]{0}', space=sflag, size = 0x8, scoped, tag = 'scoped memory for tpu_custom_call.1']
    #allocation4 [shape = 's32[2]{0}', space=sflag, size = 0x8, scoped, tag = 'scoped memory for tpu_custom_call.1']
    #allocation5 [shape = 'u8[131072]{0}', space=vmem, size = 0x20000, scoped, tag = 'input window, operand 1']
    #allocation6 [shape = 's32[2]{0}', space=sflag, size = 0x8, scoped, tag = 'scoped memory for tpu_custom_call.1']
    #allocation7 [shape = 'u8[131072]{0}', space=vmem, size = 0x20000, scoped, tag = 'input window, operand 2']
    #allocation8 [shape = 'u8[131072]{0}', space=vmem, size = 0x20000, scoped, tag = 'input window, operand 3']
    #allocation9 [shape = 's32[2]{0}', space=sflag, size = 0x8, scoped, tag = 'scoped memory for tpu_custom_call.1']
    #allocation10 [shape = 'u8[262144]{0}', space=vmem, size = 0x40000, scoped, tag = 'input window, operand 4, single buffered']
    #allocation11 [shape = 'u8[32768]{0}', space=vmem, size = 0x8000, scoped, tag = 'input window, operand 5, single buffered']
    #allocation12 [shape = 's32[1]{0}', space=sflag, size = 0x4, scoped, tag = 'scoped memory for tpu_custom_call.1']
    #allocation13 [shape = 'u8[32768]{0}', space=vmem, size = 0x8000, scoped, tag = 'input window, operand 7, single buffered']
    #allocation14 [shape = 'u8[32768]{0}', space=vmem, size = 0x8000, scoped, tag = 'input window, operand 9, single buffered']
    #allocation15 [shape = 's32[1]{0}', space=sflag, size = 0x4, scoped, tag = 'scoped memory for tpu_custom_call.1']
    #allocation16 [shape = 'u8[262144]{0}', space=vmem, size = 0x40000, scoped, tag = 'input window, operand 10, single buffered']
    #allocation17 [shape = 'u8[1048576]{0}', space=vmem, size = 0x100000, scoped, tag = 'output window, operand 0']
    %17 = vsyncpa [#allocation3], 0
    %s18 = scalar_lea.sflag [#allocation3], 1
    %19 = vsyncpa %s18, 0
    %20 = vsyncpa [#allocation6], 0
    %s21 = scalar_lea.sflag [#allocation6], 1
    %22 = vsyncpa %s21, 0
    %23 = vsyncpa [#allocation9], 0
    %s24 = scalar_lea.sflag [#allocation9], 1
    %25 = vsyncpa %s24, 0
    %26 = vsyncpa [#allocation12], 0
    %27 = vsyncpa [#allocation15], 0
    %28 = vsyncpa [#allocation4], 0
    %s29 = scalar_lea.sflag [#allocation4], 1
    %30 = vsyncpa %s29, 0
    loop: start=0, step=1, limit=4
    $region2: #{tpu_custom_call.1} parent=1 // loop_pre_header
      _
    $region3: #{tpu_custom_call.1} parent=1 // loop_header
      %s32 = sphi 0, %s36
      %p33 = scmp.ge.s32.totalorder %s32, 4
      %s42 = sphi 0, %s44
      %s45 = sphi 0, %s42
      %s46 = sphi 0, %s45
      %s62 = sphi 0, %s46
      %s68 = sphi 0, %s70
      %s71 = sphi 0, %s68
      %s72 = sphi 0, %s71
      %s88 = sphi 0, %s72
      %s94 = sphi 0, %s96
      %s97 = sphi 0, %s94
      %s98 = sphi 0, %s97
      %s114 = sphi 0, %s98
      %s120 = sphi 0, %s122
      %s123 = sphi 0, %s120
      %s124 = sphi 0, %s123
      %s140 = sphi 0, %s124
      %s144 = sphi 0, %s144
      %s146 = sphi 0, %s144
      %s147 = sphi 0, %s146
      %s161 = sphi 0, %s147
      %s165 = sphi 0, %s165
      %s167 = sphi 0, %s165
      %s168 = sphi 0, %s167
      %s182 = sphi 0, %s168
      %s186 = sphi 0, %s186
      %s188 = sphi 0, %s186
      %s189 = sphi 0, %s188
      %s203 = sphi 0, %s189
      %s207 = sphi 0, %s207
      %s209 = sphi 0, %s207
      %s210 = sphi 0, %s209
      %s224 = sphi 0, %s210
      %s228 = sphi 0, %s228
      %s230 = sphi 0, %s228
      %s231 = sphi 0, %s230
      %s245 = sphi 0, %s231
      %s249 = sphi 0, %s249
      %s251 = sphi 0, %s249
      %s252 = sphi 0, %s251
      %s266 = sphi 0, %s252
      %s270 = sphi 0, %s270
      %s272 = sphi 0, %s270
      %s273 = sphi 0, %s272
      %s287 = sphi 0, %s273
      %s291 = sphi 0, %s291
      %s293 = sphi 0, %s291
      %s294 = sphi 0, %s293
      %s308 = sphi 0, %s294
      %s314 = sphi 0, %s316
      %s317 = sphi 0, %s314
      %s318 = sphi 0, %s317
      %s334 = sphi 0, %s318
    $region4: #{tpu_custom_call.1} parent=1 // loop_header_branch
      %35 = sbr.rel (%p33) target = $region8
    $region5: #{tpu_custom_call.1} parent=1 // loop_body
      %s37 = ssub.s32 %s32, 1
      %s38 = ssub.s32 %s32, 2
      %s39 = sadd.s32 %s32, 1
      %s40 = ssub.s32 %s32, %s39
      %p41 = scmp.eq.s32.totalorder %s40, 0
      %s43 = sadd.s32 %s42, 1
      %s44 = scalar_select %p41, %s42, %s43
      %p47 = pneg %p41
      %p48 = scmp.eq.s32.totalorder %s32, 1
      %p49 = por %p47, %p48
      %p50 = scmp.ne.s32.totalorder %s42, %s45
      %p51 = scmp.eq.s32.totalorder %s32, 0
      %p52 = por %p50, %p51
      %p53 = scmp.ne.s32.totalorder %s42, %s45
      %p54 = scmp.eq.s32.totalorder %s37, 1
      %p55 = por %p53, %p54
      %p56 = scmp.ne.s32.totalorder %s45, %s46
      %p57 = scmp.eq.s32.totalorder %s37, 0
      %p58 = por %p56, %p57
      %p59 = scmp.ne.s32.totalorder %s45, %s46
      %p60 = scmp.eq.s32.totalorder %s38, 1
      %p61 = por %p59, %p60
      %p63 = scmp.ne.s32.totalorder %s46, %s62
      %p64 = scmp.eq.s32.totalorder %s38, 0
      %p65 = por %p63, %p64
      %s66 = ssub.s32 %s32, %s39
      %p67 = scmp.eq.s32.totalorder %s66, 0
      %s69 = sadd.s32 %s68, 1
      %s70 = scalar_select %p67, %s68, %s69
      %p73 = pneg %p67
      %p74 = scmp.eq.s32.totalorder %s32, 1
      %p75 = por %p73, %p74
      %p76 = scmp.ne.s32.totalorder %s68, %s71
      %p77 = scmp.eq.s32.totalorder %s32, 0
      %p78 = por %p76, %p77
      %p79 = scmp.ne.s32.totalorder %s68, %s71
      %p80 = scmp.eq.s32.totalorder %s37, 1
      %p81 = por %p79, %p80
      %p82 = scmp.ne.s32.totalorder %s71, %s72
      %p83 = scmp.eq.s32.totalorder %s37, 0
      %p84 = por %p82, %p83
      %p85 = scmp.ne.s32.totalorder %s71, %s72
      %p86 = scmp.eq.s32.totalorder %s38, 1
      %p87 = por %p85, %p86
      %p89 = scmp.ne.s32.totalorder %s72, %s88
      %p90 = scmp.eq.s32.totalorder %s38, 0
      %p91 = por %p89, %p90
      %s92 = ssub.s32 %s32, %s39
      %p93 = scmp.eq.s32.totalorder %s92, 0
      %s95 = sadd.s32 %s94, 1
      %s96 = scalar_select %p93, %s94, %s95
      %p99 = pneg %p93
      %p100 = scmp.eq.s32.totalorder %s32, 1
      %p101 = por %p99, %p100
      %p102 = scmp.ne.s32.totalorder %s94, %s97
      %p103 = scmp.eq.s32.totalorder %s32, 0
      %p104 = por %p102, %p103
      %p105 = scmp.ne.s32.totalorder %s94, %s97
      %p106 = scmp.eq.s32.totalorder %s37, 1
      %p107 = por %p105, %p106
      %p108 = scmp.ne.s32.totalorder %s97, %s98
      %p109 = scmp.eq.s32.totalorder %s37, 0
      %p110 = por %p108, %p109
      %p111 = scmp.ne.s32.totalorder %s97, %s98
      %p112 = scmp.eq.s32.totalorder %s38, 1
      %p113 = por %p111, %p112
      %p115 = scmp.ne.s32.totalorder %s98, %s114
      %p116 = scmp.eq.s32.totalorder %s38, 0
      %p117 = por %p115, %p116
      %s118 = ssub.s32 %s32, %s39
      %p119 = scmp.eq.s32.totalorder %s118, 0
      %s121 = sadd.s32 %s120, 1
      %s122 = scalar_select %p119, %s120, %s121
      %p125 = pneg %p119
      %p126 = scmp.eq.s32.totalorder %s32, 1
      %p127 = por %p125, %p126
      %p128 = scmp.ne.s32.totalorder %s120, %s123
      %p129 = scmp.eq.s32.totalorder %s32, 0
      %p130 = por %p128, %p129
      %p131 = scmp.ne.s32.totalorder %s120, %s123
      %p132 = scmp.eq.s32.totalorder %s37, 1
      %p133 = por %p131, %p132
      %p134 = scmp.ne.s32.totalorder %s123, %s124
      %p135 = scmp.eq.s32.totalorder %s37, 0
      %p136 = por %p134, %p135
      %p137 = scmp.ne.s32.totalorder %s123, %s124
      %p138 = scmp.eq.s32.totalorder %s38, 1
      %p139 = por %p137, %p138
      %p141 = scmp.ne.s32.totalorder %s124, %s140
      %p142 = scmp.eq.s32.totalorder %s38, 0
      %p143 = por %p141, %p142
      %s145 = sadd.s32 %s144, 1
      %p148 = scmp.eq.s32.totalorder %s32, 1
      %p149 = scmp.ne.s32.totalorder %s144, %s146
      %p150 = scmp.eq.s32.totalorder %s32, 0
      %p151 = por %p149, %p150
      %p152 = scmp.ne.s32.totalorder %s144, %s146
      %p153 = scmp.eq.s32.totalorder %s37, 1
      %p154 = por %p152, %p153
      %p155 = scmp.ne.s32.totalorder %s146, %s147
      %p156 = scmp.eq.s32.totalorder %s37, 0
      %p157 = por %p155, %p156
      %p158 = scmp.ne.s32.totalorder %s146, %s147
      %p159 = scmp.eq.s32.totalorder %s38, 1
      %p160 = por %p158, %p159
      %p162 = scmp.ne.s32.totalorder %s147, %s161
      %p163 = scmp.eq.s32.totalorder %s38, 0
      %p164 = por %p162, %p163
      %s166 = sadd.s32 %s165, 1
      %p169 = scmp.eq.s32.totalorder %s32, 1
      %p170 = scmp.ne.s32.totalorder %s165, %s167
      %p171 = scmp.eq.s32.totalorder %s32, 0
      %p172 = por %p170, %p171
      %p173 = scmp.ne.s32.totalorder %s165, %s167
      %p174 = scmp.eq.s32.totalorder %s37, 1
      %p175 = por %p173, %p174
      %p176 = scmp.ne.s32.totalorder %s167, %s168
      %p177 = scmp.eq.s32.totalorder %s37, 0
      %p178 = por %p176, %p177
      %p179 = scmp.ne.s32.totalorder %s167, %s168
      %p180 = scmp.eq.s32.totalorder %s38, 1
      %p181 = por %p179, %p180
      %p183 = scmp.ne.s32.totalorder %s168, %s182
      %p184 = scmp.eq.s32.totalorder %s38, 0
      %p185 = por %p183, %p184
      %s187 = sadd.s32 %s186, 1
      %p190 = scmp.eq.s32.totalorder %s32, 1
      %p191 = scmp.ne.s32.totalorder %s186, %s188
      %p192 = scmp.eq.s32.totalorder %s32, 0
      %p193 = por %p191, %p192
      %p194 = scmp.ne.s32.totalorder %s186, %s188
      %p195 = scmp.eq.s32.totalorder %s37, 1
      %p196 = por %p194, %p195
      %p197 = scmp.ne.s32.totalorder %s188, %s189
      %p198 = scmp.eq.s32.totalorder %s37, 0
      %p199 = por %p197, %p198
      %p200 = scmp.ne.s32.totalorder %s188, %s189
      %p201 = scmp.eq.s32.totalorder %s38, 1
      %p202 = por %p200, %p201
      %p204 = scmp.ne.s32.totalorder %s189, %s203
      %p205 = scmp.eq.s32.totalorder %s38, 0
      %p206 = por %p204, %p205
      %s208 = sadd.s32 %s207, 1
      %p211 = scmp.eq.s32.totalorder %s32, 1
      %p212 = scmp.ne.s32.totalorder %s207, %s209
      %p213 = scmp.eq.s32.totalorder %s32, 0
      %p214 = por %p212, %p213
      %p215 = scmp.ne.s32.totalorder %s207, %s209
      %p216 = scmp.eq.s32.totalorder %s37, 1
      %p217 = por %p215, %p216
      %p218 = scmp.ne.s32.totalorder %s209, %s210
      %p219 = scmp.eq.s32.totalorder %s37, 0
      %p220 = por %p218, %p219
      %p221 = scmp.ne.s32.totalorder %s209, %s210
      %p222 = scmp.eq.s32.totalorder %s38, 1
      %p223 = por %p221, %p222
      %p225 = scmp.ne.s32.totalorder %s210, %s224
      %p226 = scmp.eq.s32.totalorder %s38, 0
      %p227 = por %p225, %p226
      %s229 = sadd.s32 %s228, 1
      %p232 = scmp.eq.s32.totalorder %s32, 1
      %p233 = scmp.ne.s32.totalorder %s228, %s230
      %p234 = scmp.eq.s32.totalorder %s32, 0
      %p235 = por %p233, %p234
      %p236 = scmp.ne.s32.totalorder %s228, %s230
      %p237 = scmp.eq.s32.totalorder %s37, 1
      %p238 = por %p236, %p237
      %p239 = scmp.ne.s32.totalorder %s230, %s231
      %p240 = scmp.eq.s32.totalorder %s37, 0
      %p241 = por %p239, %p240
      %p242 = scmp.ne.s32.totalorder %s230, %s231
      %p243 = scmp.eq.s32.totalorder %s38, 1
      %p244 = por %p242, %p243
      %p246 = scmp.ne.s32.totalorder %s231, %s245
      %p247 = scmp.eq.s32.totalorder %s38, 0
      %p248 = por %p246, %p247
      %s250 = sadd.s32 %s249, 1
      %p253 = scmp.eq.s32.totalorder %s32, 1
      %p254 = scmp.ne.s32.totalorder %s249, %s251
      %p255 = scmp.eq.s32.totalorder %s32, 0
      %p256 = por %p254, %p255
      %p257 = scmp.ne.s32.totalorder %s249, %s251
      %p258 = scmp.eq.s32.totalorder %s37, 1
      %p259 = por %p257, %p258
      %p260 = scmp.ne.s32.totalorder %s251, %s252
      %p261 = scmp.eq.s32.totalorder %s37, 0
      %p262 = por %p260, %p261
      %p263 = scmp.ne.s32.totalorder %s251, %s252
      %p264 = scmp.eq.s32.totalorder %s38, 1
      %p265 = por %p263, %p264
      %p267 = scmp.ne.s32.totalorder %s252, %s266
      %p268 = scmp.eq.s32.totalorder %s38, 0
      %p269 = por %p267, %p268
      %s271 = sadd.s32 %s270, 1
      %p274 = scmp.eq.s32.totalorder %s32, 1
      %p275 = scmp.ne.s32.totalorder %s270, %s272
      %p276 = scmp.eq.s32.totalorder %s32, 0
      %p277 = por %p275, %p276
      %p278 = scmp.ne.s32.totalorder %s270, %s272
      %p279 = scmp.eq.s32.totalorder %s37, 1
      %p280 = por %p278, %p279
      %p281 = scmp.ne.s32.totalorder %s272, %s273
      %p282 = scmp.eq.s32.totalorder %s37, 0
      %p283 = por %p281, %p282
      %p284 = scmp.ne.s32.totalorder %s272, %s273
      %p285 = scmp.eq.s32.totalorder %s38, 1
      %p286 = por %p284, %p285
      %p288 = scmp.ne.s32.totalorder %s273, %s287
      %p289 = scmp.eq.s32.totalorder %s38, 0
      %p290 = por %p288, %p289
      %s292 = sadd.s32 %s291, 1
      %p295 = scmp.eq.s32.totalorder %s32, 1
      %p296 = scmp.ne.s32.totalorder %s291, %s293
      %p297 = scmp.eq.s32.totalorder %s32, 0
      %p298 = por %p296, %p297
      %p299 = scmp.ne.s32.totalorder %s291, %s293
      %p300 = scmp.eq.s32.totalorder %s37, 1
      %p301 = por %p299, %p300
      %p302 = scmp.ne.s32.totalorder %s293, %s294
      %p303 = scmp.eq.s32.totalorder %s37, 0
      %p304 = por %p302, %p303
      %p305 = scmp.ne.s32.totalorder %s293, %s294
      %p306 = scmp.eq.s32.totalorder %s38, 1
      %p307 = por %p305, %p306
      %p309 = scmp.ne.s32.totalorder %s294, %s308
      %p310 = scmp.eq.s32.totalorder %s38, 0
      %p311 = por %p309, %p310
      %s312 = ssub.s32 %s32, %s39
      %p313 = scmp.eq.s32.totalorder %s312, 0
      %s315 = sadd.s32 %s314, 1
      %s316 = scalar_select %p313, %s314, %s315
      %p319 = pneg %p313
      %p320 = scmp.eq.s32.totalorder %s32, 1
      %p321 = por %p319, %p320
      %p322 = scmp.ne.s32.totalorder %s314, %s317
      %p323 = scmp.eq.s32.totalorder %s32, 0
      %p324 = por %p322, %p323
      %p325 = scmp.ne.s32.totalorder %s314, %s317
      %p326 = scmp.eq.s32.totalorder %s37, 1
      %p327 = por %p325, %p326
      %p328 = scmp.ne.s32.totalorder %s317, %s318
      %p329 = scmp.eq.s32.totalorder %s37, 0
      %p330 = por %p328, %p329
      %p331 = scmp.ne.s32.totalorder %s317, %s318
      %p332 = scmp.eq.s32.totalorder %s38, 1
      %p333 = por %p331, %p332
      %p335 = scmp.ne.s32.totalorder %s318, %s334
      %p336 = scmp.eq.s32.totalorder %s38, 0
      %p337 = por %p335, %p336
      %p338 = scmp.le.s32.totalorder 1, %s32
      %p339 = scmp.lt.s32.totalorder %s32, 3
      %p340 = pnand %p338, %p339
      %p341 = pneg %p340
      // Predicated region
      $region9: #{tpu_custom_call.1} parent=5 // pred_check
        _
      $region10: #{tpu_custom_call.1} parent=5 // pred_check_branch
        %343 = sbr.rel (%p340) target = $region12
      $region11: #{tpu_custom_call.1} parent=5 // pred_region
        %s344 = ssub.s32 %s32, 1
        // Predicated region
        $region13: #{tpu_custom_call.1} parent=11 // pred_check
          %p345 = pneg %p157
        $region14: #{tpu_custom_call.1} parent=11 // pred_check_branch
          %347 = sbr.rel (%p345) target = $region16
        $region15: #{tpu_custom_call.1} parent=11 // pred_region
          %s349 = ssub.s32 8192, 8192
          %350 = vsyncadd [#allocation9], %s349
          %s351 = sshll.u32 [#allocation10], 4
          %s352 = int_to_ptr.vmem [resolvable:$true] %s351
          %357 = dma.hbm_to_vmem [thread:$0]  %s4, 8192, %s352, [#allocation9], 64, 64, 4
        $region16: #{tpu_custom_call.1} parent=11 // pred_fallthru
          _
        // Predicated region
        $region17: #{tpu_custom_call.1} parent=11 // pred_check
          %p358 = pneg %p178
        $region18: #{tpu_custom_call.1} parent=11 // pred_check_branch
          %360 = sbr.rel (%p358) target = $region20
        $region19: #{tpu_custom_call.1} parent=11 // pred_region
          %s362 = ssub.s32 1024, 1024
          %363 = vsyncadd [#allocation12], %s362
          %s364 = sshll.u32 [#allocation11], 4
          %s365 = int_to_ptr.vmem [resolvable:$true] %s364
          %370 = dma.hbm_to_vmem [thread:$0]  %s5, 1024, %s365, [#allocation12], 64, 64, 4
        $region20: #{tpu_custom_call.1} parent=11 // pred_fallthru
          _
        // Predicated region
        $region21: #{tpu_custom_call.1} parent=11 // pred_check
          %p371 = pneg %p199
        $region22: #{tpu_custom_call.1} parent=11 // pred_check_branch
          %373 = sbr.rel (%p371) target = $region24
        $region23: #{tpu_custom_call.1} parent=11 // pred_region
          _
        $region24: #{tpu_custom_call.1} parent=11 // pred_fallthru
          _
        // Predicated region
        $region25: #{tpu_custom_call.1} parent=11 // pred_check
          %p374 = pneg %p220
        $region26: #{tpu_custom_call.1} parent=11 // pred_check_branch
          %376 = sbr.rel (%p374) target = $region28
        $region27: #{tpu_custom_call.1} parent=11 // pred_region
          %s378 = ssub.s32 1024, 1024
          %379 = vsyncadd [#allocation12], %s378
          %s380 = sshll.u32 [#allocation13], 4
          %s381 = int_to_ptr.vmem [resolvable:$true] %s380
          %386 = dma.hbm_to_vmem [thread:$0]  %s7, 1024, %s381, [#allocation12], 64, 64, 4
        $region28: #{tpu_custom_call.1} parent=11 // pred_fallthru
          _
        // Predicated region
        $region29: #{tpu_custom_call.1} parent=11 // pred_check
          %p387 = pneg %p241
        $region30: #{tpu_custom_call.1} parent=11 // pred_check_branch
          %389 = sbr.rel (%p387) target = $region32
        $region31: #{tpu_custom_call.1} parent=11 // pred_region
          _
        $region32: #{tpu_custom_call.1} parent=11 // pred_fallthru
          _
        // Predicated region
        $region33: #{tpu_custom_call.1} parent=11 // pred_check
          %p390 = pneg %p262
        $region34: #{tpu_custom_call.1} parent=11 // pred_check_branch
          %392 = sbr.rel (%p390) target = $region36
        $region35: #{tpu_custom_call.1} parent=11 // pred_region
          %s394 = ssub.s32 1024, 1024
          %395 = vsyncadd [#allocation15], %s394
          %s396 = sshll.u32 [#allocation14], 4
          %s397 = int_to_ptr.vmem [resolvable:$true] %s396
          %402 = dma.hbm_to_vmem [thread:$0]  %s9, 1024, %s397, [#allocation15], 64, 64, 4
        $region36: #{tpu_custom_call.1} parent=11 // pred_fallthru
          _
        // Predicated region
        $region37: #{tpu_custom_call.1} parent=11 // pred_check
          %p403 = pneg %p283
        $region38: #{tpu_custom_call.1} parent=11 // pred_check_branch
          %405 = sbr.rel (%p403) target = $region40
        $region39: #{tpu_custom_call.1} parent=11 // pred_region
          %s407 = ssub.s32 8192, 8192
          %408 = vsyncadd [#allocation15], %s407
          %s409 = sshll.u32 [#allocation16], 4
          %s410 = int_to_ptr.vmem [resolvable:$true] %s409
          %415 = dma.hbm_to_vmem [thread:$0]  %s10, 8192, %s410, [#allocation15], 512, 512, 32
        $region40: #{tpu_custom_call.1} parent=11 // pred_fallthru
          _
        // Predicated region
        $region41: #{tpu_custom_call.1} parent=11 // pred_check
          %p416 = pneg %p304
        $region42: #{tpu_custom_call.1} parent=11 // pred_check_branch
          %418 = sbr.rel (%p416) target = $region44
        $region43: #{tpu_custom_call.1} parent=11 // pred_region
          _
        $region44: #{tpu_custom_call.1} parent=11 // pred_fallthru
          _
      $region12: #{tpu_custom_call.1} parent=5 // pred_fallthru
        _
      %p419 = scmp.lt.s32.totalorder %s32, 2
      // Predicated region
      $region45: #{tpu_custom_call.1} parent=5 // pred_check
        %p420 = pneg %p419
      $region46: #{tpu_custom_call.1} parent=5 // pred_check_branch
        %422 = sbr.rel (%p420) target = $region48
      $region47: #{tpu_custom_call.1} parent=5 // pred_region
        // Predicated region
        $region49: #{tpu_custom_call.1} parent=47 // pred_check
          %p423 = pneg %p52
        $region50: #{tpu_custom_call.1} parent=47 // pred_check_branch
          %425 = sbr.rel (%p423) target = $region52
        $region51: #{tpu_custom_call.1} parent=47 // pred_region
          %s426 = sand.u32 %s42, 1
          %s427 = scalar_lea.sflag [#allocation3], %s426
          %s428 = sand.u32 %s42, 1
          %s429 = smul.addr %s428, 512
          %s430 = scalar_lea.vmem [#allocation2], %s429
          %s431 = smul.u32 16, %s32
          %s433 = ssub.s32 8192, 8192
          %434 = vsyncadd %s427, %s433
          %s435 = smul.addr %s431, 8
          %s436 = smul.addr %s435, 64
          %s437 = scalar_lea.hbm %s0, %s436
          %s438 = sshll.u32 %s430, 4
          %s439 = int_to_ptr.vmem [resolvable:$true] %s438
          %444 = dma.hbm_to_vmem [thread:$0]  %s437, 8192, %s439, %s427, 512, 512, 32
        $region52: #{tpu_custom_call.1} parent=47 // pred_fallthru
          _
        // Predicated region
        $region53: #{tpu_custom_call.1} parent=47 // pred_check
          %p445 = pneg %p78
        $region54: #{tpu_custom_call.1} parent=47 // pred_check_branch
          %447 = sbr.rel (%p445) target = $region56
        $region55: #{tpu_custom_call.1} parent=47 // pred_region
          %s448 = sand.u32 %s32, 1
          %s449 = scalar_lea.sflag [#allocation6], %s448
          %s450 = sand.u32 %s68, 1
          %s451 = smul.addr %s450, 128
          %s452 = scalar_lea.vmem [#allocation5], %s451
          %s453 = smul.u32 16, %s32
          %s455 = ssub.s32 2048, 2048
          %456 = vsyncadd %s449, %s455
          %s457 = smul.addr %s453, 128
          %s458 = scalar_lea.hbm %s1, %s457
          %s459 = sshll.u32 %s452, 4
          %s460 = int_to_ptr.vmem [resolvable:$true] %s459
          %465 = dma.hbm_to_vmem [thread:$0]  %s458, 2048, %s460, %s449, 128, 128, 8
        $region56: #{tpu_custom_call.1} parent=47 // pred_fallthru
          _
        // Predicated region
        $region57: #{tpu_custom_call.1} parent=47 // pred_check
          %p466 = pneg %p104
        $region58: #{tpu_custom_call.1} parent=47 // pred_check_branch
          %468 = sbr.rel (%p466) target = $region60
        $region59: #{tpu_custom_call.1} parent=47 // pred_region
          %s469 = sand.u32 %s32, 1
          %s470 = scalar_lea.sflag [#allocation6], %s469
          %s471 = sand.u32 %s94, 1
          %s472 = smul.addr %s471, 128
          %s473 = scalar_lea.vmem [#allocation7], %s472
          %s474 = smul.u32 16, %s32
          %s476 = ssub.s32 2048, 2048
          %477 = vsyncadd %s470, %s476
          %s478 = smul.addr %s474, 128
          %s479 = scalar_lea.hbm %s2, %s478
          %s480 = sshll.u32 %s473, 4
          %s481 = int_to_ptr.vmem [resolvable:$true] %s480
          %486 = dma.hbm_to_vmem [thread:$0]  %s479, 2048, %s481, %s470, 128, 128, 8
        $region60: #{tpu_custom_call.1} parent=47 // pred_fallthru
          _
        // Predicated region
        $region61: #{tpu_custom_call.1} parent=47 // pred_check
          %p487 = pneg %p130
        $region62: #{tpu_custom_call.1} parent=47 // pred_check_branch
          %489 = sbr.rel (%p487) target = $region64
        $region63: #{tpu_custom_call.1} parent=47 // pred_region
          %s490 = sand.u32 %s32, 1
          %s491 = scalar_lea.sflag [#allocation9], %s490
          %s492 = sand.u32 %s120, 1
          %s493 = smul.addr %s492, 128
          %s494 = scalar_lea.vmem [#allocation8], %s493
          %s495 = smul.u32 16, %s32
          %s497 = ssub.s32 2048, 2048
          %498 = vsyncadd %s491, %s497
          %s499 = smul.addr %s495, 128
          %s500 = scalar_lea.hbm %s3, %s499
          %s501 = sshll.u32 %s494, 4
          %s502 = int_to_ptr.vmem [resolvable:$true] %s501
          %507 = dma.hbm_to_vmem [thread:$0]  %s500, 2048, %s502, %s491, 128, 128, 8
        $region64: #{tpu_custom_call.1} parent=47 // pred_fallthru
          _
      $region48: #{tpu_custom_call.1} parent=5 // pred_fallthru
        _
      %p508 = scmp.le.s32.totalorder 1, %s32
      %p509 = scmp.lt.s32.totalorder %s32, 3
      %p510 = pnand %p508, %p509
      %p511 = pneg %p510
      // Predicated region
      $region65: #{tpu_custom_call.1} parent=5 // pred_check
        _
      $region66: #{tpu_custom_call.1} parent=5 // pred_check_branch
        %513 = sbr.rel (%p510) target = $region68
      $region67: #{tpu_custom_call.1} parent=5 // pred_region
        %s514 = ssub.s32 %s32, 1
        %s515 = sand.u32 %s45, 1
        %s516 = scalar_lea.sflag [#allocation3], %s515
        %s517 = sand.u32 %s45, 1
        %s518 = smul.addr %s517, 512
        %s519 = scalar_lea.vmem [#allocation2], %s518
        // Predicated region
        $region69: #{tpu_custom_call.1} parent=67 // pred_check
          %p520 = pneg %p58
        $region70: #{tpu_custom_call.1} parent=67 // pred_check_branch
          %522 = sbr.rel (%p520) target = $region72
        $region71: #{tpu_custom_call.1} parent=67 // pred_region
          %523 = dma.done %s516, 8192
        $region72: #{tpu_custom_call.1} parent=67 // pred_fallthru
          _
        %s524 = sand.u32 %s37, 1
        %s525 = scalar_lea.sflag [#allocation6], %s524
        %s526 = sand.u32 %s71, 1
        %s527 = smul.addr %s526, 128
        %s528 = scalar_lea.vmem [#allocation5], %s527
        // Predicated region
        $region73: #{tpu_custom_call.1} parent=67 // pred_check
          %p529 = pneg %p84
        $region74: #{tpu_custom_call.1} parent=67 // pred_check_branch
          %531 = sbr.rel (%p529) target = $region76
        $region75: #{tpu_custom_call.1} parent=67 // pred_region
          %532 = dma.done %s525, 2048
        $region76: #{tpu_custom_call.1} parent=67 // pred_fallthru
          _
        %s533 = sand.u32 %s37, 1
        %s534 = scalar_lea.sflag [#allocation6], %s533
        %s535 = sand.u32 %s97, 1
        %s536 = smul.addr %s535, 128
        %s537 = scalar_lea.vmem [#allocation7], %s536
        // Predicated region
        $region77: #{tpu_custom_call.1} parent=67 // pred_check
          %p538 = pneg %p110
        $region78: #{tpu_custom_call.1} parent=67 // pred_check_branch
          %540 = sbr.rel (%p538) target = $region80
        $region79: #{tpu_custom_call.1} parent=67 // pred_region
          %541 = dma.done %s534, 2048
        $region80: #{tpu_custom_call.1} parent=67 // pred_fallthru
          _
        %s542 = sand.u32 %s37, 1
        %s543 = scalar_lea.sflag [#allocation9], %s542
        %s544 = sand.u32 %s123, 1
        %s545 = smul.addr %s544, 128
        %s546 = scalar_lea.vmem [#allocation8], %s545
        // Predicated region
        $region81: #{tpu_custom_call.1} parent=67 // pred_check
          %p547 = pneg %p136
        $region82: #{tpu_custom_call.1} parent=67 // pred_check_branch
          %549 = sbr.rel (%p547) target = $region84
        $region83: #{tpu_custom_call.1} parent=67 // pred_region
          %550 = dma.done %s543, 2048
        $region84: #{tpu_custom_call.1} parent=67 // pred_fallthru
          _
        // Predicated region
        $region85: #{tpu_custom_call.1} parent=67 // pred_check
          %p551 = pneg %p157
        $region86: #{tpu_custom_call.1} parent=67 // pred_check_branch
          %553 = sbr.rel (%p551) target = $region88
        $region87: #{tpu_custom_call.1} parent=67 // pred_region
          %554 = dma.done [#allocation9], 8192
        $region88: #{tpu_custom_call.1} parent=67 // pred_fallthru
          _
        // Predicated region
        $region89: #{tpu_custom_call.1} parent=67 // pred_check
          %p555 = pneg %p178
        $region90: #{tpu_custom_call.1} parent=67 // pred_check_branch
          %557 = sbr.rel (%p555) target = $region92
        $region91: #{tpu_custom_call.1} parent=67 // pred_region
          %558 = dma.done [#allocation12], 1024
        $region92: #{tpu_custom_call.1} parent=67 // pred_fallthru
          _
        // Predicated region
        $region93: #{tpu_custom_call.1} parent=67 // pred_check
          %p559 = pneg %p220
        $region94: #{tpu_custom_call.1} parent=67 // pred_check_branch
          %561 = sbr.rel (%p559) target = $region96
        $region95: #{tpu_custom_call.1} parent=67 // pred_region
          %562 = dma.done [#allocation12], 1024
        $region96: #{tpu_custom_call.1} parent=67 // pred_fallthru
          _
        // Predicated region
        $region97: #{tpu_custom_call.1} parent=67 // pred_check
          %p563 = pneg %p262
        $region98: #{tpu_custom_call.1} parent=67 // pred_check_branch
          %565 = sbr.rel (%p563) target = $region100
        $region99: #{tpu_custom_call.1} parent=67 // pred_region
          %566 = dma.done [#allocation15], 1024
        $region100: #{tpu_custom_call.1} parent=67 // pred_fallthru
          _
        // Predicated region
        $region101: #{tpu_custom_call.1} parent=67 // pred_check
          %p567 = pneg %p283
        $region102: #{tpu_custom_call.1} parent=67 // pred_check_branch
          %569 = sbr.rel (%p567) target = $region104
        $region103: #{tpu_custom_call.1} parent=67 // pred_region
          %570 = dma.done [#allocation15], 8192
        $region104: #{tpu_custom_call.1} parent=67 // pred_fallthru
          _
        %s571 = sand.u32 %s45, 1
        %s572 = scalar_lea.sflag [#allocation3], %s571
        %s573 = sand.u32 %s45, 1
        %s574 = smul.addr %s573, 512
        %s575 = scalar_lea.vmem [#allocation2], %s574
        %p576 = pneg %p58
        %p577 = pneg %p55
        %s578 = sand.u32 %s37, 1
        %s579 = scalar_lea.sflag [#allocation6], %s578
        %s580 = sand.u32 %s71, 1
        %s581 = smul.addr %s580, 128
        %s582 = scalar_lea.vmem [#allocation5], %s581
        %p583 = pneg %p84
        %p584 = pneg %p81
        %s585 = sand.u32 %s37, 1
        %s586 = scalar_lea.sflag [#allocation6], %s585
        %s587 = sand.u32 %s97, 1
        %s588 = smul.addr %s587, 128
        %s589 = scalar_lea.vmem [#allocation7], %s588
        %p590 = pneg %p110
        %p591 = pneg %p107
        %s592 = sand.u32 %s37, 1
        %s593 = scalar_lea.sflag [#allocation9], %s592
        %s594 = sand.u32 %s123, 1
        %s595 = smul.addr %s594, 128
        %s596 = scalar_lea.vmem [#allocation8], %s595
        %p597 = pneg %p136
        %p598 = pneg %p133
        %p599 = pneg %p157
        %p600 = pneg %p154
        %p601 = pneg %p178
        %p602 = pneg %p175
        %p603 = pneg %p199
        %p604 = pneg %p196
        %p605 = pneg %p220
        %p606 = pneg %p217
        %p607 = pneg %p241
        %p608 = pneg %p238
        %p609 = pneg %p262
        %p610 = pneg %p259
        %p611 = pneg %p283
        %p612 = pneg %p280
        %p613 = pneg %p304
        %p614 = pneg %p301
        %p615 = pneg %p330
        %p616 = pneg %p327
        %s617 = sand.u32 %s317, 1
        %s618 = scalar_lea.sflag [#allocation4], %s617
        %s619 = sand.u32 %s317, 1
        %s620 = smul.addr %s619, 1024
        %s621 = scalar_lea.vmem [#allocation17], %s620
        %s622 = smul.u32 16, %s37
        %s623 = smul.u32 16, %s37
        %s624 = smul.u32 16, %s37
        %s625 = smul.u32 16, %s37
        %s626 = smul.u32 16, %s37
        %v628 = vld [vmem:[%s519] sm:$0xff]
        %v629 = vld [vmem:[%s519 + $0x8] sm:$0xff]
        %v630 = vld [vmem:[%s519 + $0x10] sm:$0xff]
        %v631 = vld [vmem:[%s519 + $0x18] sm:$0xff]
        %v632 = vld [vmem:[%s519 + $0x20] sm:$0xff]
        %v633 = vld [vmem:[%s519 + $0x28] sm:$0xff]
        %v634 = vld [vmem:[%s519 + $0x30] sm:$0xff]
        %v635 = vld [vmem:[%s519 + $0x38] sm:$0xff]
        %v636 = vld [vmem:[%s519 + $0x40] sm:$0xff]
        %v637 = vld [vmem:[%s519 + $0x48] sm:$0xff]
        %v638 = vld [vmem:[%s519 + $0x50] sm:$0xff]
        %v639 = vld [vmem:[%s519 + $0x58] sm:$0xff]
        %v640 = vld [vmem:[%s519 + $0x60] sm:$0xff]
        %v641 = vld [vmem:[%s519 + $0x68] sm:$0xff]
        %v642 = vld [vmem:[%s519 + $0x70] sm:$0xff]
        %v643 = vld [vmem:[%s519 + $0x78] sm:$0xff]
        %v644 = vld [vmem:[%s519 + $0x80] sm:$0xff]
        %v645 = vld [vmem:[%s519 + $0x88] sm:$0xff]
        %v646 = vld [vmem:[%s519 + $0x90] sm:$0xff]
        %v647 = vld [vmem:[%s519 + $0x98] sm:$0xff]
        %v648 = vld [vmem:[%s519 + $0xa0] sm:$0xff]
        %v649 = vld [vmem:[%s519 + $0xa8] sm:$0xff]
        %v650 = vld [vmem:[%s519 + $0xb0] sm:$0xff]
        %v651 = vld [vmem:[%s519 + $0xb8] sm:$0xff]
        %v652 = vld [vmem:[%s519 + $0xc0] sm:$0xff]
        %v653 = vld [vmem:[%s519 + $0xc8] sm:$0xff]
        %v654 = vld [vmem:[%s519 + $0xd0] sm:$0xff]
        %v655 = vld [vmem:[%s519 + $0xd8] sm:$0xff]
        %v656 = vld [vmem:[%s519 + $0xe0] sm:$0xff]
        %v657 = vld [vmem:[%s519 + $0xe8] sm:$0xff]
        %v658 = vld [vmem:[%s519 + $0xf0] sm:$0xff]
        %v659 = vld [vmem:[%s519 + $0xf8] sm:$0xff]
        %v660 = vld [vmem:[%s519 + $0x100] sm:$0xff]
        %v661 = vld [vmem:[%s519 + $0x108] sm:$0xff]
        %v662 = vld [vmem:[%s519 + $0x110] sm:$0xff]
        %v663 = vld [vmem:[%s519 + $0x118] sm:$0xff]
        %v664 = vld [vmem:[%s519 + $0x120] sm:$0xff]
        %v665 = vld [vmem:[%s519 + $0x128] sm:$0xff]
        %v666 = vld [vmem:[%s519 + $0x130] sm:$0xff]
        %v667 = vld [vmem:[%s519 + $0x138] sm:$0xff]
        %v668 = vld [vmem:[%s519 + $0x140] sm:$0xff]
        %v669 = vld [vmem:[%s519 + $0x148] sm:$0xff]
        %v670 = vld [vmem:[%s519 + $0x150] sm:$0xff]
        %v671 = vld [vmem:[%s519 + $0x158] sm:$0xff]
        %v672 = vld [vmem:[%s519 + $0x160] sm:$0xff]
        %v673 = vld [vmem:[%s519 + $0x168] sm:$0xff]
        %v674 = vld [vmem:[%s519 + $0x170] sm:$0xff]
        %v675 = vld [vmem:[%s519 + $0x178] sm:$0xff]
        %v676 = vld [vmem:[%s519 + $0x180] sm:$0xff]
        %v677 = vld [vmem:[%s519 + $0x188] sm:$0xff]
        %v678 = vld [vmem:[%s519 + $0x190] sm:$0xff]
        %v679 = vld [vmem:[%s519 + $0x198] sm:$0xff]
        %v680 = vld [vmem:[%s519 + $0x1a0] sm:$0xff]
        %v681 = vld [vmem:[%s519 + $0x1a8] sm:$0xff]
        %v682 = vld [vmem:[%s519 + $0x1b0] sm:$0xff]
        %v683 = vld [vmem:[%s519 + $0x1b8] sm:$0xff]
        %v684 = vld [vmem:[%s519 + $0x1c0] sm:$0xff]
        %v685 = vld [vmem:[%s519 + $0x1c8] sm:$0xff]
        %v686 = vld [vmem:[%s519 + $0x1d0] sm:$0xff]
        %v687 = vld [vmem:[%s519 + $0x1d8] sm:$0xff]
        %v688 = vld [vmem:[%s519 + $0x1e0] sm:$0xff]
        %v689 = vld [vmem:[%s519 + $0x1e8] sm:$0xff]
        %v690 = vld [vmem:[%s519 + $0x1f0] sm:$0xff]
        %v691 = vld [vmem:[%s519 + $0x1f8] sm:$0xff]
        %v692 = vld [vmem:[#allocation10] sm:$0xf]
        %v693 = vld [vmem:[#allocation10 + $0x4] sm:$0xf]
        %v694 = vld [vmem:[#allocation10 + $0x8] sm:$0xf]
        %v695 = vld [vmem:[#allocation10 + $0xc] sm:$0xf]
        %v696 = vld [vmem:[#allocation10 + $0x10] sm:$0xf]
        %v697 = vld [vmem:[#allocation10 + $0x14] sm:$0xf]
        %v698 = vld [vmem:[#allocation10 + $0x18] sm:$0xf]
        %v699 = vld [vmem:[#allocation10 + $0x1c] sm:$0xf]
        %v700 = vld [vmem:[#allocation10 + $0x20] sm:$0xf]
        %v701 = vld [vmem:[#allocation10 + $0x24] sm:$0xf]
        %v702 = vld [vmem:[#allocation10 + $0x28] sm:$0xf]
        %v703 = vld [vmem:[#allocation10 + $0x2c] sm:$0xf]
        %v704 = vld [vmem:[#allocation10 + $0x30] sm:$0xf]
        %v705 = vld [vmem:[#allocation10 + $0x34] sm:$0xf]
        %v706 = vld [vmem:[#allocation10 + $0x38] sm:$0xf]
        %v707 = vld [vmem:[#allocation10 + $0x3c] sm:$0xf]
        %v708 = vld [vmem:[#allocation10 + $0x40] sm:$0xf]
        %v709 = vld [vmem:[#allocation10 + $0x44] sm:$0xf]
        %v710 = vld [vmem:[#allocation10 + $0x48] sm:$0xf]
        %v711 = vld [vmem:[#allocation10 + $0x4c] sm:$0xf]
        %v712 = vld [vmem:[#allocation10 + $0x50] sm:$0xf]
        %v713 = vld [vmem:[#allocation10 + $0x54] sm:$0xf]
        %v714 = vld [vmem:[#allocation10 + $0x58] sm:$0xf]
        %v715 = vld [vmem:[#allocation10 + $0x5c] sm:$0xf]
        %v716 = vld [vmem:[#allocation10 + $0x60] sm:$0xf]
        %v717 = vld [vmem:[#allocation10 + $0x64] sm:$0xf]
        %v718 = vld [vmem:[#allocation10 + $0x68] sm:$0xf]
        %v719 = vld [vmem:[#allocation10 + $0x6c] sm:$0xf]
        %v720 = vld [vmem:[#allocation10 + $0x70] sm:$0xf]
        %v721 = vld [vmem:[#allocation10 + $0x74] sm:$0xf]
        %v722 = vld [vmem:[#allocation10 + $0x78] sm:$0xf]
        %v723 = vld [vmem:[#allocation10 + $0x7c] sm:$0xf]
        %v724 = vld [vmem:[#allocation10 + $0x80] sm:$0xf]
        %v725 = vld [vmem:[#allocation10 + $0x84] sm:$0xf]
        %v726 = vld [vmem:[#allocation10 + $0x88] sm:$0xf]
        %v727 = vld [vmem:[#allocation10 + $0x8c] sm:$0xf]
        %v728 = vld [vmem:[#allocation10 + $0x90] sm:$0xf]
        %v729 = vld [vmem:[#allocation10 + $0x94] sm:$0xf]
        %v730 = vld [vmem:[#allocation10 + $0x98] sm:$0xf]
        %v731 = vld [vmem:[#allocation10 + $0x9c] sm:$0xf]
        %v732 = vld [vmem:[#allocation10 + $0xa0] sm:$0xf]
        %v733 = vld [vmem:[#allocation10 + $0xa4] sm:$0xf]
        %v734 = vld [vmem:[#allocation10 + $0xa8] sm:$0xf]
        %v735 = vld [vmem:[#allocation10 + $0xac] sm:$0xf]
        %v736 = vld [vmem:[#allocation10 + $0xb0] sm:$0xf]
        %v737 = vld [vmem:[#allocation10 + $0xb4] sm:$0xf]
        %v738 = vld [vmem:[#allocation10 + $0xb8] sm:$0xf]
        %v739 = vld [vmem:[#allocation10 + $0xbc] sm:$0xf]
        %v740 = vld [vmem:[#allocation10 + $0xc0] sm:$0xf]
        %v741 = vld [vmem:[#allocation10 + $0xc4] sm:$0xf]
        %v742 = vld [vmem:[#allocation10 + $0xc8] sm:$0xf]
        %v743 = vld [vmem:[#allocation10 + $0xcc] sm:$0xf]
        %v744 = vld [vmem:[#allocation10 + $0xd0] sm:$0xf]
        %v745 = vld [vmem:[#allocation10 + $0xd4] sm:$0xf]
        %v746 = vld [vmem:[#allocation10 + $0xd8] sm:$0xf]
        %v747 = vld [vmem:[#allocation10 + $0xdc] sm:$0xf]
        %v748 = vld [vmem:[#allocation10 + $0xe0] sm:$0xf]
        %v749 = vld [vmem:[#allocation10 + $0xe4] sm:$0xf]
        %v750 = vld [vmem:[#allocation10 + $0xe8] sm:$0xf]
        %v751 = vld [vmem:[#allocation10 + $0xec] sm:$0xf]
        %v752 = vld [vmem:[#allocation10 + $0xf0] sm:$0xf]
        %v753 = vld [vmem:[#allocation10 + $0xf4] sm:$0xf]
        %v754 = vld [vmem:[#allocation10 + $0xf8] sm:$0xf]
        %v755 = vld [vmem:[#allocation10 + $0xfc] sm:$0xf]
        %v756 = vld [vmem:[#allocation10 + $0x100] sm:$0xf]
        %v757 = vld [vmem:[#allocation10 + $0x104] sm:$0xf]
        %v758 = vld [vmem:[#allocation10 + $0x108] sm:$0xf]
        %v759 = vld [vmem:[#allocation10 + $0x10c] sm:$0xf]
        %v760 = vld [vmem:[#allocation10 + $0x110] sm:$0xf]
        %v761 = vld [vmem:[#allocation10 + $0x114] sm:$0xf]
        %v762 = vld [vmem:[#allocation10 + $0x118] sm:$0xf]
        %v763 = vld [vmem:[#allocation10 + $0x11c] sm:$0xf]
        %v764 = vld [vmem:[#allocation10 + $0x120] sm:$0xf]
        %v765 = vld [vmem:[#allocation10 + $0x124] sm:$0xf]
        %v766 = vld [vmem:[#allocation10 + $0x128] sm:$0xf]
        %v767 = vld [vmem:[#allocation10 + $0x12c] sm:$0xf]
        %v768 = vld [vmem:[#allocation10 + $0x130] sm:$0xf]
        %v769 = vld [vmem:[#allocation10 + $0x134] sm:$0xf]
        %v770 = vld [vmem:[#allocation10 + $0x138] sm:$0xf]
        %v771 = vld [vmem:[#allocation10 + $0x13c] sm:$0xf]
        %v772 = vld [vmem:[#allocation10 + $0x140] sm:$0xf]
        %v773 = vld [vmem:[#allocation10 + $0x144] sm:$0xf]
        %v774 = vld [vmem:[#allocation10 + $0x148] sm:$0xf]
        %v775 = vld [vmem:[#allocation10 + $0x14c] sm:$0xf]
        %v776 = vld [vmem:[#allocation10 + $0x150] sm:$0xf]
        %v777 = vld [vmem:[#allocation10 + $0x154] sm:$0xf]
        %v778 = vld [vmem:[#allocation10 + $0x158] sm:$0xf]
        %v779 = vld [vmem:[#allocation10 + $0x15c] sm:$0xf]
        %v780 = vld [vmem:[#allocation10 + $0x160] sm:$0xf]
        %v781 = vld [vmem:[#allocation10 + $0x164] sm:$0xf]
        %v782 = vld [vmem:[#allocation10 + $0x168] sm:$0xf]
        %v783 = vld [vmem:[#allocation10 + $0x16c] sm:$0xf]
        %v784 = vld [vmem:[#allocation10 + $0x170] sm:$0xf]
        %v785 = vld [vmem:[#allocation10 + $0x174] sm:$0xf]
        %v786 = vld [vmem:[#allocation10 + $0x178] sm:$0xf]
        %v787 = vld [vmem:[#allocation10 + $0x17c] sm:$0xf]
        %v788 = vld [vmem:[#allocation10 + $0x180] sm:$0xf]
        %v789 = vld [vmem:[#allocation10 + $0x184] sm:$0xf]
        %v790 = vld [vmem:[#allocation10 + $0x188] sm:$0xf]
        %v791 = vld [vmem:[#allocation10 + $0x18c] sm:$0xf]
        %v792 = vld [vmem:[#allocation10 + $0x190] sm:$0xf]
        %v793 = vld [vmem:[#allocation10 + $0x194] sm:$0xf]
        %v794 = vld [vmem:[#allocation10 + $0x198] sm:$0xf]
        %v795 = vld [vmem:[#allocation10 + $0x19c] sm:$0xf]
        %v796 = vld [vmem:[#allocation10 + $0x1a0] sm:$0xf]
        %v797 = vld [vmem:[#allocation10 + $0x1a4] sm:$0xf]
        %v798 = vld [vmem:[#allocation10 + $0x1a8] sm:$0xf]
        %v799 = vld [vmem:[#allocation10 + $0x1ac] sm:$0xf]
        %v800 = vld [vmem:[#allocation10 + $0x1b0] sm:$0xf]
        %v801 = vld [vmem:[#allocation10 + $0x1b4] sm:$0xf]
        %v802 = vld [vmem:[#allocation10 + $0x1b8] sm:$0xf]
        %v803 = vld [vmem:[#allocation10 + $0x1bc] sm:$0xf]
        %v804 = vld [vmem:[#allocation10 + $0x1c0] sm:$0xf]
        %v805 = vld [vmem:[#allocation10 + $0x1c4] sm:$0xf]
        %v806 = vld [vmem:[#allocation10 + $0x1c8] sm:$0xf]
        %v807 = vld [vmem:[#allocation10 + $0x1cc] sm:$0xf]
        %v808 = vld [vmem:[#allocation10 + $0x1d0] sm:$0xf]
        %v809 = vld [vmem:[#allocation10 + $0x1d4] sm:$0xf]
        %v810 = vld [vmem:[#allocation10 + $0x1d8] sm:$0xf]
        %v811 = vld [vmem:[#allocation10 + $0x1dc] sm:$0xf]
        %v812 = vld [vmem:[#allocation10 + $0x1e0] sm:$0xf]
        %v813 = vld [vmem:[#allocation10 + $0x1e4] sm:$0xf]
        %v814 = vld [vmem:[#allocation10 + $0x1e8] sm:$0xf]
        %v815 = vld [vmem:[#allocation10 + $0x1ec] sm:$0xf]
        %v816 = vld [vmem:[#allocation10 + $0x1f0] sm:$0xf]
        %v817 = vld [vmem:[#allocation10 + $0x1f4] sm:$0xf]
        %v818 = vld [vmem:[#allocation10 + $0x1f8] sm:$0xf]
        %v819 = vld [vmem:[#allocation10 + $0x1fc] sm:$0xf]
        %v820 = vld [vmem:[%s528] sm:$0xff]
        %v821 = vld [vmem:[%s528 + $0x8] sm:$0xff]
        %v822 = vld [vmem:[%s528 + $0x10] sm:$0xff]
        %v823 = vld [vmem:[%s528 + $0x18] sm:$0xff]
        %v824 = vld [vmem:[%s528 + $0x20] sm:$0xff]
        %v825 = vld [vmem:[%s528 + $0x28] sm:$0xff]
        %v826 = vld [vmem:[%s528 + $0x30] sm:$0xff]
        %v827 = vld [vmem:[%s528 + $0x38] sm:$0xff]
        %v828 = vld [vmem:[%s528 + $0x40] sm:$0xff]
        %v829 = vld [vmem:[%s528 + $0x48] sm:$0xff]
        %v830 = vld [vmem:[%s528 + $0x50] sm:$0xff]
        %v831 = vld [vmem:[%s528 + $0x58] sm:$0xff]
        %v832 = vld [vmem:[%s528 + $0x60] sm:$0xff]
        %v833 = vld [vmem:[%s528 + $0x68] sm:$0xff]
        %v834 = vld [vmem:[%s528 + $0x70] sm:$0xff]
        %v835 = vld [vmem:[%s528 + $0x78] sm:$0xff]
        %v900 = vunpack.c.l.b16 %v628
        %v901 = vunpack.c.h.b16 %v628
        %v902 = vunpack.c.l.b16 %v629
        %v903 = vunpack.c.h.b16 %v629
        %v904 = vunpack.c.l.b16 %v630
        %v905 = vunpack.c.h.b16 %v630
        %v906 = vunpack.c.l.b16 %v631
        %v907 = vunpack.c.h.b16 %v631
        %v908 = vunpack.c.l.b16 %v632
        %v909 = vunpack.c.h.b16 %v632
        %v910 = vunpack.c.l.b16 %v633
        %v911 = vunpack.c.h.b16 %v633
        %v912 = vunpack.c.l.b16 %v634
        %v913 = vunpack.c.h.b16 %v634
        %v914 = vunpack.c.l.b16 %v635
        %v915 = vunpack.c.h.b16 %v635
        %v916 = vunpack.c.l.b16 %v636
        %v917 = vunpack.c.h.b16 %v636
        %v918 = vunpack.c.l.b16 %v637
        %v919 = vunpack.c.h.b16 %v637
        %v920 = vunpack.c.l.b16 %v638
        %v921 = vunpack.c.h.b16 %v638
        %v922 = vunpack.c.l.b16 %v639
        %v923 = vunpack.c.h.b16 %v639
        %v924 = vunpack.c.l.b16 %v640
        %v925 = vunpack.c.h.b16 %v640
        %v926 = vunpack.c.l.b16 %v641
        %v927 = vunpack.c.h.b16 %v641
        %v928 = vunpack.c.l.b16 %v642
        %v929 = vunpack.c.h.b16 %v642
        %v930 = vunpack.c.l.b16 %v643
        %v931 = vunpack.c.h.b16 %v643
        %v932 = vunpack.c.l.b16 %v644
        %v933 = vunpack.c.h.b16 %v644
        %v934 = vunpack.c.l.b16 %v645
        %v935 = vunpack.c.h.b16 %v645
        %v936 = vunpack.c.l.b16 %v646
        %v937 = vunpack.c.h.b16 %v646
        %v938 = vunpack.c.l.b16 %v647
        %v939 = vunpack.c.h.b16 %v647
        %v940 = vunpack.c.l.b16 %v648
        %v941 = vunpack.c.h.b16 %v648
        %v942 = vunpack.c.l.b16 %v649
        %v943 = vunpack.c.h.b16 %v649
        %v944 = vunpack.c.l.b16 %v650
        %v945 = vunpack.c.h.b16 %v650
        %v946 = vunpack.c.l.b16 %v651
        %v947 = vunpack.c.h.b16 %v651
        %v948 = vunpack.c.l.b16 %v652
        %v949 = vunpack.c.h.b16 %v652
        %v950 = vunpack.c.l.b16 %v653
        %v951 = vunpack.c.h.b16 %v653
        %v952 = vunpack.c.l.b16 %v654
        %v953 = vunpack.c.h.b16 %v654
        %v954 = vunpack.c.l.b16 %v655
        %v955 = vunpack.c.h.b16 %v655
        %v956 = vunpack.c.l.b16 %v656
        %v957 = vunpack.c.h.b16 %v656
        %v958 = vunpack.c.l.b16 %v657
        %v959 = vunpack.c.h.b16 %v657
        %v960 = vunpack.c.l.b16 %v658
        %v961 = vunpack.c.h.b16 %v658
        %v962 = vunpack.c.l.b16 %v659
        %v963 = vunpack.c.h.b16 %v659
        %v964 = vunpack.c.l.b16 %v660
        %v965 = vunpack.c.h.b16 %v660
        %v966 = vunpack.c.l.b16 %v661
        %v967 = vunpack.c.h.b16 %v661
        %v968 = vunpack.c.l.b16 %v662
        %v969 = vunpack.c.h.b16 %v662
        %v970 = vunpack.c.l.b16 %v663
        %v971 = vunpack.c.h.b16 %v663
        %v972 = vunpack.c.l.b16 %v664
        %v973 = vunpack.c.h.b16 %v664
        %v974 = vunpack.c.l.b16 %v665
        %v975 = vunpack.c.h.b16 %v665
        %v976 = vunpack.c.l.b16 %v666
        %v977 = vunpack.c.h.b16 %v666
        %v978 = vunpack.c.l.b16 %v667
        %v979 = vunpack.c.h.b16 %v667
        %v980 = vunpack.c.l.b16 %v668
        %v981 = vunpack.c.h.b16 %v668
        %v982 = vunpack.c.l.b16 %v669
        %v983 = vunpack.c.h.b16 %v669
        %v984 = vunpack.c.l.b16 %v670
        %v985 = vunpack.c.h.b16 %v670
        %v986 = vunpack.c.l.b16 %v671
        %v987 = vunpack.c.h.b16 %v671
        %v988 = vunpack.c.l.b16 %v672
        %v989 = vunpack.c.h.b16 %v672
        %v990 = vunpack.c.l.b16 %v673
        %v991 = vunpack.c.h.b16 %v673
        %v992 = vunpack.c.l.b16 %v674
        %v993 = vunpack.c.h.b16 %v674
        %v994 = vunpack.c.l.b16 %v675
        %v995 = vunpack.c.h.b16 %v675
        %v996 = vunpack.c.l.b16 %v676
        %v997 = vunpack.c.h.b16 %v676
        %v998 = vunpack.c.l.b16 %v677
        %v999 = vunpack.c.h.b16 %v677
        %v1000 = vunpack.c.l.b16 %v678
        %v1001 = vunpack.c.h.b16 %v678
        %v1002 = vunpack.c.l.b16 %v679
        %v1003 = vunpack.c.h.b16 %v679
        %v1004 = vunpack.c.l.b16 %v680
        %v1005 = vunpack.c.h.b16 %v680
        %v1006 = vunpack.c.l.b16 %v681
        %v1007 = vunpack.c.h.b16 %v681
        %v1008 = vunpack.c.l.b16 %v682
        %v1009 = vunpack.c.h.b16 %v682
        %v1010 = vunpack.c.l.b16 %v683
        %v1011 = vunpack.c.h.b16 %v683
        %v1012 = vunpack.c.l.b16 %v684
        %v1013 = vunpack.c.h.b16 %v684
        %v1014 = vunpack.c.l.b16 %v685
        %v1015 = vunpack.c.h.b16 %v685
        %v1016 = vunpack.c.l.b16 %v686
        %v1017 = vunpack.c.h.b16 %v686
        %v1018 = vunpack.c.l.b16 %v687
        %v1019 = vunpack.c.h.b16 %v687
        %v1020 = vunpack.c.l.b16 %v688
        %v1021 = vunpack.c.h.b16 %v688
        %v1022 = vunpack.c.l.b16 %v689
        %v1023 = vunpack.c.h.b16 %v689
        %v1024 = vunpack.c.l.b16 %v690
        %v1025 = vunpack.c.h.b16 %v690
        %v1026 = vunpack.c.l.b16 %v691
        %v1027 = vunpack.c.h.b16 %v691
        %v1028 = vpack.c.b16 %v908, %v900
        %v1029 = vpack.c.b16 %v909, %v901
        %v1030 = vpack.c.b16 %v910, %v902
        %v1031 = vpack.c.b16 %v911, %v903
        %v1032 = vpack.c.b16 %v912, %v904
        %v1033 = vpack.c.b16 %v913, %v905
        %v1034 = vpack.c.b16 %v914, %v906
        %v1035 = vpack.c.b16 %v915, %v907
        %v1036 = vpack.c.b16 %v924, %v916
        %v1037 = vpack.c.b16 %v925, %v917
        %v1038 = vpack.c.b16 %v926, %v918
        %v1039 = vpack.c.b16 %v927, %v919
        %v1040 = vpack.c.b16 %v928, %v920
        %v1041 = vpack.c.b16 %v929, %v921
        %v1042 = vpack.c.b16 %v930, %v922
        %v1043 = vpack.c.b16 %v931, %v923
        %v1044 = vpack.c.b16 %v940, %v932
        %v1045 = vpack.c.b16 %v941, %v933
        %v1046 = vpack.c.b16 %v942, %v934
        %v1047 = vpack.c.b16 %v943, %v935
        %v1048 = vpack.c.b16 %v944, %v936
        %v1049 = vpack.c.b16 %v945, %v937
        %v1050 = vpack.c.b16 %v946, %v938
        %v1051 = vpack.c.b16 %v947, %v939
        %v1052 = vpack.c.b16 %v956, %v948
        %v1053 = vpack.c.b16 %v957, %v949
        %v1054 = vpack.c.b16 %v958, %v950
        %v1055 = vpack.c.b16 %v959, %v951
        %v1056 = vpack.c.b16 %v960, %v952
        %v1057 = vpack.c.b16 %v961, %v953
        %v1058 = vpack.c.b16 %v962, %v954
        %v1059 = vpack.c.b16 %v963, %v955
        %v1060 = vpack.c.b16 %v972, %v964
        %v1061 = vpack.c.b16 %v973, %v965
        %v1062 = vpack.c.b16 %v974, %v966
        %v1063 = vpack.c.b16 %v975, %v967
        %v1064 = vpack.c.b16 %v976, %v968
        %v1065 = vpack.c.b16 %v977, %v969
        %v1066 = vpack.c.b16 %v978, %v970
        %v1067 = vpack.c.b16 %v979, %v971
        %v1068 = vpack.c.b16 %v988, %v980
        %v1069 = vpack.c.b16 %v989, %v981
        %v1070 = vpack.c.b16 %v990, %v982
        %v1071 = vpack.c.b16 %v991, %v983
        %v1072 = vpack.c.b16 %v992, %v984
        %v1073 = vpack.c.b16 %v993, %v985
        %v1074 = vpack.c.b16 %v994, %v986
        %v1075 = vpack.c.b16 %v995, %v987
        %v1076 = vpack.c.b16 %v1004, %v996
        %v1077 = vpack.c.b16 %v1005, %v997
        %v1078 = vpack.c.b16 %v1006, %v998
        %v1079 = vpack.c.b16 %v1007, %v999
        %v1080 = vpack.c.b16 %v1008, %v1000
        %v1081 = vpack.c.b16 %v1009, %v1001
        %v1082 = vpack.c.b16 %v1010, %v1002
        %v1083 = vpack.c.b16 %v1011, %v1003
        %v1084 = vpack.c.b16 %v1020, %v1012
        %v1085 = vpack.c.b16 %v1021, %v1013
        %v1086 = vpack.c.b16 %v1022, %v1014
        %v1087 = vpack.c.b16 %v1023, %v1015
        %v1088 = vpack.c.b16 %v1024, %v1016
        %v1089 = vpack.c.b16 %v1025, %v1017
        %v1090 = vpack.c.b16 %v1026, %v1018
        %v1091 = vpack.c.b16 %v1027, %v1019
        %v1284 = vunpack.c.l.b16 %v692
        %v1285 = vunpack.c.l.b16 %v693
        %v1286 = vunpack.c.l.b16 %v694
        %v1287 = vunpack.c.l.b16 %v695
        %v1288 = vunpack.c.l.b16 %v696
        %v1289 = vunpack.c.l.b16 %v697
        %v1290 = vunpack.c.l.b16 %v698
        %v1291 = vunpack.c.l.b16 %v699
        %v1292 = vunpack.c.l.b16 %v700
        %v1293 = vunpack.c.l.b16 %v701
        %v1294 = vunpack.c.l.b16 %v702
        %v1295 = vunpack.c.l.b16 %v703
        %v1296 = vunpack.c.l.b16 %v704
        %v1297 = vunpack.c.l.b16 %v705
        %v1298 = vunpack.c.l.b16 %v706
        %v1299 = vunpack.c.l.b16 %v707
        %v1300 = vunpack.c.l.b16 %v708
        %v1301 = vunpack.c.l.b16 %v709
        %v1302 = vunpack.c.l.b16 %v710
        %v1303 = vunpack.c.l.b16 %v711
        %v1304 = vunpack.c.l.b16 %v712
        %v1305 = vunpack.c.l.b16 %v713
        %v1306 = vunpack.c.l.b16 %v714
        %v1307 = vunpack.c.l.b16 %v715
        %v1308 = vunpack.c.l.b16 %v716
        %v1309 = vunpack.c.l.b16 %v717
        %v1310 = vunpack.c.l.b16 %v718
        %v1311 = vunpack.c.l.b16 %v719
        %v1312 = vunpack.c.l.b16 %v720
        %v1313 = vunpack.c.l.b16 %v721
        %v1314 = vunpack.c.l.b16 %v722
        %v1315 = vunpack.c.l.b16 %v723
        %v1316 = vunpack.c.l.b16 %v724
        %v1317 = vunpack.c.l.b16 %v725
        %v1318 = vunpack.c.l.b16 %v726
        %v1319 = vunpack.c.l.b16 %v727
        %v1320 = vunpack.c.l.b16 %v728
        %v1321 = vunpack.c.l.b16 %v729
        %v1322 = vunpack.c.l.b16 %v730
        %v1323 = vunpack.c.l.b16 %v731
        %v1324 = vunpack.c.l.b16 %v732
        %v1325 = vunpack.c.l.b16 %v733
        %v1326 = vunpack.c.l.b16 %v734
        %v1327 = vunpack.c.l.b16 %v735
        %v1328 = vunpack.c.l.b16 %v736
        %v1329 = vunpack.c.l.b16 %v737
        %v1330 = vunpack.c.l.b16 %v738
        %v1331 = vunpack.c.l.b16 %v739
        %v1332 = vunpack.c.l.b16 %v740
        %v1333 = vunpack.c.l.b16 %v741
        %v1334 = vunpack.c.l.b16 %v742
        %v1335 = vunpack.c.l.b16 %v743
        %v1336 = vunpack.c.l.b16 %v744
        %v1337 = vunpack.c.l.b16 %v745
        %v1338 = vunpack.c.l.b16 %v746
        %v1339 = vunpack.c.l.b16 %v747
        %v1340 = vunpack.c.l.b16 %v748
        %v1341 = vunpack.c.l.b16 %v749
        %v1342 = vunpack.c.l.b16 %v750
        %v1343 = vunpack.c.l.b16 %v751
        %v1344 = vunpack.c.l.b16 %v752
        %v1345 = vunpack.c.l.b16 %v753
        %v1346 = vunpack.c.l.b16 %v754
        %v1347 = vunpack.c.l.b16 %v755
        %v1348 = vunpack.c.l.b16 %v756
        %v1349 = vunpack.c.l.b16 %v757
        %v1350 = vunpack.c.l.b16 %v758
        %v1351 = vunpack.c.l.b16 %v759
        %v1352 = vunpack.c.l.b16 %v760
        %v1353 = vunpack.c.l.b16 %v761
        %v1354 = vunpack.c.l.b16 %v762
        %v1355 = vunpack.c.l.b16 %v763
        %v1356 = vunpack.c.l.b16 %v764
        %v1357 = vunpack.c.l.b16 %v765
        %v1358 = vunpack.c.l.b16 %v766
        %v1359 = vunpack.c.l.b16 %v767
        %v1360 = vunpack.c.l.b16 %v768
        %v1361 = vunpack.c.l.b16 %v769
        %v1362 = vunpack.c.l.b16 %v770
        %v1363 = vunpack.c.l.b16 %v771
        %v1364 = vunpack.c.l.b16 %v772
        %v1365 = vunpack.c.l.b16 %v773
        %v1366 = vunpack.c.l.b16 %v774
        %v1367 = vunpack.c.l.b16 %v775
        %v1368 = vunpack.c.l.b16 %v776
        %v1369 = vunpack.c.l.b16 %v777
        %v1370 = vunpack.c.l.b16 %v778
        %v1371 = vunpack.c.l.b16 %v779
        %v1372 = vunpack.c.l.b16 %v780
        %v1373 = vunpack.c.l.b16 %v781
        %v1374 = vunpack.c.l.b16 %v782
        %v1375 = vunpack.c.l.b16 %v783
        %v1376 = vunpack.c.l.b16 %v784
        %v1377 = vunpack.c.l.b16 %v785
        %v1378 = vunpack.c.l.b16 %v786
        %v1379 = vunpack.c.l.b16 %v787
        %v1380 = vunpack.c.l.b16 %v788
        %v1381 = vunpack.c.l.b16 %v789
        %v1382 = vunpack.c.l.b16 %v790
        %v1383 = vunpack.c.l.b16 %v791
        %v1384 = vunpack.c.l.b16 %v792
        %v1385 = vunpack.c.l.b16 %v793
        %v1386 = vunpack.c.l.b16 %v794
        %v1387 = vunpack.c.l.b16 %v795
        %v1388 = vunpack.c.l.b16 %v796
        %v1389 = vunpack.c.l.b16 %v797
        %v1390 = vunpack.c.l.b16 %v798
        %v1391 = vunpack.c.l.b16 %v799
        %v1392 = vunpack.c.l.b16 %v800
        %v1393 = vunpack.c.l.b16 %v801
        %v1394 = vunpack.c.l.b16 %v802
        %v1395 = vunpack.c.l.b16 %v803
        %v1396 = vunpack.c.l.b16 %v804
        %v1397 = vunpack.c.l.b16 %v805
        %v1398 = vunpack.c.l.b16 %v806
        %v1399 = vunpack.c.l.b16 %v807
        %v1400 = vunpack.c.l.b16 %v808
        %v1401 = vunpack.c.l.b16 %v809
        %v1402 = vunpack.c.l.b16 %v810
        %v1403 = vunpack.c.l.b16 %v811
        %v1404 = vunpack.c.l.b16 %v812
        %v1405 = vunpack.c.l.b16 %v813
        %v1406 = vunpack.c.l.b16 %v814
        %v1407 = vunpack.c.l.b16 %v815
        %v1408 = vunpack.c.l.b16 %v816
        %v1409 = vunpack.c.l.b16 %v817
        %v1410 = vunpack.c.l.b16 %v818
        %v1411 = vunpack.c.l.b16 %v819
        %v1412 = vpack.c.b16 %v1285, %v1284
        %v1413 = vpack.c.b16 %v1287, %v1286
        %v1414 = vpack.c.b16 %v1289, %v1288
        %v1415 = vpack.c.b16 %v1291, %v1290
        %v1416 = vpack.c.b16 %v1293, %v1292
        %v1417 = vpack.c.b16 %v1295, %v1294
        %v1418 = vpack.c.b16 %v1297, %v1296
        %v1419 = vpack.c.b16 %v1299, %v1298
        %v1420 = vpack.c.b16 %v1301, %v1300
        %v1421 = vpack.c.b16 %v1303, %v1302
        %v1422 = vpack.c.b16 %v1305, %v1304
        %v1423 = vpack.c.b16 %v1307, %v1306
        %v1424 = vpack.c.b16 %v1309, %v1308
        %v1425 = vpack.c.b16 %v1311, %v1310
        %v1426 = vpack.c.b16 %v1313, %v1312
        %v1427 = vpack.c.b16 %v1315, %v1314
        %v1428 = vpack.c.b16 %v1317, %v1316
        %v1429 = vpack.c.b16 %v1319, %v1318
        %v1430 = vpack.c.b16 %v1321, %v1320
        %v1431 = vpack.c.b16 %v1323, %v1322
        %v1432 = vpack.c.b16 %v1325, %v1324
        %v1433 = vpack.c.b16 %v1327, %v1326
        %v1434 = vpack.c.b16 %v1329, %v1328
        %v1435 = vpack.c.b16 %v1331, %v1330
        %v1436 = vpack.c.b16 %v1333, %v1332
        %v1437 = vpack.c.b16 %v1335, %v1334
        %v1438 = vpack.c.b16 %v1337, %v1336
        %v1439 = vpack.c.b16 %v1339, %v1338
        %v1440 = vpack.c.b16 %v1341, %v1340
        %v1441 = vpack.c.b16 %v1343, %v1342
        %v1442 = vpack.c.b16 %v1345, %v1344
        %v1443 = vpack.c.b16 %v1347, %v1346
        %v1444 = vpack.c.b16 %v1349, %v1348
        %v1445 = vpack.c.b16 %v1351, %v1350
        %v1446 = vpack.c.b16 %v1353, %v1352
        %v1447 = vpack.c.b16 %v1355, %v1354
        %v1448 = vpack.c.b16 %v1357, %v1356
        %v1449 = vpack.c.b16 %v1359, %v1358
        %v1450 = vpack.c.b16 %v1361, %v1360
        %v1451 = vpack.c.b16 %v1363, %v1362
        %v1452 = vpack.c.b16 %v1365, %v1364
        %v1453 = vpack.c.b16 %v1367, %v1366
        %v1454 = vpack.c.b16 %v1369, %v1368
        %v1455 = vpack.c.b16 %v1371, %v1370
        %v1456 = vpack.c.b16 %v1373, %v1372
        %v1457 = vpack.c.b16 %v1375, %v1374
        %v1458 = vpack.c.b16 %v1377, %v1376
        %v1459 = vpack.c.b16 %v1379, %v1378
        %v1460 = vpack.c.b16 %v1381, %v1380
        %v1461 = vpack.c.b16 %v1383, %v1382
        %v1462 = vpack.c.b16 %v1385, %v1384
        %v1463 = vpack.c.b16 %v1387, %v1386
        %v1464 = vpack.c.b16 %v1389, %v1388
        %v1465 = vpack.c.b16 %v1391, %v1390
        %v1466 = vpack.c.b16 %v1393, %v1392
        %v1467 = vpack.c.b16 %v1395, %v1394
        %v1468 = vpack.c.b16 %v1397, %v1396
        %v1469 = vpack.c.b16 %v1399, %v1398
        %v1470 = vpack.c.b16 %v1401, %v1400
        %v1471 = vpack.c.b16 %v1403, %v1402
        %v1472 = vpack.c.b16 %v1405, %v1404
        %v1473 = vpack.c.b16 %v1407, %v1406
        %v1474 = vpack.c.b16 %v1409, %v1408
        %v1475 = vpack.c.b16 %v1411, %v1410
        %1540 = vmatprep.subr.bf16.mxu0 0
        %1541 = vmatpush1.bf16.msra.mxu0 %v1412
        %1542 = vmatprep.subr.bf16.mxu0 0
        %1543 = vmatpush1.bf16.msra.mxu0 %v1413
        %1544 = vmatprep.subr.bf16.mxu0 0
        %1545 = vmatpush1.bf16.msra.mxu0 %v1414
        %1546 = vmatprep.subr.bf16.mxu0 0
        %1547 = vmatpush1.bf16.msra.mxu0 %v1415
        %1548 = vmatprep.subr.bf16.mxu0 0
        %1549 = vmatpush1.bf16.msra.mxu0 %v1416
        %1550 = vmatprep.subr.bf16.mxu0 0
        %1551 = vmatpush1.bf16.msra.mxu0 %v1417
        %1552 = vmatprep.subr.bf16.mxu0 0
        %1553 = vmatpush1.bf16.msra.mxu0 %v1418
        %1554 = vmatprep.subr.bf16.mxu0 0
        %1555 = vmatpush1.bf16.msra.mxu0 %v1419
        %1556 = vmatprep.subr.bf16.mxu0 0
        %1557 = vmatpush1.bf16.msra.mxu0 %v1420
        %1558 = vmatprep.subr.bf16.mxu0 0
        %1559 = vmatpush1.bf16.msra.mxu0 %v1421
        %1560 = vmatprep.subr.bf16.mxu0 0
        %1561 = vmatpush1.bf16.msra.mxu0 %v1422
        %1562 = vmatprep.subr.bf16.mxu0 0
        %1563 = vmatpush1.bf16.msra.mxu0 %v1423
        %1564 = vmatprep.subr.bf16.mxu0 0
        %1565 = vmatpush1.bf16.msra.mxu0 %v1424
        %1566 = vmatprep.subr.bf16.mxu0 0
        %1567 = vmatpush1.bf16.msra.mxu0 %v1425
        %1568 = vmatprep.subr.bf16.mxu0 0
        %1569 = vmatpush1.bf16.msra.mxu0 %v1426
        %1570 = vmatprep.subr.bf16.mxu0 0
        %1571 = vmatpush1.bf16.msra.mxu0 %v1427
        %1572 = vmatprep.mubr.bf16.mxu0 %v1029
        %1573 = vmatmul.mubr.bf16.gmra.mrb[0].mxu0 %v1028
        %v1574 = vpop.f32.mrb[0].mxu0
        %v1575 = vadd.f32 %v820, %v1574
        %v1576 = vpop.f32.mrb[0].mxu0
        %v1577 = vpop.f32.mrb[0].mxu0
        %v1578 = vadd.f32 %v821, %v1577
        %v1579 = vpop.f32.mrb[0].mxu0
        %1580 = vmatprep.mubr.bf16.mxu0 %v1037
        %1581 = vmatmul.mubr.bf16.gmra.mrb[0].mxu0 %v1036
        %v1582 = vpop.f32.mrb[0].mxu0
        %v1583 = vadd.f32 %v822, %v1582
        %v1584 = vpop.f32.mrb[0].mxu0
        %v1585 = vpop.f32.mrb[0].mxu0
        %v1586 = vadd.f32 %v823, %v1585
        %v1587 = vpop.f32.mrb[0].mxu0
        %1588 = vmatprep.mubr.bf16.mxu0 %v1045
        %1589 = vmatmul.mubr.bf16.gmra.mrb[0].mxu0 %v1044
        %v1590 = vpop.f32.mrb[0].mxu0
        %v1591 = vadd.f32 %v824, %v1590
        %v1592 = vpop.f32.mrb[0].mxu0
        %v1593 = vpop.f32.mrb[0].mxu0
        %v1594 = vadd.f32 %v825, %v1593
        %v1595 = vpop.f32.mrb[0].mxu0
        %1596 = vmatprep.mubr.bf16.mxu0 %v1053
        %1597 = vmatmul.mubr.bf16.gmra.mrb[0].mxu0 %v1052
        %v1598 = vpop.f32.mrb[0].mxu0
        %v1599 = vadd.f32 %v826, %v1598
        %v1600 = vpop.f32.mrb[0].mxu0
        %v1601 = vpop.f32.mrb[0].mxu0
        %v1602 = vadd.f32 %v827, %v1601
        %v1603 = vpop.f32.mrb[0].mxu0
        %1604 = vmatprep.mubr.bf16.mxu0 %v1061
        %1605 = vmatmul.mubr.bf16.gmra.mrb[0].mxu0 %v1060
        %v1606 = vpop.f32.mrb[0].mxu0
        %v1607 = vadd.f32 %v828, %v1606
        %v1608 = vpop.f32.mrb[0].mxu0
        %v1609 = vpop.f32.mrb[0].mxu0
        %v1610 = vadd.f32 %v829, %v1609
        %v1611 = vpop.f32.mrb[0].mxu0
        %1612 = vmatprep.mubr.bf16.mxu0 %v1069
        %1613 = vmatmul.mubr.bf16.gmra.mrb[0].mxu0 %v1068
        %v1614 = vpop.f32.mrb[0].mxu0
        %v1615 = vadd.f32 %v830, %v1614
        %v1616 = vpop.f32.mrb[0].mxu0
        %v1617 = vpop.f32.mrb[0].mxu0
        %v1618 = vadd.f32 %v831, %v1617
        %v1619 = vpop.f32.mrb[0].mxu0
        %1620 = vmatprep.mubr.bf16.mxu0 %v1077
        %1621 = vmatmul.mubr.bf16.gmra.mrb[0].mxu0 %v1076
        %v1622 = vpop.f32.mrb[0].mxu0
        %v1623 = vadd.f32 %v832, %v1622
        %v1624 = vpop.f32.mrb[0].mxu0
        %v1625 = vpop.f32.mrb[0].mxu0
        %v1626 = vadd.f32 %v833, %v1625
        %v1627 = vpop.f32.mrb[0].mxu0
        %1628 = vmatprep.mubr.bf16.mxu0 %v1085
        %1629 = vmatmul.mubr.bf16.gmra.mrb[0].mxu0 %v1084
        %v1630 = vpop.f32.mrb[0].mxu0
        %v1631 = vadd.f32 %v834, %v1630
        %v1632 = vpop.f32.mrb[0].mxu0
        %v1633 = vpop.f32.mrb[0].mxu0
        %v1634 = vadd.f32 %v835, %v1633
        %v1635 = vpop.f32.mrb[0].mxu0
        %1636 = vdwg.mxu0
        %1637 = vmatprep.subr.bf16.mxu0 0
        %1638 = vmatpush1.bf16.msra.mxu0 %v1428
        %1639 = vmatprep.subr.bf16.mxu0 0
        %1640 = vmatpush1.bf16.msra.mxu0 %v1429
        %1641 = vmatprep.subr.bf16.mxu0 0
        %1642 = vmatpush1.bf16.msra.mxu0 %v1430
        %1643 = vmatprep.subr.bf16.mxu0 0
        %1644 = vmatpush1.bf16.msra.mxu0 %v1431
        %1645 = vmatprep.subr.bf16.mxu0 0
        %1646 = vmatpush1.bf16.msra.mxu0 %v1432
        %1647 = vmatprep.subr.bf16.mxu0 0
        %1648 = vmatpush1.bf16.msra.mxu0 %v1433
        %1649 = vmatprep.subr.bf16.mxu0 0
        %1650 = vmatpush1.bf16.msra.mxu0 %v1434
        %1651 = vmatprep.subr.bf16.mxu0 0
        %1652 = vmatpush1.bf16.msra.mxu0 %v1435
        %1653 = vmatprep.subr.bf16.mxu0 0
        %1654 = vmatpush1.bf16.msra.mxu0 %v1436
        %1655 = vmatprep.subr.bf16.mxu0 0
        %1656 = vmatpush1.bf16.msra.mxu0 %v1437
        %1657 = vmatprep.subr.bf16.mxu0 0
        %1658 = vmatpush1.bf16.msra.mxu0 %v1438
        %1659 = vmatprep.subr.bf16.mxu0 0
        %1660 = vmatpush1.bf16.msra.mxu0 %v1439
        %1661 = vmatprep.subr.bf16.mxu0 0
        %1662 = vmatpush1.bf16.msra.mxu0 %v1440
        %1663 = vmatprep.subr.bf16.mxu0 0
        %1664 = vmatpush1.bf16.msra.mxu0 %v1441
        %1665 = vmatprep.subr.bf16.mxu0 0
        %1666 = vmatpush1.bf16.msra.mxu0 %v1442
        %1667 = vmatprep.subr.bf16.mxu0 0
        %1668 = vmatpush1.bf16.msra.mxu0 %v1443
        %1669 = vmatprep.mubr.bf16.mxu0 %v1031
        %1670 = vmatmul.mubr.bf16.gmra.mrb[0].mxu0 %v1030
        %v1671 = vpop.f32.mrb[0].mxu0
        %v1672 = vadd.f32 %v1575, %v1671
        %v1673 = vpop.f32.mrb[0].mxu0
        %v1674 = vpop.f32.mrb[0].mxu0
        %v1675 = vadd.f32 %v1578, %v1674
        %v1676 = vpop.f32.mrb[0].mxu0
        %1677 = vmatprep.mubr.bf16.mxu0 %v1039
        %1678 = vmatmul.mubr.bf16.gmra.mrb[0].mxu0 %v1038
        %v1679 = vpop.f32.mrb[0].mxu0
        %v1680 = vadd.f32 %v1583, %v1679
        %v1681 = vpop.f32.mrb[0].mxu0
        %v1682 = vpop.f32.mrb[0].mxu0
        %v1683 = vadd.f32 %v1586, %v1682
        %v1684 = vpop.f32.mrb[0].mxu0
        %1685 = vmatprep.mubr.bf16.mxu0 %v1047
        %1686 = vmatmul.mubr.bf16.gmra.mrb[0].mxu0 %v1046
        %v1687 = vpop.f32.mrb[0].mxu0
        %v1688 = vadd.f32 %v1591, %v1687
        %v1689 = vpop.f32.mrb[0].mxu0
        %v1690 = vpop.f32.mrb[0].mxu0
        %v1691 = vadd.f32 %v1594, %v1690
        %v1692 = vpop.f32.mrb[0].mxu0
        %1693 = vmatprep.mubr.bf16.mxu0 %v1055
        %1694 = vmatmul.mubr.bf16.gmra.mrb[0].mxu0 %v1054
        %v1695 = vpop.f32.mrb[0].mxu0
        %v1696 = vadd.f32 %v1599, %v1695
        %v1697 = vpop.f32.mrb[0].mxu0
        %v1698 = vpop.f32.mrb[0].mxu0
        %v1699 = vadd.f32 %v1602, %v1698
        %v1700 = vpop.f32.mrb[0].mxu0
        %1701 = vmatprep.mubr.bf16.mxu0 %v1063
        %1702 = vmatmul.mubr.bf16.gmra.mrb[0].mxu0 %v1062
        %v1703 = vpop.f32.mrb[0].mxu0
        %v1704 = vadd.f32 %v1607, %v1703
        %v1705 = vpop.f32.mrb[0].mxu0
        %v1706 = vpop.f32.mrb[0].mxu0
        %v1707 = vadd.f32 %v1610, %v1706
        %v1708 = vpop.f32.mrb[0].mxu0
        %1709 = vmatprep.mubr.bf16.mxu0 %v1071
        %1710 = vmatmul.mubr.bf16.gmra.mrb[0].mxu0 %v1070
        %v1711 = vpop.f32.mrb[0].mxu0
        %v1712 = vadd.f32 %v1615, %v1711
        %v1713 = vpop.f32.mrb[0].mxu0
        %v1714 = vpop.f32.mrb[0].mxu0
        %v1715 = vadd.f32 %v1618, %v1714
        %v1716 = vpop.f32.mrb[0].mxu0
        %1717 = vmatprep.mubr.bf16.mxu0 %v1079
        %1718 = vmatmul.mubr.bf16.gmra.mrb[0].mxu0 %v1078
        %v1719 = vpop.f32.mrb[0].mxu0
        %v1720 = vadd.f32 %v1623, %v1719
        %v1721 = vpop.f32.mrb[0].mxu0
        %v1722 = vpop.f32.mrb[0].mxu0
        %v1723 = vadd.f32 %v1626, %v1722
        %v1724 = vpop.f32.mrb[0].mxu0
        %1725 = vmatprep.mubr.bf16.mxu0 %v1087
        %1726 = vmatmul.mubr.bf16.gmra.mrb[0].mxu0 %v1086
        %v1727 = vpop.f32.mrb[0].mxu0
        %v1728 = vadd.f32 %v1631, %v1727
        %v1729 = vpop.f32.mrb[0].mxu0
        %v1730 = vpop.f32.mrb[0].mxu0
        %v1731 = vadd.f32 %v1634, %v1730
        %v1732 = vpop.f32.mrb[0].mxu0
        %1733 = vdwg.mxu0
        %1734 = vmatprep.subr.bf16.mxu0 0
        %1735 = vmatpush1.bf16.msra.mxu0 %v1444
        %1736 = vmatprep.subr.bf16.mxu0 0
        %1737 = vmatpush1.bf16.msra.mxu0 %v1445
        %1738 = vmatprep.subr.bf16.mxu0 0
        %1739 = vmatpush1.bf16.msra.mxu0 %v1446
        %1740 = vmatprep.subr.bf16.mxu0 0
        %1741 = vmatpush1.bf16.msra.mxu0 %v1447
        %1742 = vmatprep.subr.bf16.mxu0 0
        %1743 = vmatpush1.bf16.msra.mxu0 %v1448
        %1744 = vmatprep.subr.bf16.mxu0 0
        %1745 = vmatpush1.bf16.msra.mxu0 %v1449
        %1746 = vmatprep.subr.bf16.mxu0 0
        %1747 = vmatpush1.bf16.msra.mxu0 %v1450
        %1748 = vmatprep.subr.bf16.mxu0 0
        %1749 = vmatpush1.bf16.msra.mxu0 %v1451
        %1750 = vmatprep.subr.bf16.mxu0 0
        %1751 = vmatpush1.bf16.msra.mxu0 %v1452
        %1752 = vmatprep.subr.bf16.mxu0 0
        %1753 = vmatpush1.bf16.msra.mxu0 %v1453
        %1754 = vmatprep.subr.bf16.mxu0 0
        %1755 = vmatpush1.bf16.msra.mxu0 %v1454
        %1756 = vmatprep.subr.bf16.mxu0 0
        %1757 = vmatpush1.bf16.msra.mxu0 %v1455
        %1758 = vmatprep.subr.bf16.mxu0 0
        %1759 = vmatpush1.bf16.msra.mxu0 %v1456
        %1760 = vmatprep.subr.bf16.mxu0 0
        %1761 = vmatpush1.bf16.msra.mxu0 %v1457
        %1762 = vmatprep.subr.bf16.mxu0 0
        %1763 = vmatpush1.bf16.msra.mxu0 %v1458
        %1764 = vmatprep.subr.bf16.mxu0 0
        %1765 = vmatpush1.bf16.msra.mxu0 %v1459
        %1766 = vmatprep.mubr.bf16.mxu0 %v1033
        %1767 = vmatmul.mubr.bf16.gmra.mrb[0].mxu0 %v1032
        %v1768 = vpop.f32.mrb[0].mxu0
        %v1769 = vadd.f32 %v1672, %v1768
        %v1770 = vpop.f32.mrb[0].mxu0
        %v1771 = vpop.f32.mrb[0].mxu0
        %v1772 = vadd.f32 %v1675, %v1771
        %v1773 = vpop.f32.mrb[0].mxu0
        %1774 = vmatprep.mubr.bf16.mxu0 %v1041
        %1775 = vmatmul.mubr.bf16.gmra.mrb[0].mxu0 %v1040
        %v1776 = vpop.f32.mrb[0].mxu0
        %v1777 = vadd.f32 %v1680, %v1776
        %v1778 = vpop.f32.mrb[0].mxu0
        %v1779 = vpop.f32.mrb[0].mxu0
        %v1780 = vadd.f32 %v1683, %v1779
        %v1781 = vpop.f32.mrb[0].mxu0
        %1782 = vmatprep.mubr.bf16.mxu0 %v1049
        %1783 = vmatmul.mubr.bf16.gmra.mrb[0].mxu0 %v1048
        %v1784 = vpop.f32.mrb[0].mxu0
        %v1785 = vadd.f32 %v1688, %v1784
        %v1786 = vpop.f32.mrb[0].mxu0
        %v1787 = vpop.f32.mrb[0].mxu0
        %v1788 = vadd.f32 %v1691, %v1787
        %v1789 = vpop.f32.mrb[0].mxu0
        %1790 = vmatprep.mubr.bf16.mxu0 %v1057
        %1791 = vmatmul.mubr.bf16.gmra.mrb[0].mxu0 %v1056
        %v1792 = vpop.f32.mrb[0].mxu0
        %v1793 = vadd.f32 %v1696, %v1792
        %v1794 = vpop.f32.mrb[0].mxu0
        %v1795 = vpop.f32.mrb[0].mxu0
        %v1796 = vadd.f32 %v1699, %v1795
        %v1797 = vpop.f32.mrb[0].mxu0
        %1798 = vmatprep.mubr.bf16.mxu0 %v1065
        %1799 = vmatmul.mubr.bf16.gmra.mrb[0].mxu0 %v1064
        %v1800 = vpop.f32.mrb[0].mxu0
        %v1801 = vadd.f32 %v1704, %v1800
        %v1802 = vpop.f32.mrb[0].mxu0
        %v1803 = vpop.f32.mrb[0].mxu0
        %v1804 = vadd.f32 %v1707, %v1803
        %v1805 = vpop.f32.mrb[0].mxu0
        %1806 = vmatprep.mubr.bf16.mxu0 %v1073
        %1807 = vmatmul.mubr.bf16.gmra.mrb[0].mxu0 %v1072
        %v1808 = vpop.f32.mrb[0].mxu0
        %v1809 = vadd.f32 %v1712, %v1808
        %v1810 = vpop.f32.mrb[0].mxu0
        %v1811 = vpop.f32.mrb[0].mxu0
        %v1812 = vadd.f32 %v1715, %v1811
        %v1813 = vpop.f32.mrb[0].mxu0
        %1814 = vmatprep.mubr.bf16.mxu0 %v1081
        %1815 = vmatmul.mubr.bf16.gmra.mrb[0].mxu0 %v1080
        %v1816 = vpop.f32.mrb[0].mxu0
        %v1817 = vadd.f32 %v1720, %v1816
        %v1818 = vpop.f32.mrb[0].mxu0
        %v1819 = vpop.f32.mrb[0].mxu0
        %v1820 = vadd.f32 %v1723, %v1819
        %v1821 = vpop.f32.mrb[0].mxu0
        %1822 = vmatprep.mubr.bf16.mxu0 %v1089
        %1823 = vmatmul.mubr.bf16.gmra.mrb[0].mxu0 %v1088
        %v1824 = vpop.f32.mrb[0].mxu0
        %v1825 = vadd.f32 %v1728, %v1824
        %v1826 = vpop.f32.mrb[0].mxu0
        %v1827 = vpop.f32.mrb[0].mxu0
        %v1828 = vadd.f32 %v1731, %v1827
        %v1829 = vpop.f32.mrb[0].mxu0
        %1830 = vdwg.mxu0
        %1831 = vmatprep.subr.bf16.mxu0 0
        %1832 = vmatpush1.bf16.msra.mxu0 %v1460
        %1833 = vmatprep.subr.bf16.mxu0 0
        %1834 = vmatpush1.bf16.msra.mxu0 %v1461
        %1835 = vmatprep.subr.bf16.mxu0 0
        %1836 = vmatpush1.bf16.msra.mxu0 %v1462
        %1837 = vmatprep.subr.bf16.mxu0 0
        %1838 = vmatpush1.bf16.msra.mxu0 %v1463
        %1839 = vmatprep.subr.bf16.mxu0 0
        %1840 = vmatpush1.bf16.msra.mxu0 %v1464
        %1841 = vmatprep.subr.bf16.mxu0 0
        %1842 = vmatpush1.bf16.msra.mxu0 %v1465
        %1843 = vmatprep.subr.bf16.mxu0 0
        %1844 = vmatpush1.bf16.msra.mxu0 %v1466
        %1845 = vmatprep.subr.bf16.mxu0 0
        %1846 = vmatpush1.bf16.msra.mxu0 %v1467
        %1847 = vmatprep.subr.bf16.mxu0 0
        %1848 = vmatpush1.bf16.msra.mxu0 %v1468
        %1849 = vmatprep.subr.bf16.mxu0 0
        %1850 = vmatpush1.bf16.msra.mxu0 %v1469
        %1851 = vmatprep.subr.bf16.mxu0 0
        %1852 = vmatpush1.bf16.msra.mxu0 %v1470
        %1853 = vmatprep.subr.bf16.mxu0 0
        %1854 = vmatpush1.bf16.msra.mxu0 %v1471
        %1855 = vmatprep.subr.bf16.mxu0 0
        %1856 = vmatpush1.bf16.msra.mxu0 %v1472
        %1857 = vmatprep.subr.bf16.mxu0 0
        %1858 = vmatpush1.bf16.msra.mxu0 %v1473
        %1859 = vmatprep.subr.bf16.mxu0 0
        %1860 = vmatpush1.bf16.msra.mxu0 %v1474
        %1861 = vmatprep.subr.bf16.mxu0 0
        %1862 = vmatpush1.bf16.msra.mxu0 %v1475
        %1863 = vmatprep.mubr.bf16.mxu0 %v1035
        %1864 = vmatmul.mubr.bf16.gmra.mrb[0].mxu0 %v1034
        %v1865 = vpop.f32.mrb[0].mxu0
        %v1866 = vadd.f32 %v1769, %v1865
        %v1867 = vpop.f32.mrb[0].mxu0
        %v1868 = vpop.f32.mrb[0].mxu0
        %v1869 = vadd.f32 %v1772, %v1868
        %v1870 = vpop.f32.mrb[0].mxu0
        %1871 = vmatprep.mubr.bf16.mxu0 %v1043
        %1872 = vmatmul.mubr.bf16.gmra.mrb[0].mxu0 %v1042
        %v1873 = vpop.f32.mrb[0].mxu0
        %v1874 = vadd.f32 %v1777, %v1873
        %v1875 = vpop.f32.mrb[0].mxu0
        %v1876 = vpop.f32.mrb[0].mxu0
        %v1877 = vadd.f32 %v1780, %v1876
        %v1878 = vpop.f32.mrb[0].mxu0
        %1879 = vmatprep.mubr.bf16.mxu0 %v1051
        %1880 = vmatmul.mubr.bf16.gmra.mrb[0].mxu0 %v1050
        %v1881 = vpop.f32.mrb[0].mxu0
        %v1882 = vadd.f32 %v1785, %v1881
        %v1883 = vpop.f32.mrb[0].mxu0
        %v1884 = vpop.f32.mrb[0].mxu0
        %v1885 = vadd.f32 %v1788, %v1884
        %v1886 = vpop.f32.mrb[0].mxu0
        %1887 = vmatprep.mubr.bf16.mxu0 %v1059
        %1888 = vmatmul.mubr.bf16.gmra.mrb[0].mxu0 %v1058
        %v1889 = vpop.f32.mrb[0].mxu0
        %v1890 = vadd.f32 %v1793, %v1889
        %v1891 = vpop.f32.mrb[0].mxu0
        %v1892 = vpop.f32.mrb[0].mxu0
        %v1893 = vadd.f32 %v1796, %v1892
        %v1894 = vpop.f32.mrb[0].mxu0
        %1895 = vmatprep.mubr.bf16.mxu0 %v1067
        %1896 = vmatmul.mubr.bf16.gmra.mrb[0].mxu0 %v1066
        %v1897 = vpop.f32.mrb[0].mxu0
        %v1898 = vadd.f32 %v1801, %v1897
        %v1899 = vpop.f32.mrb[0].mxu0
        %v1900 = vpop.f32.mrb[0].mxu0
        %v1901 = vadd.f32 %v1804, %v1900
        %v1902 = vpop.f32.mrb[0].mxu0
        %1903 = vmatprep.mubr.bf16.mxu0 %v1075
        %1904 = vmatmul.mubr.bf16.gmra.mrb[0].mxu0 %v1074
        %v1905 = vpop.f32.mrb[0].mxu0
        %v1906 = vadd.f32 %v1809, %v1905
        %v1907 = vpop.f32.mrb[0].mxu0
        %v1908 = vpop.f32.mrb[0].mxu0
        %v1909 = vadd.f32 %v1812, %v1908
        %v1910 = vpop.f32.mrb[0].mxu0
        %1911 = vmatprep.mubr.bf16.mxu0 %v1083
        %1912 = vmatmul.mubr.bf16.gmra.mrb[0].mxu0 %v1082
        %v1913 = vpop.f32.mrb[0].mxu0
        %v1914 = vadd.f32 %v1817, %v1913
        %v1915 = vpop.f32.mrb[0].mxu0
        %v1916 = vpop.f32.mrb[0].mxu0
        %v1917 = vadd.f32 %v1820, %v1916
        %v1918 = vpop.f32.mrb[0].mxu0
        %1919 = vmatprep.mubr.bf16.mxu0 %v1091
        %1920 = vmatmul.mubr.bf16.gmra.mrb[0].mxu0 %v1090
        %v1921 = vpop.f32.mrb[0].mxu0
        %v1922 = vadd.f32 %v1825, %v1921
        %v1923 = vpop.f32.mrb[0].mxu0
        %v1924 = vpop.f32.mrb[0].mxu0
        %v1925 = vadd.f32 %v1828, %v1924
        %v1926 = vpop.f32.mrb[0].mxu0
        %1927 = vdwg.mxu0
        %v1928 = vmax.f32 %v1866, 0.0
        %v1929 = vmax.f32 %v1869, 0.0
        %v1930 = vmax.f32 %v1874, 0.0
        %v1931 = vmax.f32 %v1877, 0.0
        %v1932 = vmax.f32 %v1882, 0.0
        %v1933 = vmax.f32 %v1885, 0.0
        %v1934 = vmax.f32 %v1890, 0.0
        %v1935 = vmax.f32 %v1893, 0.0
        %v1936 = vmax.f32 %v1898, 0.0
        %v1937 = vmax.f32 %v1901, 0.0
        %v1938 = vmax.f32 %v1906, 0.0
        %v1939 = vmax.f32 %v1909, 0.0
        %v1940 = vmax.f32 %v1914, 0.0
        %v1941 = vmax.f32 %v1917, 0.0
        %v1942 = vmax.f32 %v1922, 0.0
        %v1943 = vmax.f32 %v1925, 0.0
        %v1944 = vpack.c.bf16 %v1929, %v1928
        %v1945 = vpack.c.bf16 %v1931, %v1930
        %v1946 = vpack.c.bf16 %v1933, %v1932
        %v1947 = vpack.c.bf16 %v1935, %v1934
        %v1948 = vpack.c.bf16 %v1937, %v1936
        %v1949 = vpack.c.bf16 %v1939, %v1938
        %v1950 = vpack.c.bf16 %v1941, %v1940
        %v1951 = vpack.c.bf16 %v1943, %v1942
        %v1952 = vld [vmem:[#allocation11] sm:$0xf]
        %v1953 = vld [vmem:[#allocation11 + $0x4] sm:$0xf]
        %v1954 = vld [vmem:[#allocation11 + $0x8] sm:$0xf]
        %v1955 = vld [vmem:[#allocation11 + $0xc] sm:$0xf]
        %v1956 = vld [vmem:[#allocation11 + $0x10] sm:$0xf]
        %v1957 = vld [vmem:[#allocation11 + $0x14] sm:$0xf]
        %v1958 = vld [vmem:[#allocation11 + $0x18] sm:$0xf]
        %v1959 = vld [vmem:[#allocation11 + $0x1c] sm:$0xf]
        %v1960 = vld [vmem:[#allocation11 + $0x20] sm:$0xf]
        %v1961 = vld [vmem:[#allocation11 + $0x24] sm:$0xf]
        %v1962 = vld [vmem:[#allocation11 + $0x28] sm:$0xf]
        %v1963 = vld [vmem:[#allocation11 + $0x2c] sm:$0xf]
        %v1964 = vld [vmem:[#allocation11 + $0x30] sm:$0xf]
        %v1965 = vld [vmem:[#allocation11 + $0x34] sm:$0xf]
        %v1966 = vld [vmem:[#allocation11 + $0x38] sm:$0xf]
        %v1967 = vld [vmem:[#allocation11 + $0x3c] sm:$0xf]
        %v1968 = vld [vmem:[%s6] sm:$0x1]
        %v1970 = vlaneseq
        %v1971 = vshrl.u32 %v1970, 7
        %v1972 = vsub.s32 0, %v1971
        %v1973 = vrot.slane %v1968, %v1972
        %v1991 = vunpack.c.l.b16 %v1952
        %v1992 = vunpack.c.l.b16 %v1953
        %v1993 = vunpack.c.l.b16 %v1954
        %v1994 = vunpack.c.l.b16 %v1955
        %v1995 = vunpack.c.l.b16 %v1956
        %v1996 = vunpack.c.l.b16 %v1957
        %v1997 = vunpack.c.l.b16 %v1958
        %v1998 = vunpack.c.l.b16 %v1959
        %v1999 = vunpack.c.l.b16 %v1960
        %v2000 = vunpack.c.l.b16 %v1961
        %v2001 = vunpack.c.l.b16 %v1962
        %v2002 = vunpack.c.l.b16 %v1963
        %v2003 = vunpack.c.l.b16 %v1964
        %v2004 = vunpack.c.l.b16 %v1965
        %v2005 = vunpack.c.l.b16 %v1966
        %v2006 = vunpack.c.l.b16 %v1967
        %v2007 = vpack.c.b16 %v1992, %v1991
        %v2008 = vpack.c.b16 %v1994, %v1993
        %v2009 = vpack.c.b16 %v1996, %v1995
        %v2010 = vpack.c.b16 %v1998, %v1997
        %v2011 = vpack.c.b16 %v2000, %v1999
        %v2012 = vpack.c.b16 %v2002, %v2001
        %v2013 = vpack.c.b16 %v2004, %v2003
        %v2014 = vpack.c.b16 %v2006, %v2005
        %2023 = vmatprep.subr.bf16.mxu0 0
        %2024 = vmatpush1.bf16.msra.mxu0 %v2007
        %2025 = vmatprep.subr.bf16.mxu0 0
        %2026 = vmatpush1.bf16.msra.mxu0 %v2008
        %2027 = vmatprep.subr.bf16.mxu0 0
        %2028 = vmatpush1.bf16.msra.mxu0 %v2009
        %2029 = vmatprep.subr.bf16.mxu0 0
        %2030 = vmatpush1.bf16.msra.mxu0 %v2010
        %2031 = vmatprep.subr.bf16.mxu0 0
        %2032 = vmatpush1.bf16.msra.mxu0 %v2011
        %2033 = vmatprep.subr.bf16.mxu0 0
        %2034 = vmatpush1.bf16.msra.mxu0 %v2012
        %2035 = vmatprep.subr.bf16.mxu0 0
        %2036 = vmatpush1.bf16.msra.mxu0 %v2013
        %2037 = vmatprep.subr.bf16.mxu0 0
        %2038 = vmatpush1.bf16.msra.mxu0 %v2014
        %2039 = vmatprep.subr.bf16.mxu0 0
        %2040 = vmatpush1.bf16.msra.mxu0 0
        %2041 = vmatprep.subr.bf16.mxu0 0
        %2042 = vmatpush1.bf16.msra.mxu0 0
        %2043 = vmatprep.subr.bf16.mxu0 0
        %2044 = vmatpush1.bf16.msra.mxu0 0
        %2045 = vmatprep.subr.bf16.mxu0 0
        %2046 = vmatpush1.bf16.msra.mxu0 0
        %2047 = vmatprep.subr.bf16.mxu0 0
        %2048 = vmatpush1.bf16.msra.mxu0 0
        %2049 = vmatprep.subr.bf16.mxu0 0
        %2050 = vmatpush1.bf16.msra.mxu0 0
        %2051 = vmatprep.subr.bf16.mxu0 0
        %2052 = vmatpush1.bf16.msra.mxu0 0
        %2053 = vmatprep.subr.bf16.mxu0 0
        %2054 = vmatpush1.bf16.msra.mxu0 0
        %2055 = vmatprep.mubr.bf16.mxu0 0
        %2056 = vmatmul.mubr.bf16.gmra.mrb[0].mxu0 %v1944
        %v2057 = vpop.f32.mrb[0].mxu0
        %v2058 = vadd.f32 %v1973, %v2057
        %v2059 = vpop.f32.mrb[0].mxu0
        %v2060 = vpop.f32.mrb[0].mxu0
        %v2061 = vadd.f32 %v1973, %v2060
        %v2062 = vpop.f32.mrb[0].mxu0
        %2063 = vmatprep.mubr.bf16.mxu0 0
        %2064 = vmatmul.mubr.bf16.gmra.mrb[0].mxu0 %v1945
        %v2065 = vpop.f32.mrb[0].mxu0
        %v2066 = vadd.f32 %v1973, %v2065
        %v2067 = vpop.f32.mrb[0].mxu0
        %v2068 = vpop.f32.mrb[0].mxu0
        %v2069 = vadd.f32 %v1973, %v2068
        %v2070 = vpop.f32.mrb[0].mxu0
        %2071 = vmatprep.mubr.bf16.mxu0 0
        %2072 = vmatmul.mubr.bf16.gmra.mrb[0].mxu0 %v1946
        %v2073 = vpop.f32.mrb[0].mxu0
        %v2074 = vadd.f32 %v1973, %v2073
        %v2075 = vpop.f32.mrb[0].mxu0
        %v2076 = vpop.f32.mrb[0].mxu0
        %v2077 = vadd.f32 %v1973, %v2076
        %v2078 = vpop.f32.mrb[0].mxu0
        %2079 = vmatprep.mubr.bf16.mxu0 0
        %2080 = vmatmul.mubr.bf16.gmra.mrb[0].mxu0 %v1947
        %v2081 = vpop.f32.mrb[0].mxu0
        %v2082 = vadd.f32 %v1973, %v2081
        %v2083 = vpop.f32.mrb[0].mxu0
        %v2084 = vpop.f32.mrb[0].mxu0
        %v2085 = vadd.f32 %v1973, %v2084
        %v2086 = vpop.f32.mrb[0].mxu0
        %2087 = vmatprep.mubr.bf16.mxu0 0
        %2088 = vmatmul.mubr.bf16.gmra.mrb[0].mxu0 %v1948
        %v2089 = vpop.f32.mrb[0].mxu0
        %v2090 = vadd.f32 %v1973, %v2089
        %v2091 = vpop.f32.mrb[0].mxu0
        %v2092 = vpop.f32.mrb[0].mxu0
        %v2093 = vadd.f32 %v1973, %v2092
        %v2094 = vpop.f32.mrb[0].mxu0
        %2095 = vmatprep.mubr.bf16.mxu0 0
        %2096 = vmatmul.mubr.bf16.gmra.mrb[0].mxu0 %v1949
        %v2097 = vpop.f32.mrb[0].mxu0
        %v2098 = vadd.f32 %v1973, %v2097
        %v2099 = vpop.f32.mrb[0].mxu0
        %v2100 = vpop.f32.mrb[0].mxu0
        %v2101 = vadd.f32 %v1973, %v2100
        %v2102 = vpop.f32.mrb[0].mxu0
        %2103 = vmatprep.mubr.bf16.mxu0 0
        %2104 = vmatmul.mubr.bf16.gmra.mrb[0].mxu0 %v1950
        %v2105 = vpop.f32.mrb[0].mxu0
        %v2106 = vadd.f32 %v1973, %v2105
        %v2107 = vpop.f32.mrb[0].mxu0
        %v2108 = vpop.f32.mrb[0].mxu0
        %v2109 = vadd.f32 %v1973, %v2108
        %v2110 = vpop.f32.mrb[0].mxu0
        %2111 = vmatprep.mubr.bf16.mxu0 0
        %2112 = vmatmul.mubr.bf16.gmra.mrb[0].mxu0 %v1951
        %v2113 = vpop.f32.mrb[0].mxu0
        %v2114 = vadd.f32 %v1973, %v2113
        %v2115 = vpop.f32.mrb[0].mxu0
        %v2116 = vpop.f32.mrb[0].mxu0
        %v2117 = vadd.f32 %v1973, %v2116
        %v2118 = vpop.f32.mrb[0].mxu0
        %2119 = vdwg.mxu0
        %v2120 = vld [vmem:[#allocation13] sm:$0xf]
        %v2121 = vld [vmem:[#allocation13 + $0x4] sm:$0xf]
        %v2122 = vld [vmem:[#allocation13 + $0x8] sm:$0xf]
        %v2123 = vld [vmem:[#allocation13 + $0xc] sm:$0xf]
        %v2124 = vld [vmem:[#allocation13 + $0x10] sm:$0xf]
        %v2125 = vld [vmem:[#allocation13 + $0x14] sm:$0xf]
        %v2126 = vld [vmem:[#allocation13 + $0x18] sm:$0xf]
        %v2127 = vld [vmem:[#allocation13 + $0x1c] sm:$0xf]
        %v2128 = vld [vmem:[#allocation13 + $0x20] sm:$0xf]
        %v2129 = vld [vmem:[#allocation13 + $0x24] sm:$0xf]
        %v2130 = vld [vmem:[#allocation13 + $0x28] sm:$0xf]
        %v2131 = vld [vmem:[#allocation13 + $0x2c] sm:$0xf]
        %v2132 = vld [vmem:[#allocation13 + $0x30] sm:$0xf]
        %v2133 = vld [vmem:[#allocation13 + $0x34] sm:$0xf]
        %v2134 = vld [vmem:[#allocation13 + $0x38] sm:$0xf]
        %v2135 = vld [vmem:[#allocation13 + $0x3c] sm:$0xf]
        %v2136 = vld [vmem:[%s8] sm:$0x1]
        %v2138 = vlaneseq
        %v2139 = vshrl.u32 %v2138, 7
        %v2140 = vsub.s32 0, %v2139
        %v2141 = vrot.slane %v2136, %v2140
        %v2159 = vunpack.c.l.b16 %v2120
        %v2160 = vunpack.c.l.b16 %v2121
        %v2161 = vunpack.c.l.b16 %v2122
        %v2162 = vunpack.c.l.b16 %v2123
        %v2163 = vunpack.c.l.b16 %v2124
        %v2164 = vunpack.c.l.b16 %v2125
        %v2165 = vunpack.c.l.b16 %v2126
        %v2166 = vunpack.c.l.b16 %v2127
        %v2167 = vunpack.c.l.b16 %v2128
        %v2168 = vunpack.c.l.b16 %v2129
        %v2169 = vunpack.c.l.b16 %v2130
        %v2170 = vunpack.c.l.b16 %v2131
        %v2171 = vunpack.c.l.b16 %v2132
        %v2172 = vunpack.c.l.b16 %v2133
        %v2173 = vunpack.c.l.b16 %v2134
        %v2174 = vunpack.c.l.b16 %v2135
        %v2175 = vpack.c.b16 %v2160, %v2159
        %v2176 = vpack.c.b16 %v2162, %v2161
        %v2177 = vpack.c.b16 %v2164, %v2163
        %v2178 = vpack.c.b16 %v2166, %v2165
        %v2179 = vpack.c.b16 %v2168, %v2167
        %v2180 = vpack.c.b16 %v2170, %v2169
        %v2181 = vpack.c.b16 %v2172, %v2171
        %v2182 = vpack.c.b16 %v2174, %v2173
        %2191 = vmatprep.subr.bf16.mxu0 0
        %2192 = vmatpush1.bf16.msra.mxu0 %v2175
        %2193 = vmatprep.subr.bf16.mxu0 0
        %2194 = vmatpush1.bf16.msra.mxu0 %v2176
        %2195 = vmatprep.subr.bf16.mxu0 0
        %2196 = vmatpush1.bf16.msra.mxu0 %v2177
        %2197 = vmatprep.subr.bf16.mxu0 0
        %2198 = vmatpush1.bf16.msra.mxu0 %v2178
        %2199 = vmatprep.subr.bf16.mxu0 0
        %2200 = vmatpush1.bf16.msra.mxu0 %v2179
        %2201 = vmatprep.subr.bf16.mxu0 0
        %2202 = vmatpush1.bf16.msra.mxu0 %v2180
        %2203 = vmatprep.subr.bf16.mxu0 0
        %2204 = vmatpush1.bf16.msra.mxu0 %v2181
        %2205 = vmatprep.subr.bf16.mxu0 0
        %2206 = vmatpush1.bf16.msra.mxu0 %v2182
        %2207 = vmatprep.subr.bf16.mxu0 0
        %2208 = vmatpush1.bf16.msra.mxu0 0
        %2209 = vmatprep.subr.bf16.mxu0 0
        %2210 = vmatpush1.bf16.msra.mxu0 0
        %2211 = vmatprep.subr.bf16.mxu0 0
        %2212 = vmatpush1.bf16.msra.mxu0 0
        %2213 = vmatprep.subr.bf16.mxu0 0
        %2214 = vmatpush1.bf16.msra.mxu0 0
        %2215 = vmatprep.subr.bf16.mxu0 0
        %2216 = vmatpush1.bf16.msra.mxu0 0
        %2217 = vmatprep.subr.bf16.mxu0 0
        %2218 = vmatpush1.bf16.msra.mxu0 0
        %2219 = vmatprep.subr.bf16.mxu0 0
        %2220 = vmatpush1.bf16.msra.mxu0 0
        %2221 = vmatprep.subr.bf16.mxu0 0
        %2222 = vmatpush1.bf16.msra.mxu0 0
        %2223 = vmatprep.mubr.bf16.mxu0 0
        %2224 = vmatmul.mubr.bf16.gmra.mrb[0].mxu0 %v1944
        %v2225 = vpop.f32.mrb[0].mxu0
        %v2226 = vadd.f32 %v2141, %v2225
        %v2227 = vpop.f32.mrb[0].mxu0
        %v2228 = vpop.f32.mrb[0].mxu0
        %v2229 = vadd.f32 %v2141, %v2228
        %v2230 = vpop.f32.mrb[0].mxu0
        %2231 = vmatprep.mubr.bf16.mxu0 0
        %2232 = vmatmul.mubr.bf16.gmra.mrb[0].mxu0 %v1945
        %v2233 = vpop.f32.mrb[0].mxu0
        %v2234 = vadd.f32 %v2141, %v2233
        %v2235 = vpop.f32.mrb[0].mxu0
        %v2236 = vpop.f32.mrb[0].mxu0
        %v2237 = vadd.f32 %v2141, %v2236
        %v2238 = vpop.f32.mrb[0].mxu0
        %2239 = vmatprep.mubr.bf16.mxu0 0
        %2240 = vmatmul.mubr.bf16.gmra.mrb[0].mxu0 %v1946
        %v2241 = vpop.f32.mrb[0].mxu0
        %v2242 = vadd.f32 %v2141, %v2241
        %v2243 = vpop.f32.mrb[0].mxu0
        %v2244 = vpop.f32.mrb[0].mxu0
        %v2245 = vadd.f32 %v2141, %v2244
        %v2246 = vpop.f32.mrb[0].mxu0
        %2247 = vmatprep.mubr.bf16.mxu0 0
        %2248 = vmatmul.mubr.bf16.gmra.mrb[0].mxu0 %v1947
        %v2249 = vpop.f32.mrb[0].mxu0
        %v2250 = vadd.f32 %v2141, %v2249
        %v2251 = vpop.f32.mrb[0].mxu0
        %v2252 = vpop.f32.mrb[0].mxu0
        %v2253 = vadd.f32 %v2141, %v2252
        %v2254 = vpop.f32.mrb[0].mxu0
        %2255 = vmatprep.mubr.bf16.mxu0 0
        %2256 = vmatmul.mubr.bf16.gmra.mrb[0].mxu0 %v1948
        %v2257 = vpop.f32.mrb[0].mxu0
        %v2258 = vadd.f32 %v2141, %v2257
        %v2259 = vpop.f32.mrb[0].mxu0
        %v2260 = vpop.f32.mrb[0].mxu0
        %v2261 = vadd.f32 %v2141, %v2260
        %v2262 = vpop.f32.mrb[0].mxu0
        %2263 = vmatprep.mubr.bf16.mxu0 0
        %2264 = vmatmul.mubr.bf16.gmra.mrb[0].mxu0 %v1949
        %v2265 = vpop.f32.mrb[0].mxu0
        %v2266 = vadd.f32 %v2141, %v2265
        %v2267 = vpop.f32.mrb[0].mxu0
        %v2268 = vpop.f32.mrb[0].mxu0
        %v2269 = vadd.f32 %v2141, %v2268
        %v2270 = vpop.f32.mrb[0].mxu0
        %2271 = vmatprep.mubr.bf16.mxu0 0
        %2272 = vmatmul.mubr.bf16.gmra.mrb[0].mxu0 %v1950
        %v2273 = vpop.f32.mrb[0].mxu0
        %v2274 = vadd.f32 %v2141, %v2273
        %v2275 = vpop.f32.mrb[0].mxu0
        %v2276 = vpop.f32.mrb[0].mxu0
        %v2277 = vadd.f32 %v2141, %v2276
        %v2278 = vpop.f32.mrb[0].mxu0
        %2279 = vmatprep.mubr.bf16.mxu0 0
        %2280 = vmatmul.mubr.bf16.gmra.mrb[0].mxu0 %v1951
        %v2281 = vpop.f32.mrb[0].mxu0
        %v2282 = vadd.f32 %v2141, %v2281
        %v2283 = vpop.f32.mrb[0].mxu0
        %v2284 = vpop.f32.mrb[0].mxu0
        %v2285 = vadd.f32 %v2141, %v2284
        %v2286 = vpop.f32.mrb[0].mxu0
        %2287 = vdwg.mxu0
        %v2288 = vld [vmem:[%s546] sm:$0xff]
        %v2289 = vld [vmem:[%s546 + $0x8] sm:$0xff]
        %v2290 = vld [vmem:[%s546 + $0x10] sm:$0xff]
        %v2291 = vld [vmem:[%s546 + $0x18] sm:$0xff]
        %v2292 = vld [vmem:[%s546 + $0x20] sm:$0xff]
        %v2293 = vld [vmem:[%s546 + $0x28] sm:$0xff]
        %v2294 = vld [vmem:[%s546 + $0x30] sm:$0xff]
        %v2295 = vld [vmem:[%s546 + $0x38] sm:$0xff]
        %v2296 = vld [vmem:[%s546 + $0x40] sm:$0xff]
        %v2297 = vld [vmem:[%s546 + $0x48] sm:$0xff]
        %v2298 = vld [vmem:[%s546 + $0x50] sm:$0xff]
        %v2299 = vld [vmem:[%s546 + $0x58] sm:$0xff]
        %v2300 = vld [vmem:[%s546 + $0x60] sm:$0xff]
        %v2301 = vld [vmem:[%s546 + $0x68] sm:$0xff]
        %v2302 = vld [vmem:[%s546 + $0x70] sm:$0xff]
        %v2303 = vld [vmem:[%s546 + $0x78] sm:$0xff]
        %v2304 = vmul.f32 %v2226, 1.442695
        %v2305 = vpow.pop %v2304
        %v2306 = vmul.f32 %v2229, 1.442695
        %v2307 = vpow.pop %v2306
        %v2308 = vmul.f32 %v2234, 1.442695
        %v2309 = vpow.pop %v2308
        %v2310 = vmul.f32 %v2237, 1.442695
        %v2311 = vpow.pop %v2310
        %v2312 = vmul.f32 %v2242, 1.442695
        %v2313 = vpow.pop %v2312
        %v2314 = vmul.f32 %v2245, 1.442695
        %v2315 = vpow.pop %v2314
        %v2316 = vmul.f32 %v2250, 1.442695
        %v2317 = vpow.pop %v2316
        %v2318 = vmul.f32 %v2253, 1.442695
        %v2319 = vpow.pop %v2318
        %v2320 = vmul.f32 %v2258, 1.442695
        %v2321 = vpow.pop %v2320
        %v2322 = vmul.f32 %v2261, 1.442695
        %v2323 = vpow.pop %v2322
        %v2324 = vmul.f32 %v2266, 1.442695
        %v2325 = vpow.pop %v2324
        %v2326 = vmul.f32 %v2269, 1.442695
        %v2327 = vpow.pop %v2326
        %v2328 = vmul.f32 %v2274, 1.442695
        %v2329 = vpow.pop %v2328
        %v2330 = vmul.f32 %v2277, 1.442695
        %v2331 = vpow.pop %v2330
        %v2332 = vmul.f32 %v2282, 1.442695
        %v2333 = vpow.pop %v2332
        %v2334 = vmul.f32 %v2285, 1.442695
        %v2335 = vpow.pop %v2334
        %v2336 = vmul.f32 %v2288, %v2305
        %v2337 = vmul.f32 %v2289, %v2307
        %v2338 = vmul.f32 %v2290, %v2309
        %v2339 = vmul.f32 %v2291, %v2311
        %v2340 = vmul.f32 %v2292, %v2313
        %v2341 = vmul.f32 %v2293, %v2315
        %v2342 = vmul.f32 %v2294, %v2317
        %v2343 = vmul.f32 %v2295, %v2319
        %v2344 = vmul.f32 %v2296, %v2321
        %v2345 = vmul.f32 %v2297, %v2323
        %v2346 = vmul.f32 %v2298, %v2325
        %v2347 = vmul.f32 %v2299, %v2327
        %v2348 = vmul.f32 %v2300, %v2329
        %v2349 = vmul.f32 %v2301, %v2331
        %v2350 = vmul.f32 %v2302, %v2333
        %v2351 = vmul.f32 %v2303, %v2335
        %v2352 = vadd.f32 %v2336, %v2058
        %v2353 = vadd.f32 %v2337, %v2061
        %v2354 = vadd.f32 %v2338, %v2066
        %v2355 = vadd.f32 %v2339, %v2069
        %v2356 = vadd.f32 %v2340, %v2074
        %v2357 = vadd.f32 %v2341, %v2077
        %v2358 = vadd.f32 %v2342, %v2082
        %v2359 = vadd.f32 %v2343, %v2085
        %v2360 = vadd.f32 %v2344, %v2090
        %v2361 = vadd.f32 %v2345, %v2093
        %v2362 = vadd.f32 %v2346, %v2098
        %v2363 = vadd.f32 %v2347, %v2101
        %v2364 = vadd.f32 %v2348, %v2106
        %v2365 = vadd.f32 %v2349, %v2109
        %v2366 = vadd.f32 %v2350, %v2114
        %v2367 = vadd.f32 %v2351, %v2117
        %v2368 = vpack.c.bf16 %v2353, %v2352
        %v2369 = vpack.c.bf16 %v2355, %v2354
        %v2370 = vpack.c.bf16 %v2357, %v2356
        %v2371 = vpack.c.bf16 %v2359, %v2358
        %v2372 = vpack.c.bf16 %v2361, %v2360
        %v2373 = vpack.c.bf16 %v2363, %v2362
        %v2374 = vpack.c.bf16 %v2365, %v2364
        %v2375 = vpack.c.bf16 %v2367, %v2366
        %v2376 = vld [vmem:[#allocation14] sm:$0xf]
        %v2377 = vld [vmem:[#allocation14 + $0x4] sm:$0xf]
        %v2378 = vld [vmem:[#allocation14 + $0x8] sm:$0xf]
        %v2379 = vld [vmem:[#allocation14 + $0xc] sm:$0xf]
        %v2380 = vld [vmem:[#allocation14 + $0x10] sm:$0xf]
        %v2381 = vld [vmem:[#allocation14 + $0x14] sm:$0xf]
        %v2382 = vld [vmem:[#allocation14 + $0x18] sm:$0xf]
        %v2383 = vld [vmem:[#allocation14 + $0x1c] sm:$0xf]
        %v2384 = vld [vmem:[#allocation14 + $0x20] sm:$0xf]
        %v2385 = vld [vmem:[#allocation14 + $0x24] sm:$0xf]
        %v2386 = vld [vmem:[#allocation14 + $0x28] sm:$0xf]
        %v2387 = vld [vmem:[#allocation14 + $0x2c] sm:$0xf]
        %v2388 = vld [vmem:[#allocation14 + $0x30] sm:$0xf]
        %v2389 = vld [vmem:[#allocation14 + $0x34] sm:$0xf]
        %v2390 = vld [vmem:[#allocation14 + $0x38] sm:$0xf]
        %v2391 = vld [vmem:[#allocation14 + $0x3c] sm:$0xf]
        %v2392 = vld [vmem:[%s537] sm:$0xff]
        %v2393 = vld [vmem:[%s537 + $0x8] sm:$0xff]
        %v2394 = vld [vmem:[%s537 + $0x10] sm:$0xff]
        %v2395 = vld [vmem:[%s537 + $0x18] sm:$0xff]
        %v2396 = vld [vmem:[%s537 + $0x20] sm:$0xff]
        %v2397 = vld [vmem:[%s537 + $0x28] sm:$0xff]
        %v2398 = vld [vmem:[%s537 + $0x30] sm:$0xff]
        %v2399 = vld [vmem:[%s537 + $0x38] sm:$0xff]
        %v2400 = vld [vmem:[%s537 + $0x40] sm:$0xff]
        %v2401 = vld [vmem:[%s537 + $0x48] sm:$0xff]
        %v2402 = vld [vmem:[%s537 + $0x50] sm:$0xff]
        %v2403 = vld [vmem:[%s537 + $0x58] sm:$0xff]
        %v2404 = vld [vmem:[%s537 + $0x60] sm:$0xff]
        %v2405 = vld [vmem:[%s537 + $0x68] sm:$0xff]
        %v2406 = vld [vmem:[%s537 + $0x70] sm:$0xff]
        %v2407 = vld [vmem:[%s537 + $0x78] sm:$0xff]
        %v2424 = vunpack.c.l.b16 %v2376
        %v2425 = vunpack.c.l.b16 %v2377
        %v2426 = vunpack.c.l.b16 %v2378
        %v2427 = vunpack.c.l.b16 %v2379
        %v2428 = vunpack.c.l.b16 %v2380
        %v2429 = vunpack.c.l.b16 %v2381
        %v2430 = vunpack.c.l.b16 %v2382
        %v2431 = vunpack.c.l.b16 %v2383
        %v2432 = vunpack.c.l.b16 %v2384
        %v2433 = vunpack.c.l.b16 %v2385
        %v2434 = vunpack.c.l.b16 %v2386
        %v2435 = vunpack.c.l.b16 %v2387
        %v2436 = vunpack.c.l.b16 %v2388
        %v2437 = vunpack.c.l.b16 %v2389
        %v2438 = vunpack.c.l.b16 %v2390
        %v2439 = vunpack.c.l.b16 %v2391
        %v2440 = vpack.c.b16 %v2425, %v2424
        %v2441 = vpack.c.b16 %v2427, %v2426
        %v2442 = vpack.c.b16 %v2429, %v2428
        %v2443 = vpack.c.b16 %v2431, %v2430
        %v2444 = vpack.c.b16 %v2433, %v2432
        %v2445 = vpack.c.b16 %v2435, %v2434
        %v2446 = vpack.c.b16 %v2437, %v2436
        %v2447 = vpack.c.b16 %v2439, %v2438
        %2456 = vmatprep.subr.bf16.mxu0 0
        %2457 = vmatpush1.bf16.msra.mxu0 %v2440
        %2458 = vmatprep.subr.bf16.mxu0 0
        %2459 = vmatpush1.bf16.msra.mxu0 %v2441
        %2460 = vmatprep.subr.bf16.mxu0 0
        %2461 = vmatpush1.bf16.msra.mxu0 %v2442
        %2462 = vmatprep.subr.bf16.mxu0 0
        %2463 = vmatpush1.bf16.msra.mxu0 %v2443
        %2464 = vmatprep.subr.bf16.mxu0 0
        %2465 = vmatpush1.bf16.msra.mxu0 %v2444
        %2466 = vmatprep.subr.bf16.mxu0 0
        %2467 = vmatpush1.bf16.msra.mxu0 %v2445
        %2468 = vmatprep.subr.bf16.mxu0 0
        %2469 = vmatpush1.bf16.msra.mxu0 %v2446
        %2470 = vmatprep.subr.bf16.mxu0 0
        %2471 = vmatpush1.bf16.msra.mxu0 %v2447
        %2472 = vmatprep.subr.bf16.mxu0 0
        %2473 = vmatpush1.bf16.msra.mxu0 0
        %2474 = vmatprep.subr.bf16.mxu0 0
        %2475 = vmatpush1.bf16.msra.mxu0 0
        %2476 = vmatprep.subr.bf16.mxu0 0
        %2477 = vmatpush1.bf16.msra.mxu0 0
        %2478 = vmatprep.subr.bf16.mxu0 0
        %2479 = vmatpush1.bf16.msra.mxu0 0
        %2480 = vmatprep.subr.bf16.mxu0 0
        %2481 = vmatpush1.bf16.msra.mxu0 0
        %2482 = vmatprep.subr.bf16.mxu0 0
        %2483 = vmatpush1.bf16.msra.mxu0 0
        %2484 = vmatprep.subr.bf16.mxu0 0
        %2485 = vmatpush1.bf16.msra.mxu0 0
        %2486 = vmatprep.subr.bf16.mxu0 0
        %2487 = vmatpush1.bf16.msra.mxu0 0
        %2488 = vmatprep.mubr.bf16.mxu0 0
        %2489 = vmatmul.mubr.bf16.gmra.mrb[0].mxu0 %v2368
        %v2490 = vpop.f32.mrb[0].mxu0
        %v2491 = vadd.f32 %v2392, %v2490
        %v2492 = vpop.f32.mrb[0].mxu0
        %v2493 = vpop.f32.mrb[0].mxu0
        %v2494 = vadd.f32 %v2393, %v2493
        %v2495 = vpop.f32.mrb[0].mxu0
        %2496 = vmatprep.mubr.bf16.mxu0 0
        %2497 = vmatmul.mubr.bf16.gmra.mrb[0].mxu0 %v2369
        %v2498 = vpop.f32.mrb[0].mxu0
        %v2499 = vadd.f32 %v2394, %v2498
        %v2500 = vpop.f32.mrb[0].mxu0
        %v2501 = vpop.f32.mrb[0].mxu0
        %v2502 = vadd.f32 %v2395, %v2501
        %v2503 = vpop.f32.mrb[0].mxu0
        %2504 = vmatprep.mubr.bf16.mxu0 0
        %2505 = vmatmul.mubr.bf16.gmra.mrb[0].mxu0 %v2370
        %v2506 = vpop.f32.mrb[0].mxu0
        %v2507 = vadd.f32 %v2396, %v2506
        %v2508 = vpop.f32.mrb[0].mxu0
        %v2509 = vpop.f32.mrb[0].mxu0
        %v2510 = vadd.f32 %v2397, %v2509
        %v2511 = vpop.f32.mrb[0].mxu0
        %2512 = vmatprep.mubr.bf16.mxu0 0
        %2513 = vmatmul.mubr.bf16.gmra.mrb[0].mxu0 %v2371
        %v2514 = vpop.f32.mrb[0].mxu0
        %v2515 = vadd.f32 %v2398, %v2514
        %v2516 = vpop.f32.mrb[0].mxu0
        %v2517 = vpop.f32.mrb[0].mxu0
        %v2518 = vadd.f32 %v2399, %v2517
        %v2519 = vpop.f32.mrb[0].mxu0
        %2520 = vmatprep.mubr.bf16.mxu0 0
        %2521 = vmatmul.mubr.bf16.gmra.mrb[0].mxu0 %v2372
        %v2522 = vpop.f32.mrb[0].mxu0
        %v2523 = vadd.f32 %v2400, %v2522
        %v2524 = vpop.f32.mrb[0].mxu0
        %v2525 = vpop.f32.mrb[0].mxu0
        %v2526 = vadd.f32 %v2401, %v2525
        %v2527 = vpop.f32.mrb[0].mxu0
        %2528 = vmatprep.mubr.bf16.mxu0 0
        %2529 = vmatmul.mubr.bf16.gmra.mrb[0].mxu0 %v2373
        %v2530 = vpop.f32.mrb[0].mxu0
        %v2531 = vadd.f32 %v2402, %v2530
        %v2532 = vpop.f32.mrb[0].mxu0
        %v2533 = vpop.f32.mrb[0].mxu0
        %v2534 = vadd.f32 %v2403, %v2533
        %v2535 = vpop.f32.mrb[0].mxu0
        %2536 = vmatprep.mubr.bf16.mxu0 0
        %2537 = vmatmul.mubr.bf16.gmra.mrb[0].mxu0 %v2374
        %v2538 = vpop.f32.mrb[0].mxu0
        %v2539 = vadd.f32 %v2404, %v2538
        %v2540 = vpop.f32.mrb[0].mxu0
        %v2541 = vpop.f32.mrb[0].mxu0
        %v2542 = vadd.f32 %v2405, %v2541
        %v2543 = vpop.f32.mrb[0].mxu0
        %2544 = vmatprep.mubr.bf16.mxu0 0
        %2545 = vmatmul.mubr.bf16.gmra.mrb[0].mxu0 %v2375
        %v2546 = vpop.f32.mrb[0].mxu0
        %v2547 = vadd.f32 %v2406, %v2546
        %v2548 = vpop.f32.mrb[0].mxu0
        %v2549 = vpop.f32.mrb[0].mxu0
        %v2550 = vadd.f32 %v2407, %v2549
        %v2551 = vpop.f32.mrb[0].mxu0
        %2552 = vdwg.mxu0
        %v2553 = vmax.f32 %v2491, 0.0
        %v2554 = vmax.f32 %v2494, 0.0
        %v2555 = vmax.f32 %v2499, 0.0
        %v2556 = vmax.f32 %v2502, 0.0
        %v2557 = vmax.f32 %v2507, 0.0
        %v2558 = vmax.f32 %v2510, 0.0
        %v2559 = vmax.f32 %v2515, 0.0
        %v2560 = vmax.f32 %v2518, 0.0
        %v2561 = vmax.f32 %v2523, 0.0
        %v2562 = vmax.f32 %v2526, 0.0
        %v2563 = vmax.f32 %v2531, 0.0
        %v2564 = vmax.f32 %v2534, 0.0
        %v2565 = vmax.f32 %v2539, 0.0
        %v2566 = vmax.f32 %v2542, 0.0
        %v2567 = vmax.f32 %v2547, 0.0
        %v2568 = vmax.f32 %v2550, 0.0
        %v2569 = vpack.c.bf16 %v2554, %v2553
        %v2570 = vpack.c.bf16 %v2556, %v2555
        %v2571 = vpack.c.bf16 %v2558, %v2557
        %v2572 = vpack.c.bf16 %v2560, %v2559
        %v2573 = vpack.c.bf16 %v2562, %v2561
        %v2574 = vpack.c.bf16 %v2564, %v2563
        %v2575 = vpack.c.bf16 %v2566, %v2565
        %v2576 = vpack.c.bf16 %v2568, %v2567
        %v2577 = vld [vmem:[#allocation16] sm:$0xff]
        %v2578 = vld [vmem:[#allocation16 + $0x8] sm:$0xff]
        %v2579 = vld [vmem:[#allocation16 + $0x10] sm:$0xff]
        %v2580 = vld [vmem:[#allocation16 + $0x18] sm:$0xff]
        %v2581 = vld [vmem:[#allocation16 + $0x20] sm:$0xff]
        %v2582 = vld [vmem:[#allocation16 + $0x28] sm:$0xff]
        %v2583 = vld [vmem:[#allocation16 + $0x30] sm:$0xff]
        %v2584 = vld [vmem:[#allocation16 + $0x38] sm:$0xff]
        %v2585 = vld [vmem:[#allocation16 + $0x40] sm:$0xff]
        %v2586 = vld [vmem:[#allocation16 + $0x48] sm:$0xff]
        %v2587 = vld [vmem:[#allocation16 + $0x50] sm:$0xff]
        %v2588 = vld [vmem:[#allocation16 + $0x58] sm:$0xff]
        %v2589 = vld [vmem:[#allocation16 + $0x60] sm:$0xff]
        %v2590 = vld [vmem:[#allocation16 + $0x68] sm:$0xff]
        %v2591 = vld [vmem:[#allocation16 + $0x70] sm:$0xff]
        %v2592 = vld [vmem:[#allocation16 + $0x78] sm:$0xff]
        %v2593 = vld [vmem:[#allocation16 + $0x80] sm:$0xff]
        %v2594 = vld [vmem:[#allocation16 + $0x88] sm:$0xff]
        %v2595 = vld [vmem:[#allocation16 + $0x90] sm:$0xff]
        %v2596 = vld [vmem:[#allocation16 + $0x98] sm:$0xff]
        %v2597 = vld [vmem:[#allocation16 + $0xa0] sm:$0xff]
        %v2598 = vld [vmem:[#allocation16 + $0xa8] sm:$0xff]
        %v2599 = vld [vmem:[#allocation16 + $0xb0] sm:$0xff]
        %v2600 = vld [vmem:[#allocation16 + $0xb8] sm:$0xff]
        %v2601 = vld [vmem:[#allocation16 + $0xc0] sm:$0xff]
        %v2602 = vld [vmem:[#allocation16 + $0xc8] sm:$0xff]
        %v2603 = vld [vmem:[#allocation16 + $0xd0] sm:$0xff]
        %v2604 = vld [vmem:[#allocation16 + $0xd8] sm:$0xff]
        %v2605 = vld [vmem:[#allocation16 + $0xe0] sm:$0xff]
        %v2606 = vld [vmem:[#allocation16 + $0xe8] sm:$0xff]
        %v2607 = vld [vmem:[#allocation16 + $0xf0] sm:$0xff]
        %v2608 = vld [vmem:[#allocation16 + $0xf8] sm:$0xff]
        %v2609 = vld [vmem:[#allocation16 + $0x100] sm:$0xff]
        %v2610 = vld [vmem:[#allocation16 + $0x108] sm:$0xff]
        %v2611 = vld [vmem:[#allocation16 + $0x110] sm:$0xff]
        %v2612 = vld [vmem:[#allocation16 + $0x118] sm:$0xff]
        %v2613 = vld [vmem:[#allocation16 + $0x120] sm:$0xff]
        %v2614 = vld [vmem:[#allocation16 + $0x128] sm:$0xff]
        %v2615 = vld [vmem:[#allocation16 + $0x130] sm:$0xff]
        %v2616 = vld [vmem:[#allocation16 + $0x138] sm:$0xff]
        %v2617 = vld [vmem:[#allocation16 + $0x140] sm:$0xff]
        %v2618 = vld [vmem:[#allocation16 + $0x148] sm:$0xff]
        %v2619 = vld [vmem:[#allocation16 + $0x150] sm:$0xff]
        %v2620 = vld [vmem:[#allocation16 + $0x158] sm:$0xff]
        %v2621 = vld [vmem:[#allocation16 + $0x160] sm:$0xff]
        %v2622 = vld [vmem:[#allocation16 + $0x168] sm:$0xff]
        %v2623 = vld [vmem:[#allocation16 + $0x170] sm:$0xff]
        %v2624 = vld [vmem:[#allocation16 + $0x178] sm:$0xff]
        %v2625 = vld [vmem:[#allocation16 + $0x180] sm:$0xff]
        %v2626 = vld [vmem:[#allocation16 + $0x188] sm:$0xff]
        %v2627 = vld [vmem:[#allocation16 + $0x190] sm:$0xff]
        %v2628 = vld [vmem:[#allocation16 + $0x198] sm:$0xff]
        %v2629 = vld [vmem:[#allocation16 + $0x1a0] sm:$0xff]
        %v2630 = vld [vmem:[#allocation16 + $0x1a8] sm:$0xff]
        %v2631 = vld [vmem:[#allocation16 + $0x1b0] sm:$0xff]
        %v2632 = vld [vmem:[#allocation16 + $0x1b8] sm:$0xff]
        %v2633 = vld [vmem:[#allocation16 + $0x1c0] sm:$0xff]
        %v2634 = vld [vmem:[#allocation16 + $0x1c8] sm:$0xff]
        %v2635 = vld [vmem:[#allocation16 + $0x1d0] sm:$0xff]
        %v2636 = vld [vmem:[#allocation16 + $0x1d8] sm:$0xff]
        %v2637 = vld [vmem:[#allocation16 + $0x1e0] sm:$0xff]
        %v2638 = vld [vmem:[#allocation16 + $0x1e8] sm:$0xff]
        %v2639 = vld [vmem:[#allocation16 + $0x1f0] sm:$0xff]
        %v2640 = vld [vmem:[#allocation16 + $0x1f8] sm:$0xff]
        %v2641 = vld [vmem:[%s11] sm:$0xff]
        %v2643 = vlaneseq
        %v2644 = vshrl.u32 %v2643, 7
        %v2645 = vsub.s32 0, %v2644
        %v2646 = vrot.slane %v2641, %v2645
        %v2647 = vlaneseq
        %v2648 = vshrl.u32 %v2647, 7
        %v2649 = vsub.s32 1, %v2648
        %v2650 = vrot.slane %v2641, %v2649
        %v2651 = vlaneseq
        %v2652 = vshrl.u32 %v2651, 7
        %v2653 = vsub.s32 2, %v2652
        %v2654 = vrot.slane %v2641, %v2653
        %v2655 = vlaneseq
        %v2656 = vshrl.u32 %v2655, 7
        %v2657 = vsub.s32 3, %v2656
        %v2658 = vrot.slane %v2641, %v2657
        %v2659 = vlaneseq
        %v2660 = vshrl.u32 %v2659, 7
        %v2661 = vsub.s32 4, %v2660
        %v2662 = vrot.slane %v2641, %v2661
        %v2663 = vlaneseq
        %v2664 = vshrl.u32 %v2663, 7
        %v2665 = vsub.s32 5, %v2664
        %v2666 = vrot.slane %v2641, %v2665
        %v2667 = vlaneseq
        %v2668 = vshrl.u32 %v2667, 7
        %v2669 = vsub.s32 6, %v2668
        %v2670 = vrot.slane %v2641, %v2669
        %v2671 = vlaneseq
        %v2672 = vshrl.u32 %v2671, 7
        %v2673 = vsub.s32 7, %v2672
        %v2674 = vrot.slane %v2641, %v2673
        %v2747 = vunpack.c.l.b16 %v2577
        %v2748 = vunpack.c.h.b16 %v2577
        %v2749 = vunpack.c.l.b16 %v2578
        %v2750 = vunpack.c.h.b16 %v2578
        %v2751 = vunpack.c.l.b16 %v2579
        %v2752 = vunpack.c.h.b16 %v2579
        %v2753 = vunpack.c.l.b16 %v2580
        %v2754 = vunpack.c.h.b16 %v2580
        %v2755 = vunpack.c.l.b16 %v2581
        %v2756 = vunpack.c.h.b16 %v2581
        %v2757 = vunpack.c.l.b16 %v2582
        %v2758 = vunpack.c.h.b16 %v2582
        %v2759 = vunpack.c.l.b16 %v2583
        %v2760 = vunpack.c.h.b16 %v2583
        %v2761 = vunpack.c.l.b16 %v2584
        %v2762 = vunpack.c.h.b16 %v2584
        %v2763 = vunpack.c.l.b16 %v2585
        %v2764 = vunpack.c.h.b16 %v2585
        %v2765 = vunpack.c.l.b16 %v2586
        %v2766 = vunpack.c.h.b16 %v2586
        %v2767 = vunpack.c.l.b16 %v2587
        %v2768 = vunpack.c.h.b16 %v2587
        %v2769 = vunpack.c.l.b16 %v2588
        %v2770 = vunpack.c.h.b16 %v2588
        %v2771 = vunpack.c.l.b16 %v2589
        %v2772 = vunpack.c.h.b16 %v2589
        %v2773 = vunpack.c.l.b16 %v2590
        %v2774 = vunpack.c.h.b16 %v2590
        %v2775 = vunpack.c.l.b16 %v2591
        %v2776 = vunpack.c.h.b16 %v2591
        %v2777 = vunpack.c.l.b16 %v2592
        %v2778 = vunpack.c.h.b16 %v2592
        %v2779 = vunpack.c.l.b16 %v2593
        %v2780 = vunpack.c.h.b16 %v2593
        %v2781 = vunpack.c.l.b16 %v2594
        %v2782 = vunpack.c.h.b16 %v2594
        %v2783 = vunpack.c.l.b16 %v2595
        %v2784 = vunpack.c.h.b16 %v2595
        %v2785 = vunpack.c.l.b16 %v2596
        %v2786 = vunpack.c.h.b16 %v2596
        %v2787 = vunpack.c.l.b16 %v2597
        %v2788 = vunpack.c.h.b16 %v2597
        %v2789 = vunpack.c.l.b16 %v2598
        %v2790 = vunpack.c.h.b16 %v2598
        %v2791 = vunpack.c.l.b16 %v2599
        %v2792 = vunpack.c.h.b16 %v2599
        %v2793 = vunpack.c.l.b16 %v2600
        %v2794 = vunpack.c.h.b16 %v2600
        %v2795 = vunpack.c.l.b16 %v2601
        %v2796 = vunpack.c.h.b16 %v2601
        %v2797 = vunpack.c.l.b16 %v2602
        %v2798 = vunpack.c.h.b16 %v2602
        %v2799 = vunpack.c.l.b16 %v2603
        %v2800 = vunpack.c.h.b16 %v2603
        %v2801 = vunpack.c.l.b16 %v2604
        %v2802 = vunpack.c.h.b16 %v2604
        %v2803 = vunpack.c.l.b16 %v2605
        %v2804 = vunpack.c.h.b16 %v2605
        %v2805 = vunpack.c.l.b16 %v2606
        %v2806 = vunpack.c.h.b16 %v2606
        %v2807 = vunpack.c.l.b16 %v2607
        %v2808 = vunpack.c.h.b16 %v2607
        %v2809 = vunpack.c.l.b16 %v2608
        %v2810 = vunpack.c.h.b16 %v2608
        %v2811 = vunpack.c.l.b16 %v2609
        %v2812 = vunpack.c.h.b16 %v2609
        %v2813 = vunpack.c.l.b16 %v2610
        %v2814 = vunpack.c.h.b16 %v2610
        %v2815 = vunpack.c.l.b16 %v2611
        %v2816 = vunpack.c.h.b16 %v2611
        %v2817 = vunpack.c.l.b16 %v2612
        %v2818 = vunpack.c.h.b16 %v2612
        %v2819 = vunpack.c.l.b16 %v2613
        %v2820 = vunpack.c.h.b16 %v2613
        %v2821 = vunpack.c.l.b16 %v2614
        %v2822 = vunpack.c.h.b16 %v2614
        %v2823 = vunpack.c.l.b16 %v2615
        %v2824 = vunpack.c.h.b16 %v2615
        %v2825 = vunpack.c.l.b16 %v2616
        %v2826 = vunpack.c.h.b16 %v2616
        %v2827 = vunpack.c.l.b16 %v2617
        %v2828 = vunpack.c.h.b16 %v2617
        %v2829 = vunpack.c.l.b16 %v2618
        %v2830 = vunpack.c.h.b16 %v2618
        %v2831 = vunpack.c.l.b16 %v2619
        %v2832 = vunpack.c.h.b16 %v2619
        %v2833 = vunpack.c.l.b16 %v2620
        %v2834 = vunpack.c.h.b16 %v2620
        %v2835 = vunpack.c.l.b16 %v2621
        %v2836 = vunpack.c.h.b16 %v2621
        %v2837 = vunpack.c.l.b16 %v2622
        %v2838 = vunpack.c.h.b16 %v2622
        %v2839 = vunpack.c.l.b16 %v2623
        %v2840 = vunpack.c.h.b16 %v2623
        %v2841 = vunpack.c.l.b16 %v2624
        %v2842 = vunpack.c.h.b16 %v2624
        %v2843 = vunpack.c.l.b16 %v2625
        %v2844 = vunpack.c.h.b16 %v2625
        %v2845 = vunpack.c.l.b16 %v2626
        %v2846 = vunpack.c.h.b16 %v2626
        %v2847 = vunpack.c.l.b16 %v2627
        %v2848 = vunpack.c.h.b16 %v2627
        %v2849 = vunpack.c.l.b16 %v2628
        %v2850 = vunpack.c.h.b16 %v2628
        %v2851 = vunpack.c.l.b16 %v2629
        %v2852 = vunpack.c.h.b16 %v2629
        %v2853 = vunpack.c.l.b16 %v2630
        %v2854 = vunpack.c.h.b16 %v2630
        %v2855 = vunpack.c.l.b16 %v2631
        %v2856 = vunpack.c.h.b16 %v2631
        %v2857 = vunpack.c.l.b16 %v2632
        %v2858 = vunpack.c.h.b16 %v2632
        %v2859 = vunpack.c.l.b16 %v2633
        %v2860 = vunpack.c.h.b16 %v2633
        %v2861 = vunpack.c.l.b16 %v2634
        %v2862 = vunpack.c.h.b16 %v2634
        %v2863 = vunpack.c.l.b16 %v2635
        %v2864 = vunpack.c.h.b16 %v2635
        %v2865 = vunpack.c.l.b16 %v2636
        %v2866 = vunpack.c.h.b16 %v2636
        %v2867 = vunpack.c.l.b16 %v2637
        %v2868 = vunpack.c.h.b16 %v2637
        %v2869 = vunpack.c.l.b16 %v2638
        %v2870 = vunpack.c.h.b16 %v2638
        %v2871 = vunpack.c.l.b16 %v2639
        %v2872 = vunpack.c.h.b16 %v2639
        %v2873 = vunpack.c.l.b16 %v2640
        %v2874 = vunpack.c.h.b16 %v2640
        %v2875 = vpack.c.b16 %v2755, %v2747
        %v2876 = vpack.c.b16 %v2756, %v2748
        %v2877 = vpack.c.b16 %v2757, %v2749
        %v2878 = vpack.c.b16 %v2758, %v2750
        %v2879 = vpack.c.b16 %v2759, %v2751
        %v2880 = vpack.c.b16 %v2760, %v2752
        %v2881 = vpack.c.b16 %v2761, %v2753
        %v2882 = vpack.c.b16 %v2762, %v2754
        %v2883 = vpack.c.b16 %v2771, %v2763
        %v2884 = vpack.c.b16 %v2772, %v2764
        %v2885 = vpack.c.b16 %v2773, %v2765
        %v2886 = vpack.c.b16 %v2774, %v2766
        %v2887 = vpack.c.b16 %v2775, %v2767
        %v2888 = vpack.c.b16 %v2776, %v2768
        %v2889 = vpack.c.b16 %v2777, %v2769
        %v2890 = vpack.c.b16 %v2778, %v2770
        %v2891 = vpack.c.b16 %v2787, %v2779
        %v2892 = vpack.c.b16 %v2788, %v2780
        %v2893 = vpack.c.b16 %v2789, %v2781
        %v2894 = vpack.c.b16 %v2790, %v2782
        %v2895 = vpack.c.b16 %v2791, %v2783
        %v2896 = vpack.c.b16 %v2792, %v2784
        %v2897 = vpack.c.b16 %v2793, %v2785
        %v2898 = vpack.c.b16 %v2794, %v2786
        %v2899 = vpack.c.b16 %v2803, %v2795
        %v2900 = vpack.c.b16 %v2804, %v2796
        %v2901 = vpack.c.b16 %v2805, %v2797
        %v2902 = vpack.c.b16 %v2806, %v2798
        %v2903 = vpack.c.b16 %v2807, %v2799
        %v2904 = vpack.c.b16 %v2808, %v2800
        %v2905 = vpack.c.b16 %v2809, %v2801
        %v2906 = vpack.c.b16 %v2810, %v2802
        %v2907 = vpack.c.b16 %v2819, %v2811
        %v2908 = vpack.c.b16 %v2820, %v2812
        %v2909 = vpack.c.b16 %v2821, %v2813
        %v2910 = vpack.c.b16 %v2822, %v2814
        %v2911 = vpack.c.b16 %v2823, %v2815
        %v2912 = vpack.c.b16 %v2824, %v2816
        %v2913 = vpack.c.b16 %v2825, %v2817
        %v2914 = vpack.c.b16 %v2826, %v2818
        %v2915 = vpack.c.b16 %v2835, %v2827
        %v2916 = vpack.c.b16 %v2836, %v2828
        %v2917 = vpack.c.b16 %v2837, %v2829
        %v2918 = vpack.c.b16 %v2838, %v2830
        %v2919 = vpack.c.b16 %v2839, %v2831
        %v2920 = vpack.c.b16 %v2840, %v2832
        %v2921 = vpack.c.b16 %v2841, %v2833
        %v2922 = vpack.c.b16 %v2842, %v2834
        %v2923 = vpack.c.b16 %v2851, %v2843
        %v2924 = vpack.c.b16 %v2852, %v2844
        %v2925 = vpack.c.b16 %v2853, %v2845
        %v2926 = vpack.c.b16 %v2854, %v2846
        %v2927 = vpack.c.b16 %v2855, %v2847
        %v2928 = vpack.c.b16 %v2856, %v2848
        %v2929 = vpack.c.b16 %v2857, %v2849
        %v2930 = vpack.c.b16 %v2858, %v2850
        %v2931 = vpack.c.b16 %v2867, %v2859
        %v2932 = vpack.c.b16 %v2868, %v2860
        %v2933 = vpack.c.b16 %v2869, %v2861
        %v2934 = vpack.c.b16 %v2870, %v2862
        %v2935 = vpack.c.b16 %v2871, %v2863
        %v2936 = vpack.c.b16 %v2872, %v2864
        %v2937 = vpack.c.b16 %v2873, %v2865
        %v2938 = vpack.c.b16 %v2874, %v2866
        %3003 = vmatprep.subr.bf16.mxu0 %v2876
        %3004 = vmatpush1.bf16.msra.mxu0 %v2875
        %3005 = vmatprep.subr.bf16.mxu0 %v2884
        %3006 = vmatpush1.bf16.msra.mxu0 %v2883
        %3007 = vmatprep.subr.bf16.mxu0 %v2892
        %3008 = vmatpush1.bf16.msra.mxu0 %v2891
        %3009 = vmatprep.subr.bf16.mxu0 %v2900
        %3010 = vmatpush1.bf16.msra.mxu0 %v2899
        %3011 = vmatprep.subr.bf16.mxu0 %v2908
        %3012 = vmatpush1.bf16.msra.mxu0 %v2907
        %3013 = vmatprep.subr.bf16.mxu0 %v2916
        %3014 = vmatpush1.bf16.msra.mxu0 %v2915
        %3015 = vmatprep.subr.bf16.mxu0 %v2924
        %3016 = vmatpush1.bf16.msra.mxu0 %v2923
        %3017 = vmatprep.subr.bf16.mxu0 %v2932
        %3018 = vmatpush1.bf16.msra.mxu0 %v2931
        %3019 = vmatprep.subr.bf16.mxu0 0
        %3020 = vmatpush1.bf16.msra.mxu0 0
        %3021 = vmatprep.subr.bf16.mxu0 0
        %3022 = vmatpush1.bf16.msra.mxu0 0
        %3023 = vmatprep.subr.bf16.mxu0 0
        %3024 = vmatpush1.bf16.msra.mxu0 0
        %3025 = vmatprep.subr.bf16.mxu0 0
        %3026 = vmatpush1.bf16.msra.mxu0 0
        %3027 = vmatprep.subr.bf16.mxu0 0
        %3028 = vmatpush1.bf16.msra.mxu0 0
        %3029 = vmatprep.subr.bf16.mxu0 0
        %3030 = vmatpush1.bf16.msra.mxu0 0
        %3031 = vmatprep.subr.bf16.mxu0 0
        %3032 = vmatpush1.bf16.msra.mxu0 0
        %3033 = vmatprep.subr.bf16.mxu0 0
        %3034 = vmatpush1.bf16.msra.mxu0 0
        %3035 = vmatprep.mubr.bf16.mxu0 0
        %3036 = vmatmul.mubr.bf16.gmra.mrb[0].mxu0 %v2569
        %v3037 = vpop.f32.mrb[0].mxu0
        %v3038 = vadd.f32 %v2646, %v3037
        %v3039 = vpop.f32.mrb[0].mxu0
        %v3040 = vadd.f32 %v2650, %v3039
        %v3041 = vpop.f32.mrb[0].mxu0
        %v3042 = vadd.f32 %v2646, %v3041
        %v3043 = vpop.f32.mrb[0].mxu0
        %v3044 = vadd.f32 %v2650, %v3043
        %3045 = vmatprep.mubr.bf16.mxu0 0
        %3046 = vmatmul.mubr.bf16.gmra.mrb[0].mxu0 %v2570
        %v3047 = vpop.f32.mrb[0].mxu0
        %v3048 = vadd.f32 %v2646, %v3047
        %v3049 = vpop.f32.mrb[0].mxu0
        %v3050 = vadd.f32 %v2650, %v3049
        %v3051 = vpop.f32.mrb[0].mxu0
        %v3052 = vadd.f32 %v2646, %v3051
        %v3053 = vpop.f32.mrb[0].mxu0
        %v3054 = vadd.f32 %v2650, %v3053
        %3055 = vmatprep.mubr.bf16.mxu0 0
        %3056 = vmatmul.mubr.bf16.gmra.mrb[0].mxu0 %v2571
        %v3057 = vpop.f32.mrb[0].mxu0
        %v3058 = vadd.f32 %v2646, %v3057
        %v3059 = vpop.f32.mrb[0].mxu0
        %v3060 = vadd.f32 %v2650, %v3059
        %v3061 = vpop.f32.mrb[0].mxu0
        %v3062 = vadd.f32 %v2646, %v3061
        %v3063 = vpop.f32.mrb[0].mxu0
        %v3064 = vadd.f32 %v2650, %v3063
        %3065 = vmatprep.mubr.bf16.mxu0 0
        %3066 = vmatmul.mubr.bf16.gmra.mrb[0].mxu0 %v2572
        %v3067 = vpop.f32.mrb[0].mxu0
        %v3068 = vadd.f32 %v2646, %v3067
        %v3069 = vpop.f32.mrb[0].mxu0
        %v3070 = vadd.f32 %v2650, %v3069
        %v3071 = vpop.f32.mrb[0].mxu0
        %v3072 = vadd.f32 %v2646, %v3071
        %v3073 = vpop.f32.mrb[0].mxu0
        %v3074 = vadd.f32 %v2650, %v3073
        %3075 = vmatprep.mubr.bf16.mxu0 0
        %3076 = vmatmul.mubr.bf16.gmra.mrb[0].mxu0 %v2573
        %v3077 = vpop.f32.mrb[0].mxu0
        %v3078 = vadd.f32 %v2646, %v3077
        %v3079 = vpop.f32.mrb[0].mxu0
        %v3080 = vadd.f32 %v2650, %v3079
        %v3081 = vpop.f32.mrb[0].mxu0
        %v3082 = vadd.f32 %v2646, %v3081
        %v3083 = vpop.f32.mrb[0].mxu0
        %v3084 = vadd.f32 %v2650, %v3083
        %3085 = vmatprep.mubr.bf16.mxu0 0
        %3086 = vmatmul.mubr.bf16.gmra.mrb[0].mxu0 %v2574
        %v3087 = vpop.f32.mrb[0].mxu0
        %v3088 = vadd.f32 %v2646, %v3087
        %v3089 = vpop.f32.mrb[0].mxu0
        %v3090 = vadd.f32 %v2650, %v3089
        %v3091 = vpop.f32.mrb[0].mxu0
        %v3092 = vadd.f32 %v2646, %v3091
        %v3093 = vpop.f32.mrb[0].mxu0
        %v3094 = vadd.f32 %v2650, %v3093
        %3095 = vmatprep.mubr.bf16.mxu0 0
        %3096 = vmatmul.mubr.bf16.gmra.mrb[0].mxu0 %v2575
        %v3097 = vpop.f32.mrb[0].mxu0
        %v3098 = vadd.f32 %v2646, %v3097
        %v3099 = vpop.f32.mrb[0].mxu0
        %v3100 = vadd.f32 %v2650, %v3099
        %v3101 = vpop.f32.mrb[0].mxu0
        %v3102 = vadd.f32 %v2646, %v3101
        %v3103 = vpop.f32.mrb[0].mxu0
        %v3104 = vadd.f32 %v2650, %v3103
        %3105 = vmatprep.mubr.bf16.mxu0 0
        %3106 = vmatmul.mubr.bf16.gmra.mrb[0].mxu0 %v2576
        %v3107 = vpop.f32.mrb[0].mxu0
        %v3108 = vadd.f32 %v2646, %v3107
        %v3109 = vpop.f32.mrb[0].mxu0
        %v3110 = vadd.f32 %v2650, %v3109
        %v3111 = vpop.f32.mrb[0].mxu0
        %v3112 = vadd.f32 %v2646, %v3111
        %v3113 = vpop.f32.mrb[0].mxu0
        %v3114 = vadd.f32 %v2650, %v3113
        %3115 = vdwg.mxu0
        %3116 = vmatprep.subr.bf16.mxu0 %v2878
        %3117 = vmatpush1.bf16.msra.mxu0 %v2877
        %3118 = vmatprep.subr.bf16.mxu0 %v2886
        %3119 = vmatpush1.bf16.msra.mxu0 %v2885
        %3120 = vmatprep.subr.bf16.mxu0 %v2894
        %3121 = vmatpush1.bf16.msra.mxu0 %v2893
        %3122 = vmatprep.subr.bf16.mxu0 %v2902
        %3123 = vmatpush1.bf16.msra.mxu0 %v2901
        %3124 = vmatprep.subr.bf16.mxu0 %v2910
        %3125 = vmatpush1.bf16.msra.mxu0 %v2909
        %3126 = vmatprep.subr.bf16.mxu0 %v2918
        %3127 = vmatpush1.bf16.msra.mxu0 %v2917
        %3128 = vmatprep.subr.bf16.mxu0 %v2926
        %3129 = vmatpush1.bf16.msra.mxu0 %v2925
        %3130 = vmatprep.subr.bf16.mxu0 %v2934
        %3131 = vmatpush1.bf16.msra.mxu0 %v2933
        %3132 = vmatprep.subr.bf16.mxu0 0
        %3133 = vmatpush1.bf16.msra.mxu0 0
        %3134 = vmatprep.subr.bf16.mxu0 0
        %3135 = vmatpush1.bf16.msra.mxu0 0
        %3136 = vmatprep.subr.bf16.mxu0 0
        %3137 = vmatpush1.bf16.msra.mxu0 0
        %3138 = vmatprep.subr.bf16.mxu0 0
        %3139 = vmatpush1.bf16.msra.mxu0 0
        %3140 = vmatprep.subr.bf16.mxu0 0
        %3141 = vmatpush1.bf16.msra.mxu0 0
        %3142 = vmatprep.subr.bf16.mxu0 0
        %3143 = vmatpush1.bf16.msra.mxu0 0
        %3144 = vmatprep.subr.bf16.mxu0 0
        %3145 = vmatpush1.bf16.msra.mxu0 0
        %3146 = vmatprep.subr.bf16.mxu0 0
        %3147 = vmatpush1.bf16.msra.mxu0 0
        %3148 = vmatprep.mubr.bf16.mxu0 0
        %3149 = vmatmul.mubr.bf16.gmra.mrb[0].mxu0 %v2569
        %v3150 = vpop.f32.mrb[0].mxu0
        %v3151 = vadd.f32 %v2654, %v3150
        %v3152 = vpop.f32.mrb[0].mxu0
        %v3153 = vadd.f32 %v2658, %v3152
        %v3154 = vpop.f32.mrb[0].mxu0
        %v3155 = vadd.f32 %v2654, %v3154
        %v3156 = vpop.f32.mrb[0].mxu0
        %v3157 = vadd.f32 %v2658, %v3156
        %3158 = vmatprep.mubr.bf16.mxu0 0
        %3159 = vmatmul.mubr.bf16.gmra.mrb[0].mxu0 %v2570
        %v3160 = vpop.f32.mrb[0].mxu0
        %v3161 = vadd.f32 %v2654, %v3160
        %v3162 = vpop.f32.mrb[0].mxu0
        %v3163 = vadd.f32 %v2658, %v3162
        %v3164 = vpop.f32.mrb[0].mxu0
        %v3165 = vadd.f32 %v2654, %v3164
        %v3166 = vpop.f32.mrb[0].mxu0
        %v3167 = vadd.f32 %v2658, %v3166
        %3168 = vmatprep.mubr.bf16.mxu0 0
        %3169 = vmatmul.mubr.bf16.gmra.mrb[0].mxu0 %v2571
        %v3170 = vpop.f32.mrb[0].mxu0
        %v3171 = vadd.f32 %v2654, %v3170
        %v3172 = vpop.f32.mrb[0].mxu0
        %v3173 = vadd.f32 %v2658, %v3172
        %v3174 = vpop.f32.mrb[0].mxu0
        %v3175 = vadd.f32 %v2654, %v3174
        %v3176 = vpop.f32.mrb[0].mxu0
        %v3177 = vadd.f32 %v2658, %v3176
        %3178 = vmatprep.mubr.bf16.mxu0 0
        %3179 = vmatmul.mubr.bf16.gmra.mrb[0].mxu0 %v2572
        %v3180 = vpop.f32.mrb[0].mxu0
        %v3181 = vadd.f32 %v2654, %v3180
        %v3182 = vpop.f32.mrb[0].mxu0
        %v3183 = vadd.f32 %v2658, %v3182
        %v3184 = vpop.f32.mrb[0].mxu0
        %v3185 = vadd.f32 %v2654, %v3184
        %v3186 = vpop.f32.mrb[0].mxu0
        %v3187 = vadd.f32 %v2658, %v3186
        %3188 = vmatprep.mubr.bf16.mxu0 0
        %3189 = vmatmul.mubr.bf16.gmra.mrb[0].mxu0 %v2573
        %v3190 = vpop.f32.mrb[0].mxu0
        %v3191 = vadd.f32 %v2654, %v3190
        %v3192 = vpop.f32.mrb[0].mxu0
        %v3193 = vadd.f32 %v2658, %v3192
        %v3194 = vpop.f32.mrb[0].mxu0
        %v3195 = vadd.f32 %v2654, %v3194
        %v3196 = vpop.f32.mrb[0].mxu0
        %v3197 = vadd.f32 %v2658, %v3196
        %3198 = vmatprep.mubr.bf16.mxu0 0
        %3199 = vmatmul.mubr.bf16.gmra.mrb[0].mxu0 %v2574
        %v3200 = vpop.f32.mrb[0].mxu0
        %v3201 = vadd.f32 %v2654, %v3200
        %v3202 = vpop.f32.mrb[0].mxu0
        %v3203 = vadd.f32 %v2658, %v3202
        %v3204 = vpop.f32.mrb[0].mxu0
        %v3205 = vadd.f32 %v2654, %v3204
        %v3206 = vpop.f32.mrb[0].mxu0
        %v3207 = vadd.f32 %v2658, %v3206
        %3208 = vmatprep.mubr.bf16.mxu0 0
        %3209 = vmatmul.mubr.bf16.gmra.mrb[0].mxu0 %v2575
        %v3210 = vpop.f32.mrb[0].mxu0
        %v3211 = vadd.f32 %v2654, %v3210
        %v3212 = vpop.f32.mrb[0].mxu0
        %v3213 = vadd.f32 %v2658, %v3212
        %v3214 = vpop.f32.mrb[0].mxu0
        %v3215 = vadd.f32 %v2654, %v3214
        %v3216 = vpop.f32.mrb[0].mxu0
        %v3217 = vadd.f32 %v2658, %v3216
        %3218 = vmatprep.mubr.bf16.mxu0 0
        %3219 = vmatmul.mubr.bf16.gmra.mrb[0].mxu0 %v2576
        %v3220 = vpop.f32.mrb[0].mxu0
        %v3221 = vadd.f32 %v2654, %v3220
        %v3222 = vpop.f32.mrb[0].mxu0
        %v3223 = vadd.f32 %v2658, %v3222
        %v3224 = vpop.f32.mrb[0].mxu0
        %v3225 = vadd.f32 %v2654, %v3224
        %v3226 = vpop.f32.mrb[0].mxu0
        %v3227 = vadd.f32 %v2658, %v3226
        %3228 = vdwg.mxu0
        %3229 = vmatprep.subr.bf16.mxu0 %v2880
        %3230 = vmatpush1.bf16.msra.mxu0 %v2879
        %3231 = vmatprep.subr.bf16.mxu0 %v2888
        %3232 = vmatpush1.bf16.msra.mxu0 %v2887
        %3233 = vmatprep.subr.bf16.mxu0 %v2896
        %3234 = vmatpush1.bf16.msra.mxu0 %v2895
        %3235 = vmatprep.subr.bf16.mxu0 %v2904
        %3236 = vmatpush1.bf16.msra.mxu0 %v2903
        %3237 = vmatprep.subr.bf16.mxu0 %v2912
        %3238 = vmatpush1.bf16.msra.mxu0 %v2911
        %3239 = vmatprep.subr.bf16.mxu0 %v2920
        %3240 = vmatpush1.bf16.msra.mxu0 %v2919
        %3241 = vmatprep.subr.bf16.mxu0 %v2928
        %3242 = vmatpush1.bf16.msra.mxu0 %v2927
        %3243 = vmatprep.subr.bf16.mxu0 %v2936
        %3244 = vmatpush1.bf16.msra.mxu0 %v2935
        %3245 = vmatprep.subr.bf16.mxu0 0
        %3246 = vmatpush1.bf16.msra.mxu0 0
        %3247 = vmatprep.subr.bf16.mxu0 0
        %3248 = vmatpush1.bf16.msra.mxu0 0
        %3249 = vmatprep.subr.bf16.mxu0 0
        %3250 = vmatpush1.bf16.msra.mxu0 0
        %3251 = vmatprep.subr.bf16.mxu0 0
        %3252 = vmatpush1.bf16.msra.mxu0 0
        %3253 = vmatprep.subr.bf16.mxu0 0
        %3254 = vmatpush1.bf16.msra.mxu0 0
        %3255 = vmatprep.subr.bf16.mxu0 0
        %3256 = vmatpush1.bf16.msra.mxu0 0
        %3257 = vmatprep.subr.bf16.mxu0 0
        %3258 = vmatpush1.bf16.msra.mxu0 0
        %3259 = vmatprep.subr.bf16.mxu0 0
        %3260 = vmatpush1.bf16.msra.mxu0 0
        %3261 = vmatprep.mubr.bf16.mxu0 0
        %3262 = vmatmul.mubr.bf16.gmra.mrb[0].mxu0 %v2569
        %v3263 = vpop.f32.mrb[0].mxu0
        %v3264 = vadd.f32 %v2662, %v3263
        %v3265 = vpop.f32.mrb[0].mxu0
        %v3266 = vadd.f32 %v2666, %v3265
        %v3267 = vpop.f32.mrb[0].mxu0
        %v3268 = vadd.f32 %v2662, %v3267
        %v3269 = vpop.f32.mrb[0].mxu0
        %v3270 = vadd.f32 %v2666, %v3269
        %3271 = vmatprep.mubr.bf16.mxu0 0
        %3272 = vmatmul.mubr.bf16.gmra.mrb[0].mxu0 %v2570
        %v3273 = vpop.f32.mrb[0].mxu0
        %v3274 = vadd.f32 %v2662, %v3273
        %v3275 = vpop.f32.mrb[0].mxu0
        %v3276 = vadd.f32 %v2666, %v3275
        %v3277 = vpop.f32.mrb[0].mxu0
        %v3278 = vadd.f32 %v2662, %v3277
        %v3279 = vpop.f32.mrb[0].mxu0
        %v3280 = vadd.f32 %v2666, %v3279
        %3281 = vmatprep.mubr.bf16.mxu0 0
        %3282 = vmatmul.mubr.bf16.gmra.mrb[0].mxu0 %v2571
        %v3283 = vpop.f32.mrb[0].mxu0
        %v3284 = vadd.f32 %v2662, %v3283
        %v3285 = vpop.f32.mrb[0].mxu0
        %v3286 = vadd.f32 %v2666, %v3285
        %v3287 = vpop.f32.mrb[0].mxu0
        %v3288 = vadd.f32 %v2662, %v3287
        %v3289 = vpop.f32.mrb[0].mxu0
        %v3290 = vadd.f32 %v2666, %v3289
        %3291 = vmatprep.mubr.bf16.mxu0 0
        %3292 = vmatmul.mubr.bf16.gmra.mrb[0].mxu0 %v2572
        %v3293 = vpop.f32.mrb[0].mxu0
        %v3294 = vadd.f32 %v2662, %v3293
        %v3295 = vpop.f32.mrb[0].mxu0
        %v3296 = vadd.f32 %v2666, %v3295
        %v3297 = vpop.f32.mrb[0].mxu0
        %v3298 = vadd.f32 %v2662, %v3297
        %v3299 = vpop.f32.mrb[0].mxu0
        %v3300 = vadd.f32 %v2666, %v3299
        %3301 = vmatprep.mubr.bf16.mxu0 0
        %3302 = vmatmul.mubr.bf16.gmra.mrb[0].mxu0 %v2573
        %v3303 = vpop.f32.mrb[0].mxu0
        %v3304 = vadd.f32 %v2662, %v3303
        %v3305 = vpop.f32.mrb[0].mxu0
        %v3306 = vadd.f32 %v2666, %v3305
        %v3307 = vpop.f32.mrb[0].mxu0
        %v3308 = vadd.f32 %v2662, %v3307
        %v3309 = vpop.f32.mrb[0].mxu0
        %v3310 = vadd.f32 %v2666, %v3309
        %3311 = vmatprep.mubr.bf16.mxu0 0
        %3312 = vmatmul.mubr.bf16.gmra.mrb[0].mxu0 %v2574
        %v3313 = vpop.f32.mrb[0].mxu0
        %v3314 = vadd.f32 %v2662, %v3313
        %v3315 = vpop.f32.mrb[0].mxu0
        %v3316 = vadd.f32 %v2666, %v3315
        %v3317 = vpop.f32.mrb[0].mxu0
        %v3318 = vadd.f32 %v2662, %v3317
        %v3319 = vpop.f32.mrb[0].mxu0
        %v3320 = vadd.f32 %v2666, %v3319
        %3321 = vmatprep.mubr.bf16.mxu0 0
        %3322 = vmatmul.mubr.bf16.gmra.mrb[0].mxu0 %v2575
        %v3323 = vpop.f32.mrb[0].mxu0
        %v3324 = vadd.f32 %v2662, %v3323
        %v3325 = vpop.f32.mrb[0].mxu0
        %v3326 = vadd.f32 %v2666, %v3325
        %v3327 = vpop.f32.mrb[0].mxu0
        %v3328 = vadd.f32 %v2662, %v3327
        %v3329 = vpop.f32.mrb[0].mxu0
        %v3330 = vadd.f32 %v2666, %v3329
        %3331 = vmatprep.mubr.bf16.mxu0 0
        %3332 = vmatmul.mubr.bf16.gmra.mrb[0].mxu0 %v2576
        %v3333 = vpop.f32.mrb[0].mxu0
        %v3334 = vadd.f32 %v2662, %v3333
        %v3335 = vpop.f32.mrb[0].mxu0
        %v3336 = vadd.f32 %v2666, %v3335
        %v3337 = vpop.f32.mrb[0].mxu0
        %v3338 = vadd.f32 %v2662, %v3337
        %v3339 = vpop.f32.mrb[0].mxu0
        %v3340 = vadd.f32 %v2666, %v3339
        %3341 = vdwg.mxu0
        %3342 = vmatprep.subr.bf16.mxu0 %v2882
        %3343 = vmatpush1.bf16.msra.mxu0 %v2881
        %3344 = vmatprep.subr.bf16.mxu0 %v2890
        %3345 = vmatpush1.bf16.msra.mxu0 %v2889
        %3346 = vmatprep.subr.bf16.mxu0 %v2898
        %3347 = vmatpush1.bf16.msra.mxu0 %v2897
        %3348 = vmatprep.subr.bf16.mxu0 %v2906
        %3349 = vmatpush1.bf16.msra.mxu0 %v2905
        %3350 = vmatprep.subr.bf16.mxu0 %v2914
        %3351 = vmatpush1.bf16.msra.mxu0 %v2913
        %3352 = vmatprep.subr.bf16.mxu0 %v2922
        %3353 = vmatpush1.bf16.msra.mxu0 %v2921
        %3354 = vmatprep.subr.bf16.mxu0 %v2930
        %3355 = vmatpush1.bf16.msra.mxu0 %v2929
        %3356 = vmatprep.subr.bf16.mxu0 %v2938
        %3357 = vmatpush1.bf16.msra.mxu0 %v2937
        %3358 = vmatprep.subr.bf16.mxu0 0
        %3359 = vmatpush1.bf16.msra.mxu0 0
        %3360 = vmatprep.subr.bf16.mxu0 0
        %3361 = vmatpush1.bf16.msra.mxu0 0
        %3362 = vmatprep.subr.bf16.mxu0 0
        %3363 = vmatpush1.bf16.msra.mxu0 0
        %3364 = vmatprep.subr.bf16.mxu0 0
        %3365 = vmatpush1.bf16.msra.mxu0 0
        %3366 = vmatprep.subr.bf16.mxu0 0
        %3367 = vmatpush1.bf16.msra.mxu0 0
        %3368 = vmatprep.subr.bf16.mxu0 0
        %3369 = vmatpush1.bf16.msra.mxu0 0
        %3370 = vmatprep.subr.bf16.mxu0 0
        %3371 = vmatpush1.bf16.msra.mxu0 0
        %3372 = vmatprep.subr.bf16.mxu0 0
        %3373 = vmatpush1.bf16.msra.mxu0 0
        %3374 = vmatprep.mubr.bf16.mxu0 0
        %3375 = vmatmul.mubr.bf16.gmra.mrb[0].mxu0 %v2569
        %v3376 = vpop.f32.mrb[0].mxu0
        %v3377 = vadd.f32 %v2670, %v3376
        %v3378 = vpop.f32.mrb[0].mxu0
        %v3379 = vadd.f32 %v2674, %v3378
        %v3380 = vpop.f32.mrb[0].mxu0
        %v3381 = vadd.f32 %v2670, %v3380
        %v3382 = vpop.f32.mrb[0].mxu0
        %v3383 = vadd.f32 %v2674, %v3382
        %3384 = vmatprep.mubr.bf16.mxu0 0
        %3385 = vmatmul.mubr.bf16.gmra.mrb[0].mxu0 %v2570
        %v3386 = vpop.f32.mrb[0].mxu0
        %v3387 = vadd.f32 %v2670, %v3386
        %v3388 = vpop.f32.mrb[0].mxu0
        %v3389 = vadd.f32 %v2674, %v3388
        %v3390 = vpop.f32.mrb[0].mxu0
        %v3391 = vadd.f32 %v2670, %v3390
        %v3392 = vpop.f32.mrb[0].mxu0
        %v3393 = vadd.f32 %v2674, %v3392
        %3394 = vmatprep.mubr.bf16.mxu0 0
        %3395 = vmatmul.mubr.bf16.gmra.mrb[0].mxu0 %v2571
        %v3396 = vpop.f32.mrb[0].mxu0
        %v3397 = vadd.f32 %v2670, %v3396
        %v3398 = vpop.f32.mrb[0].mxu0
        %v3399 = vadd.f32 %v2674, %v3398
        %v3400 = vpop.f32.mrb[0].mxu0
        %v3401 = vadd.f32 %v2670, %v3400
        %v3402 = vpop.f32.mrb[0].mxu0
        %v3403 = vadd.f32 %v2674, %v3402
        %3404 = vmatprep.mubr.bf16.mxu0 0
        %3405 = vmatmul.mubr.bf16.gmra.mrb[0].mxu0 %v2572
        %v3406 = vpop.f32.mrb[0].mxu0
        %v3407 = vadd.f32 %v2670, %v3406
        %v3408 = vpop.f32.mrb[0].mxu0
        %v3409 = vadd.f32 %v2674, %v3408
        %v3410 = vpop.f32.mrb[0].mxu0
        %v3411 = vadd.f32 %v2670, %v3410
        %v3412 = vpop.f32.mrb[0].mxu0
        %v3413 = vadd.f32 %v2674, %v3412
        %3414 = vmatprep.mubr.bf16.mxu0 0
        %3415 = vmatmul.mubr.bf16.gmra.mrb[0].mxu0 %v2573
        %v3416 = vpop.f32.mrb[0].mxu0
        %v3417 = vadd.f32 %v2670, %v3416
        %v3418 = vpop.f32.mrb[0].mxu0
        %v3419 = vadd.f32 %v2674, %v3418
        %v3420 = vpop.f32.mrb[0].mxu0
        %v3421 = vadd.f32 %v2670, %v3420
        %v3422 = vpop.f32.mrb[0].mxu0
        %v3423 = vadd.f32 %v2674, %v3422
        %3424 = vmatprep.mubr.bf16.mxu0 0
        %3425 = vmatmul.mubr.bf16.gmra.mrb[0].mxu0 %v2574
        %v3426 = vpop.f32.mrb[0].mxu0
        %v3427 = vadd.f32 %v2670, %v3426
        %v3428 = vpop.f32.mrb[0].mxu0
        %v3429 = vadd.f32 %v2674, %v3428
        %v3430 = vpop.f32.mrb[0].mxu0
        %v3431 = vadd.f32 %v2670, %v3430
        %v3432 = vpop.f32.mrb[0].mxu0
        %v3433 = vadd.f32 %v2674, %v3432
        %3434 = vmatprep.mubr.bf16.mxu0 0
        %3435 = vmatmul.mubr.bf16.gmra.mrb[0].mxu0 %v2575
        %v3436 = vpop.f32.mrb[0].mxu0
        %v3437 = vadd.f32 %v2670, %v3436
        %v3438 = vpop.f32.mrb[0].mxu0
        %v3439 = vadd.f32 %v2674, %v3438
        %v3440 = vpop.f32.mrb[0].mxu0
        %v3441 = vadd.f32 %v2670, %v3440
        %v3442 = vpop.f32.mrb[0].mxu0
        %v3443 = vadd.f32 %v2674, %v3442
        %3444 = vmatprep.mubr.bf16.mxu0 0
        %3445 = vmatmul.mubr.bf16.gmra.mrb[0].mxu0 %v2576
        %v3446 = vpop.f32.mrb[0].mxu0
        %v3447 = vadd.f32 %v2670, %v3446
        %v3448 = vpop.f32.mrb[0].mxu0
        %v3449 = vadd.f32 %v2674, %v3448
        %v3450 = vpop.f32.mrb[0].mxu0
        %v3451 = vadd.f32 %v2670, %v3450
        %v3452 = vpop.f32.mrb[0].mxu0
        %v3453 = vadd.f32 %v2674, %v3452
        %3454 = vdwg.mxu0
        %3455 = vst [vmem:[%s621] sm:$0xff] %v3038
        %3456 = vst [vmem:[%s621 + $0x8] sm:$0xff] %v3040
        %3457 = vst [vmem:[%s621 + $0x10] sm:$0xff] %v3151
        %3458 = vst [vmem:[%s621 + $0x18] sm:$0xff] %v3153
        %3459 = vst [vmem:[%s621 + $0x20] sm:$0xff] %v3264
        %3460 = vst [vmem:[%s621 + $0x28] sm:$0xff] %v3266
        %3461 = vst [vmem:[%s621 + $0x30] sm:$0xff] %v3377
        %3462 = vst [vmem:[%s621 + $0x38] sm:$0xff] %v3379
        %3463 = vst [vmem:[%s621 + $0x40] sm:$0xff] %v3042
        %3464 = vst [vmem:[%s621 + $0x48] sm:$0xff] %v3044
        %3465 = vst [vmem:[%s621 + $0x50] sm:$0xff] %v3155
        %3466 = vst [vmem:[%s621 + $0x58] sm:$0xff] %v3157
        %3467 = vst [vmem:[%s621 + $0x60] sm:$0xff] %v3268
        %3468 = vst [vmem:[%s621 + $0x68] sm:$0xff] %v3270
        %3469 = vst [vmem:[%s621 + $0x70] sm:$0xff] %v3381
        %3470 = vst [vmem:[%s621 + $0x78] sm:$0xff] %v3383
        %3471 = vst [vmem:[%s621 + $0x80] sm:$0xff] %v3048
        %3472 = vst [vmem:[%s621 + $0x88] sm:$0xff] %v3050
        %3473 = vst [vmem:[%s621 + $0x90] sm:$0xff] %v3161
        %3474 = vst [vmem:[%s621 + $0x98] sm:$0xff] %v3163
        %3475 = vst [vmem:[%s621 + $0xa0] sm:$0xff] %v3274
        %3476 = vst [vmem:[%s621 + $0xa8] sm:$0xff] %v3276
        %3477 = vst [vmem:[%s621 + $0xb0] sm:$0xff] %v3387
        %3478 = vst [vmem:[%s621 + $0xb8] sm:$0xff] %v3389
        %3479 = vst [vmem:[%s621 + $0xc0] sm:$0xff] %v3052
        %3480 = vst [vmem:[%s621 + $0xc8] sm:$0xff] %v3054
        %3481 = vst [vmem:[%s621 + $0xd0] sm:$0xff] %v3165
        %3482 = vst [vmem:[%s621 + $0xd8] sm:$0xff] %v3167
        %3483 = vst [vmem:[%s621 + $0xe0] sm:$0xff] %v3278
        %3484 = vst [vmem:[%s621 + $0xe8] sm:$0xff] %v3280
        %3485 = vst [vmem:[%s621 + $0xf0] sm:$0xff] %v3391
        %3486 = vst [vmem:[%s621 + $0xf8] sm:$0xff] %v3393
        %3487 = vst [vmem:[%s621 + $0x100] sm:$0xff] %v3058
        %3488 = vst [vmem:[%s621 + $0x108] sm:$0xff] %v3060
        %3489 = vst [vmem:[%s621 + $0x110] sm:$0xff] %v3171
        %3490 = vst [vmem:[%s621 + $0x118] sm:$0xff] %v3173
        %3491 = vst [vmem:[%s621 + $0x120] sm:$0xff] %v3284
        %3492 = vst [vmem:[%s621 + $0x128] sm:$0xff] %v3286
        %3493 = vst [vmem:[%s621 + $0x130] sm:$0xff] %v3397
        %3494 = vst [vmem:[%s621 + $0x138] sm:$0xff] %v3399
        %3495 = vst [vmem:[%s621 + $0x140] sm:$0xff] %v3062
        %3496 = vst [vmem:[%s621 + $0x148] sm:$0xff] %v3064
        %3497 = vst [vmem:[%s621 + $0x150] sm:$0xff] %v3175
        %3498 = vst [vmem:[%s621 + $0x158] sm:$0xff] %v3177
        %3499 = vst [vmem:[%s621 + $0x160] sm:$0xff] %v3288
        %3500 = vst [vmem:[%s621 + $0x168] sm:$0xff] %v3290
        %3501 = vst [vmem:[%s621 + $0x170] sm:$0xff] %v3401
        %3502 = vst [vmem:[%s621 + $0x178] sm:$0xff] %v3403
        %3503 = vst [vmem:[%s621 + $0x180] sm:$0xff] %v3068
        %3504 = vst [vmem:[%s621 + $0x188] sm:$0xff] %v3070
        %3505 = vst [vmem:[%s621 + $0x190] sm:$0xff] %v3181
        %3506 = vst [vmem:[%s621 + $0x198] sm:$0xff] %v3183
        %3507 = vst [vmem:[%s621 + $0x1a0] sm:$0xff] %v3294
        %3508 = vst [vmem:[%s621 + $0x1a8] sm:$0xff] %v3296
        %3509 = vst [vmem:[%s621 + $0x1b0] sm:$0xff] %v3407
        %3510 = vst [vmem:[%s621 + $0x1b8] sm:$0xff] %v3409
        %3511 = vst [vmem:[%s621 + $0x1c0] sm:$0xff] %v3072
        %3512 = vst [vmem:[%s621 + $0x1c8] sm:$0xff] %v3074
        %3513 = vst [vmem:[%s621 + $0x1d0] sm:$0xff] %v3185
        %3514 = vst [vmem:[%s621 + $0x1d8] sm:$0xff] %v3187
        %3515 = vst [vmem:[%s621 + $0x1e0] sm:$0xff] %v3298
        %3516 = vst [vmem:[%s621 + $0x1e8] sm:$0xff] %v3300
        %3517 = vst [vmem:[%s621 + $0x1f0] sm:$0xff] %v3411
        %3518 = vst [vmem:[%s621 + $0x1f8] sm:$0xff] %v3413
        %3519 = vst [vmem:[%s621 + $0x200] sm:$0xff] %v3078
        %3520 = vst [vmem:[%s621 + $0x208] sm:$0xff] %v3080
        %3521 = vst [vmem:[%s621 + $0x210] sm:$0xff] %v3191
        %3522 = vst [vmem:[%s621 + $0x218] sm:$0xff] %v3193
        %3523 = vst [vmem:[%s621 + $0x220] sm:$0xff] %v3304
        %3524 = vst [vmem:[%s621 + $0x228] sm:$0xff] %v3306
        %3525 = vst [vmem:[%s621 + $0x230] sm:$0xff] %v3417
        %3526 = vst [vmem:[%s621 + $0x238] sm:$0xff] %v3419
        %3527 = vst [vmem:[%s621 + $0x240] sm:$0xff] %v3082
        %3528 = vst [vmem:[%s621 + $0x248] sm:$0xff] %v3084
        %3529 = vst [vmem:[%s621 + $0x250] sm:$0xff] %v3195
        %3530 = vst [vmem:[%s621 + $0x258] sm:$0xff] %v3197
        %3531 = vst [vmem:[%s621 + $0x260] sm:$0xff] %v3308
        %3532 = vst [vmem:[%s621 + $0x268] sm:$0xff] %v3310
        %3533 = vst [vmem:[%s621 + $0x270] sm:$0xff] %v3421
        %3534 = vst [vmem:[%s621 + $0x278] sm:$0xff] %v3423
        %3535 = vst [vmem:[%s621 + $0x280] sm:$0xff] %v3088
        %3536 = vst [vmem:[%s621 + $0x288] sm:$0xff] %v3090
        %3537 = vst [vmem:[%s621 + $0x290] sm:$0xff] %v3201
        %3538 = vst [vmem:[%s621 + $0x298] sm:$0xff] %v3203
        %3539 = vst [vmem:[%s621 + $0x2a0] sm:$0xff] %v3314
        %3540 = vst [vmem:[%s621 + $0x2a8] sm:$0xff] %v3316
        %3541 = vst [vmem:[%s621 + $0x2b0] sm:$0xff] %v3427
        %3542 = vst [vmem:[%s621 + $0x2b8] sm:$0xff] %v3429
        %3543 = vst [vmem:[%s621 + $0x2c0] sm:$0xff] %v3092
        %3544 = vst [vmem:[%s621 + $0x2c8] sm:$0xff] %v3094
        %3545 = vst [vmem:[%s621 + $0x2d0] sm:$0xff] %v3205
        %3546 = vst [vmem:[%s621 + $0x2d8] sm:$0xff] %v3207
        %3547 = vst [vmem:[%s621 + $0x2e0] sm:$0xff] %v3318
        %3548 = vst [vmem:[%s621 + $0x2e8] sm:$0xff] %v3320
        %3549 = vst [vmem:[%s621 + $0x2f0] sm:$0xff] %v3431
        %3550 = vst [vmem:[%s621 + $0x2f8] sm:$0xff] %v3433
        %3551 = vst [vmem:[%s621 + $0x300] sm:$0xff] %v3098
        %3552 = vst [vmem:[%s621 + $0x308] sm:$0xff] %v3100
        %3553 = vst [vmem:[%s621 + $0x310] sm:$0xff] %v3211
        %3554 = vst [vmem:[%s621 + $0x318] sm:$0xff] %v3213
        %3555 = vst [vmem:[%s621 + $0x320] sm:$0xff] %v3324
        %3556 = vst [vmem:[%s621 + $0x328] sm:$0xff] %v3326
        %3557 = vst [vmem:[%s621 + $0x330] sm:$0xff] %v3437
        %3558 = vst [vmem:[%s621 + $0x338] sm:$0xff] %v3439
        %3559 = vst [vmem:[%s621 + $0x340] sm:$0xff] %v3102
        %3560 = vst [vmem:[%s621 + $0x348] sm:$0xff] %v3104
        %3561 = vst [vmem:[%s621 + $0x350] sm:$0xff] %v3215
        %3562 = vst [vmem:[%s621 + $0x358] sm:$0xff] %v3217
        %3563 = vst [vmem:[%s621 + $0x360] sm:$0xff] %v3328
        %3564 = vst [vmem:[%s621 + $0x368] sm:$0xff] %v3330
        %3565 = vst [vmem:[%s621 + $0x370] sm:$0xff] %v3441
        %3566 = vst [vmem:[%s621 + $0x378] sm:$0xff] %v3443
        %3567 = vst [vmem:[%s621 + $0x380] sm:$0xff] %v3108
        %3568 = vst [vmem:[%s621 + $0x388] sm:$0xff] %v3110
        %3569 = vst [vmem:[%s621 + $0x390] sm:$0xff] %v3221
        %3570 = vst [vmem:[%s621 + $0x398] sm:$0xff] %v3223
        %3571 = vst [vmem:[%s621 + $0x3a0] sm:$0xff] %v3334
        %3572 = vst [vmem:[%s621 + $0x3a8] sm:$0xff] %v3336
        %3573 = vst [vmem:[%s621 + $0x3b0] sm:$0xff] %v3447
        %3574 = vst [vmem:[%s621 + $0x3b8] sm:$0xff] %v3449
        %3575 = vst [vmem:[%s621 + $0x3c0] sm:$0xff] %v3112
        %3576 = vst [vmem:[%s621 + $0x3c8] sm:$0xff] %v3114
        %3577 = vst [vmem:[%s621 + $0x3d0] sm:$0xff] %v3225
        %3578 = vst [vmem:[%s621 + $0x3d8] sm:$0xff] %v3227
        %3579 = vst [vmem:[%s621 + $0x3e0] sm:$0xff] %v3338
        %3580 = vst [vmem:[%s621 + $0x3e8] sm:$0xff] %v3340
        %3581 = vst [vmem:[%s621 + $0x3f0] sm:$0xff] %v3451
        %3582 = vst [vmem:[%s621 + $0x3f8] sm:$0xff] %v3453
        %s3583 = sand.u32 %s317, 1
        %s3584 = scalar_lea.sflag [#allocation4], %s3583
        %s3585 = sand.u32 %s317, 1
        %s3586 = smul.addr %s3585, 1024
        %s3587 = scalar_lea.vmem [#allocation17], %s3586
        // Predicated region
        $region105: #{tpu_custom_call.1} parent=67 // pred_check
          %p3588 = pneg %p327
        $region106: #{tpu_custom_call.1} parent=67 // pred_check_branch
          %3590 = sbr.rel (%p3588) target = $region108
        $region107: #{tpu_custom_call.1} parent=67 // pred_region
          %s3591 = smul.u32 16, %s37
          %s3593 = ssub.s32 16384, 16384
          %3594 = vsyncadd %s3584, %s3593
          %s3595 = smul.addr %s3591, 8
          %s3596 = smul.addr %s3595, 128
          %s3597 = scalar_lea.hbm %s12, %s3596
          %s3598 = sshll.u32 %s3587, 4
          %s3599 = int_to_ptr.vmem [resolvable:$true] %s3598
          %3604 = dma.vmem_to_hbm [thread:$0]  %s3599, 16384, %s3597, %s3584, 1024, 1024, 64
        $region108: #{tpu_custom_call.1} parent=67 // pred_fallthru
          _
      $region68: #{tpu_custom_call.1} parent=5 // pred_fallthru
        _
      %p3605 = scmp.le.s32.totalorder 2, %s32
      // Predicated region
      $region109: #{tpu_custom_call.1} parent=5 // pred_check
        %p3606 = pneg %p3605
      $region110: #{tpu_custom_call.1} parent=5 // pred_check_branch
        %3608 = sbr.rel (%p3606) target = $region112
      $region111: #{tpu_custom_call.1} parent=5 // pred_region
        %s3609 = ssub.s32 %s32, 2
        // Predicated region
        $region113: #{tpu_custom_call.1} parent=111 // pred_check
          %p3610 = pneg %p333
        $region114: #{tpu_custom_call.1} parent=111 // pred_check_branch
          %3612 = sbr.rel (%p3610) target = $region116
        $region115: #{tpu_custom_call.1} parent=111 // pred_region
          %s3613 = sand.u32 %s318, 1
          %s3614 = scalar_lea.sflag [#allocation4], %s3613
          %s3615 = sand.u32 %s318, 1
          %s3616 = smul.addr %s3615, 1024
          %s3617 = scalar_lea.vmem [#allocation17], %s3616
          %3618 = dma.done %s3614, 16384
        $region116: #{tpu_custom_call.1} parent=111 // pred_fallthru
          _
      $region112: #{tpu_custom_call.1} parent=5 // pred_fallthru
        _
    $region6: #{tpu_custom_call.1} parent=1 // loop_footer
      %s36 = sadd.s32 1, %s32
    $region7: #{tpu_custom_call.1} parent=1 // loop_footer_branch
      %31 = sbr.rel target = $region3
    $region8: #{tpu_custom_call.1} parent=1 // loop_exit
      _
    %3619 = vsyncpa [#allocation3], 1
    %s3620 = scalar_lea.sflag [#allocation3], 1
    %3621 = vsyncpa %s3620, 1
    %3622 = vsyncpa [#allocation6], 1
    %s3623 = scalar_lea.sflag [#allocation6], 1
    %3624 = vsyncpa %s3623, 1
    %3625 = vsyncpa [#allocation9], 1
    %s3626 = scalar_lea.sflag [#allocation9], 1
    %3627 = vsyncpa %s3626, 1
    %3628 = vsyncpa [#allocation12], 1
    %3629 = vsyncpa [#allocation15], 1
    %3630 = vsyncpa [#allocation4], 1
    %s3631 = scalar_lea.sflag [#allocation4], 1
    %3632 = vsyncpa %s3631, 1

</llo_original>
